<compile_context>
chip_gen: v7x
topology: tpu7x:2x2x1
jax: 0.10.0
libtpu: 0.0.40
codegen_flags: <defaults>
</compile_context>

<pallas_src>
import functools

import jax
import jax.numpy as jnp
from jax.experimental import pallas as pl
from jax.experimental.pallas import tpu as pltpu

_LANE = 128
_LRELU_SLOPE = 0.1   # StyleBlock.nl = nn.LeakyReLU(0.1)
_EPS = 1e-5          # assumed instance-norm eps (nn.InstanceNorm2d default)


def _round_up(x, m):
  return (x + m - 1) // m * m


def _default_vmem_limit():
  """~3/4 of physical VMEM (v5e/v6e: 128 MiB, v7x: 64 MiB), conservative fallback."""
  try:
    cap = int(pltpu.get_tpu_info().vmem_capacity_bytes)
    return max(32 * 1024 * 1024, min(cap * 3 // 4, 100 * 1024 * 1024))
  except Exception:  # interpret mode / older jax: keep the safe default
    return 32 * 1024 * 1024


def _step_vmem_bytes(th, wdt, kp, coutp):
  """Rough per-grid-step VMEM footprint (double-buffered ins/outs + f32 temps)."""
  pt = th * wdt
  return (2 * (th + 2) * wdt * kp * 2      # haloed bf16 input tile
          + 2 * pt * coutp * 2             # modulated-noise tile (bf16)
          + 2 * pt * coutp * 2             # output tile (bf16)
          + 2 * 3 * kp * coutp * 2         # conv taps (bf16)
          + 4 * pt * coutp * 4)            # live f32 temporaries (acc/x/x*x/y)


def _pick_tile_rows(h, wdt, kp, coutp, budget):
  for th in range(h, 0, -1):               # largest divisor tile that fits
    if h % th == 0 and (th * wdt) % 8 == 0 and _step_vmem_bytes(th, wdt, kp, coutp) <= budget:
      return th
  for th in range(1, h + 1):               # fall back to smallest aligned divisor
    if h % th == 0 and (th * wdt) % 8 == 0:
      return th
  return h


# ----------------------------------------------------------------------------
# Kernels
# ----------------------------------------------------------------------------
def _conv3x3_acc(x_ref, w_ref, *, th, wdt, kp, coutp):
  """3x3 conv on a haloed row tile as 3 MXU matmuls with K = kp (= 3*Cin padded).

  x_ref : (1, th+2, wdt, kp) bf16 -- dx-shifts pre-folded into the channel dim,
          so the per-dy row slice + flatten is a free view (wdt % 8 == 0).
  w_ref : (3, kp, coutp) bf16 -- taps laid out as [dy, dx*cin + ci, co].
  Returns the (th*wdt, coutp) f32 accumulator.
  The conv bias is intentionally omitted: the AdaIN instance-norm mean
  subtraction cancels a per-channel constant exactly.
  """
  pt = th * wdt
  acc = jnp.zeros((pt, coutp), jnp.float32)
  for dy in range(3):
    patch = x_ref[0, pl.ds(dy, th)].reshape(pt, kp)
    acc = acc + jnp.dot(patch, w_ref[dy], preferred_element_type=jnp.float32)
  return acc


def _style_conv_fused_kernel(x_ref, w_ref, nz_ref, mu_ref, sg_ref, o_ref,
                             *, th, wdt, kp, coutp, inv_count, apply_lrelu):
  """Single-tile path: conv + noise + instance-norm stats + AdaIN (+lrelu)."""
  # TODO(synk): AdaIN / Conv class bodies were not provided; standard StyleGAN1
  # AdaIN assumed: y = sigma * instance_norm(x) + mu, biased variance, eps=1e-5.
  x = _conv3x3_acc(x_ref, w_ref, th=th, wdt=wdt, kp=kp, coutp=coutp)
  x = x + nz_ref[0].astype(jnp.float32)                     # modulated noise
  mean = jnp.sum(x, axis=0, keepdims=True) * inv_count      # (1, coutp)
  var = jnp.maximum(jnp.sum(x * x, axis=0, keepdims=True) * inv_count
                    - mean * mean, 0.0)
  y = sg_ref[0] * ((x - mean) * jax.lax.rsqrt(var + _EPS)) + mu_ref[0]
  if apply_lrelu:
    y = jnp.where(y >= 0.0, y, _LRELU_SLOPE * y)
  o_ref[...] = y[None].astype(o_ref.dtype)


def _style_conv_stats_kernel(x_ref, w_ref, nz_ref, act_ref, ssum_ref, ssq_ref,
                             *, th, wdt, kp, coutp):
  """Tiled path, pass A: conv + noise, write bf16 activation + running stats."""
  x = _conv3x3_acc(x_ref, w_ref, th=th, wdt=wdt, kp=kp, coutp=coutp)
  x = x + nz_ref[0].astype(jnp.float32)
  act_ref[...] = x[None].astype(act_ref.dtype)

  @pl.when(pl.program_id(1) == 0)
  def _():
    ssum_ref[...] = jnp.zeros_like(ssum_ref)
    ssq_ref[...] = jnp.zeros_like(ssq_ref)

  ssum_ref[...] += jnp.sum(x, axis=0, keepdims=True)[None]
  ssq_ref[...] += jnp.sum(x * x, axis=0, keepdims=True)[None]


def _adain_kernel(x_ref, scale_ref, shift_ref, o_ref, *, apply_lrelu):
  """Tiled path, pass B: y = scale*x + shift (AdaIN folded), optional lrelu."""
  y = x_ref[...].astype(jnp.float32) * scale_ref[...] + shift_ref[...]
  if apply_lrelu:
    y = jnp.where(y >= 0.0, y, _LRELU_SLOPE * y)
  o_ref[...] = y.astype(o_ref.dtype)


# ----------------------------------------------------------------------------
# StyleConv wrapper
# ----------------------------------------------------------------------------
def _style_conv(x, w_lat, p, noise_key, *, apply_lrelu, tile_rows, out_dtype,
                vmem_limit):
  """x: (N, H, W, Cin) float. Returns (N, H*W, Coutp) lane-dense activations."""
  n, h, w, cin = x.shape
  _, kp, coutp = p["cw"].shape
  cout = p["nm"].shape[-1]
  assert kp >= 3 * cin, (kp, cin)

  # AdaIN statistics hoisted out of the kernel: one tiny (N,Wd)x(Wd,2C) matmul.
  style = w_lat.astype(jnp.float32) @ p["sw"] + p["sb"]             # (n, 2*cout)
  mu = jnp.pad(style[:, :cout], ((0, 0), (0, coutp - cout)))[:, None, :]
  sigma = jnp.pad(style[:, cout:2 * cout], ((0, 0), (0, coutp - cout)))[:, None, :]

  # noise_modulation * N(0,1), folded on the host, stored bf16.
  # TODO(synk): use in-kernel pltpu.prng_seed/stateful_normal on real-TPU-only
  # builds to remove this HBM tensor (does not lower in interpret/CPU mode).
  noise = p["nm"] * jax.random.normal(noise_key, (n, h * w, cout), jnp.float32)
  noise = jnp.pad(noise, ((0, 0), (0, 0), (0, coutp - cout))).astype(jnp.bfloat16)

  # Conv input: spatial pad=1, then channel-concatenate the 3 dx-shifts so the
  # conv becomes 3 matmuls with K = 3*Cin (padded to a lane multiple).
  xb = x.astype(jnp.bfloat16)
  xpad = jnp.pad(xb, ((0, 0), (1, 1), (1, 1), (0, 0)))              # (n,h+2,w+2,cin)
  xdx = jnp.concatenate([xpad[:, :, dx:dx + w, :] for dx in range(3)], axis=-1)
  xdx = jnp.pad(xdx, ((0, 0), (0, 0), (0, 0), (0, kp - 3 * cin)))   # (n,h+2,w,kp)

  # Tile selection: biggest tile fitting the VMEM budget; prefer the whole image.
  budget = int(0.55 * vmem_limit)
  if tile_rows is None:
    th = h if _step_vmem_bytes(h, w, kp, coutp) <= budget else \
        _pick_tile_rows(h, w, kp, coutp, budget)
  else:
    th = max(1, min(int(tile_rows), h))
    while th > 1 and (h % th != 0 or (th * w) % 8 != 0):
      th -= 1
    if h % th != 0 or (th * w) % 8 != 0:
      th = h
  n_tiles = h // th
  pt = th * w

  if n_tiles == 1:
    # -------- fused single-step path: no recompute, no stats round trip ------
    kernel = functools.partial(
        _style_conv_fused_kernel, th=h, wdt=w, kp=kp, coutp=coutp,
        inv_count=1.0 / float(h * w), apply_lrelu=apply_lrelu)
    return pl.pallas_call(
        kernel,
        out_shape=jax.ShapeDtypeStruct((n, h * w, coutp), out_dtype),
        grid=(n,),
        in_specs=[
            pl.BlockSpec((1, h + 2, w, kp), lambda b: (b, 0, 0, 0)),
            pl.BlockSpec((3, kp, coutp), lambda b: (0, 0, 0)),
            pl.BlockSpec((1, h * w, coutp), lambda b: (b, 0, 0)),
            pl.BlockSpec((1, 1, coutp), lambda b: (b, 0, 0)),
            pl.BlockSpec((1, 1, coutp), lambda b: (b, 0, 0)),
        ],
        out_specs=pl.BlockSpec((1, h * w, coutp), lambda b: (b, 0, 0)),
        compiler_params=pltpu.CompilerParams(
            dimension_semantics=("parallel",),
            vmem_limit_bytes=vmem_limit),
    )(xdx, p["cw"], noise, mu, sigma)

  # -------- tiled path: pass A (conv + stats) then pass B (AdaIN) ------------
  # Overlapping haloed row tiles (2 extra rows each).
  # TODO(synk): replace with in-kernel halo DMA (pl.ANY + make_async_copy).
  xtiles = jnp.concatenate(
      [xdx[:, None, t * th:t * th + th + 2] for t in range(n_tiles)], axis=1)
  xtiles = xtiles.reshape(n * n_tiles, th + 2, w, kp)

  conv_kernel = functools.partial(
      _style_conv_stats_kernel, th=th, wdt=w, kp=kp, coutp=coutp)
  act, ssum, ssq = pl.pallas_call(
      conv_kernel,
      out_shape=(jax.ShapeDtypeStruct((n, h * w, coutp), jnp.bfloat16),
                 jax.ShapeDtypeStruct((n, 1, coutp), jnp.float32),
                 jax.ShapeDtypeStruct((n, 1, coutp), jnp.float32)),
      grid=(n, n_tiles),
      in_specs=[
          pl.BlockSpec((1, th + 2, w, kp),
                       lambda b, t: (b * n_tiles + t, 0, 0, 0)),
          pl.BlockSpec((3, kp, coutp), lambda b, t: (0, 0, 0)),
          pl.BlockSpec((1, pt, coutp), lambda b, t: (b, t, 0)),
      ],
      out_specs=(
          pl.BlockSpec((1, pt, coutp), lambda b, t: (b, t, 0)),
          pl.BlockSpec((1, 1, coutp), lambda b, t: (b, 0, 0)),
          pl.BlockSpec((1, 1, coutp), lambda b, t: (b, 0, 0)),
      ),
      compiler_params=pltpu.CompilerParams(
          dimension_semantics=("parallel", "arbitrary"),
          vmem_limit_bytes=vmem_limit),
  )(xtiles, p["cw"], noise)

  # Fold AdaIN into one scale/shift per (batch, channel) -- tiny host math.
  inv_count = 1.0 / float(h * w)
  mean = ssum * inv_count                                     # (n, 1, coutp)
  var = jnp.maximum(ssq * inv_count - mean * mean, 0.0)
  inv_std = jax.lax.rsqrt(var + _EPS)
  scale = sigma * inv_std
  shift = mu - mean * scale

  norm_kernel = functools.partial(_adain_kernel, apply_lrelu=apply_lrelu)
  return pl.pallas_call(
      norm_kernel,
      out_shape=jax.ShapeDtypeStruct((n, h * w, coutp), out_dtype),
      grid=(n, n_tiles),
      in_specs=[
          pl.BlockSpec((1, pt, coutp), lambda b, t: (b, t, 0)),
          pl.BlockSpec((1, 1, coutp), lambda b, t: (b, 0, 0)),
          pl.BlockSpec((1, 1, coutp), lambda b, t: (b, 0, 0)),
      ],
      out_specs=pl.BlockSpec((1, pt, coutp), lambda b, t: (b, t, 0)),
      compiler_params=pltpu.CompilerParams(
          dimension_semantics=("parallel", "parallel"),
          vmem_limit_bytes=vmem_limit),
  )(act, scale, shift)


# ----------------------------------------------------------------------------
# Parameters / forward
# ----------------------------------------------------------------------------
def _init_style_conv_params(key, cin, cout, wdim):
  k = jax.random.split(key, 5)
  kp = _round_up(3 * cin, _LANE)
  coutp = _round_up(cout, _LANE)
  conv_w = 0.1 * jax.random.normal(k[0], (cout, cin, 3, 3), jnp.float32)   # torch Conv2d layout
  conv_b = 0.1 * jax.random.normal(k[1], (cout,), jnp.float32)
  noise_mod = 0.01 * jax.random.normal(k[2], (cout,), jnp.float32)         # torch (1,cout,1,1)
  style_w = 0.1 * jax.random.normal(k[3], (2 * cout, wdim), jnp.float32)   # torch Linear layout
  style_b = 0.1 * jax.random.normal(k[4], (2 * cout,), jnp.float32)
  # (cout,cin,3,3) -> (dy,dx,cin,cout) -> (3, 3*cin, cout); K index = dx*cin+ci
  # matches the wrapper's dx-shift channel concatenation; pad K->kp, cout->coutp.
  cw = jnp.transpose(conv_w, (2, 3, 1, 0)).reshape(3, 3 * cin, cout)
  cw = jnp.pad(cw, ((0, 0), (0, kp - 3 * cin), (0, coutp - cout))).astype(jnp.bfloat16)
  return {
      "cw": cw,
      # Conv bias kept only for bookkeeping; it is NOT applied in the kernel
      # because the instance-norm mean subtraction cancels it exactly.
      "cb": conv_b,
      "nm": noise_mod.reshape(1, 1, cout),
      "sw": jnp.transpose(style_w),                # (wdim, 2*cout)
      "sb": style_b.reshape(1, 2 * cout),
  }


def init_style_block_params(key, nc_in, nc_out, w_dim):
  k1, k2 = jax.random.split(key)
  return {"sc1": _init_style_conv_params(k1, nc_in, nc_out, w_dim),
          "sc2": _init_style_conv_params(k2, nc_out, nc_out, w_dim)}


def style_block_forward(x_nchw, w_lat, params, noise_key, tile_rows=None):
  """StyleBlock.forward with sine_maps=False, w_map=None, save_noise=False."""
  n, cin, h, w = x_nchw.shape
  h2, w2 = 2 * h, 2 * w
  vmem_limit = _default_vmem_limit()

  # NCHW -> NHWC, bf16 before the resize so the 4x-larger upsampled activation
  # only ever lives in HBM as bf16.
  x = jnp.transpose(x_nchw, (0, 2, 3, 1)).astype(jnp.bfloat16)
  # F.interpolate(scale_factor=2, mode='bilinear', align_corners=False) ==
  # half-pixel-centers bilinear == jax.image.resize 'bilinear' for upsampling.
  # TODO(synk): fuse the x2 upsample into the first conv kernel to avoid
  # materializing the upsampled activation in HBM at all.
  x = jax.image.resize(x, (n, h2, w2, cin), method="bilinear")

  cout = params["sc1"]["nm"].shape[-1]
  k1, k2 = jax.random.split(noise_key)
  x = _style_conv(x, w_lat, params["sc1"], k1, apply_lrelu=False,
                  tile_rows=tile_rows, out_dtype=jnp.bfloat16,
                  vmem_limit=vmem_limit)
  x = x.reshape(n, h2, w2, -1)[..., :cout]              # drop channel padding
  x = _style_conv(x, w_lat, params["sc2"], k2, apply_lrelu=True,   # lrelu fused
                  tile_rows=tile_rows, out_dtype=jnp.bfloat16,
                  vmem_limit=vmem_limit)
  x = x.reshape(n, h2, w2, -1)[..., :cout]
  # NHWC -> NCHW; f32 for parity with the PyTorch module (cast fuses with the
  # transpose; drop it if the caller consumes bf16 directly).
  return jnp.transpose(x, (0, 3, 1, 2)).astype(jnp.float32)


if __name__ == "__main__":
  key = jax.random.PRNGKey(0)
  N, C_IN, H, W = 2, 4, 16, 16
  C_OUT, W_DIM = 8, 32
  kx, kw, kparams, kn = jax.random.split(key, 4)
  x = jax.random.normal(kx, (N, C_IN, H, W), jnp.float32)
  w_lat = jax.random.normal(kw, (N, W_DIM), jnp.float32)
  params = init_style_block_params(kparams, C_IN, C_OUT, W_DIM)

  fwd = jax.jit(style_block_forward, static_argnames=("tile_rows",))

  # Default: whole 32x32 image in one tile -> fused conv+stats+AdaIN kernel.
  out = jax.block_until_ready(fwd(x, w_lat, params, kn))
  assert out.shape == (N, C_OUT, 2 * H, 2 * W), out.shape
  assert bool(jnp.all(jnp.isfinite(out)))

  # Forced row tiling (2 tiles) exercises the two-pass conv/stats + AdaIN path;
  # same noise key, so it must match the fused path up to bf16 round trips.
  out_tiled = jax.block_until_ready(fwd(x, w_lat, params, kn, tile_rows=16))
  assert out_tiled.shape == out.shape
  assert bool(jnp.all(jnp.isfinite(out_tiled)))
  assert bool(jnp.allclose(out, out_tiled, rtol=0.15, atol=0.15))

  print("KERNEL_OK")
</pallas_src>

<mosaic_0001>
module attributes {stable_mosaic.version = 11 : i64} {
  func.func @_style_conv_fused_kernel(%arg0: i32, %arg1: memref<1x34x32x128xbf16, #tpu.memory_space<vmem>>, %arg2: memref<3x128x128xbf16, #tpu.memory_space<vmem>>, %arg3: memref<1x1024x128xbf16, #tpu.memory_space<vmem>>, %arg4: memref<1x1x128xf32, #tpu.memory_space<vmem>>, %arg5: memref<1x1x128xf32, #tpu.memory_space<vmem>>, %arg6: memref<1x1024x128xbf16, #tpu.memory_space<vmem>>) attributes {dimension_semantics = [#tpu.dimension_semantics<parallel>], iteration_bounds = array<i64: 2>, scalar_prefetch = 0 : i64, scratch_operands = 0 : i64, tpu.core_type = #tpu.core_type<tc>, window_params = [{transform_indices = @transform_0, window_bounds = array<i64: 1, 34, 32, 128>}, {pipeline_mode = #tpu.pipeline_mode<synchronous>, transform_indices = @transform_1, window_bounds = array<i64: 3, 128, 128>}, {transform_indices = @transform_2, window_bounds = array<i64: 1, 1024, 128>}, {transform_indices = @transform_3, window_bounds = array<i64: 1, 1, 128>}, {transform_indices = @transform_4, window_bounds = array<i64: 1, 1, 128>}, {transform_indices = @transform_5, window_bounds = array<i64: 1, 1024, 128>}]} {
    %cst = arith.constant 0.000000e+00 : f32
    %0 = vector.broadcast %cst : f32 to vector<1024x128xf32>
    %c0 = arith.constant 0 : index
    %c0_0 = arith.constant 0 : index
    %c0_1 = arith.constant 0 : index
    %c0_2 = arith.constant 0 : index
    %1 = vector.load %arg1[%c0, %c0_0, %c0_1, %c0_2] : memref<1x34x32x128xbf16, #tpu.memory_space<vmem>>, vector<1x32x32x128xbf16>
    %2 = vector.shape_cast %1 : vector<1x32x32x128xbf16> to vector<32x32x128xbf16>
    %3 = vector.shape_cast %2 : vector<32x32x128xbf16> to vector<1024x128xbf16>
    %c0_3 = arith.constant 0 : index
    %c0_4 = arith.constant 0 : index
    %c0_5 = arith.constant 0 : index
    %4 = vector.load %arg2[%c0_3, %c0_4, %c0_5] : memref<3x128x128xbf16, #tpu.memory_space<vmem>>, vector<1x128x128xbf16>
    %5 = vector.shape_cast %4 : vector<1x128x128xbf16> to vector<128x128xbf16>
    %cst_6 = arith.constant dense<0.000000e+00> : vector<1024x128xf32>
    %6 = tpu.matmul %3, %5, %cst_6 {dimension_numbers = #tpu.dot_dimension_numbers<[1], [0], [0], [1], [0, 0, 1, 1], [], []>} : vector<1024x128xbf16>, vector<128x128xbf16>, vector<1024x128xf32> -> vector<1024x128xf32>
    %7 = arith.addf %0, %6 : vector<1024x128xf32>
    %c0_7 = arith.constant 0 : index
    %c1 = arith.constant 1 : index
    %c0_8 = arith.constant 0 : index
    %c0_9 = arith.constant 0 : index
    %8 = vector.load %arg1[%c0_7, %c1, %c0_8, %c0_9] : memref<1x34x32x128xbf16, #tpu.memory_space<vmem>>, vector<1x32x32x128xbf16>
    %9 = vector.shape_cast %8 : vector<1x32x32x128xbf16> to vector<32x32x128xbf16>
    %10 = vector.shape_cast %9 : vector<32x32x128xbf16> to vector<1024x128xbf16>
    %c1_10 = arith.constant 1 : index
    %c0_11 = arith.constant 0 : index
    %c0_12 = arith.constant 0 : index
    %11 = vector.load %arg2[%c1_10, %c0_11, %c0_12] : memref<3x128x128xbf16, #tpu.memory_space<vmem>>, vector<1x128x128xbf16>
    %12 = vector.shape_cast %11 : vector<1x128x128xbf16> to vector<128x128xbf16>
    %cst_13 = arith.constant dense<0.000000e+00> : vector<1024x128xf32>
    %13 = tpu.matmul %10, %12, %cst_13 {dimension_numbers = #tpu.dot_dimension_numbers<[1], [0], [0], [1], [0, 0, 1, 1], [], []>} : vector<1024x128xbf16>, vector<128x128xbf16>, vector<1024x128xf32> -> vector<1024x128xf32>
    %14 = arith.addf %7, %13 : vector<1024x128xf32>
    %c0_14 = arith.constant 0 : index
    %c2 = arith.constant 2 : index
    %c0_15 = arith.constant 0 : index
    %c0_16 = arith.constant 0 : index
    %15 = vector.load %arg1[%c0_14, %c2, %c0_15, %c0_16] : memref<1x34x32x128xbf16, #tpu.memory_space<vmem>>, vector<1x32x32x128xbf16>
    %16 = vector.shape_cast %15 : vector<1x32x32x128xbf16> to vector<32x32x128xbf16>
    %17 = vector.shape_cast %16 : vector<32x32x128xbf16> to vector<1024x128xbf16>
    %c2_17 = arith.constant 2 : index
    %c0_18 = arith.constant 0 : index
    %c0_19 = arith.constant 0 : index
    %18 = vector.load %arg2[%c2_17, %c0_18, %c0_19] : memref<3x128x128xbf16, #tpu.memory_space<vmem>>, vector<1x128x128xbf16>
    %19 = vector.shape_cast %18 : vector<1x128x128xbf16> to vector<128x128xbf16>
    %cst_20 = arith.constant dense<0.000000e+00> : vector<1024x128xf32>
    %20 = tpu.matmul %17, %19, %cst_20 {dimension_numbers = #tpu.dot_dimension_numbers<[1], [0], [0], [1], [0, 0, 1, 1], [], []>} : vector<1024x128xbf16>, vector<128x128xbf16>, vector<1024x128xf32> -> vector<1024x128xf32>
    %21 = arith.addf %14, %20 : vector<1024x128xf32>
    %c0_21 = arith.constant 0 : index
    %c0_22 = arith.constant 0 : index
    %c0_23 = arith.constant 0 : index
    %22 = vector.load %arg3[%c0_21, %c0_22, %c0_23] : memref<1x1024x128xbf16, #tpu.memory_space<vmem>>, vector<1x1024x128xbf16>
    %23 = vector.shape_cast %22 : vector<1x1024x128xbf16> to vector<1024x128xbf16>
    %24 = arith.extf %23 : vector<1024x128xbf16> to vector<1024x128xf32>
    %25 = arith.addf %21, %24 : vector<1024x128xf32>
    %cst_24 = arith.constant dense<0.000000e+00> : vector<128xf32>
    %26 = vector.multi_reduction <add>, %25, %cst_24 [0] : vector<1024x128xf32> to vector<128xf32>
    %27 = vector.shape_cast %26 : vector<128xf32> to vector<1x128xf32>
    %cst_25 = arith.constant 9.765625E-4 : f32
    %28 = vector.broadcast %cst_25 : f32 to vector<1x128xf32>
    %29 = arith.mulf %27, %28 : vector<1x128xf32>
    %30 = arith.mulf %25, %25 : vector<1024x128xf32>
    %cst_26 = arith.constant dense<0.000000e+00> : vector<128xf32>
    %31 = vector.multi_reduction <add>, %30, %cst_26 [0] : vector<1024x128xf32> to vector<128xf32>
    %32 = vector.shape_cast %31 : vector<128xf32> to vector<1x128xf32>
    %cst_27 = arith.constant 9.765625E-4 : f32
    %33 = vector.broadcast %cst_27 : f32 to vector<1x128xf32>
    %34 = arith.mulf %32, %33 : vector<1x128xf32>
    %35 = arith.mulf %29, %29 : vector<1x128xf32>
    %36 = arith.subf %34, %35 : vector<1x128xf32>
    %cst_28 = arith.constant 0.000000e+00 : f32
    %37 = vector.broadcast %cst_28 : f32 to vector<1x128xf32>
    %38 = arith.maximumf %36, %37 : vector<1x128xf32>
    %c0_29 = arith.constant 0 : index
    %c0_30 = arith.constant 0 : index
    %c0_31 = arith.constant 0 : index
    %39 = vector.load %arg5[%c0_29, %c0_30, %c0_31] : memref<1x1x128xf32, #tpu.memory_space<vmem>>, vector<1x1x128xf32>
    %40 = vector.shape_cast %39 : vector<1x1x128xf32> to vector<1x128xf32>
    %41 = vector.broadcast %29 : vector<1x128xf32> to vector<1024x128xf32>
    %42 = arith.subf %25, %41 : vector<1024x128xf32>
    %cst_32 = arith.constant 9.99999974E-6 : f32
    %43 = vector.broadcast %cst_32 : f32 to vector<1x128xf32>
    %44 = arith.addf %38, %43 : vector<1x128xf32>
    %45 = math.rsqrt %44 : vector<1x128xf32>
    %46 = vector.broadcast %45 : vector<1x128xf32> to vector<1024x128xf32>
    %47 = arith.mulf %42, %46 : vector<1024x128xf32>
    %48 = vector.broadcast %40 : vector<1x128xf32> to vector<1024x128xf32>
    %49 = arith.mulf %48, %47 : vector<1024x128xf32>
    %c0_33 = arith.constant 0 : index
    %c0_34 = arith.constant 0 : index
    %c0_35 = arith.constant 0 : index
    %50 = vector.load %arg4[%c0_33, %c0_34, %c0_35] : memref<1x1x128xf32, #tpu.memory_space<vmem>>, vector<1x1x128xf32>
    %51 = vector.shape_cast %50 : vector<1x1x128xf32> to vector<1x128xf32>
    %52 = vector.broadcast %51 : vector<1x128xf32> to vector<1024x128xf32>
    %53 = arith.addf %49, %52 : vector<1024x128xf32>
    %54 = vector.shape_cast %53 : vector<1024x128xf32> to vector<1x1024x128xf32>
    %55 = arith.truncf %54 : vector<1x1024x128xf32> to vector<1x1024x128xbf16>
    %c0_36 = arith.constant 0 : index
    %c0_37 = arith.constant 0 : index
    %c0_38 = arith.constant 0 : index
    %56 = vector.load %arg6[%c0_36, %c0_37, %c0_38] : memref<1x1024x128xbf16, #tpu.memory_space<vmem>>, vector<1x1024x128xbf16>
    tpu.vector_store %arg6[%c0_36, %c0_37, %c0_38], %55 {strides = array<i32>} : memref<1x1024x128xbf16, #tpu.memory_space<vmem>>, vector<1x1024x128xbf16>,
    return
  }
  func.func @transform_0(%arg0: i32) -> (i32, i32, i32, i32) {
    %c0_i32 = arith.constant 0 : i32
    %c0_i32_0 = arith.constant 0 : i32
    %c0_i32_1 = arith.constant 0 : i32
    %c0_i32_2 = arith.constant 0 : i32
    return %arg0, %c0_i32, %c0_i32_0, %c0_i32_1 : i32, i32, i32, i32
  }
  func.func @transform_1(%arg0: i32) -> (i32, i32, i32) {
    %c0_i32 = arith.constant 0 : i32
    %c0_i32_0 = arith.constant 0 : i32
    %c0_i32_1 = arith.constant 0 : i32
    %c0_i32_2 = arith.constant 0 : i32
    return %c0_i32, %c0_i32_0, %c0_i32_1 : i32, i32, i32
  }
  func.func @transform_2(%arg0: i32) -> (i32, i32, i32) {
    %c0_i32 = arith.constant 0 : i32
    %c0_i32_0 = arith.constant 0 : i32
    %c0_i32_1 = arith.constant 0 : i32
    return %arg0, %c0_i32, %c0_i32_0 : i32, i32, i32
  }
  func.func @transform_3(%arg0: i32) -> (i32, i32, i32) {
    %c0_i32 = arith.constant 0 : i32
    %c0_i32_0 = arith.constant 0 : i32
    %c0_i32_1 = arith.constant 0 : i32
    return %arg0, %c0_i32, %c0_i32_0 : i32, i32, i32
  }
  func.func @transform_4(%arg0: i32) -> (i32, i32, i32) {
    %c0_i32 = arith.constant 0 : i32
    %c0_i32_0 = arith.constant 0 : i32
    %c0_i32_1 = arith.constant 0 : i32
    return %arg0, %c0_i32, %c0_i32_0 : i32, i32, i32
  }
  func.func @transform_5(%arg0: i32) -> (i32, i32, i32) {
    %c0_i32 = arith.constant 0 : i32
    %c0_i32_0 = arith.constant 0 : i32
    %c0_i32_1 = arith.constant 0 : i32
    return %arg0, %c0_i32, %c0_i32_0 : i32, i32, i32
  }
}

module attributes {stable_mosaic.version = 11 : i64} {
  func.func @_style_conv_fused_kernel(%arg0: i32, %arg1: memref<1x34x32x128xbf16, #tpu.memory_space<vmem>>, %arg2: memref<3x128x128xbf16, #tpu.memory_space<vmem>>, %arg3: memref<1x1024x128xbf16, #tpu.memory_space<vmem>>, %arg4: memref<1x1x128xf32, #tpu.memory_space<vmem>>, %arg5: memref<1x1x128xf32, #tpu.memory_space<vmem>>, %arg6: memref<1x1024x128xbf16, #tpu.memory_space<vmem>>) attributes {dimension_semantics = [#tpu.dimension_semantics<parallel>], iteration_bounds = array<i64: 2>, scalar_prefetch = 0 : i64, scratch_operands = 0 : i64, tpu.core_type = #tpu.core_type<tc>, window_params = [{transform_indices = @transform_0, window_bounds = array<i64: 1, 34, 32, 128>}, {pipeline_mode = #tpu.pipeline_mode<synchronous>, transform_indices = @transform_1, window_bounds = array<i64: 3, 128, 128>}, {transform_indices = @transform_2, window_bounds = array<i64: 1, 1024, 128>}, {transform_indices = @transform_3, window_bounds = array<i64: 1, 1, 128>}, {transform_indices = @transform_4, window_bounds = array<i64: 1, 1, 128>}, {transform_indices = @transform_5, window_bounds = array<i64: 1, 1024, 128>}]} {
    %cst = arith.constant 0.000000e+00 : f32
    %0 = vector.broadcast %cst : f32 to vector<1024x128xf32>
    %c0 = arith.constant 0 : index
    %c0_0 = arith.constant 0 : index
    %c0_1 = arith.constant 0 : index
    %c0_2 = arith.constant 0 : index
    %1 = vector.load %arg1[%c0, %c0_0, %c0_1, %c0_2] : memref<1x34x32x128xbf16, #tpu.memory_space<vmem>>, vector<1x32x32x128xbf16>
    %2 = vector.shape_cast %1 : vector<1x32x32x128xbf16> to vector<32x32x128xbf16>
    %3 = vector.shape_cast %2 : vector<32x32x128xbf16> to vector<1024x128xbf16>
    %c0_3 = arith.constant 0 : index
    %c0_4 = arith.constant 0 : index
    %c0_5 = arith.constant 0 : index
    %4 = vector.load %arg2[%c0_3, %c0_4, %c0_5] : memref<3x128x128xbf16, #tpu.memory_space<vmem>>, vector<1x128x128xbf16>
    %5 = vector.shape_cast %4 : vector<1x128x128xbf16> to vector<128x128xbf16>
    %cst_6 = arith.constant dense<0.000000e+00> : vector<1024x128xf32>
    %6 = tpu.matmul %3, %5, %cst_6 {dimension_numbers = #tpu.dot_dimension_numbers<[1], [0], [0], [1], [0, 0, 1, 1], [], []>} : vector<1024x128xbf16>, vector<128x128xbf16>, vector<1024x128xf32> -> vector<1024x128xf32>
    %7 = arith.addf %0, %6 : vector<1024x128xf32>
    %c0_7 = arith.constant 0 : index
    %c1 = arith.constant 1 : index
    %c0_8 = arith.constant 0 : index
    %c0_9 = arith.constant 0 : index
    %8 = vector.load %arg1[%c0_7, %c1, %c0_8, %c0_9] : memref<1x34x32x128xbf16, #tpu.memory_space<vmem>>, vector<1x32x32x128xbf16>
    %9 = vector.shape_cast %8 : vector<1x32x32x128xbf16> to vector<32x32x128xbf16>
    %10 = vector.shape_cast %9 : vector<32x32x128xbf16> to vector<1024x128xbf16>
    %c1_10 = arith.constant 1 : index
    %c0_11 = arith.constant 0 : index
    %c0_12 = arith.constant 0 : index
    %11 = vector.load %arg2[%c1_10, %c0_11, %c0_12] : memref<3x128x128xbf16, #tpu.memory_space<vmem>>, vector<1x128x128xbf16>
    %12 = vector.shape_cast %11 : vector<1x128x128xbf16> to vector<128x128xbf16>
    %cst_13 = arith.constant dense<0.000000e+00> : vector<1024x128xf32>
    %13 = tpu.matmul %10, %12, %cst_13 {dimension_numbers = #tpu.dot_dimension_numbers<[1], [0], [0], [1], [0, 0, 1, 1], [], []>} : vector<1024x128xbf16>, vector<128x128xbf16>, vector<1024x128xf32> -> vector<1024x128xf32>
    %14 = arith.addf %7, %13 : vector<1024x128xf32>
    %c0_14 = arith.constant 0 : index
    %c2 = arith.constant 2 : index
    %c0_15 = arith.constant 0 : index
    %c0_16 = arith.constant 0 : index
    %15 = vector.load %arg1[%c0_14, %c2, %c0_15, %c0_16] : memref<1x34x32x128xbf16, #tpu.memory_space<vmem>>, vector<1x32x32x128xbf16>
    %16 = vector.shape_cast %15 : vector<1x32x32x128xbf16> to vector<32x32x128xbf16>
    %17 = vector.shape_cast %16 : vector<32x32x128xbf16> to vector<1024x128xbf16>
    %c2_17 = arith.constant 2 : index
    %c0_18 = arith.constant 0 : index
    %c0_19 = arith.constant 0 : index
    %18 = vector.load %arg2[%c2_17, %c0_18, %c0_19] : memref<3x128x128xbf16, #tpu.memory_space<vmem>>, vector<1x128x128xbf16>
    %19 = vector.shape_cast %18 : vector<1x128x128xbf16> to vector<128x128xbf16>
    %cst_20 = arith.constant dense<0.000000e+00> : vector<1024x128xf32>
    %20 = tpu.matmul %17, %19, %cst_20 {dimension_numbers = #tpu.dot_dimension_numbers<[1], [0], [0], [1], [0, 0, 1, 1], [], []>} : vector<1024x128xbf16>, vector<128x128xbf16>, vector<1024x128xf32> -> vector<1024x128xf32>
    %21 = arith.addf %14, %20 : vector<1024x128xf32>
    %c0_21 = arith.constant 0 : index
    %c0_22 = arith.constant 0 : index
    %c0_23 = arith.constant 0 : index
    %22 = vector.load %arg3[%c0_21, %c0_22, %c0_23] : memref<1x1024x128xbf16, #tpu.memory_space<vmem>>, vector<1x1024x128xbf16>
    %23 = vector.shape_cast %22 : vector<1x1024x128xbf16> to vector<1024x128xbf16>
    %24 = arith.extf %23 : vector<1024x128xbf16> to vector<1024x128xf32>
    %25 = arith.addf %21, %24 : vector<1024x128xf32>
    %cst_24 = arith.constant dense<0.000000e+00> : vector<128xf32>
    %26 = vector.multi_reduction <add>, %25, %cst_24 [0] : vector<1024x128xf32> to vector<128xf32>
    %27 = vector.shape_cast %26 : vector<128xf32> to vector<1x128xf32>
    %cst_25 = arith.constant 9.765625E-4 : f32
    %28 = vector.broadcast %cst_25 : f32 to vector<1x128xf32>
    %29 = arith.mulf %27, %28 : vector<1x128xf32>
    %30 = arith.mulf %25, %25 : vector<1024x128xf32>
    %cst_26 = arith.constant dense<0.000000e+00> : vector<128xf32>
    %31 = vector.multi_reduction <add>, %30, %cst_26 [0] : vector<1024x128xf32> to vector<128xf32>
    %32 = vector.shape_cast %31 : vector<128xf32> to vector<1x128xf32>
    %cst_27 = arith.constant 9.765625E-4 : f32
    %33 = vector.broadcast %cst_27 : f32 to vector<1x128xf32>
    %34 = arith.mulf %32, %33 : vector<1x128xf32>
    %35 = arith.mulf %29, %29 : vector<1x128xf32>
    %36 = arith.subf %34, %35 : vector<1x128xf32>
    %cst_28 = arith.constant 0.000000e+00 : f32
    %37 = vector.broadcast %cst_28 : f32 to vector<1x128xf32>
    %38 = arith.maximumf %36, %37 : vector<1x128xf32>
    %c0_29 = arith.constant 0 : index
    %c0_30 = arith.constant 0 : index
    %c0_31 = arith.constant 0 : index
    %39 = vector.load %arg5[%c0_29, %c0_30, %c0_31] : memref<1x1x128xf32, #tpu.memory_space<vmem>>, vector<1x1x128xf32>
    %40 = vector.shape_cast %39 : vector<1x1x128xf32> to vector<1x128xf32>
    %41 = vector.broadcast %29 : vector<1x128xf32> to vector<1024x128xf32>
    %42 = arith.subf %25, %41 : vector<1024x128xf32>
    %cst_32 = arith.constant 9.99999974E-6 : f32
    %43 = vector.broadcast %cst_32 : f32 to vector<1x128xf32>
    %44 = arith.addf %38, %43 : vector<1x128xf32>
    %45 = math.rsqrt %44 : vector<1x128xf32>
    %46 = vector.broadcast %45 : vector<1x128xf32> to vector<1024x128xf32>
    %47 = arith.mulf %42, %46 : vector<1024x128xf32>
    %48 = vector.broadcast %40 : vector<1x128xf32> to vector<1024x128xf32>
    %49 = arith.mulf %48, %47 : vector<1024x128xf32>
    %c0_33 = arith.constant 0 : index
    %c0_34 = arith.constant 0 : index
    %c0_35 = arith.constant 0 : index
    %50 = vector.load %arg4[%c0_33, %c0_34, %c0_35] : memref<1x1x128xf32, #tpu.memory_space<vmem>>, vector<1x1x128xf32>
    %51 = vector.shape_cast %50 : vector<1x1x128xf32> to vector<1x128xf32>
    %52 = vector.broadcast %51 : vector<1x128xf32> to vector<1024x128xf32>
    %53 = arith.addf %49, %52 : vector<1024x128xf32>
    %cst_36 = arith.constant 0.000000e+00 : f32
    %54 = vector.broadcast %cst_36 : f32 to vector<1024x128xf32>
    %55 = arith.cmpf oge, %53, %54 : vector<1024x128xf32>
    %cst_37 = arith.constant 1.000000e-01 : f32
    %56 = vector.broadcast %cst_37 : f32 to vector<1024x128xf32>
    %57 = arith.mulf %56, %53 : vector<1024x128xf32>
    %58 = arith.select %55, %53, %57 : vector<1024x128xi1>, vector<1024x128xf32>
    %59 = vector.shape_cast %58 : vector<1024x128xf32> to vector<1x1024x128xf32>
    %60 = arith.truncf %59 : vector<1x1024x128xf32> to vector<1x1024x128xbf16>
    %c0_38 = arith.constant 0 : index
    %c0_39 = arith.constant 0 : index
    %c0_40 = arith.constant 0 : index
    %61 = vector.load %arg6[%c0_38, %c0_39, %c0_40] : memref<1x1024x128xbf16, #tpu.memory_space<vmem>>, vector<1x1024x128xbf16>
    tpu.vector_store %arg6[%c0_38, %c0_39, %c0_40], %60 {strides = array<i32>} : memref<1x1024x128xbf16, #tpu.memory_space<vmem>>, vector<1x1024x128xbf16>,
    return
  }
  func.func @transform_0(%arg0: i32) -> (i32, i32, i32, i32) {
    %c0_i32 = arith.constant 0 : i32
    %c0_i32_0 = arith.constant 0 : i32
    %c0_i32_1 = arith.constant 0 : i32
    %c0_i32_2 = arith.constant 0 : i32
    return %arg0, %c0_i32, %c0_i32_0, %c0_i32_1 : i32, i32, i32, i32
  }
  func.func @transform_1(%arg0: i32) -> (i32, i32, i32) {
    %c0_i32 = arith.constant 0 : i32
    %c0_i32_0 = arith.constant 0 : i32
    %c0_i32_1 = arith.constant 0 : i32
    %c0_i32_2 = arith.constant 0 : i32
    return %c0_i32, %c0_i32_0, %c0_i32_1 : i32, i32, i32
  }
  func.func @transform_2(%arg0: i32) -> (i32, i32, i32) {
    %c0_i32 = arith.constant 0 : i32
    %c0_i32_0 = arith.constant 0 : i32
    %c0_i32_1 = arith.constant 0 : i32
    return %arg0, %c0_i32, %c0_i32_0 : i32, i32, i32
  }
  func.func @transform_3(%arg0: i32) -> (i32, i32, i32) {
    %c0_i32 = arith.constant 0 : i32
    %c0_i32_0 = arith.constant 0 : i32
    %c0_i32_1 = arith.constant 0 : i32
    return %arg0, %c0_i32, %c0_i32_0 : i32, i32, i32
  }
  func.func @transform_4(%arg0: i32) -> (i32, i32, i32) {
    %c0_i32 = arith.constant 0 : i32
    %c0_i32_0 = arith.constant 0 : i32
    %c0_i32_1 = arith.constant 0 : i32
    return %arg0, %c0_i32, %c0_i32_0 : i32, i32, i32
  }
  func.func @transform_5(%arg0: i32) -> (i32, i32, i32) {
    %c0_i32 = arith.constant 0 : i32
    %c0_i32_0 = arith.constant 0 : i32
    %c0_i32_1 = arith.constant 0 : i32
    return %arg0, %c0_i32, %c0_i32_0 : i32, i32, i32
  }
}

</mosaic_0001>

<llo_original>
// kernel: style_block_forward.4
$region0: #{style_block_forward.4}
  #allocation0 [shape = 'u32[]', space=smem, size = 0x4, offset = 0x4, fixed_abs, tag = 'smem constant byte address 0x4 - core index']
  #allocation1 [shape = 'u32[144,128]{1,0:T(1,128)}', space=vmem, size = 0x12000, scoped, tag = 'internal scratch']
  %s0 = inlined_call_operand.vmem [shape: bf16[2,34,32,128], index: 0, kind: input, shape index: {}]
  %s1 = inlined_call_operand.vmem [shape: bf16[3,128,128], index: 1, kind: input, shape index: {}]
  %s2 = inlined_call_operand.vmem [shape: bf16[2,1024,128], index: 2, kind: input, shape index: {}]
  %s3 = inlined_call_operand.vmem [shape: f32[2,1,128], index: 3, kind: input, shape index: {}]
  %s4 = inlined_call_operand.vmem [shape: f32[2,1,128], index: 4, kind: input, shape index: {}]
  %s5 = inlined_call_operand.vmem [shape: bf16[2,1024,128], index: 5, kind: output, shape index: {}]
  %s6 = sld [smem:[#allocation0]]
  $region53: #{style_block_forward.4} parent=0
    _
  %s8 = ssub.s32 1, %s6
  %s9 = scalar_select 0, %s8, %s6
  loop: start=0, step=1, limit=4
  $region2: #{style_block_forward.4} parent=0 // loop_pre_header
    _
  $region3: #{style_block_forward.4} parent=0 // loop_header
    %s11 = sphi 0, %s15
    %p12 = scmp.ge.s32.totalorder %s11, 4
    %s21 = sphi 0, %s23
    %s24 = sphi 0, %s21
    %s25 = sphi 0, %s24
    %s41 = sphi 0, %s25
    %s45 = sphi 0, %s45
    %s47 = sphi 0, %s45
    %s48 = sphi 0, %s47
    %s62 = sphi 0, %s48
    %s68 = sphi 0, %s70
    %s71 = sphi 0, %s68
    %s72 = sphi 0, %s71
    %s88 = sphi 0, %s72
    %s94 = sphi 0, %s96
    %s97 = sphi 0, %s94
    %s98 = sphi 0, %s97
    %s114 = sphi 0, %s98
    %s120 = sphi 0, %s122
    %s123 = sphi 0, %s120
    %s124 = sphi 0, %s123
    %s140 = sphi 0, %s124
    %s146 = sphi 0, %s148
    %s149 = sphi 0, %s146
    %s150 = sphi 0, %s149
    %s166 = sphi 0, %s150
  $region4: #{style_block_forward.4} parent=0 // loop_header_branch
    %14 = sbr.rel (%p12) target = $region8
  $region5: #{style_block_forward.4} parent=0 // loop_body
    %s16 = ssub.s32 %s11, 1
    %s17 = ssub.s32 %s11, 2
    %s18 = sadd.s32 %s11, 1
    %s19 = ssub.s32 %s11, %s18
    %p20 = scmp.eq.s32.totalorder %s19, 0
    %s22 = sadd.s32 %s21, 1
    %s23 = scalar_select %p20, %s21, %s22
    %p26 = pneg %p20
    %p27 = scmp.eq.s32.totalorder %s11, 1
    %p28 = por %p26, %p27
    %p29 = scmp.ne.s32.totalorder %s21, %s24
    %p30 = scmp.eq.s32.totalorder %s11, 0
    %p31 = por %p29, %p30
    %p32 = scmp.ne.s32.totalorder %s21, %s24
    %p33 = scmp.eq.s32.totalorder %s16, 1
    %p34 = por %p32, %p33
    %p35 = scmp.ne.s32.totalorder %s24, %s25
    %p36 = scmp.eq.s32.totalorder %s16, 0
    %p37 = por %p35, %p36
    %p38 = scmp.ne.s32.totalorder %s24, %s25
    %p39 = scmp.eq.s32.totalorder %s17, 1
    %p40 = por %p38, %p39
    %p42 = scmp.ne.s32.totalorder %s25, %s41
    %p43 = scmp.eq.s32.totalorder %s17, 0
    %p44 = por %p42, %p43
    %s46 = sadd.s32 %s45, 1
    %p49 = scmp.eq.s32.totalorder %s11, 1
    %p50 = scmp.ne.s32.totalorder %s45, %s47
    %p51 = scmp.eq.s32.totalorder %s11, 0
    %p52 = por %p50, %p51
    %p53 = scmp.ne.s32.totalorder %s45, %s47
    %p54 = scmp.eq.s32.totalorder %s16, 1
    %p55 = por %p53, %p54
    %p56 = scmp.ne.s32.totalorder %s47, %s48
    %p57 = scmp.eq.s32.totalorder %s16, 0
    %p58 = por %p56, %p57
    %p59 = scmp.ne.s32.totalorder %s47, %s48
    %p60 = scmp.eq.s32.totalorder %s17, 1
    %p61 = por %p59, %p60
    %p63 = scmp.ne.s32.totalorder %s48, %s62
    %p64 = scmp.eq.s32.totalorder %s17, 0
    %p65 = por %p63, %p64
    %s66 = ssub.s32 %s11, %s18
    %p67 = scmp.eq.s32.totalorder %s66, 0
    %s69 = sadd.s32 %s68, 1
    %s70 = scalar_select %p67, %s68, %s69
    %p73 = pneg %p67
    %p74 = scmp.eq.s32.totalorder %s11, 1
    %p75 = por %p73, %p74
    %p76 = scmp.ne.s32.totalorder %s68, %s71
    %p77 = scmp.eq.s32.totalorder %s11, 0
    %p78 = por %p76, %p77
    %p79 = scmp.ne.s32.totalorder %s68, %s71
    %p80 = scmp.eq.s32.totalorder %s16, 1
    %p81 = por %p79, %p80
    %p82 = scmp.ne.s32.totalorder %s71, %s72
    %p83 = scmp.eq.s32.totalorder %s16, 0
    %p84 = por %p82, %p83
    %p85 = scmp.ne.s32.totalorder %s71, %s72
    %p86 = scmp.eq.s32.totalorder %s17, 1
    %p87 = por %p85, %p86
    %p89 = scmp.ne.s32.totalorder %s72, %s88
    %p90 = scmp.eq.s32.totalorder %s17, 0
    %p91 = por %p89, %p90
    %s92 = ssub.s32 %s11, %s18
    %p93 = scmp.eq.s32.totalorder %s92, 0
    %s95 = sadd.s32 %s94, 1
    %s96 = scalar_select %p93, %s94, %s95
    %p99 = pneg %p93
    %p100 = scmp.eq.s32.totalorder %s11, 1
    %p101 = por %p99, %p100
    %p102 = scmp.ne.s32.totalorder %s94, %s97
    %p103 = scmp.eq.s32.totalorder %s11, 0
    %p104 = por %p102, %p103
    %p105 = scmp.ne.s32.totalorder %s94, %s97
    %p106 = scmp.eq.s32.totalorder %s16, 1
    %p107 = por %p105, %p106
    %p108 = scmp.ne.s32.totalorder %s97, %s98
    %p109 = scmp.eq.s32.totalorder %s16, 0
    %p110 = por %p108, %p109
    %p111 = scmp.ne.s32.totalorder %s97, %s98
    %p112 = scmp.eq.s32.totalorder %s17, 1
    %p113 = por %p111, %p112
    %p115 = scmp.ne.s32.totalorder %s98, %s114
    %p116 = scmp.eq.s32.totalorder %s17, 0
    %p117 = por %p115, %p116
    %s118 = ssub.s32 %s11, %s18
    %p119 = scmp.eq.s32.totalorder %s118, 0
    %s121 = sadd.s32 %s120, 1
    %s122 = scalar_select %p119, %s120, %s121
    %p125 = pneg %p119
    %p126 = scmp.eq.s32.totalorder %s11, 1
    %p127 = por %p125, %p126
    %p128 = scmp.ne.s32.totalorder %s120, %s123
    %p129 = scmp.eq.s32.totalorder %s11, 0
    %p130 = por %p128, %p129
    %p131 = scmp.ne.s32.totalorder %s120, %s123
    %p132 = scmp.eq.s32.totalorder %s16, 1
    %p133 = por %p131, %p132
    %p134 = scmp.ne.s32.totalorder %s123, %s124
    %p135 = scmp.eq.s32.totalorder %s16, 0
    %p136 = por %p134, %p135
    %p137 = scmp.ne.s32.totalorder %s123, %s124
    %p138 = scmp.eq.s32.totalorder %s17, 1
    %p139 = por %p137, %p138
    %p141 = scmp.ne.s32.totalorder %s124, %s140
    %p142 = scmp.eq.s32.totalorder %s17, 0
    %p143 = por %p141, %p142
    %s144 = ssub.s32 %s11, %s18
    %p145 = scmp.eq.s32.totalorder %s144, 0
    %s147 = sadd.s32 %s146, 1
    %s148 = scalar_select %p145, %s146, %s147
    %p151 = pneg %p145
    %p152 = scmp.eq.s32.totalorder %s11, 1
    %p153 = por %p151, %p152
    %p154 = scmp.ne.s32.totalorder %s146, %s149
    %p155 = scmp.eq.s32.totalorder %s11, 0
    %p156 = por %p154, %p155
    %p157 = scmp.ne.s32.totalorder %s146, %s149
    %p158 = scmp.eq.s32.totalorder %s16, 1
    %p159 = por %p157, %p158
    %p160 = scmp.ne.s32.totalorder %s149, %s150
    %p161 = scmp.eq.s32.totalorder %s16, 0
    %p162 = por %p160, %p161
    %p163 = scmp.ne.s32.totalorder %s149, %s150
    %p164 = scmp.eq.s32.totalorder %s17, 1
    %p165 = por %p163, %p164
    %p167 = scmp.ne.s32.totalorder %s150, %s166
    %p168 = scmp.eq.s32.totalorder %s17, 0
    %p169 = por %p167, %p168
    %p170 = scmp.le.s32.totalorder 1, %s11
    %p171 = scmp.lt.s32.totalorder %s11, 3
    %p172 = pnand %p170, %p171
    %p173 = pneg %p172
    // Predicated region
    $region9: #{style_block_forward.4} parent=5 // pred_check
      _
    $region10: #{style_block_forward.4} parent=5 // pred_check_branch
      %175 = sbr.rel (%p172) target = $region12
    $region11: #{style_block_forward.4} parent=5 // pred_region
      %s176 = ssub.s32 %s11, 1
      // Predicated region
      $region13: #{style_block_forward.4} parent=11 // pred_check
        %p177 = pneg %p58
      $region14: #{style_block_forward.4} parent=11 // pred_check_branch
        %179 = sbr.rel (%p177) target = $region16
      $region15: #{style_block_forward.4} parent=11 // pred_region
        _
      $region16: #{style_block_forward.4} parent=11 // pred_fallthru
        _
    $region12: #{style_block_forward.4} parent=5 // pred_fallthru
      _
    %p180 = scmp.lt.s32.totalorder %s11, 2
    // Predicated region
    $region17: #{style_block_forward.4} parent=5 // pred_check
      %p181 = pneg %p180
    $region18: #{style_block_forward.4} parent=5 // pred_check_branch
      %183 = sbr.rel (%p181) target = $region20
    $region19: #{style_block_forward.4} parent=5 // pred_region
      // Predicated region
      $region21: #{style_block_forward.4} parent=19 // pred_check
        %p184 = pneg %p31
      $region22: #{style_block_forward.4} parent=19 // pred_check_branch
        %186 = sbr.rel (%p184) target = $region24
      $region23: #{style_block_forward.4} parent=19 // pred_region
        %p187 = scmp.lt.s32.totalorder %s11, 1
        %s188 = scalar_select %p187, %s11, 1
        %s189 = smul.addr %s188, 136
        %s190 = smul.addr %s189, 4
        %s191 = scalar_lea.vmem %s0, %s190
      $region24: #{style_block_forward.4} parent=19 // pred_fallthru
        _
      // Predicated region
      $region25: #{style_block_forward.4} parent=19 // pred_check
        %p192 = pneg %p78
      $region26: #{style_block_forward.4} parent=19 // pred_check_branch
        %194 = sbr.rel (%p192) target = $region28
      $region27: #{style_block_forward.4} parent=19 // pred_region
        %p195 = scmp.lt.s32.totalorder %s11, 1
        %s196 = scalar_select %p195, %s11, 1
        %s197 = smul.addr %s196, 128
        %s198 = smul.addr %s197, 4
        %s199 = scalar_lea.vmem %s2, %s198
      $region28: #{style_block_forward.4} parent=19 // pred_fallthru
        _
      // Predicated region
      $region29: #{style_block_forward.4} parent=19 // pred_check
        %p200 = pneg %p104
      $region30: #{style_block_forward.4} parent=19 // pred_check_branch
        %202 = sbr.rel (%p200) target = $region32
      $region31: #{style_block_forward.4} parent=19 // pred_region
        %p203 = scmp.lt.s32.totalorder %s11, 1
        %s204 = scalar_select %p203, %s11, 1
        %s205 = scalar_lea.vmem %s3, %s204
      $region32: #{style_block_forward.4} parent=19 // pred_fallthru
        _
      // Predicated region
      $region33: #{style_block_forward.4} parent=19 // pred_check
        %p206 = pneg %p130
      $region34: #{style_block_forward.4} parent=19 // pred_check_branch
        %208 = sbr.rel (%p206) target = $region36
      $region35: #{style_block_forward.4} parent=19 // pred_region
        %p209 = scmp.lt.s32.totalorder %s11, 1
        %s210 = scalar_select %p209, %s11, 1
        %s211 = scalar_lea.vmem %s4, %s210
      $region36: #{style_block_forward.4} parent=19 // pred_fallthru
        _
    $region20: #{style_block_forward.4} parent=5 // pred_fallthru
      _
    %p212 = scmp.le.s32.totalorder 1, %s11
    %p213 = scmp.lt.s32.totalorder %s11, 3
    %p214 = pnand %p212, %p213
    %p215 = pneg %p214
    // Predicated region
    $region37: #{style_block_forward.4} parent=5 // pred_check
      _
    $region38: #{style_block_forward.4} parent=5 // pred_check_branch
      %217 = sbr.rel (%p214) target = $region40
    $region39: #{style_block_forward.4} parent=5 // pred_region
      %s218 = ssub.s32 %s11, 1
      %p219 = scmp.lt.s32.totalorder %s16, 1
      %s220 = scalar_select %p219, %s16, 1
      %s221 = smul.addr %s220, 136
      %s222 = smul.addr %s221, 4
      %s223 = scalar_lea.vmem %s0, %s222
      %p224 = pneg %p37
      %p225 = pneg %p34
      %p226 = pneg %p58
      %p227 = pneg %p55
      %p228 = scmp.lt.s32.totalorder %s16, 1
      %s229 = scalar_select %p228, %s16, 1
      %s230 = smul.addr %s229, 128
      %s231 = smul.addr %s230, 4
      %s232 = scalar_lea.vmem %s2, %s231
      %p233 = pneg %p84
      %p234 = pneg %p81
      %p235 = scmp.lt.s32.totalorder %s16, 1
      %s236 = scalar_select %p235, %s16, 1
      %s237 = scalar_lea.vmem %s3, %s236
      %p238 = pneg %p110
      %p239 = pneg %p107
      %p240 = scmp.lt.s32.totalorder %s16, 1
      %s241 = scalar_select %p240, %s16, 1
      %s242 = scalar_lea.vmem %s4, %s241
      %p243 = pneg %p136
      %p244 = pneg %p133
      %p245 = pneg %p162
      %p246 = pneg %p159
      %p247 = scmp.lt.s32.totalorder %s16, 1
      %s248 = scalar_select %p247, %s16, 1
      %s249 = smul.addr %s248, 128
      %s250 = smul.addr %s249, 4
      %s251 = scalar_lea.vmem %s5, %s250
      %p252 = scmp.lt.s32.totalorder %s16, 1
      %s253 = scalar_select %p252, %s16, 1
      %s254 = smul.addr %s253, 136
      %s255 = smul.addr %s254, 4
      %s256 = scalar_lea.vmem %s0, %s255
      %p257 = scmp.lt.s32.totalorder %s16, 1
      %s258 = scalar_select %p257, %s16, 1
      %s259 = smul.addr %s258, 128
      %s260 = smul.addr %s259, 4
      %s261 = scalar_lea.vmem %s2, %s260
      %p262 = scmp.lt.s32.totalorder %s16, 1
      %s263 = scalar_select %p262, %s16, 1
      %s264 = scalar_lea.vmem %s3, %s263
      %p265 = scmp.lt.s32.totalorder %s16, 1
      %s266 = scalar_select %p265, %s16, 1
      %s267 = scalar_lea.vmem %s4, %s266
      %p268 = scmp.lt.s32.totalorder %s16, 1
      %s269 = scalar_select %p268, %s16, 1
      %s270 = smul.addr %s269, 128
      %s271 = smul.addr %s270, 4
      %s272 = scalar_lea.vmem %s5, %s271
      %v274 = vld [vmem:[%s256] sm:$0xf]
      %v275 = vld [vmem:[%s256 + $0x4] sm:$0xf]
      %v276 = vld [vmem:[%s256 + $0x8] sm:$0xf]
      %v277 = vld [vmem:[%s256 + $0xc] sm:$0xf]
      %v278 = vld [vmem:[%s256 + $0x10] sm:$0xf]
      %v279 = vld [vmem:[%s256 + $0x14] sm:$0xf]
      %v280 = vld [vmem:[%s256 + $0x18] sm:$0xf]
      %v281 = vld [vmem:[%s256 + $0x1c] sm:$0xf]
      %v282 = vld [vmem:[%s256 + $0x20] sm:$0xf]
      %v283 = vld [vmem:[%s256 + $0x24] sm:$0xf]
      %v284 = vld [vmem:[%s256 + $0x28] sm:$0xf]
      %v285 = vld [vmem:[%s256 + $0x2c] sm:$0xf]
      %v286 = vld [vmem:[%s256 + $0x30] sm:$0xf]
      %v287 = vld [vmem:[%s256 + $0x34] sm:$0xf]
      %v288 = vld [vmem:[%s256 + $0x38] sm:$0xf]
      %v289 = vld [vmem:[%s256 + $0x3c] sm:$0xf]
      %v290 = vld [vmem:[%s256 + $0x40] sm:$0xf]
      %v291 = vld [vmem:[%s256 + $0x44] sm:$0xf]
      %v292 = vld [vmem:[%s256 + $0x48] sm:$0xf]
      %v293 = vld [vmem:[%s256 + $0x4c] sm:$0xf]
      %v294 = vld [vmem:[%s256 + $0x50] sm:$0xf]
      %v295 = vld [vmem:[%s256 + $0x54] sm:$0xf]
      %v296 = vld [vmem:[%s256 + $0x58] sm:$0xf]
      %v297 = vld [vmem:[%s256 + $0x5c] sm:$0xf]
      %v298 = vld [vmem:[%s256 + $0x60] sm:$0xf]
      %v299 = vld [vmem:[%s256 + $0x64] sm:$0xf]
      %v300 = vld [vmem:[%s256 + $0x68] sm:$0xf]
      %v301 = vld [vmem:[%s256 + $0x6c] sm:$0xf]
      %v302 = vld [vmem:[%s256 + $0x70] sm:$0xf]
      %v303 = vld [vmem:[%s256 + $0x74] sm:$0xf]
      %v304 = vld [vmem:[%s256 + $0x78] sm:$0xf]
      %v305 = vld [vmem:[%s256 + $0x7c] sm:$0xf]
      %v306 = vld [vmem:[%s256 + $0x80] sm:$0xf]
      %v307 = vld [vmem:[%s256 + $0x84] sm:$0xf]
      %v308 = vld [vmem:[%s256 + $0x88] sm:$0xf]
      %v309 = vld [vmem:[%s256 + $0x8c] sm:$0xf]
      %v310 = vld [vmem:[%s256 + $0x90] sm:$0xf]
      %v311 = vld [vmem:[%s256 + $0x94] sm:$0xf]
      %v312 = vld [vmem:[%s256 + $0x98] sm:$0xf]
      %v313 = vld [vmem:[%s256 + $0x9c] sm:$0xf]
      %v314 = vld [vmem:[%s256 + $0xa0] sm:$0xf]
      %v315 = vld [vmem:[%s256 + $0xa4] sm:$0xf]
      %v316 = vld [vmem:[%s256 + $0xa8] sm:$0xf]
      %v317 = vld [vmem:[%s256 + $0xac] sm:$0xf]
      %v318 = vld [vmem:[%s256 + $0xb0] sm:$0xf]
      %v319 = vld [vmem:[%s256 + $0xb4] sm:$0xf]
      %v320 = vld [vmem:[%s256 + $0xb8] sm:$0xf]
      %v321 = vld [vmem:[%s256 + $0xbc] sm:$0xf]
      %v322 = vld [vmem:[%s256 + $0xc0] sm:$0xf]
      %v323 = vld [vmem:[%s256 + $0xc4] sm:$0xf]
      %v324 = vld [vmem:[%s256 + $0xc8] sm:$0xf]
      %v325 = vld [vmem:[%s256 + $0xcc] sm:$0xf]
      %v326 = vld [vmem:[%s256 + $0xd0] sm:$0xf]
      %v327 = vld [vmem:[%s256 + $0xd4] sm:$0xf]
      %v328 = vld [vmem:[%s256 + $0xd8] sm:$0xf]
      %v329 = vld [vmem:[%s256 + $0xdc] sm:$0xf]
      %v330 = vld [vmem:[%s256 + $0xe0] sm:$0xf]
      %v331 = vld [vmem:[%s256 + $0xe4] sm:$0xf]
      %v332 = vld [vmem:[%s256 + $0xe8] sm:$0xf]
      %v333 = vld [vmem:[%s256 + $0xec] sm:$0xf]
      %v334 = vld [vmem:[%s256 + $0xf0] sm:$0xf]
      %v335 = vld [vmem:[%s256 + $0xf4] sm:$0xf]
      %v336 = vld [vmem:[%s256 + $0xf8] sm:$0xf]
      %v337 = vld [vmem:[%s256 + $0xfc] sm:$0xf]
      %v338 = vld [vmem:[%s256 + $0x100] sm:$0xf]
      %v339 = vld [vmem:[%s256 + $0x104] sm:$0xf]
      %v340 = vld [vmem:[%s256 + $0x108] sm:$0xf]
      %v341 = vld [vmem:[%s256 + $0x10c] sm:$0xf]
      %v342 = vld [vmem:[%s256 + $0x110] sm:$0xf]
      %v343 = vld [vmem:[%s256 + $0x114] sm:$0xf]
      %v344 = vld [vmem:[%s256 + $0x118] sm:$0xf]
      %v345 = vld [vmem:[%s256 + $0x11c] sm:$0xf]
      %v346 = vld [vmem:[%s256 + $0x120] sm:$0xf]
      %v347 = vld [vmem:[%s256 + $0x124] sm:$0xf]
      %v348 = vld [vmem:[%s256 + $0x128] sm:$0xf]
      %v349 = vld [vmem:[%s256 + $0x12c] sm:$0xf]
      %v350 = vld [vmem:[%s256 + $0x130] sm:$0xf]
      %v351 = vld [vmem:[%s256 + $0x134] sm:$0xf]
      %v352 = vld [vmem:[%s256 + $0x138] sm:$0xf]
      %v353 = vld [vmem:[%s256 + $0x13c] sm:$0xf]
      %v354 = vld [vmem:[%s256 + $0x140] sm:$0xf]
      %v355 = vld [vmem:[%s256 + $0x144] sm:$0xf]
      %v356 = vld [vmem:[%s256 + $0x148] sm:$0xf]
      %v357 = vld [vmem:[%s256 + $0x14c] sm:$0xf]
      %v358 = vld [vmem:[%s256 + $0x150] sm:$0xf]
      %v359 = vld [vmem:[%s256 + $0x154] sm:$0xf]
      %v360 = vld [vmem:[%s256 + $0x158] sm:$0xf]
      %v361 = vld [vmem:[%s256 + $0x15c] sm:$0xf]
      %v362 = vld [vmem:[%s256 + $0x160] sm:$0xf]
      %v363 = vld [vmem:[%s256 + $0x164] sm:$0xf]
      %v364 = vld [vmem:[%s256 + $0x168] sm:$0xf]
      %v365 = vld [vmem:[%s256 + $0x16c] sm:$0xf]
      %v366 = vld [vmem:[%s256 + $0x170] sm:$0xf]
      %v367 = vld [vmem:[%s256 + $0x174] sm:$0xf]
      %v368 = vld [vmem:[%s256 + $0x178] sm:$0xf]
      %v369 = vld [vmem:[%s256 + $0x17c] sm:$0xf]
      %v370 = vld [vmem:[%s256 + $0x180] sm:$0xf]
      %v371 = vld [vmem:[%s256 + $0x184] sm:$0xf]
      %v372 = vld [vmem:[%s256 + $0x188] sm:$0xf]
      %v373 = vld [vmem:[%s256 + $0x18c] sm:$0xf]
      %v374 = vld [vmem:[%s256 + $0x190] sm:$0xf]
      %v375 = vld [vmem:[%s256 + $0x194] sm:$0xf]
      %v376 = vld [vmem:[%s256 + $0x198] sm:$0xf]
      %v377 = vld [vmem:[%s256 + $0x19c] sm:$0xf]
      %v378 = vld [vmem:[%s256 + $0x1a0] sm:$0xf]
      %v379 = vld [vmem:[%s256 + $0x1a4] sm:$0xf]
      %v380 = vld [vmem:[%s256 + $0x1a8] sm:$0xf]
      %v381 = vld [vmem:[%s256 + $0x1ac] sm:$0xf]
      %v382 = vld [vmem:[%s256 + $0x1b0] sm:$0xf]
      %v383 = vld [vmem:[%s256 + $0x1b4] sm:$0xf]
      %v384 = vld [vmem:[%s256 + $0x1b8] sm:$0xf]
      %v385 = vld [vmem:[%s256 + $0x1bc] sm:$0xf]
      %v386 = vld [vmem:[%s256 + $0x1c0] sm:$0xf]
      %v387 = vld [vmem:[%s256 + $0x1c4] sm:$0xf]
      %v388 = vld [vmem:[%s256 + $0x1c8] sm:$0xf]
      %v389 = vld [vmem:[%s256 + $0x1cc] sm:$0xf]
      %v390 = vld [vmem:[%s256 + $0x1d0] sm:$0xf]
      %v391 = vld [vmem:[%s256 + $0x1d4] sm:$0xf]
      %v392 = vld [vmem:[%s256 + $0x1d8] sm:$0xf]
      %v393 = vld [vmem:[%s256 + $0x1dc] sm:$0xf]
      %v394 = vld [vmem:[%s256 + $0x1e0] sm:$0xf]
      %v395 = vld [vmem:[%s256 + $0x1e4] sm:$0xf]
      %v396 = vld [vmem:[%s256 + $0x1e8] sm:$0xf]
      %v397 = vld [vmem:[%s256 + $0x1ec] sm:$0xf]
      %v398 = vld [vmem:[%s256 + $0x1f0] sm:$0xf]
      %v399 = vld [vmem:[%s256 + $0x1f4] sm:$0xf]
      %v400 = vld [vmem:[%s256 + $0x1f8] sm:$0xf]
      %v401 = vld [vmem:[%s256 + $0x1fc] sm:$0xf]
      %v402 = vld [vmem:[%s1] sm:$0xf]
      %v403 = vld [vmem:[%s1 + $0x4] sm:$0xf]
      %v404 = vld [vmem:[%s1 + $0x8] sm:$0xf]
      %v405 = vld [vmem:[%s1 + $0xc] sm:$0xf]
      %v406 = vld [vmem:[%s1 + $0x10] sm:$0xf]
      %v407 = vld [vmem:[%s1 + $0x14] sm:$0xf]
      %v408 = vld [vmem:[%s1 + $0x18] sm:$0xf]
      %v409 = vld [vmem:[%s1 + $0x1c] sm:$0xf]
      %v410 = vld [vmem:[%s1 + $0x20] sm:$0xf]
      %v411 = vld [vmem:[%s1 + $0x24] sm:$0xf]
      %v412 = vld [vmem:[%s1 + $0x28] sm:$0xf]
      %v413 = vld [vmem:[%s1 + $0x2c] sm:$0xf]
      %v414 = vld [vmem:[%s1 + $0x30] sm:$0xf]
      %v415 = vld [vmem:[%s1 + $0x34] sm:$0xf]
      %v416 = vld [vmem:[%s1 + $0x38] sm:$0xf]
      %v417 = vld [vmem:[%s1 + $0x3c] sm:$0xf]
      %s418 = scalar_lea.vmem %s256, 16
      %v419 = vld [vmem:[%s418] sm:$0xf]
      %v420 = vld [vmem:[%s418 + $0x4] sm:$0xf]
      %v421 = vld [vmem:[%s418 + $0x8] sm:$0xf]
      %v422 = vld [vmem:[%s418 + $0xc] sm:$0xf]
      %v423 = vld [vmem:[%s418 + $0x10] sm:$0xf]
      %v424 = vld [vmem:[%s418 + $0x14] sm:$0xf]
      %v425 = vld [vmem:[%s418 + $0x18] sm:$0xf]
      %v426 = vld [vmem:[%s418 + $0x1c] sm:$0xf]
      %v427 = vld [vmem:[%s418 + $0x20] sm:$0xf]
      %v428 = vld [vmem:[%s418 + $0x24] sm:$0xf]
      %v429 = vld [vmem:[%s418 + $0x28] sm:$0xf]
      %v430 = vld [vmem:[%s418 + $0x2c] sm:$0xf]
      %v431 = vld [vmem:[%s418 + $0x30] sm:$0xf]
      %v432 = vld [vmem:[%s418 + $0x34] sm:$0xf]
      %v433 = vld [vmem:[%s418 + $0x38] sm:$0xf]
      %v434 = vld [vmem:[%s418 + $0x3c] sm:$0xf]
      %v435 = vld [vmem:[%s418 + $0x40] sm:$0xf]
      %v436 = vld [vmem:[%s418 + $0x44] sm:$0xf]
      %v437 = vld [vmem:[%s418 + $0x48] sm:$0xf]
      %v438 = vld [vmem:[%s418 + $0x4c] sm:$0xf]
      %v439 = vld [vmem:[%s418 + $0x50] sm:$0xf]
      %v440 = vld [vmem:[%s418 + $0x54] sm:$0xf]
      %v441 = vld [vmem:[%s418 + $0x58] sm:$0xf]
      %v442 = vld [vmem:[%s418 + $0x5c] sm:$0xf]
      %v443 = vld [vmem:[%s418 + $0x60] sm:$0xf]
      %v444 = vld [vmem:[%s418 + $0x64] sm:$0xf]
      %v445 = vld [vmem:[%s418 + $0x68] sm:$0xf]
      %v446 = vld [vmem:[%s418 + $0x6c] sm:$0xf]
      %v447 = vld [vmem:[%s418 + $0x70] sm:$0xf]
      %v448 = vld [vmem:[%s418 + $0x74] sm:$0xf]
      %v449 = vld [vmem:[%s418 + $0x78] sm:$0xf]
      %v450 = vld [vmem:[%s418 + $0x7c] sm:$0xf]
      %v451 = vld [vmem:[%s418 + $0x80] sm:$0xf]
      %v452 = vld [vmem:[%s418 + $0x84] sm:$0xf]
      %v453 = vld [vmem:[%s418 + $0x88] sm:$0xf]
      %v454 = vld [vmem:[%s418 + $0x8c] sm:$0xf]
      %v455 = vld [vmem:[%s418 + $0x90] sm:$0xf]
      %v456 = vld [vmem:[%s418 + $0x94] sm:$0xf]
      %v457 = vld [vmem:[%s418 + $0x98] sm:$0xf]
      %v458 = vld [vmem:[%s418 + $0x9c] sm:$0xf]
      %v459 = vld [vmem:[%s418 + $0xa0] sm:$0xf]
      %v460 = vld [vmem:[%s418 + $0xa4] sm:$0xf]
      %v461 = vld [vmem:[%s418 + $0xa8] sm:$0xf]
      %v462 = vld [vmem:[%s418 + $0xac] sm:$0xf]
      %v463 = vld [vmem:[%s418 + $0xb0] sm:$0xf]
      %v464 = vld [vmem:[%s418 + $0xb4] sm:$0xf]
      %v465 = vld [vmem:[%s418 + $0xb8] sm:$0xf]
      %v466 = vld [vmem:[%s418 + $0xbc] sm:$0xf]
      %v467 = vld [vmem:[%s418 + $0xc0] sm:$0xf]
      %v468 = vld [vmem:[%s418 + $0xc4] sm:$0xf]
      %v469 = vld [vmem:[%s418 + $0xc8] sm:$0xf]
      %v470 = vld [vmem:[%s418 + $0xcc] sm:$0xf]
      %v471 = vld [vmem:[%s418 + $0xd0] sm:$0xf]
      %v472 = vld [vmem:[%s418 + $0xd4] sm:$0xf]
      %v473 = vld [vmem:[%s418 + $0xd8] sm:$0xf]
      %v474 = vld [vmem:[%s418 + $0xdc] sm:$0xf]
      %v475 = vld [vmem:[%s418 + $0xe0] sm:$0xf]
      %v476 = vld [vmem:[%s418 + $0xe4] sm:$0xf]
      %v477 = vld [vmem:[%s418 + $0xe8] sm:$0xf]
      %v478 = vld [vmem:[%s418 + $0xec] sm:$0xf]
      %v479 = vld [vmem:[%s418 + $0xf0] sm:$0xf]
      %v480 = vld [vmem:[%s418 + $0xf4] sm:$0xf]
      %v481 = vld [vmem:[%s418 + $0xf8] sm:$0xf]
      %v482 = vld [vmem:[%s418 + $0xfc] sm:$0xf]
      %v483 = vld [vmem:[%s418 + $0x100] sm:$0xf]
      %v484 = vld [vmem:[%s418 + $0x104] sm:$0xf]
      %v485 = vld [vmem:[%s418 + $0x108] sm:$0xf]
      %v486 = vld [vmem:[%s418 + $0x10c] sm:$0xf]
      %v487 = vld [vmem:[%s418 + $0x110] sm:$0xf]
      %v488 = vld [vmem:[%s418 + $0x114] sm:$0xf]
      %v489 = vld [vmem:[%s418 + $0x118] sm:$0xf]
      %v490 = vld [vmem:[%s418 + $0x11c] sm:$0xf]
      %v491 = vld [vmem:[%s418 + $0x120] sm:$0xf]
      %v492 = vld [vmem:[%s418 + $0x124] sm:$0xf]
      %v493 = vld [vmem:[%s418 + $0x128] sm:$0xf]
      %v494 = vld [vmem:[%s418 + $0x12c] sm:$0xf]
      %v495 = vld [vmem:[%s418 + $0x130] sm:$0xf]
      %v496 = vld [vmem:[%s418 + $0x134] sm:$0xf]
      %v497 = vld [vmem:[%s418 + $0x138] sm:$0xf]
      %v498 = vld [vmem:[%s418 + $0x13c] sm:$0xf]
      %v499 = vld [vmem:[%s418 + $0x140] sm:$0xf]
      %v500 = vld [vmem:[%s418 + $0x144] sm:$0xf]
      %v501 = vld [vmem:[%s418 + $0x148] sm:$0xf]
      %v502 = vld [vmem:[%s418 + $0x14c] sm:$0xf]
      %v503 = vld [vmem:[%s418 + $0x150] sm:$0xf]
      %v504 = vld [vmem:[%s418 + $0x154] sm:$0xf]
      %v505 = vld [vmem:[%s418 + $0x158] sm:$0xf]
      %v506 = vld [vmem:[%s418 + $0x15c] sm:$0xf]
      %v507 = vld [vmem:[%s418 + $0x160] sm:$0xf]
      %v508 = vld [vmem:[%s418 + $0x164] sm:$0xf]
      %v509 = vld [vmem:[%s418 + $0x168] sm:$0xf]
      %v510 = vld [vmem:[%s418 + $0x16c] sm:$0xf]
      %v511 = vld [vmem:[%s418 + $0x170] sm:$0xf]
      %v512 = vld [vmem:[%s418 + $0x174] sm:$0xf]
      %v513 = vld [vmem:[%s418 + $0x178] sm:$0xf]
      %v514 = vld [vmem:[%s418 + $0x17c] sm:$0xf]
      %v515 = vld [vmem:[%s418 + $0x180] sm:$0xf]
      %v516 = vld [vmem:[%s418 + $0x184] sm:$0xf]
      %v517 = vld [vmem:[%s418 + $0x188] sm:$0xf]
      %v518 = vld [vmem:[%s418 + $0x18c] sm:$0xf]
      %v519 = vld [vmem:[%s418 + $0x190] sm:$0xf]
      %v520 = vld [vmem:[%s418 + $0x194] sm:$0xf]
      %v521 = vld [vmem:[%s418 + $0x198] sm:$0xf]
      %v522 = vld [vmem:[%s418 + $0x19c] sm:$0xf]
      %v523 = vld [vmem:[%s418 + $0x1a0] sm:$0xf]
      %v524 = vld [vmem:[%s418 + $0x1a4] sm:$0xf]
      %v525 = vld [vmem:[%s418 + $0x1a8] sm:$0xf]
      %v526 = vld [vmem:[%s418 + $0x1ac] sm:$0xf]
      %v527 = vld [vmem:[%s418 + $0x1b0] sm:$0xf]
      %v528 = vld [vmem:[%s418 + $0x1b4] sm:$0xf]
      %v529 = vld [vmem:[%s418 + $0x1b8] sm:$0xf]
      %v530 = vld [vmem:[%s418 + $0x1bc] sm:$0xf]
      %v531 = vld [vmem:[%s418 + $0x1c0] sm:$0xf]
      %v532 = vld [vmem:[%s418 + $0x1c4] sm:$0xf]
      %v533 = vld [vmem:[%s418 + $0x1c8] sm:$0xf]
      %v534 = vld [vmem:[%s418 + $0x1cc] sm:$0xf]
      %v535 = vld [vmem:[%s418 + $0x1d0] sm:$0xf]
      %v536 = vld [vmem:[%s418 + $0x1d4] sm:$0xf]
      %v537 = vld [vmem:[%s418 + $0x1d8] sm:$0xf]
      %v538 = vld [vmem:[%s418 + $0x1dc] sm:$0xf]
      %v539 = vld [vmem:[%s418 + $0x1e0] sm:$0xf]
      %v540 = vld [vmem:[%s418 + $0x1e4] sm:$0xf]
      %v541 = vld [vmem:[%s418 + $0x1e8] sm:$0xf]
      %v542 = vld [vmem:[%s418 + $0x1ec] sm:$0xf]
      %v543 = vld [vmem:[%s418 + $0x1f0] sm:$0xf]
      %v544 = vld [vmem:[%s418 + $0x1f4] sm:$0xf]
      %v545 = vld [vmem:[%s418 + $0x1f8] sm:$0xf]
      %v546 = vld [vmem:[%s418 + $0x1fc] sm:$0xf]
      %s547 = scalar_lea.vmem %s1, 64
      %v548 = vld [vmem:[%s547] sm:$0xf]
      %v549 = vld [vmem:[%s547 + $0x4] sm:$0xf]
      %v550 = vld [vmem:[%s547 + $0x8] sm:$0xf]
      %v551 = vld [vmem:[%s547 + $0xc] sm:$0xf]
      %v552 = vld [vmem:[%s547 + $0x10] sm:$0xf]
      %v553 = vld [vmem:[%s547 + $0x14] sm:$0xf]
      %v554 = vld [vmem:[%s547 + $0x18] sm:$0xf]
      %v555 = vld [vmem:[%s547 + $0x1c] sm:$0xf]
      %v556 = vld [vmem:[%s547 + $0x20] sm:$0xf]
      %v557 = vld [vmem:[%s547 + $0x24] sm:$0xf]
      %v558 = vld [vmem:[%s547 + $0x28] sm:$0xf]
      %v559 = vld [vmem:[%s547 + $0x2c] sm:$0xf]
      %v560 = vld [vmem:[%s547 + $0x30] sm:$0xf]
      %v561 = vld [vmem:[%s547 + $0x34] sm:$0xf]
      %v562 = vld [vmem:[%s547 + $0x38] sm:$0xf]
      %v563 = vld [vmem:[%s547 + $0x3c] sm:$0xf]
      %v692 = vunpack.c.l.b16 %v419
      %v693 = vunpack.c.l.b16 %v420
      %v694 = vunpack.c.l.b16 %v421
      %v695 = vunpack.c.l.b16 %v422
      %v696 = vunpack.c.l.b16 %v423
      %v697 = vunpack.c.l.b16 %v424
      %v698 = vunpack.c.l.b16 %v425
      %v699 = vunpack.c.l.b16 %v426
      %v700 = vunpack.c.l.b16 %v427
      %v701 = vunpack.c.l.b16 %v428
      %v702 = vunpack.c.l.b16 %v429
      %v703 = vunpack.c.l.b16 %v430
      %v704 = vunpack.c.l.b16 %v431
      %v705 = vunpack.c.l.b16 %v432
      %v706 = vunpack.c.l.b16 %v433
      %v707 = vunpack.c.l.b16 %v434
      %v708 = vunpack.c.l.b16 %v435
      %v709 = vunpack.c.l.b16 %v436
      %v710 = vunpack.c.l.b16 %v437
      %v711 = vunpack.c.l.b16 %v438
      %v712 = vunpack.c.l.b16 %v439
      %v713 = vunpack.c.l.b16 %v440
      %v714 = vunpack.c.l.b16 %v441
      %v715 = vunpack.c.l.b16 %v442
      %v716 = vunpack.c.l.b16 %v443
      %v717 = vunpack.c.l.b16 %v444
      %v718 = vunpack.c.l.b16 %v445
      %v719 = vunpack.c.l.b16 %v446
      %v720 = vunpack.c.l.b16 %v447
      %v721 = vunpack.c.l.b16 %v448
      %v722 = vunpack.c.l.b16 %v449
      %v723 = vunpack.c.l.b16 %v450
      %v724 = vunpack.c.l.b16 %v451
      %v725 = vunpack.c.l.b16 %v452
      %v726 = vunpack.c.l.b16 %v453
      %v727 = vunpack.c.l.b16 %v454
      %v728 = vunpack.c.l.b16 %v455
      %v729 = vunpack.c.l.b16 %v456
      %v730 = vunpack.c.l.b16 %v457
      %v731 = vunpack.c.l.b16 %v458
      %v732 = vunpack.c.l.b16 %v459
      %v733 = vunpack.c.l.b16 %v460
      %v734 = vunpack.c.l.b16 %v461
      %v735 = vunpack.c.l.b16 %v462
      %v736 = vunpack.c.l.b16 %v463
      %v737 = vunpack.c.l.b16 %v464
      %v738 = vunpack.c.l.b16 %v465
      %v739 = vunpack.c.l.b16 %v466
      %v740 = vunpack.c.l.b16 %v467
      %v741 = vunpack.c.l.b16 %v468
      %v742 = vunpack.c.l.b16 %v469
      %v743 = vunpack.c.l.b16 %v470
      %v744 = vunpack.c.l.b16 %v471
      %v745 = vunpack.c.l.b16 %v472
      %v746 = vunpack.c.l.b16 %v473
      %v747 = vunpack.c.l.b16 %v474
      %v748 = vunpack.c.l.b16 %v475
      %v749 = vunpack.c.l.b16 %v476
      %v750 = vunpack.c.l.b16 %v477
      %v751 = vunpack.c.l.b16 %v478
      %v752 = vunpack.c.l.b16 %v479
      %v753 = vunpack.c.l.b16 %v480
      %v754 = vunpack.c.l.b16 %v481
      %v755 = vunpack.c.l.b16 %v482
      %v756 = vunpack.c.l.b16 %v483
      %v757 = vunpack.c.l.b16 %v484
      %v758 = vunpack.c.l.b16 %v485
      %v759 = vunpack.c.l.b16 %v486
      %v760 = vunpack.c.l.b16 %v487
      %v761 = vunpack.c.l.b16 %v488
      %v762 = vunpack.c.l.b16 %v489
      %v763 = vunpack.c.l.b16 %v490
      %v764 = vunpack.c.l.b16 %v491
      %v765 = vunpack.c.l.b16 %v492
      %v766 = vunpack.c.l.b16 %v493
      %v767 = vunpack.c.l.b16 %v494
      %v768 = vunpack.c.l.b16 %v495
      %v769 = vunpack.c.l.b16 %v496
      %v770 = vunpack.c.l.b16 %v497
      %v771 = vunpack.c.l.b16 %v498
      %v772 = vunpack.c.l.b16 %v499
      %v773 = vunpack.c.l.b16 %v500
      %v774 = vunpack.c.l.b16 %v501
      %v775 = vunpack.c.l.b16 %v502
      %v776 = vunpack.c.l.b16 %v503
      %v777 = vunpack.c.l.b16 %v504
      %v778 = vunpack.c.l.b16 %v505
      %v779 = vunpack.c.l.b16 %v506
      %v780 = vunpack.c.l.b16 %v507
      %v781 = vunpack.c.l.b16 %v508
      %v782 = vunpack.c.l.b16 %v509
      %v783 = vunpack.c.l.b16 %v510
      %v784 = vunpack.c.l.b16 %v511
      %v785 = vunpack.c.l.b16 %v512
      %v786 = vunpack.c.l.b16 %v513
      %v787 = vunpack.c.l.b16 %v514
      %v788 = vunpack.c.l.b16 %v515
      %v789 = vunpack.c.l.b16 %v516
      %v790 = vunpack.c.l.b16 %v517
      %v791 = vunpack.c.l.b16 %v518
      %v792 = vunpack.c.l.b16 %v519
      %v793 = vunpack.c.l.b16 %v520
      %v794 = vunpack.c.l.b16 %v521
      %v795 = vunpack.c.l.b16 %v522
      %v796 = vunpack.c.l.b16 %v523
      %v797 = vunpack.c.l.b16 %v524
      %v798 = vunpack.c.l.b16 %v525
      %v799 = vunpack.c.l.b16 %v526
      %v800 = vunpack.c.l.b16 %v527
      %v801 = vunpack.c.l.b16 %v528
      %v802 = vunpack.c.l.b16 %v529
      %v803 = vunpack.c.l.b16 %v530
      %v804 = vunpack.c.l.b16 %v531
      %v805 = vunpack.c.l.b16 %v532
      %v806 = vunpack.c.l.b16 %v533
      %v807 = vunpack.c.l.b16 %v534
      %v808 = vunpack.c.l.b16 %v535
      %v809 = vunpack.c.l.b16 %v536
      %v810 = vunpack.c.l.b16 %v537
      %v811 = vunpack.c.l.b16 %v538
      %v812 = vunpack.c.l.b16 %v539
      %v813 = vunpack.c.l.b16 %v540
      %v814 = vunpack.c.l.b16 %v541
      %v815 = vunpack.c.l.b16 %v542
      %v816 = vunpack.c.l.b16 %v543
      %v817 = vunpack.c.l.b16 %v544
      %v818 = vunpack.c.l.b16 %v545
      %v819 = vunpack.c.l.b16 %v546
      %v820 = vpack.c.b16 %v693, %v692
      %v821 = vpack.c.b16 %v695, %v694
      %v822 = vpack.c.b16 %v697, %v696
      %v823 = vpack.c.b16 %v699, %v698
      %v824 = vpack.c.b16 %v701, %v700
      %v825 = vpack.c.b16 %v703, %v702
      %v826 = vpack.c.b16 %v705, %v704
      %v827 = vpack.c.b16 %v707, %v706
      %v828 = vpack.c.b16 %v709, %v708
      %v829 = vpack.c.b16 %v711, %v710
      %v830 = vpack.c.b16 %v713, %v712
      %v831 = vpack.c.b16 %v715, %v714
      %v832 = vpack.c.b16 %v717, %v716
      %v833 = vpack.c.b16 %v719, %v718
      %v834 = vpack.c.b16 %v721, %v720
      %v835 = vpack.c.b16 %v723, %v722
      %v836 = vpack.c.b16 %v725, %v724
      %v837 = vpack.c.b16 %v727, %v726
      %v838 = vpack.c.b16 %v729, %v728
      %v839 = vpack.c.b16 %v731, %v730
      %v840 = vpack.c.b16 %v733, %v732
      %v841 = vpack.c.b16 %v735, %v734
      %v842 = vpack.c.b16 %v737, %v736
      %v843 = vpack.c.b16 %v739, %v738
      %v844 = vpack.c.b16 %v741, %v740
      %v845 = vpack.c.b16 %v743, %v742
      %v846 = vpack.c.b16 %v745, %v744
      %v847 = vpack.c.b16 %v747, %v746
      %v848 = vpack.c.b16 %v749, %v748
      %v849 = vpack.c.b16 %v751, %v750
      %v850 = vpack.c.b16 %v753, %v752
      %v851 = vpack.c.b16 %v755, %v754
      %v852 = vpack.c.b16 %v757, %v756
      %v853 = vpack.c.b16 %v759, %v758
      %v854 = vpack.c.b16 %v761, %v760
      %v855 = vpack.c.b16 %v763, %v762
      %v856 = vpack.c.b16 %v765, %v764
      %v857 = vpack.c.b16 %v767, %v766
      %v858 = vpack.c.b16 %v769, %v768
      %v859 = vpack.c.b16 %v771, %v770
      %v860 = vpack.c.b16 %v773, %v772
      %v861 = vpack.c.b16 %v775, %v774
      %v862 = vpack.c.b16 %v777, %v776
      %v863 = vpack.c.b16 %v779, %v778
      %v864 = vpack.c.b16 %v781, %v780
      %v865 = vpack.c.b16 %v783, %v782
      %v866 = vpack.c.b16 %v785, %v784
      %v867 = vpack.c.b16 %v787, %v786
      %v868 = vpack.c.b16 %v789, %v788
      %v869 = vpack.c.b16 %v791, %v790
      %v870 = vpack.c.b16 %v793, %v792
      %v871 = vpack.c.b16 %v795, %v794
      %v872 = vpack.c.b16 %v797, %v796
      %v873 = vpack.c.b16 %v799, %v798
      %v874 = vpack.c.b16 %v801, %v800
      %v875 = vpack.c.b16 %v803, %v802
      %v876 = vpack.c.b16 %v805, %v804
      %v877 = vpack.c.b16 %v807, %v806
      %v878 = vpack.c.b16 %v809, %v808
      %v879 = vpack.c.b16 %v811, %v810
      %v880 = vpack.c.b16 %v813, %v812
      %v881 = vpack.c.b16 %v815, %v814
      %v882 = vpack.c.b16 %v817, %v816
      %v883 = vpack.c.b16 %v819, %v818
      %v964 = vunpack.c.l.b16 %v548
      %v965 = vunpack.c.l.b16 %v549
      %v966 = vunpack.c.l.b16 %v550
      %v967 = vunpack.c.l.b16 %v551
      %v968 = vunpack.c.l.b16 %v552
      %v969 = vunpack.c.l.b16 %v553
      %v970 = vunpack.c.l.b16 %v554
      %v971 = vunpack.c.l.b16 %v555
      %v972 = vunpack.c.l.b16 %v556
      %v973 = vunpack.c.l.b16 %v557
      %v974 = vunpack.c.l.b16 %v558
      %v975 = vunpack.c.l.b16 %v559
      %v976 = vunpack.c.l.b16 %v560
      %v977 = vunpack.c.l.b16 %v561
      %v978 = vunpack.c.l.b16 %v562
      %v979 = vunpack.c.l.b16 %v563
      %v980 = vpack.c.b16 %v965, %v964
      %v981 = vpack.c.b16 %v967, %v966
      %v982 = vpack.c.b16 %v969, %v968
      %v983 = vpack.c.b16 %v971, %v970
      %v984 = vpack.c.b16 %v973, %v972
      %v985 = vpack.c.b16 %v975, %v974
      %v986 = vpack.c.b16 %v977, %v976
      %v987 = vpack.c.b16 %v979, %v978
      %996 = vmatprep.subr.bf16.mxu0 0
      %997 = vmatpush1.bf16.msra.mxu0 %v980
      %998 = vmatprep.subr.bf16.mxu0 0
      %999 = vmatpush1.bf16.msra.mxu0 %v981
      %1000 = vmatprep.subr.bf16.mxu0 0
      %1001 = vmatpush1.bf16.msra.mxu0 %v982
      %1002 = vmatprep.subr.bf16.mxu0 0
      %1003 = vmatpush1.bf16.msra.mxu0 %v983
      %1004 = vmatprep.subr.bf16.mxu0 0
      %1005 = vmatpush1.bf16.msra.mxu0 %v984
      %1006 = vmatprep.subr.bf16.mxu0 0
      %1007 = vmatpush1.bf16.msra.mxu0 %v985
      %1008 = vmatprep.subr.bf16.mxu0 0
      %1009 = vmatpush1.bf16.msra.mxu0 %v986
      %1010 = vmatprep.subr.bf16.mxu0 0
      %1011 = vmatpush1.bf16.msra.mxu0 %v987
      %1012 = vmatprep.subr.bf16.mxu0 0
      %1013 = vmatpush1.bf16.msra.mxu0 0
      %1014 = vmatprep.subr.bf16.mxu0 0
      %1015 = vmatpush1.bf16.msra.mxu0 0
      %1016 = vmatprep.subr.bf16.mxu0 0
      %1017 = vmatpush1.bf16.msra.mxu0 0
      %1018 = vmatprep.subr.bf16.mxu0 0
      %1019 = vmatpush1.bf16.msra.mxu0 0
      %1020 = vmatprep.subr.bf16.mxu0 0
      %1021 = vmatpush1.bf16.msra.mxu0 0
      %1022 = vmatprep.subr.bf16.mxu0 0
      %1023 = vmatpush1.bf16.msra.mxu0 0
      %1024 = vmatprep.subr.bf16.mxu0 0
      %1025 = vmatpush1.bf16.msra.mxu0 0
      %1026 = vmatprep.subr.bf16.mxu0 0
      %1027 = vmatpush1.bf16.msra.mxu0 0
      %1028 = vmatprep.mubr.bf16.mxu0 0
      %1029 = vmatmul.mubr.bf16.gmra.mrb[0].mxu0 %v820
      %v1030 = vpop.f32.mrb[0].mxu0
      %v1031 = vadd.f32 0.0, %v1030
      %v1032 = vpop.f32.mrb[0].mxu0
      %v1033 = vpop.f32.mrb[0].mxu0
      %v1034 = vadd.f32 0.0, %v1033
      %v1035 = vpop.f32.mrb[0].mxu0
      %1036 = vmatprep.mubr.bf16.mxu0 0
      %1037 = vmatmul.mubr.bf16.gmra.mrb[0].mxu0 %v821
      %v1038 = vpop.f32.mrb[0].mxu0
      %v1039 = vadd.f32 0.0, %v1038
      %v1040 = vpop.f32.mrb[0].mxu0
      %v1041 = vpop.f32.mrb[0].mxu0
      %v1042 = vadd.f32 0.0, %v1041
      %v1043 = vpop.f32.mrb[0].mxu0
      %1044 = vmatprep.mubr.bf16.mxu0 0
      %1045 = vmatmul.mubr.bf16.gmra.mrb[0].mxu0 %v822
      %v1046 = vpop.f32.mrb[0].mxu0
      %v1047 = vadd.f32 0.0, %v1046
      %v1048 = vpop.f32.mrb[0].mxu0
      %v1049 = vpop.f32.mrb[0].mxu0
      %v1050 = vadd.f32 0.0, %v1049
      %v1051 = vpop.f32.mrb[0].mxu0
      %1052 = vmatprep.mubr.bf16.mxu0 0
      %1053 = vmatmul.mubr.bf16.gmra.mrb[0].mxu0 %v823
      %v1054 = vpop.f32.mrb[0].mxu0
      %v1055 = vadd.f32 0.0, %v1054
      %v1056 = vpop.f32.mrb[0].mxu0
      %v1057 = vpop.f32.mrb[0].mxu0
      %v1058 = vadd.f32 0.0, %v1057
      %v1059 = vpop.f32.mrb[0].mxu0
      %1060 = vmatprep.mubr.bf16.mxu0 0
      %1061 = vmatmul.mubr.bf16.gmra.mrb[0].mxu0 %v824
      %v1062 = vpop.f32.mrb[0].mxu0
      %v1063 = vadd.f32 0.0, %v1062
      %v1064 = vpop.f32.mrb[0].mxu0
      %v1065 = vpop.f32.mrb[0].mxu0
      %v1066 = vadd.f32 0.0, %v1065
      %v1067 = vpop.f32.mrb[0].mxu0
      %1068 = vmatprep.mubr.bf16.mxu0 0
      %1069 = vmatmul.mubr.bf16.gmra.mrb[0].mxu0 %v825
      %v1070 = vpop.f32.mrb[0].mxu0
      %v1071 = vadd.f32 0.0, %v1070
      %v1072 = vpop.f32.mrb[0].mxu0
      %v1073 = vpop.f32.mrb[0].mxu0
      %v1074 = vadd.f32 0.0, %v1073
      %v1075 = vpop.f32.mrb[0].mxu0
      %1076 = vmatprep.mubr.bf16.mxu0 0
      %1077 = vmatmul.mubr.bf16.gmra.mrb[0].mxu0 %v826
      %v1078 = vpop.f32.mrb[0].mxu0
      %v1079 = vadd.f32 0.0, %v1078
      %v1080 = vpop.f32.mrb[0].mxu0
      %v1081 = vpop.f32.mrb[0].mxu0
      %v1082 = vadd.f32 0.0, %v1081
      %v1083 = vpop.f32.mrb[0].mxu0
      %1084 = vmatprep.mubr.bf16.mxu0 0
      %1085 = vmatmul.mubr.bf16.gmra.mrb[0].mxu0 %v827
      %v1086 = vpop.f32.mrb[0].mxu0
      %v1087 = vadd.f32 0.0, %v1086
      %v1088 = vpop.f32.mrb[0].mxu0
      %v1089 = vpop.f32.mrb[0].mxu0
      %v1090 = vadd.f32 0.0, %v1089
      %v1091 = vpop.f32.mrb[0].mxu0
      %1092 = vmatprep.mubr.bf16.mxu0 0
      %1093 = vmatmul.mubr.bf16.gmra.mrb[0].mxu0 %v828
      %v1094 = vpop.f32.mrb[0].mxu0
      %v1095 = vadd.f32 0.0, %v1094
      %v1096 = vpop.f32.mrb[0].mxu0
      %v1097 = vpop.f32.mrb[0].mxu0
      %v1098 = vadd.f32 0.0, %v1097
      %v1099 = vpop.f32.mrb[0].mxu0
      %1100 = vmatprep.mubr.bf16.mxu0 0
      %1101 = vmatmul.mubr.bf16.gmra.mrb[0].mxu0 %v829
      %v1102 = vpop.f32.mrb[0].mxu0
      %v1103 = vadd.f32 0.0, %v1102
      %v1104 = vpop.f32.mrb[0].mxu0
      %v1105 = vpop.f32.mrb[0].mxu0
      %v1106 = vadd.f32 0.0, %v1105
      %v1107 = vpop.f32.mrb[0].mxu0
      %1108 = vmatprep.mubr.bf16.mxu0 0
      %1109 = vmatmul.mubr.bf16.gmra.mrb[0].mxu0 %v830
      %v1110 = vpop.f32.mrb[0].mxu0
      %v1111 = vadd.f32 0.0, %v1110
      %v1112 = vpop.f32.mrb[0].mxu0
      %v1113 = vpop.f32.mrb[0].mxu0
      %v1114 = vadd.f32 0.0, %v1113
      %v1115 = vpop.f32.mrb[0].mxu0
      %1116 = vmatprep.mubr.bf16.mxu0 0
      %1117 = vmatmul.mubr.bf16.gmra.mrb[0].mxu0 %v831
      %v1118 = vpop.f32.mrb[0].mxu0
      %v1119 = vadd.f32 0.0, %v1118
      %v1120 = vpop.f32.mrb[0].mxu0
      %v1121 = vpop.f32.mrb[0].mxu0
      %v1122 = vadd.f32 0.0, %v1121
      %v1123 = vpop.f32.mrb[0].mxu0
      %1124 = vmatprep.mubr.bf16.mxu0 0
      %1125 = vmatmul.mubr.bf16.gmra.mrb[0].mxu0 %v832
      %v1126 = vpop.f32.mrb[0].mxu0
      %v1127 = vadd.f32 0.0, %v1126
      %v1128 = vpop.f32.mrb[0].mxu0
      %v1129 = vpop.f32.mrb[0].mxu0
      %v1130 = vadd.f32 0.0, %v1129
      %v1131 = vpop.f32.mrb[0].mxu0
      %1132 = vmatprep.mubr.bf16.mxu0 0
      %1133 = vmatmul.mubr.bf16.gmra.mrb[0].mxu0 %v833
      %v1134 = vpop.f32.mrb[0].mxu0
      %v1135 = vadd.f32 0.0, %v1134
      %v1136 = vpop.f32.mrb[0].mxu0
      %v1137 = vpop.f32.mrb[0].mxu0
      %v1138 = vadd.f32 0.0, %v1137
      %v1139 = vpop.f32.mrb[0].mxu0
      %1140 = vmatprep.mubr.bf16.mxu0 0
      %1141 = vmatmul.mubr.bf16.gmra.mrb[0].mxu0 %v834
      %v1142 = vpop.f32.mrb[0].mxu0
      %v1143 = vadd.f32 0.0, %v1142
      %v1144 = vpop.f32.mrb[0].mxu0
      %v1145 = vpop.f32.mrb[0].mxu0
      %v1146 = vadd.f32 0.0, %v1145
      %v1147 = vpop.f32.mrb[0].mxu0
      %1148 = vmatprep.mubr.bf16.mxu0 0
      %1149 = vmatmul.mubr.bf16.gmra.mrb[0].mxu0 %v835
      %v1150 = vpop.f32.mrb[0].mxu0
      %v1151 = vadd.f32 0.0, %v1150
      %v1152 = vpop.f32.mrb[0].mxu0
      %v1153 = vpop.f32.mrb[0].mxu0
      %v1154 = vadd.f32 0.0, %v1153
      %v1155 = vpop.f32.mrb[0].mxu0
      %1156 = vmatprep.mubr.bf16.mxu0 0
      %1157 = vmatmul.mubr.bf16.gmra.mrb[0].mxu0 %v836
      %v1158 = vpop.f32.mrb[0].mxu0
      %v1159 = vadd.f32 0.0, %v1158
      %v1160 = vpop.f32.mrb[0].mxu0
      %v1161 = vpop.f32.mrb[0].mxu0
      %v1162 = vadd.f32 0.0, %v1161
      %v1163 = vpop.f32.mrb[0].mxu0
      %1164 = vmatprep.mubr.bf16.mxu0 0
      %1165 = vmatmul.mubr.bf16.gmra.mrb[0].mxu0 %v837
      %v1166 = vpop.f32.mrb[0].mxu0
      %v1167 = vadd.f32 0.0, %v1166
      %v1168 = vpop.f32.mrb[0].mxu0
      %v1169 = vpop.f32.mrb[0].mxu0
      %v1170 = vadd.f32 0.0, %v1169
      %v1171 = vpop.f32.mrb[0].mxu0
      %1172 = vmatprep.mubr.bf16.mxu0 0
      %1173 = vmatmul.mubr.bf16.gmra.mrb[0].mxu0 %v838
      %v1174 = vpop.f32.mrb[0].mxu0
      %v1175 = vadd.f32 0.0, %v1174
      %v1176 = vpop.f32.mrb[0].mxu0
      %v1177 = vpop.f32.mrb[0].mxu0
      %v1178 = vadd.f32 0.0, %v1177
      %v1179 = vpop.f32.mrb[0].mxu0
      %1180 = vmatprep.mubr.bf16.mxu0 0
      %1181 = vmatmul.mubr.bf16.gmra.mrb[0].mxu0 %v839
      %v1182 = vpop.f32.mrb[0].mxu0
      %v1183 = vadd.f32 0.0, %v1182
      %v1184 = vpop.f32.mrb[0].mxu0
      %v1185 = vpop.f32.mrb[0].mxu0
      %v1186 = vadd.f32 0.0, %v1185
      %v1187 = vpop.f32.mrb[0].mxu0
      %1188 = vmatprep.mubr.bf16.mxu0 0
      %1189 = vmatmul.mubr.bf16.gmra.mrb[0].mxu0 %v840
      %v1190 = vpop.f32.mrb[0].mxu0
      %v1191 = vadd.f32 0.0, %v1190
      %v1192 = vpop.f32.mrb[0].mxu0
      %v1193 = vpop.f32.mrb[0].mxu0
      %v1194 = vadd.f32 0.0, %v1193
      %v1195 = vpop.f32.mrb[0].mxu0
      %1196 = vmatprep.mubr.bf16.mxu0 0
      %1197 = vmatmul.mubr.bf16.gmra.mrb[0].mxu0 %v841
      %v1198 = vpop.f32.mrb[0].mxu0
      %v1199 = vadd.f32 0.0, %v1198
      %v1200 = vpop.f32.mrb[0].mxu0
      %v1201 = vpop.f32.mrb[0].mxu0
      %v1202 = vadd.f32 0.0, %v1201
      %v1203 = vpop.f32.mrb[0].mxu0
      %1204 = vmatprep.mubr.bf16.mxu0 0
      %1205 = vmatmul.mubr.bf16.gmra.mrb[0].mxu0 %v842
      %v1206 = vpop.f32.mrb[0].mxu0
      %v1207 = vadd.f32 0.0, %v1206
      %v1208 = vpop.f32.mrb[0].mxu0
      %v1209 = vpop.f32.mrb[0].mxu0
      %v1210 = vadd.f32 0.0, %v1209
      %v1211 = vpop.f32.mrb[0].mxu0
      %1212 = vmatprep.mubr.bf16.mxu0 0
      %1213 = vmatmul.mubr.bf16.gmra.mrb[0].mxu0 %v843
      %v1214 = vpop.f32.mrb[0].mxu0
      %v1215 = vadd.f32 0.0, %v1214
      %v1216 = vpop.f32.mrb[0].mxu0
      %v1217 = vpop.f32.mrb[0].mxu0
      %v1218 = vadd.f32 0.0, %v1217
      %v1219 = vpop.f32.mrb[0].mxu0
      %1220 = vmatprep.mubr.bf16.mxu0 0
      %1221 = vmatmul.mubr.bf16.gmra.mrb[0].mxu0 %v844
      %v1222 = vpop.f32.mrb[0].mxu0
      %v1223 = vadd.f32 0.0, %v1222
      %v1224 = vpop.f32.mrb[0].mxu0
      %v1225 = vpop.f32.mrb[0].mxu0
      %v1226 = vadd.f32 0.0, %v1225
      %v1227 = vpop.f32.mrb[0].mxu0
      %1228 = vmatprep.mubr.bf16.mxu0 0
      %1229 = vmatmul.mubr.bf16.gmra.mrb[0].mxu0 %v845
      %v1230 = vpop.f32.mrb[0].mxu0
      %v1231 = vadd.f32 0.0, %v1230
      %v1232 = vpop.f32.mrb[0].mxu0
      %v1233 = vpop.f32.mrb[0].mxu0
      %v1234 = vadd.f32 0.0, %v1233
      %v1235 = vpop.f32.mrb[0].mxu0
      %1236 = vmatprep.mubr.bf16.mxu0 0
      %1237 = vmatmul.mubr.bf16.gmra.mrb[0].mxu0 %v846
      %v1238 = vpop.f32.mrb[0].mxu0
      %v1239 = vadd.f32 0.0, %v1238
      %v1240 = vpop.f32.mrb[0].mxu0
      %v1241 = vpop.f32.mrb[0].mxu0
      %v1242 = vadd.f32 0.0, %v1241
      %v1243 = vpop.f32.mrb[0].mxu0
      %1244 = vmatprep.mubr.bf16.mxu0 0
      %1245 = vmatmul.mubr.bf16.gmra.mrb[0].mxu0 %v847
      %v1246 = vpop.f32.mrb[0].mxu0
      %v1247 = vadd.f32 0.0, %v1246
      %v1248 = vpop.f32.mrb[0].mxu0
      %v1249 = vpop.f32.mrb[0].mxu0
      %v1250 = vadd.f32 0.0, %v1249
      %v1251 = vpop.f32.mrb[0].mxu0
      %1252 = vmatprep.mubr.bf16.mxu0 0
      %1253 = vmatmul.mubr.bf16.gmra.mrb[0].mxu0 %v848
      %v1254 = vpop.f32.mrb[0].mxu0
      %v1255 = vadd.f32 0.0, %v1254
      %v1256 = vpop.f32.mrb[0].mxu0
      %v1257 = vpop.f32.mrb[0].mxu0
      %v1258 = vadd.f32 0.0, %v1257
      %v1259 = vpop.f32.mrb[0].mxu0
      %1260 = vmatprep.mubr.bf16.mxu0 0
      %1261 = vmatmul.mubr.bf16.gmra.mrb[0].mxu0 %v849
      %v1262 = vpop.f32.mrb[0].mxu0
      %v1263 = vadd.f32 0.0, %v1262
      %v1264 = vpop.f32.mrb[0].mxu0
      %v1265 = vpop.f32.mrb[0].mxu0
      %v1266 = vadd.f32 0.0, %v1265
      %v1267 = vpop.f32.mrb[0].mxu0
      %1268 = vmatprep.mubr.bf16.mxu0 0
      %1269 = vmatmul.mubr.bf16.gmra.mrb[0].mxu0 %v850
      %v1270 = vpop.f32.mrb[0].mxu0
      %v1271 = vadd.f32 0.0, %v1270
      %v1272 = vpop.f32.mrb[0].mxu0
      %v1273 = vpop.f32.mrb[0].mxu0
      %v1274 = vadd.f32 0.0, %v1273
      %v1275 = vpop.f32.mrb[0].mxu0
      %1276 = vmatprep.mubr.bf16.mxu0 0
      %1277 = vmatmul.mubr.bf16.gmra.mrb[0].mxu0 %v851
      %v1278 = vpop.f32.mrb[0].mxu0
      %v1279 = vadd.f32 0.0, %v1278
      %v1280 = vpop.f32.mrb[0].mxu0
      %v1281 = vpop.f32.mrb[0].mxu0
      %v1282 = vadd.f32 0.0, %v1281
      %v1283 = vpop.f32.mrb[0].mxu0
      %1284 = vmatprep.mubr.bf16.mxu0 0
      %1285 = vmatmul.mubr.bf16.gmra.mrb[0].mxu0 %v852
      %v1286 = vpop.f32.mrb[0].mxu0
      %v1287 = vadd.f32 0.0, %v1286
      %v1288 = vpop.f32.mrb[0].mxu0
      %v1289 = vpop.f32.mrb[0].mxu0
      %v1290 = vadd.f32 0.0, %v1289
      %v1291 = vpop.f32.mrb[0].mxu0
      %1292 = vmatprep.mubr.bf16.mxu0 0
      %1293 = vmatmul.mubr.bf16.gmra.mrb[0].mxu0 %v853
      %v1294 = vpop.f32.mrb[0].mxu0
      %v1295 = vadd.f32 0.0, %v1294
      %v1296 = vpop.f32.mrb[0].mxu0
      %v1297 = vpop.f32.mrb[0].mxu0
      %v1298 = vadd.f32 0.0, %v1297
      %v1299 = vpop.f32.mrb[0].mxu0
      %1300 = vmatprep.mubr.bf16.mxu0 0
      %1301 = vmatmul.mubr.bf16.gmra.mrb[0].mxu0 %v854
      %v1302 = vpop.f32.mrb[0].mxu0
      %v1303 = vadd.f32 0.0, %v1302
      %v1304 = vpop.f32.mrb[0].mxu0
      %v1305 = vpop.f32.mrb[0].mxu0
      %v1306 = vadd.f32 0.0, %v1305
      %v1307 = vpop.f32.mrb[0].mxu0
      %1308 = vmatprep.mubr.bf16.mxu0 0
      %1309 = vmatmul.mubr.bf16.gmra.mrb[0].mxu0 %v855
      %v1310 = vpop.f32.mrb[0].mxu0
      %v1311 = vadd.f32 0.0, %v1310
      %v1312 = vpop.f32.mrb[0].mxu0
      %v1313 = vpop.f32.mrb[0].mxu0
      %v1314 = vadd.f32 0.0, %v1313
      %v1315 = vpop.f32.mrb[0].mxu0
      %1316 = vmatprep.mubr.bf16.mxu0 0
      %1317 = vmatmul.mubr.bf16.gmra.mrb[0].mxu0 %v856
      %v1318 = vpop.f32.mrb[0].mxu0
      %v1319 = vadd.f32 0.0, %v1318
      %v1320 = vpop.f32.mrb[0].mxu0
      %v1321 = vpop.f32.mrb[0].mxu0
      %v1322 = vadd.f32 0.0, %v1321
      %v1323 = vpop.f32.mrb[0].mxu0
      %1324 = vmatprep.mubr.bf16.mxu0 0
      %1325 = vmatmul.mubr.bf16.gmra.mrb[0].mxu0 %v857
      %v1326 = vpop.f32.mrb[0].mxu0
      %v1327 = vadd.f32 0.0, %v1326
      %v1328 = vpop.f32.mrb[0].mxu0
      %v1329 = vpop.f32.mrb[0].mxu0
      %v1330 = vadd.f32 0.0, %v1329
      %v1331 = vpop.f32.mrb[0].mxu0
      %1332 = vmatprep.mubr.bf16.mxu0 0
      %1333 = vmatmul.mubr.bf16.gmra.mrb[0].mxu0 %v858
      %v1334 = vpop.f32.mrb[0].mxu0
      %v1335 = vadd.f32 0.0, %v1334
      %v1336 = vpop.f32.mrb[0].mxu0
      %v1337 = vpop.f32.mrb[0].mxu0
      %v1338 = vadd.f32 0.0, %v1337
      %v1339 = vpop.f32.mrb[0].mxu0
      %1340 = vmatprep.mubr.bf16.mxu0 0
      %1341 = vmatmul.mubr.bf16.gmra.mrb[0].mxu0 %v859
      %v1342 = vpop.f32.mrb[0].mxu0
      %v1343 = vadd.f32 0.0, %v1342
      %v1344 = vpop.f32.mrb[0].mxu0
      %v1345 = vpop.f32.mrb[0].mxu0
      %v1346 = vadd.f32 0.0, %v1345
      %v1347 = vpop.f32.mrb[0].mxu0
      %1348 = vmatprep.mubr.bf16.mxu0 0
      %1349 = vmatmul.mubr.bf16.gmra.mrb[0].mxu0 %v860
      %v1350 = vpop.f32.mrb[0].mxu0
      %v1351 = vadd.f32 0.0, %v1350
      %v1352 = vpop.f32.mrb[0].mxu0
      %v1353 = vpop.f32.mrb[0].mxu0
      %v1354 = vadd.f32 0.0, %v1353
      %v1355 = vpop.f32.mrb[0].mxu0
      %1356 = vmatprep.mubr.bf16.mxu0 0
      %1357 = vmatmul.mubr.bf16.gmra.mrb[0].mxu0 %v861
      %v1358 = vpop.f32.mrb[0].mxu0
      %v1359 = vadd.f32 0.0, %v1358
      %v1360 = vpop.f32.mrb[0].mxu0
      %v1361 = vpop.f32.mrb[0].mxu0
      %v1362 = vadd.f32 0.0, %v1361
      %v1363 = vpop.f32.mrb[0].mxu0
      %1364 = vmatprep.mubr.bf16.mxu0 0
      %1365 = vmatmul.mubr.bf16.gmra.mrb[0].mxu0 %v862
      %v1366 = vpop.f32.mrb[0].mxu0
      %v1367 = vadd.f32 0.0, %v1366
      %v1368 = vpop.f32.mrb[0].mxu0
      %v1369 = vpop.f32.mrb[0].mxu0
      %v1370 = vadd.f32 0.0, %v1369
      %v1371 = vpop.f32.mrb[0].mxu0
      %1372 = vmatprep.mubr.bf16.mxu0 0
      %1373 = vmatmul.mubr.bf16.gmra.mrb[0].mxu0 %v863
      %v1374 = vpop.f32.mrb[0].mxu0
      %v1375 = vadd.f32 0.0, %v1374
      %v1376 = vpop.f32.mrb[0].mxu0
      %v1377 = vpop.f32.mrb[0].mxu0
      %v1378 = vadd.f32 0.0, %v1377
      %v1379 = vpop.f32.mrb[0].mxu0
      %1380 = vmatprep.mubr.bf16.mxu0 0
      %1381 = vmatmul.mubr.bf16.gmra.mrb[0].mxu0 %v864
      %v1382 = vpop.f32.mrb[0].mxu0
      %v1383 = vadd.f32 0.0, %v1382
      %v1384 = vpop.f32.mrb[0].mxu0
      %v1385 = vpop.f32.mrb[0].mxu0
      %v1386 = vadd.f32 0.0, %v1385
      %v1387 = vpop.f32.mrb[0].mxu0
      %1388 = vmatprep.mubr.bf16.mxu0 0
      %1389 = vmatmul.mubr.bf16.gmra.mrb[0].mxu0 %v865
      %v1390 = vpop.f32.mrb[0].mxu0
      %v1391 = vadd.f32 0.0, %v1390
      %v1392 = vpop.f32.mrb[0].mxu0
      %v1393 = vpop.f32.mrb[0].mxu0
      %v1394 = vadd.f32 0.0, %v1393
      %v1395 = vpop.f32.mrb[0].mxu0
      %1396 = vmatprep.mubr.bf16.mxu0 0
      %1397 = vmatmul.mubr.bf16.gmra.mrb[0].mxu0 %v866
      %v1398 = vpop.f32.mrb[0].mxu0
      %v1399 = vadd.f32 0.0, %v1398
      %v1400 = vpop.f32.mrb[0].mxu0
      %v1401 = vpop.f32.mrb[0].mxu0
      %v1402 = vadd.f32 0.0, %v1401
      %v1403 = vpop.f32.mrb[0].mxu0
      %1404 = vmatprep.mubr.bf16.mxu0 0
      %1405 = vmatmul.mubr.bf16.gmra.mrb[0].mxu0 %v867
      %v1406 = vpop.f32.mrb[0].mxu0
      %v1407 = vadd.f32 0.0, %v1406
      %v1408 = vpop.f32.mrb[0].mxu0
      %v1409 = vpop.f32.mrb[0].mxu0
      %v1410 = vadd.f32 0.0, %v1409
      %v1411 = vpop.f32.mrb[0].mxu0
      %1412 = vmatprep.mubr.bf16.mxu0 0
      %1413 = vmatmul.mubr.bf16.gmra.mrb[0].mxu0 %v868
      %v1414 = vpop.f32.mrb[0].mxu0
      %v1415 = vadd.f32 0.0, %v1414
      %v1416 = vpop.f32.mrb[0].mxu0
      %v1417 = vpop.f32.mrb[0].mxu0
      %v1418 = vadd.f32 0.0, %v1417
      %v1419 = vpop.f32.mrb[0].mxu0
      %1420 = vmatprep.mubr.bf16.mxu0 0
      %1421 = vmatmul.mubr.bf16.gmra.mrb[0].mxu0 %v869
      %v1422 = vpop.f32.mrb[0].mxu0
      %v1423 = vadd.f32 0.0, %v1422
      %v1424 = vpop.f32.mrb[0].mxu0
      %v1425 = vpop.f32.mrb[0].mxu0
      %v1426 = vadd.f32 0.0, %v1425
      %v1427 = vpop.f32.mrb[0].mxu0
      %1428 = vmatprep.mubr.bf16.mxu0 0
      %1429 = vmatmul.mubr.bf16.gmra.mrb[0].mxu0 %v870
      %v1430 = vpop.f32.mrb[0].mxu0
      %v1431 = vadd.f32 0.0, %v1430
      %v1432 = vpop.f32.mrb[0].mxu0
      %v1433 = vpop.f32.mrb[0].mxu0
      %v1434 = vadd.f32 0.0, %v1433
      %v1435 = vpop.f32.mrb[0].mxu0
      %1436 = vmatprep.mubr.bf16.mxu0 0
      %1437 = vmatmul.mubr.bf16.gmra.mrb[0].mxu0 %v871
      %v1438 = vpop.f32.mrb[0].mxu0
      %v1439 = vadd.f32 0.0, %v1438
      %v1440 = vpop.f32.mrb[0].mxu0
      %v1441 = vpop.f32.mrb[0].mxu0
      %v1442 = vadd.f32 0.0, %v1441
      %v1443 = vpop.f32.mrb[0].mxu0
      %1444 = vmatprep.mubr.bf16.mxu0 0
      %1445 = vmatmul.mubr.bf16.gmra.mrb[0].mxu0 %v872
      %v1446 = vpop.f32.mrb[0].mxu0
      %v1447 = vadd.f32 0.0, %v1446
      %v1448 = vpop.f32.mrb[0].mxu0
      %v1449 = vpop.f32.mrb[0].mxu0
      %v1450 = vadd.f32 0.0, %v1449
      %v1451 = vpop.f32.mrb[0].mxu0
      %1452 = vmatprep.mubr.bf16.mxu0 0
      %1453 = vmatmul.mubr.bf16.gmra.mrb[0].mxu0 %v873
      %v1454 = vpop.f32.mrb[0].mxu0
      %v1455 = vadd.f32 0.0, %v1454
      %v1456 = vpop.f32.mrb[0].mxu0
      %v1457 = vpop.f32.mrb[0].mxu0
      %v1458 = vadd.f32 0.0, %v1457
      %v1459 = vpop.f32.mrb[0].mxu0
      %1460 = vmatprep.mubr.bf16.mxu0 0
      %1461 = vmatmul.mubr.bf16.gmra.mrb[0].mxu0 %v874
      %v1462 = vpop.f32.mrb[0].mxu0
      %v1463 = vadd.f32 0.0, %v1462
      %v1464 = vpop.f32.mrb[0].mxu0
      %v1465 = vpop.f32.mrb[0].mxu0
      %v1466 = vadd.f32 0.0, %v1465
      %v1467 = vpop.f32.mrb[0].mxu0
      %1468 = vmatprep.mubr.bf16.mxu0 0
      %1469 = vmatmul.mubr.bf16.gmra.mrb[0].mxu0 %v875
      %v1470 = vpop.f32.mrb[0].mxu0
      %v1471 = vadd.f32 0.0, %v1470
      %v1472 = vpop.f32.mrb[0].mxu0
      %v1473 = vpop.f32.mrb[0].mxu0
      %v1474 = vadd.f32 0.0, %v1473
      %v1475 = vpop.f32.mrb[0].mxu0
      %1476 = vmatprep.mubr.bf16.mxu0 0
      %1477 = vmatmul.mubr.bf16.gmra.mrb[0].mxu0 %v876
      %v1478 = vpop.f32.mrb[0].mxu0
      %v1479 = vadd.f32 0.0, %v1478
      %v1480 = vpop.f32.mrb[0].mxu0
      %v1481 = vpop.f32.mrb[0].mxu0
      %v1482 = vadd.f32 0.0, %v1481
      %v1483 = vpop.f32.mrb[0].mxu0
      %1484 = vmatprep.mubr.bf16.mxu0 0
      %1485 = vmatmul.mubr.bf16.gmra.mrb[0].mxu0 %v877
      %v1486 = vpop.f32.mrb[0].mxu0
      %v1487 = vadd.f32 0.0, %v1486
      %v1488 = vpop.f32.mrb[0].mxu0
      %v1489 = vpop.f32.mrb[0].mxu0
      %v1490 = vadd.f32 0.0, %v1489
      %v1491 = vpop.f32.mrb[0].mxu0
      %1492 = vmatprep.mubr.bf16.mxu0 0
      %1493 = vmatmul.mubr.bf16.gmra.mrb[0].mxu0 %v878
      %v1494 = vpop.f32.mrb[0].mxu0
      %v1495 = vadd.f32 0.0, %v1494
      %v1496 = vpop.f32.mrb[0].mxu0
      %v1497 = vpop.f32.mrb[0].mxu0
      %v1498 = vadd.f32 0.0, %v1497
      %v1499 = vpop.f32.mrb[0].mxu0
      %1500 = vmatprep.mubr.bf16.mxu0 0
      %1501 = vmatmul.mubr.bf16.gmra.mrb[0].mxu0 %v879
      %v1502 = vpop.f32.mrb[0].mxu0
      %v1503 = vadd.f32 0.0, %v1502
      %v1504 = vpop.f32.mrb[0].mxu0
      %v1505 = vpop.f32.mrb[0].mxu0
      %v1506 = vadd.f32 0.0, %v1505
      %v1507 = vpop.f32.mrb[0].mxu0
      %1508 = vmatprep.mubr.bf16.mxu0 0
      %1509 = vmatmul.mubr.bf16.gmra.mrb[0].mxu0 %v880
      %v1510 = vpop.f32.mrb[0].mxu0
      %v1511 = vadd.f32 0.0, %v1510
      %v1512 = vpop.f32.mrb[0].mxu0
      %v1513 = vpop.f32.mrb[0].mxu0
      %v1514 = vadd.f32 0.0, %v1513
      %v1515 = vpop.f32.mrb[0].mxu0
      %1516 = vmatprep.mubr.bf16.mxu0 0
      %1517 = vmatmul.mubr.bf16.gmra.mrb[0].mxu0 %v881
      %v1518 = vpop.f32.mrb[0].mxu0
      %v1519 = vadd.f32 0.0, %v1518
      %v1520 = vpop.f32.mrb[0].mxu0
      %v1521 = vpop.f32.mrb[0].mxu0
      %v1522 = vadd.f32 0.0, %v1521
      %v1523 = vpop.f32.mrb[0].mxu0
      %1524 = vmatprep.mubr.bf16.mxu0 0
      %1525 = vmatmul.mubr.bf16.gmra.mrb[0].mxu0 %v882
      %v1526 = vpop.f32.mrb[0].mxu0
      %v1527 = vadd.f32 0.0, %v1526
      %v1528 = vpop.f32.mrb[0].mxu0
      %v1529 = vpop.f32.mrb[0].mxu0
      %v1530 = vadd.f32 0.0, %v1529
      %v1531 = vpop.f32.mrb[0].mxu0
      %1532 = vmatprep.mubr.bf16.mxu0 0
      %1533 = vmatmul.mubr.bf16.gmra.mrb[0].mxu0 %v883
      %v1534 = vpop.f32.mrb[0].mxu0
      %v1535 = vadd.f32 0.0, %v1534
      %v1536 = vpop.f32.mrb[0].mxu0
      %v1537 = vpop.f32.mrb[0].mxu0
      %v1538 = vadd.f32 0.0, %v1537
      %v1539 = vpop.f32.mrb[0].mxu0
      %1540 = vdwg.mxu0
      %v1669 = vunpack.c.l.b16 %v274
      %v1670 = vunpack.c.l.b16 %v275
      %v1671 = vunpack.c.l.b16 %v276
      %v1672 = vunpack.c.l.b16 %v277
      %v1673 = vunpack.c.l.b16 %v278
      %v1674 = vunpack.c.l.b16 %v279
      %v1675 = vunpack.c.l.b16 %v280
      %v1676 = vunpack.c.l.b16 %v281
      %v1677 = vunpack.c.l.b16 %v282
      %v1678 = vunpack.c.l.b16 %v283
      %v1679 = vunpack.c.l.b16 %v284
      %v1680 = vunpack.c.l.b16 %v285
      %v1681 = vunpack.c.l.b16 %v286
      %v1682 = vunpack.c.l.b16 %v287
      %v1683 = vunpack.c.l.b16 %v288
      %v1684 = vunpack.c.l.b16 %v289
      %v1685 = vunpack.c.l.b16 %v290
      %v1686 = vunpack.c.l.b16 %v291
      %v1687 = vunpack.c.l.b16 %v292
      %v1688 = vunpack.c.l.b16 %v293
      %v1689 = vunpack.c.l.b16 %v294
      %v1690 = vunpack.c.l.b16 %v295
      %v1691 = vunpack.c.l.b16 %v296
      %v1692 = vunpack.c.l.b16 %v297
      %v1693 = vunpack.c.l.b16 %v298
      %v1694 = vunpack.c.l.b16 %v299
      %v1695 = vunpack.c.l.b16 %v300
      %v1696 = vunpack.c.l.b16 %v301
      %v1697 = vunpack.c.l.b16 %v302
      %v1698 = vunpack.c.l.b16 %v303
      %v1699 = vunpack.c.l.b16 %v304
      %v1700 = vunpack.c.l.b16 %v305
      %v1701 = vunpack.c.l.b16 %v306
      %v1702 = vunpack.c.l.b16 %v307
      %v1703 = vunpack.c.l.b16 %v308
      %v1704 = vunpack.c.l.b16 %v309
      %v1705 = vunpack.c.l.b16 %v310
      %v1706 = vunpack.c.l.b16 %v311
      %v1707 = vunpack.c.l.b16 %v312
      %v1708 = vunpack.c.l.b16 %v313
      %v1709 = vunpack.c.l.b16 %v314
      %v1710 = vunpack.c.l.b16 %v315
      %v1711 = vunpack.c.l.b16 %v316
      %v1712 = vunpack.c.l.b16 %v317
      %v1713 = vunpack.c.l.b16 %v318
      %v1714 = vunpack.c.l.b16 %v319
      %v1715 = vunpack.c.l.b16 %v320
      %v1716 = vunpack.c.l.b16 %v321
      %v1717 = vunpack.c.l.b16 %v322
      %v1718 = vunpack.c.l.b16 %v323
      %v1719 = vunpack.c.l.b16 %v324
      %v1720 = vunpack.c.l.b16 %v325
      %v1721 = vunpack.c.l.b16 %v326
      %v1722 = vunpack.c.l.b16 %v327
      %v1723 = vunpack.c.l.b16 %v328
      %v1724 = vunpack.c.l.b16 %v329
      %v1725 = vunpack.c.l.b16 %v330
      %v1726 = vunpack.c.l.b16 %v331
      %v1727 = vunpack.c.l.b16 %v332
      %v1728 = vunpack.c.l.b16 %v333
      %v1729 = vunpack.c.l.b16 %v334
      %v1730 = vunpack.c.l.b16 %v335
      %v1731 = vunpack.c.l.b16 %v336
      %v1732 = vunpack.c.l.b16 %v337
      %v1733 = vunpack.c.l.b16 %v338
      %v1734 = vunpack.c.l.b16 %v339
      %v1735 = vunpack.c.l.b16 %v340
      %v1736 = vunpack.c.l.b16 %v341
      %v1737 = vunpack.c.l.b16 %v342
      %v1738 = vunpack.c.l.b16 %v343
      %v1739 = vunpack.c.l.b16 %v344
      %v1740 = vunpack.c.l.b16 %v345
      %v1741 = vunpack.c.l.b16 %v346
      %v1742 = vunpack.c.l.b16 %v347
      %v1743 = vunpack.c.l.b16 %v348
      %v1744 = vunpack.c.l.b16 %v349
      %v1745 = vunpack.c.l.b16 %v350
      %v1746 = vunpack.c.l.b16 %v351
      %v1747 = vunpack.c.l.b16 %v352
      %v1748 = vunpack.c.l.b16 %v353
      %v1749 = vunpack.c.l.b16 %v354
      %v1750 = vunpack.c.l.b16 %v355
      %v1751 = vunpack.c.l.b16 %v356
      %v1752 = vunpack.c.l.b16 %v357
      %v1753 = vunpack.c.l.b16 %v358
      %v1754 = vunpack.c.l.b16 %v359
      %v1755 = vunpack.c.l.b16 %v360
      %v1756 = vunpack.c.l.b16 %v361
      %v1757 = vunpack.c.l.b16 %v362
      %v1758 = vunpack.c.l.b16 %v363
      %v1759 = vunpack.c.l.b16 %v364
      %v1760 = vunpack.c.l.b16 %v365
      %v1761 = vunpack.c.l.b16 %v366
      %v1762 = vunpack.c.l.b16 %v367
      %v1763 = vunpack.c.l.b16 %v368
      %v1764 = vunpack.c.l.b16 %v369
      %v1765 = vunpack.c.l.b16 %v370
      %v1766 = vunpack.c.l.b16 %v371
      %v1767 = vunpack.c.l.b16 %v372
      %v1768 = vunpack.c.l.b16 %v373
      %v1769 = vunpack.c.l.b16 %v374
      %v1770 = vunpack.c.l.b16 %v375
      %v1771 = vunpack.c.l.b16 %v376
      %v1772 = vunpack.c.l.b16 %v377
      %v1773 = vunpack.c.l.b16 %v378
      %v1774 = vunpack.c.l.b16 %v379
      %v1775 = vunpack.c.l.b16 %v380
      %v1776 = vunpack.c.l.b16 %v381
      %v1777 = vunpack.c.l.b16 %v382
      %v1778 = vunpack.c.l.b16 %v383
      %v1779 = vunpack.c.l.b16 %v384
      %v1780 = vunpack.c.l.b16 %v385
      %v1781 = vunpack.c.l.b16 %v386
      %v1782 = vunpack.c.l.b16 %v387
      %v1783 = vunpack.c.l.b16 %v388
      %v1784 = vunpack.c.l.b16 %v389
      %v1785 = vunpack.c.l.b16 %v390
      %v1786 = vunpack.c.l.b16 %v391
      %v1787 = vunpack.c.l.b16 %v392
      %v1788 = vunpack.c.l.b16 %v393
      %v1789 = vunpack.c.l.b16 %v394
      %v1790 = vunpack.c.l.b16 %v395
      %v1791 = vunpack.c.l.b16 %v396
      %v1792 = vunpack.c.l.b16 %v397
      %v1793 = vunpack.c.l.b16 %v398
      %v1794 = vunpack.c.l.b16 %v399
      %v1795 = vunpack.c.l.b16 %v400
      %v1796 = vunpack.c.l.b16 %v401
      %v1797 = vpack.c.b16 %v1670, %v1669
      %v1798 = vpack.c.b16 %v1672, %v1671
      %v1799 = vpack.c.b16 %v1674, %v1673
      %v1800 = vpack.c.b16 %v1676, %v1675
      %v1801 = vpack.c.b16 %v1678, %v1677
      %v1802 = vpack.c.b16 %v1680, %v1679
      %v1803 = vpack.c.b16 %v1682, %v1681
      %v1804 = vpack.c.b16 %v1684, %v1683
      %v1805 = vpack.c.b16 %v1686, %v1685
      %v1806 = vpack.c.b16 %v1688, %v1687
      %v1807 = vpack.c.b16 %v1690, %v1689
      %v1808 = vpack.c.b16 %v1692, %v1691
      %v1809 = vpack.c.b16 %v1694, %v1693
      %v1810 = vpack.c.b16 %v1696, %v1695
      %v1811 = vpack.c.b16 %v1698, %v1697
      %v1812 = vpack.c.b16 %v1700, %v1699
      %v1813 = vpack.c.b16 %v1702, %v1701
      %v1814 = vpack.c.b16 %v1704, %v1703
      %v1815 = vpack.c.b16 %v1706, %v1705
      %v1816 = vpack.c.b16 %v1708, %v1707
      %v1817 = vpack.c.b16 %v1710, %v1709
      %v1818 = vpack.c.b16 %v1712, %v1711
      %v1819 = vpack.c.b16 %v1714, %v1713
      %v1820 = vpack.c.b16 %v1716, %v1715
      %v1821 = vpack.c.b16 %v1718, %v1717
      %v1822 = vpack.c.b16 %v1720, %v1719
      %v1823 = vpack.c.b16 %v1722, %v1721
      %v1824 = vpack.c.b16 %v1724, %v1723
      %v1825 = vpack.c.b16 %v1726, %v1725
      %v1826 = vpack.c.b16 %v1728, %v1727
      %v1827 = vpack.c.b16 %v1730, %v1729
      %v1828 = vpack.c.b16 %v1732, %v1731
      %v1829 = vpack.c.b16 %v1734, %v1733
      %v1830 = vpack.c.b16 %v1736, %v1735
      %v1831 = vpack.c.b16 %v1738, %v1737
      %v1832 = vpack.c.b16 %v1740, %v1739
      %v1833 = vpack.c.b16 %v1742, %v1741
      %v1834 = vpack.c.b16 %v1744, %v1743
      %v1835 = vpack.c.b16 %v1746, %v1745
      %v1836 = vpack.c.b16 %v1748, %v1747
      %v1837 = vpack.c.b16 %v1750, %v1749
      %v1838 = vpack.c.b16 %v1752, %v1751
      %v1839 = vpack.c.b16 %v1754, %v1753
      %v1840 = vpack.c.b16 %v1756, %v1755
      %v1841 = vpack.c.b16 %v1758, %v1757
      %v1842 = vpack.c.b16 %v1760, %v1759
      %v1843 = vpack.c.b16 %v1762, %v1761
      %v1844 = vpack.c.b16 %v1764, %v1763
      %v1845 = vpack.c.b16 %v1766, %v1765
      %v1846 = vpack.c.b16 %v1768, %v1767
      %v1847 = vpack.c.b16 %v1770, %v1769
      %v1848 = vpack.c.b16 %v1772, %v1771
      %v1849 = vpack.c.b16 %v1774, %v1773
      %v1850 = vpack.c.b16 %v1776, %v1775
      %v1851 = vpack.c.b16 %v1778, %v1777
      %v1852 = vpack.c.b16 %v1780, %v1779
      %v1853 = vpack.c.b16 %v1782, %v1781
      %v1854 = vpack.c.b16 %v1784, %v1783
      %v1855 = vpack.c.b16 %v1786, %v1785
      %v1856 = vpack.c.b16 %v1788, %v1787
      %v1857 = vpack.c.b16 %v1790, %v1789
      %v1858 = vpack.c.b16 %v1792, %v1791
      %v1859 = vpack.c.b16 %v1794, %v1793
      %v1860 = vpack.c.b16 %v1796, %v1795
      %v1941 = vunpack.c.l.b16 %v402
      %v1942 = vunpack.c.l.b16 %v403
      %v1943 = vunpack.c.l.b16 %v404
      %v1944 = vunpack.c.l.b16 %v405
      %v1945 = vunpack.c.l.b16 %v406
      %v1946 = vunpack.c.l.b16 %v407
      %v1947 = vunpack.c.l.b16 %v408
      %v1948 = vunpack.c.l.b16 %v409
      %v1949 = vunpack.c.l.b16 %v410
      %v1950 = vunpack.c.l.b16 %v411
      %v1951 = vunpack.c.l.b16 %v412
      %v1952 = vunpack.c.l.b16 %v413
      %v1953 = vunpack.c.l.b16 %v414
      %v1954 = vunpack.c.l.b16 %v415
      %v1955 = vunpack.c.l.b16 %v416
      %v1956 = vunpack.c.l.b16 %v417
      %v1957 = vpack.c.b16 %v1942, %v1941
      %v1958 = vpack.c.b16 %v1944, %v1943
      %v1959 = vpack.c.b16 %v1946, %v1945
      %v1960 = vpack.c.b16 %v1948, %v1947
      %v1961 = vpack.c.b16 %v1950, %v1949
      %v1962 = vpack.c.b16 %v1952, %v1951
      %v1963 = vpack.c.b16 %v1954, %v1953
      %v1964 = vpack.c.b16 %v1956, %v1955
      %1973 = vmatprep.subr.bf16.mxu0 0
      %1974 = vmatpush1.bf16.msra.mxu0 %v1957
      %1975 = vmatprep.subr.bf16.mxu0 0
      %1976 = vmatpush1.bf16.msra.mxu0 %v1958
      %1977 = vmatprep.subr.bf16.mxu0 0
      %1978 = vmatpush1.bf16.msra.mxu0 %v1959
      %1979 = vmatprep.subr.bf16.mxu0 0
      %1980 = vmatpush1.bf16.msra.mxu0 %v1960
      %1981 = vmatprep.subr.bf16.mxu0 0
      %1982 = vmatpush1.bf16.msra.mxu0 %v1961
      %1983 = vmatprep.subr.bf16.mxu0 0
      %1984 = vmatpush1.bf16.msra.mxu0 %v1962
      %1985 = vmatprep.subr.bf16.mxu0 0
      %1986 = vmatpush1.bf16.msra.mxu0 %v1963
      %1987 = vmatprep.subr.bf16.mxu0 0
      %1988 = vmatpush1.bf16.msra.mxu0 %v1964
      %1989 = vmatprep.subr.bf16.mxu0 0
      %1990 = vmatpush1.bf16.msra.mxu0 0
      %1991 = vmatprep.subr.bf16.mxu0 0
      %1992 = vmatpush1.bf16.msra.mxu0 0
      %1993 = vmatprep.subr.bf16.mxu0 0
      %1994 = vmatpush1.bf16.msra.mxu0 0
      %1995 = vmatprep.subr.bf16.mxu0 0
      %1996 = vmatpush1.bf16.msra.mxu0 0
      %1997 = vmatprep.subr.bf16.mxu0 0
      %1998 = vmatpush1.bf16.msra.mxu0 0
      %1999 = vmatprep.subr.bf16.mxu0 0
      %2000 = vmatpush1.bf16.msra.mxu0 0
      %2001 = vmatprep.subr.bf16.mxu0 0
      %2002 = vmatpush1.bf16.msra.mxu0 0
      %2003 = vmatprep.subr.bf16.mxu0 0
      %2004 = vmatpush1.bf16.msra.mxu0 0
      %2005 = vmatprep.mubr.bf16.mxu0 0
      %2006 = vmatmul.mubr.bf16.gmra.mrb[0].mxu0 %v1797
      %v2007 = vpop.f32.mrb[0].mxu0
      %v2008 = vadd.f32 %v1031, %v2007
      %v2009 = vpop.f32.mrb[0].mxu0
      %v2010 = vpop.f32.mrb[0].mxu0
      %v2011 = vadd.f32 %v1034, %v2010
      %v2012 = vpop.f32.mrb[0].mxu0
      %2013 = vmatprep.mubr.bf16.mxu0 0
      %2014 = vmatmul.mubr.bf16.gmra.mrb[0].mxu0 %v1798
      %v2015 = vpop.f32.mrb[0].mxu0
      %v2016 = vadd.f32 %v1039, %v2015
      %v2017 = vpop.f32.mrb[0].mxu0
      %v2018 = vpop.f32.mrb[0].mxu0
      %v2019 = vadd.f32 %v1042, %v2018
      %v2020 = vpop.f32.mrb[0].mxu0
      %2021 = vmatprep.mubr.bf16.mxu0 0
      %2022 = vmatmul.mubr.bf16.gmra.mrb[0].mxu0 %v1799
      %v2023 = vpop.f32.mrb[0].mxu0
      %v2024 = vadd.f32 %v1047, %v2023
      %v2025 = vpop.f32.mrb[0].mxu0
      %v2026 = vpop.f32.mrb[0].mxu0
      %v2027 = vadd.f32 %v1050, %v2026
      %v2028 = vpop.f32.mrb[0].mxu0
      %2029 = vmatprep.mubr.bf16.mxu0 0
      %2030 = vmatmul.mubr.bf16.gmra.mrb[0].mxu0 %v1800
      %v2031 = vpop.f32.mrb[0].mxu0
      %v2032 = vadd.f32 %v1055, %v2031
      %v2033 = vpop.f32.mrb[0].mxu0
      %v2034 = vpop.f32.mrb[0].mxu0
      %v2035 = vadd.f32 %v1058, %v2034
      %v2036 = vpop.f32.mrb[0].mxu0
      %2037 = vmatprep.mubr.bf16.mxu0 0
      %2038 = vmatmul.mubr.bf16.gmra.mrb[0].mxu0 %v1801
      %v2039 = vpop.f32.mrb[0].mxu0
      %v2040 = vadd.f32 %v1063, %v2039
      %v2041 = vpop.f32.mrb[0].mxu0
      %v2042 = vpop.f32.mrb[0].mxu0
      %v2043 = vadd.f32 %v1066, %v2042
      %v2044 = vpop.f32.mrb[0].mxu0
      %2045 = vmatprep.mubr.bf16.mxu0 0
      %2046 = vmatmul.mubr.bf16.gmra.mrb[0].mxu0 %v1802
      %v2047 = vpop.f32.mrb[0].mxu0
      %v2048 = vadd.f32 %v1071, %v2047
      %v2049 = vpop.f32.mrb[0].mxu0
      %v2050 = vpop.f32.mrb[0].mxu0
      %v2051 = vadd.f32 %v1074, %v2050
      %v2052 = vpop.f32.mrb[0].mxu0
      %2053 = vmatprep.mubr.bf16.mxu0 0
      %2054 = vmatmul.mubr.bf16.gmra.mrb[0].mxu0 %v1803
      %v2055 = vpop.f32.mrb[0].mxu0
      %v2056 = vadd.f32 %v1079, %v2055
      %v2057 = vpop.f32.mrb[0].mxu0
      %v2058 = vpop.f32.mrb[0].mxu0
      %v2059 = vadd.f32 %v1082, %v2058
      %v2060 = vpop.f32.mrb[0].mxu0
      %2061 = vmatprep.mubr.bf16.mxu0 0
      %2062 = vmatmul.mubr.bf16.gmra.mrb[0].mxu0 %v1804
      %v2063 = vpop.f32.mrb[0].mxu0
      %v2064 = vadd.f32 %v1087, %v2063
      %v2065 = vpop.f32.mrb[0].mxu0
      %v2066 = vpop.f32.mrb[0].mxu0
      %v2067 = vadd.f32 %v1090, %v2066
      %v2068 = vpop.f32.mrb[0].mxu0
      %2069 = vmatprep.mubr.bf16.mxu0 0
      %2070 = vmatmul.mubr.bf16.gmra.mrb[0].mxu0 %v1805
      %v2071 = vpop.f32.mrb[0].mxu0
      %v2072 = vadd.f32 %v1095, %v2071
      %v2073 = vpop.f32.mrb[0].mxu0
      %v2074 = vpop.f32.mrb[0].mxu0
      %v2075 = vadd.f32 %v1098, %v2074
      %v2076 = vpop.f32.mrb[0].mxu0
      %2077 = vmatprep.mubr.bf16.mxu0 0
      %2078 = vmatmul.mubr.bf16.gmra.mrb[0].mxu0 %v1806
      %v2079 = vpop.f32.mrb[0].mxu0
      %v2080 = vadd.f32 %v1103, %v2079
      %v2081 = vpop.f32.mrb[0].mxu0
      %v2082 = vpop.f32.mrb[0].mxu0
      %v2083 = vadd.f32 %v1106, %v2082
      %v2084 = vpop.f32.mrb[0].mxu0
      %2085 = vmatprep.mubr.bf16.mxu0 0
      %2086 = vmatmul.mubr.bf16.gmra.mrb[0].mxu0 %v1807
      %v2087 = vpop.f32.mrb[0].mxu0
      %v2088 = vadd.f32 %v1111, %v2087
      %v2089 = vpop.f32.mrb[0].mxu0
      %v2090 = vpop.f32.mrb[0].mxu0
      %v2091 = vadd.f32 %v1114, %v2090
      %v2092 = vpop.f32.mrb[0].mxu0
      %2093 = vmatprep.mubr.bf16.mxu0 0
      %2094 = vmatmul.mubr.bf16.gmra.mrb[0].mxu0 %v1808
      %v2095 = vpop.f32.mrb[0].mxu0
      %v2096 = vadd.f32 %v1119, %v2095
      %v2097 = vpop.f32.mrb[0].mxu0
      %v2098 = vpop.f32.mrb[0].mxu0
      %v2099 = vadd.f32 %v1122, %v2098
      %v2100 = vpop.f32.mrb[0].mxu0
      %2101 = vmatprep.mubr.bf16.mxu0 0
      %2102 = vmatmul.mubr.bf16.gmra.mrb[0].mxu0 %v1809
      %v2103 = vpop.f32.mrb[0].mxu0
      %v2104 = vadd.f32 %v1127, %v2103
      %v2105 = vpop.f32.mrb[0].mxu0
      %v2106 = vpop.f32.mrb[0].mxu0
      %v2107 = vadd.f32 %v1130, %v2106
      %v2108 = vpop.f32.mrb[0].mxu0
      %2109 = vmatprep.mubr.bf16.mxu0 0
      %2110 = vmatmul.mubr.bf16.gmra.mrb[0].mxu0 %v1810
      %v2111 = vpop.f32.mrb[0].mxu0
      %v2112 = vadd.f32 %v1135, %v2111
      %v2113 = vpop.f32.mrb[0].mxu0
      %v2114 = vpop.f32.mrb[0].mxu0
      %v2115 = vadd.f32 %v1138, %v2114
      %v2116 = vpop.f32.mrb[0].mxu0
      %2117 = vmatprep.mubr.bf16.mxu0 0
      %2118 = vmatmul.mubr.bf16.gmra.mrb[0].mxu0 %v1811
      %v2119 = vpop.f32.mrb[0].mxu0
      %v2120 = vadd.f32 %v1143, %v2119
      %v2121 = vpop.f32.mrb[0].mxu0
      %v2122 = vpop.f32.mrb[0].mxu0
      %v2123 = vadd.f32 %v1146, %v2122
      %v2124 = vpop.f32.mrb[0].mxu0
      %2125 = vmatprep.mubr.bf16.mxu0 0
      %2126 = vmatmul.mubr.bf16.gmra.mrb[0].mxu0 %v1812
      %v2127 = vpop.f32.mrb[0].mxu0
      %v2128 = vadd.f32 %v1151, %v2127
      %v2129 = vpop.f32.mrb[0].mxu0
      %v2130 = vpop.f32.mrb[0].mxu0
      %v2131 = vadd.f32 %v1154, %v2130
      %v2132 = vpop.f32.mrb[0].mxu0
      %2133 = vmatprep.mubr.bf16.mxu0 0
      %2134 = vmatmul.mubr.bf16.gmra.mrb[0].mxu0 %v1813
      %v2135 = vpop.f32.mrb[0].mxu0
      %v2136 = vadd.f32 %v1159, %v2135
      %v2137 = vpop.f32.mrb[0].mxu0
      %v2138 = vpop.f32.mrb[0].mxu0
      %v2139 = vadd.f32 %v1162, %v2138
      %v2140 = vpop.f32.mrb[0].mxu0
      %2141 = vmatprep.mubr.bf16.mxu0 0
      %2142 = vmatmul.mubr.bf16.gmra.mrb[0].mxu0 %v1814
      %v2143 = vpop.f32.mrb[0].mxu0
      %v2144 = vadd.f32 %v1167, %v2143
      %v2145 = vpop.f32.mrb[0].mxu0
      %v2146 = vpop.f32.mrb[0].mxu0
      %v2147 = vadd.f32 %v1170, %v2146
      %v2148 = vpop.f32.mrb[0].mxu0
      %2149 = vmatprep.mubr.bf16.mxu0 0
      %2150 = vmatmul.mubr.bf16.gmra.mrb[0].mxu0 %v1815
      %v2151 = vpop.f32.mrb[0].mxu0
      %v2152 = vadd.f32 %v1175, %v2151
      %v2153 = vpop.f32.mrb[0].mxu0
      %v2154 = vpop.f32.mrb[0].mxu0
      %v2155 = vadd.f32 %v1178, %v2154
      %v2156 = vpop.f32.mrb[0].mxu0
      %2157 = vmatprep.mubr.bf16.mxu0 0
      %2158 = vmatmul.mubr.bf16.gmra.mrb[0].mxu0 %v1816
      %v2159 = vpop.f32.mrb[0].mxu0
      %v2160 = vadd.f32 %v1183, %v2159
      %v2161 = vpop.f32.mrb[0].mxu0
      %v2162 = vpop.f32.mrb[0].mxu0
      %v2163 = vadd.f32 %v1186, %v2162
      %v2164 = vpop.f32.mrb[0].mxu0
      %2165 = vmatprep.mubr.bf16.mxu0 0
      %2166 = vmatmul.mubr.bf16.gmra.mrb[0].mxu0 %v1817
      %v2167 = vpop.f32.mrb[0].mxu0
      %v2168 = vadd.f32 %v1191, %v2167
      %v2169 = vpop.f32.mrb[0].mxu0
      %v2170 = vpop.f32.mrb[0].mxu0
      %v2171 = vadd.f32 %v1194, %v2170
      %v2172 = vpop.f32.mrb[0].mxu0
      %2173 = vmatprep.mubr.bf16.mxu0 0
      %2174 = vmatmul.mubr.bf16.gmra.mrb[0].mxu0 %v1818
      %v2175 = vpop.f32.mrb[0].mxu0
      %v2176 = vadd.f32 %v1199, %v2175
      %v2177 = vpop.f32.mrb[0].mxu0
      %v2178 = vpop.f32.mrb[0].mxu0
      %v2179 = vadd.f32 %v1202, %v2178
      %v2180 = vpop.f32.mrb[0].mxu0
      %2181 = vmatprep.mubr.bf16.mxu0 0
      %2182 = vmatmul.mubr.bf16.gmra.mrb[0].mxu0 %v1819
      %v2183 = vpop.f32.mrb[0].mxu0
      %v2184 = vadd.f32 %v1207, %v2183
      %v2185 = vpop.f32.mrb[0].mxu0
      %v2186 = vpop.f32.mrb[0].mxu0
      %v2187 = vadd.f32 %v1210, %v2186
      %v2188 = vpop.f32.mrb[0].mxu0
      %2189 = vmatprep.mubr.bf16.mxu0 0
      %2190 = vmatmul.mubr.bf16.gmra.mrb[0].mxu0 %v1820
      %v2191 = vpop.f32.mrb[0].mxu0
      %v2192 = vadd.f32 %v1215, %v2191
      %v2193 = vpop.f32.mrb[0].mxu0
      %v2194 = vpop.f32.mrb[0].mxu0
      %v2195 = vadd.f32 %v1218, %v2194
      %v2196 = vpop.f32.mrb[0].mxu0
      %2197 = vmatprep.mubr.bf16.mxu0 0
      %2198 = vmatmul.mubr.bf16.gmra.mrb[0].mxu0 %v1821
      %v2199 = vpop.f32.mrb[0].mxu0
      %v2200 = vadd.f32 %v1223, %v2199
      %v2201 = vpop.f32.mrb[0].mxu0
      %v2202 = vpop.f32.mrb[0].mxu0
      %v2203 = vadd.f32 %v1226, %v2202
      %v2204 = vpop.f32.mrb[0].mxu0
      %2205 = vmatprep.mubr.bf16.mxu0 0
      %2206 = vmatmul.mubr.bf16.gmra.mrb[0].mxu0 %v1822
      %v2207 = vpop.f32.mrb[0].mxu0
      %v2208 = vadd.f32 %v1231, %v2207
      %v2209 = vpop.f32.mrb[0].mxu0
      %v2210 = vpop.f32.mrb[0].mxu0
      %v2211 = vadd.f32 %v1234, %v2210
      %v2212 = vpop.f32.mrb[0].mxu0
      %2213 = vmatprep.mubr.bf16.mxu0 0
      %2214 = vmatmul.mubr.bf16.gmra.mrb[0].mxu0 %v1823
      %v2215 = vpop.f32.mrb[0].mxu0
      %v2216 = vadd.f32 %v1239, %v2215
      %v2217 = vpop.f32.mrb[0].mxu0
      %v2218 = vpop.f32.mrb[0].mxu0
      %v2219 = vadd.f32 %v1242, %v2218
      %v2220 = vpop.f32.mrb[0].mxu0
      %2221 = vmatprep.mubr.bf16.mxu0 0
      %2222 = vmatmul.mubr.bf16.gmra.mrb[0].mxu0 %v1824
      %v2223 = vpop.f32.mrb[0].mxu0
      %v2224 = vadd.f32 %v1247, %v2223
      %v2225 = vpop.f32.mrb[0].mxu0
      %v2226 = vpop.f32.mrb[0].mxu0
      %v2227 = vadd.f32 %v1250, %v2226
      %v2228 = vpop.f32.mrb[0].mxu0
      %2229 = vmatprep.mubr.bf16.mxu0 0
      %2230 = vmatmul.mubr.bf16.gmra.mrb[0].mxu0 %v1825
      %v2231 = vpop.f32.mrb[0].mxu0
      %v2232 = vadd.f32 %v1255, %v2231
      %v2233 = vpop.f32.mrb[0].mxu0
      %v2234 = vpop.f32.mrb[0].mxu0
      %v2235 = vadd.f32 %v1258, %v2234
      %v2236 = vpop.f32.mrb[0].mxu0
      %2237 = vmatprep.mubr.bf16.mxu0 0
      %2238 = vmatmul.mubr.bf16.gmra.mrb[0].mxu0 %v1826
      %v2239 = vpop.f32.mrb[0].mxu0
      %v2240 = vadd.f32 %v1263, %v2239
      %v2241 = vpop.f32.mrb[0].mxu0
      %v2242 = vpop.f32.mrb[0].mxu0
      %v2243 = vadd.f32 %v1266, %v2242
      %v2244 = vpop.f32.mrb[0].mxu0
      %2245 = vmatprep.mubr.bf16.mxu0 0
      %2246 = vmatmul.mubr.bf16.gmra.mrb[0].mxu0 %v1827
      %v2247 = vpop.f32.mrb[0].mxu0
      %v2248 = vadd.f32 %v1271, %v2247
      %v2249 = vpop.f32.mrb[0].mxu0
      %v2250 = vpop.f32.mrb[0].mxu0
      %v2251 = vadd.f32 %v1274, %v2250
      %v2252 = vpop.f32.mrb[0].mxu0
      %2253 = vmatprep.mubr.bf16.mxu0 0
      %2254 = vmatmul.mubr.bf16.gmra.mrb[0].mxu0 %v1828
      %v2255 = vpop.f32.mrb[0].mxu0
      %v2256 = vadd.f32 %v1279, %v2255
      %v2257 = vpop.f32.mrb[0].mxu0
      %v2258 = vpop.f32.mrb[0].mxu0
      %v2259 = vadd.f32 %v1282, %v2258
      %v2260 = vpop.f32.mrb[0].mxu0
      %2261 = vmatprep.mubr.bf16.mxu0 0
      %2262 = vmatmul.mubr.bf16.gmra.mrb[0].mxu0 %v1829
      %v2263 = vpop.f32.mrb[0].mxu0
      %v2264 = vadd.f32 %v1287, %v2263
      %v2265 = vpop.f32.mrb[0].mxu0
      %v2266 = vpop.f32.mrb[0].mxu0
      %v2267 = vadd.f32 %v1290, %v2266
      %v2268 = vpop.f32.mrb[0].mxu0
      %2269 = vmatprep.mubr.bf16.mxu0 0
      %2270 = vmatmul.mubr.bf16.gmra.mrb[0].mxu0 %v1830
      %v2271 = vpop.f32.mrb[0].mxu0
      %v2272 = vadd.f32 %v1295, %v2271
      %v2273 = vpop.f32.mrb[0].mxu0
      %v2274 = vpop.f32.mrb[0].mxu0
      %v2275 = vadd.f32 %v1298, %v2274
      %v2276 = vpop.f32.mrb[0].mxu0
      %2277 = vmatprep.mubr.bf16.mxu0 0
      %2278 = vmatmul.mubr.bf16.gmra.mrb[0].mxu0 %v1831
      %v2279 = vpop.f32.mrb[0].mxu0
      %v2280 = vadd.f32 %v1303, %v2279
      %v2281 = vpop.f32.mrb[0].mxu0
      %v2282 = vpop.f32.mrb[0].mxu0
      %v2283 = vadd.f32 %v1306, %v2282
      %v2284 = vpop.f32.mrb[0].mxu0
      %2285 = vmatprep.mubr.bf16.mxu0 0
      %2286 = vmatmul.mubr.bf16.gmra.mrb[0].mxu0 %v1832
      %v2287 = vpop.f32.mrb[0].mxu0
      %v2288 = vadd.f32 %v1311, %v2287
      %v2289 = vpop.f32.mrb[0].mxu0
      %v2290 = vpop.f32.mrb[0].mxu0
      %v2291 = vadd.f32 %v1314, %v2290
      %v2292 = vpop.f32.mrb[0].mxu0
      %2293 = vmatprep.mubr.bf16.mxu0 0
      %2294 = vmatmul.mubr.bf16.gmra.mrb[0].mxu0 %v1833
      %v2295 = vpop.f32.mrb[0].mxu0
      %v2296 = vadd.f32 %v1319, %v2295
      %v2297 = vpop.f32.mrb[0].mxu0
      %v2298 = vpop.f32.mrb[0].mxu0
      %v2299 = vadd.f32 %v1322, %v2298
      %v2300 = vpop.f32.mrb[0].mxu0
      %2301 = vmatprep.mubr.bf16.mxu0 0
      %2302 = vmatmul.mubr.bf16.gmra.mrb[0].mxu0 %v1834
      %v2303 = vpop.f32.mrb[0].mxu0
      %v2304 = vadd.f32 %v1327, %v2303
      %v2305 = vpop.f32.mrb[0].mxu0
      %v2306 = vpop.f32.mrb[0].mxu0
      %v2307 = vadd.f32 %v1330, %v2306
      %v2308 = vpop.f32.mrb[0].mxu0
      %2309 = vmatprep.mubr.bf16.mxu0 0
      %2310 = vmatmul.mubr.bf16.gmra.mrb[0].mxu0 %v1835
      %v2311 = vpop.f32.mrb[0].mxu0
      %v2312 = vadd.f32 %v1335, %v2311
      %v2313 = vpop.f32.mrb[0].mxu0
      %v2314 = vpop.f32.mrb[0].mxu0
      %v2315 = vadd.f32 %v1338, %v2314
      %v2316 = vpop.f32.mrb[0].mxu0
      %2317 = vmatprep.mubr.bf16.mxu0 0
      %2318 = vmatmul.mubr.bf16.gmra.mrb[0].mxu0 %v1836
      %v2319 = vpop.f32.mrb[0].mxu0
      %v2320 = vadd.f32 %v1343, %v2319
      %v2321 = vpop.f32.mrb[0].mxu0
      %v2322 = vpop.f32.mrb[0].mxu0
      %v2323 = vadd.f32 %v1346, %v2322
      %v2324 = vpop.f32.mrb[0].mxu0
      %2325 = vmatprep.mubr.bf16.mxu0 0
      %2326 = vmatmul.mubr.bf16.gmra.mrb[0].mxu0 %v1837
      %v2327 = vpop.f32.mrb[0].mxu0
      %v2328 = vadd.f32 %v1351, %v2327
      %v2329 = vpop.f32.mrb[0].mxu0
      %v2330 = vpop.f32.mrb[0].mxu0
      %v2331 = vadd.f32 %v1354, %v2330
      %v2332 = vpop.f32.mrb[0].mxu0
      %2333 = vmatprep.mubr.bf16.mxu0 0
      %2334 = vmatmul.mubr.bf16.gmra.mrb[0].mxu0 %v1838
      %v2335 = vpop.f32.mrb[0].mxu0
      %v2336 = vadd.f32 %v1359, %v2335
      %v2337 = vpop.f32.mrb[0].mxu0
      %v2338 = vpop.f32.mrb[0].mxu0
      %v2339 = vadd.f32 %v1362, %v2338
      %v2340 = vpop.f32.mrb[0].mxu0
      %2341 = vmatprep.mubr.bf16.mxu0 0
      %2342 = vmatmul.mubr.bf16.gmra.mrb[0].mxu0 %v1839
      %v2343 = vpop.f32.mrb[0].mxu0
      %v2344 = vadd.f32 %v1367, %v2343
      %v2345 = vpop.f32.mrb[0].mxu0
      %v2346 = vpop.f32.mrb[0].mxu0
      %v2347 = vadd.f32 %v1370, %v2346
      %v2348 = vpop.f32.mrb[0].mxu0
      %2349 = vmatprep.mubr.bf16.mxu0 0
      %2350 = vmatmul.mubr.bf16.gmra.mrb[0].mxu0 %v1840
      %v2351 = vpop.f32.mrb[0].mxu0
      %v2352 = vadd.f32 %v1375, %v2351
      %v2353 = vpop.f32.mrb[0].mxu0
      %v2354 = vpop.f32.mrb[0].mxu0
      %v2355 = vadd.f32 %v1378, %v2354
      %v2356 = vpop.f32.mrb[0].mxu0
      %2357 = vmatprep.mubr.bf16.mxu0 0
      %2358 = vmatmul.mubr.bf16.gmra.mrb[0].mxu0 %v1841
      %v2359 = vpop.f32.mrb[0].mxu0
      %v2360 = vadd.f32 %v1383, %v2359
      %v2361 = vpop.f32.mrb[0].mxu0
      %v2362 = vpop.f32.mrb[0].mxu0
      %v2363 = vadd.f32 %v1386, %v2362
      %v2364 = vpop.f32.mrb[0].mxu0
      %2365 = vmatprep.mubr.bf16.mxu0 0
      %2366 = vmatmul.mubr.bf16.gmra.mrb[0].mxu0 %v1842
      %v2367 = vpop.f32.mrb[0].mxu0
      %v2368 = vadd.f32 %v1391, %v2367
      %v2369 = vpop.f32.mrb[0].mxu0
      %v2370 = vpop.f32.mrb[0].mxu0
      %v2371 = vadd.f32 %v1394, %v2370
      %v2372 = vpop.f32.mrb[0].mxu0
      %2373 = vmatprep.mubr.bf16.mxu0 0
      %2374 = vmatmul.mubr.bf16.gmra.mrb[0].mxu0 %v1843
      %v2375 = vpop.f32.mrb[0].mxu0
      %v2376 = vadd.f32 %v1399, %v2375
      %v2377 = vpop.f32.mrb[0].mxu0
      %v2378 = vpop.f32.mrb[0].mxu0
      %v2379 = vadd.f32 %v1402, %v2378
      %v2380 = vpop.f32.mrb[0].mxu0
      %2381 = vmatprep.mubr.bf16.mxu0 0
      %2382 = vmatmul.mubr.bf16.gmra.mrb[0].mxu0 %v1844
      %v2383 = vpop.f32.mrb[0].mxu0
      %v2384 = vadd.f32 %v1407, %v2383
      %v2385 = vpop.f32.mrb[0].mxu0
      %v2386 = vpop.f32.mrb[0].mxu0
      %v2387 = vadd.f32 %v1410, %v2386
      %v2388 = vpop.f32.mrb[0].mxu0
      %2389 = vmatprep.mubr.bf16.mxu0 0
      %2390 = vmatmul.mubr.bf16.gmra.mrb[0].mxu0 %v1845
      %v2391 = vpop.f32.mrb[0].mxu0
      %v2392 = vadd.f32 %v1415, %v2391
      %v2393 = vpop.f32.mrb[0].mxu0
      %v2394 = vpop.f32.mrb[0].mxu0
      %v2395 = vadd.f32 %v1418, %v2394
      %v2396 = vpop.f32.mrb[0].mxu0
      %2397 = vmatprep.mubr.bf16.mxu0 0
      %2398 = vmatmul.mubr.bf16.gmra.mrb[0].mxu0 %v1846
      %v2399 = vpop.f32.mrb[0].mxu0
      %v2400 = vadd.f32 %v1423, %v2399
      %v2401 = vpop.f32.mrb[0].mxu0
      %v2402 = vpop.f32.mrb[0].mxu0
      %v2403 = vadd.f32 %v1426, %v2402
      %v2404 = vpop.f32.mrb[0].mxu0
      %2405 = vmatprep.mubr.bf16.mxu0 0
      %2406 = vmatmul.mubr.bf16.gmra.mrb[0].mxu0 %v1847
      %v2407 = vpop.f32.mrb[0].mxu0
      %v2408 = vadd.f32 %v1431, %v2407
      %v2409 = vpop.f32.mrb[0].mxu0
      %v2410 = vpop.f32.mrb[0].mxu0
      %v2411 = vadd.f32 %v1434, %v2410
      %v2412 = vpop.f32.mrb[0].mxu0
      %2413 = vmatprep.mubr.bf16.mxu0 0
      %2414 = vmatmul.mubr.bf16.gmra.mrb[0].mxu0 %v1848
      %v2415 = vpop.f32.mrb[0].mxu0
      %v2416 = vadd.f32 %v1439, %v2415
      %v2417 = vpop.f32.mrb[0].mxu0
      %v2418 = vpop.f32.mrb[0].mxu0
      %v2419 = vadd.f32 %v1442, %v2418
      %v2420 = vpop.f32.mrb[0].mxu0
      %2421 = vmatprep.mubr.bf16.mxu0 0
      %2422 = vmatmul.mubr.bf16.gmra.mrb[0].mxu0 %v1849
      %v2423 = vpop.f32.mrb[0].mxu0
      %v2424 = vadd.f32 %v1447, %v2423
      %v2425 = vpop.f32.mrb[0].mxu0
      %v2426 = vpop.f32.mrb[0].mxu0
      %v2427 = vadd.f32 %v1450, %v2426
      %v2428 = vpop.f32.mrb[0].mxu0
      %2429 = vmatprep.mubr.bf16.mxu0 0
      %2430 = vmatmul.mubr.bf16.gmra.mrb[0].mxu0 %v1850
      %v2431 = vpop.f32.mrb[0].mxu0
      %v2432 = vadd.f32 %v1455, %v2431
      %v2433 = vpop.f32.mrb[0].mxu0
      %v2434 = vpop.f32.mrb[0].mxu0
      %v2435 = vadd.f32 %v1458, %v2434
      %v2436 = vpop.f32.mrb[0].mxu0
      %2437 = vmatprep.mubr.bf16.mxu0 0
      %2438 = vmatmul.mubr.bf16.gmra.mrb[0].mxu0 %v1851
      %v2439 = vpop.f32.mrb[0].mxu0
      %v2440 = vadd.f32 %v1463, %v2439
      %v2441 = vpop.f32.mrb[0].mxu0
      %v2442 = vpop.f32.mrb[0].mxu0
      %v2443 = vadd.f32 %v1466, %v2442
      %v2444 = vpop.f32.mrb[0].mxu0
      %2445 = vmatprep.mubr.bf16.mxu0 0
      %2446 = vmatmul.mubr.bf16.gmra.mrb[0].mxu0 %v1852
      %v2447 = vpop.f32.mrb[0].mxu0
      %v2448 = vadd.f32 %v1471, %v2447
      %v2449 = vpop.f32.mrb[0].mxu0
      %v2450 = vpop.f32.mrb[0].mxu0
      %v2451 = vadd.f32 %v1474, %v2450
      %v2452 = vpop.f32.mrb[0].mxu0
      %2453 = vmatprep.mubr.bf16.mxu0 0
      %2454 = vmatmul.mubr.bf16.gmra.mrb[0].mxu0 %v1853
      %v2455 = vpop.f32.mrb[0].mxu0
      %v2456 = vadd.f32 %v1479, %v2455
      %v2457 = vpop.f32.mrb[0].mxu0
      %v2458 = vpop.f32.mrb[0].mxu0
      %v2459 = vadd.f32 %v1482, %v2458
      %v2460 = vpop.f32.mrb[0].mxu0
      %2461 = vmatprep.mubr.bf16.mxu0 0
      %2462 = vmatmul.mubr.bf16.gmra.mrb[0].mxu0 %v1854
      %v2463 = vpop.f32.mrb[0].mxu0
      %v2464 = vadd.f32 %v1487, %v2463
      %v2465 = vpop.f32.mrb[0].mxu0
      %v2466 = vpop.f32.mrb[0].mxu0
      %v2467 = vadd.f32 %v1490, %v2466
      %v2468 = vpop.f32.mrb[0].mxu0
      %2469 = vmatprep.mubr.bf16.mxu0 0
      %2470 = vmatmul.mubr.bf16.gmra.mrb[0].mxu0 %v1855
      %v2471 = vpop.f32.mrb[0].mxu0
      %v2472 = vadd.f32 %v1495, %v2471
      %v2473 = vpop.f32.mrb[0].mxu0
      %v2474 = vpop.f32.mrb[0].mxu0
      %v2475 = vadd.f32 %v1498, %v2474
      %v2476 = vpop.f32.mrb[0].mxu0
      %2477 = vmatprep.mubr.bf16.mxu0 0
      %2478 = vmatmul.mubr.bf16.gmra.mrb[0].mxu0 %v1856
      %v2479 = vpop.f32.mrb[0].mxu0
      %v2480 = vadd.f32 %v1503, %v2479
      %v2481 = vpop.f32.mrb[0].mxu0
      %v2482 = vpop.f32.mrb[0].mxu0
      %v2483 = vadd.f32 %v1506, %v2482
      %v2484 = vpop.f32.mrb[0].mxu0
      %2485 = vmatprep.mubr.bf16.mxu0 0
      %2486 = vmatmul.mubr.bf16.gmra.mrb[0].mxu0 %v1857
      %v2487 = vpop.f32.mrb[0].mxu0
      %v2488 = vadd.f32 %v1511, %v2487
      %v2489 = vpop.f32.mrb[0].mxu0
      %v2490 = vpop.f32.mrb[0].mxu0
      %v2491 = vadd.f32 %v1514, %v2490
      %v2492 = vpop.f32.mrb[0].mxu0
      %2493 = vmatprep.mubr.bf16.mxu0 0
      %2494 = vmatmul.mubr.bf16.gmra.mrb[0].mxu0 %v1858
      %v2495 = vpop.f32.mrb[0].mxu0
      %v2496 = vadd.f32 %v1519, %v2495
      %v2497 = vpop.f32.mrb[0].mxu0
      %v2498 = vpop.f32.mrb[0].mxu0
      %v2499 = vadd.f32 %v1522, %v2498
      %v2500 = vpop.f32.mrb[0].mxu0
      %2501 = vmatprep.mubr.bf16.mxu0 0
      %2502 = vmatmul.mubr.bf16.gmra.mrb[0].mxu0 %v1859
      %v2503 = vpop.f32.mrb[0].mxu0
      %v2504 = vadd.f32 %v1527, %v2503
      %v2505 = vpop.f32.mrb[0].mxu0
      %v2506 = vpop.f32.mrb[0].mxu0
      %v2507 = vadd.f32 %v1530, %v2506
      %v2508 = vpop.f32.mrb[0].mxu0
      %2509 = vmatprep.mubr.bf16.mxu0 0
      %2510 = vmatmul.mubr.bf16.gmra.mrb[0].mxu0 %v1860
      %v2511 = vpop.f32.mrb[0].mxu0
      %v2512 = vadd.f32 %v1535, %v2511
      %v2513 = vpop.f32.mrb[0].mxu0
      %v2514 = vpop.f32.mrb[0].mxu0
      %v2515 = vadd.f32 %v1538, %v2514
      %v2516 = vpop.f32.mrb[0].mxu0
      %2517 = vdwg.mxu0
      %s2518 = scalar_lea.vmem %s256, 32
      %v2519 = vld [vmem:[%s2518] sm:$0xf]
      %v2520 = vld [vmem:[%s2518 + $0x4] sm:$0xf]
      %v2521 = vld [vmem:[%s2518 + $0x8] sm:$0xf]
      %v2522 = vld [vmem:[%s2518 + $0xc] sm:$0xf]
      %v2523 = vld [vmem:[%s2518 + $0x10] sm:$0xf]
      %v2524 = vld [vmem:[%s2518 + $0x14] sm:$0xf]
      %v2525 = vld [vmem:[%s2518 + $0x18] sm:$0xf]
      %v2526 = vld [vmem:[%s2518 + $0x1c] sm:$0xf]
      %v2527 = vld [vmem:[%s2518 + $0x20] sm:$0xf]
      %v2528 = vld [vmem:[%s2518 + $0x24] sm:$0xf]
      %v2529 = vld [vmem:[%s2518 + $0x28] sm:$0xf]
      %v2530 = vld [vmem:[%s2518 + $0x2c] sm:$0xf]
      %v2531 = vld [vmem:[%s2518 + $0x30] sm:$0xf]
      %v2532 = vld [vmem:[%s2518 + $0x34] sm:$0xf]
      %v2533 = vld [vmem:[%s2518 + $0x38] sm:$0xf]
      %v2534 = vld [vmem:[%s2518 + $0x3c] sm:$0xf]
      %v2535 = vld [vmem:[%s2518 + $0x40] sm:$0xf]
      %v2536 = vld [vmem:[%s2518 + $0x44] sm:$0xf]
      %v2537 = vld [vmem:[%s2518 + $0x48] sm:$0xf]
      %v2538 = vld [vmem:[%s2518 + $0x4c] sm:$0xf]
      %v2539 = vld [vmem:[%s2518 + $0x50] sm:$0xf]
      %v2540 = vld [vmem:[%s2518 + $0x54] sm:$0xf]
      %v2541 = vld [vmem:[%s2518 + $0x58] sm:$0xf]
      %v2542 = vld [vmem:[%s2518 + $0x5c] sm:$0xf]
      %v2543 = vld [vmem:[%s2518 + $0x60] sm:$0xf]
      %v2544 = vld [vmem:[%s2518 + $0x64] sm:$0xf]
      %v2545 = vld [vmem:[%s2518 + $0x68] sm:$0xf]
      %v2546 = vld [vmem:[%s2518 + $0x6c] sm:$0xf]
      %v2547 = vld [vmem:[%s2518 + $0x70] sm:$0xf]
      %v2548 = vld [vmem:[%s2518 + $0x74] sm:$0xf]
      %v2549 = vld [vmem:[%s2518 + $0x78] sm:$0xf]
      %v2550 = vld [vmem:[%s2518 + $0x7c] sm:$0xf]
      %v2551 = vld [vmem:[%s2518 + $0x80] sm:$0xf]
      %v2552 = vld [vmem:[%s2518 + $0x84] sm:$0xf]
      %v2553 = vld [vmem:[%s2518 + $0x88] sm:$0xf]
      %v2554 = vld [vmem:[%s2518 + $0x8c] sm:$0xf]
      %v2555 = vld [vmem:[%s2518 + $0x90] sm:$0xf]
      %v2556 = vld [vmem:[%s2518 + $0x94] sm:$0xf]
      %v2557 = vld [vmem:[%s2518 + $0x98] sm:$0xf]
      %v2558 = vld [vmem:[%s2518 + $0x9c] sm:$0xf]
      %v2559 = vld [vmem:[%s2518 + $0xa0] sm:$0xf]
      %v2560 = vld [vmem:[%s2518 + $0xa4] sm:$0xf]
      %v2561 = vld [vmem:[%s2518 + $0xa8] sm:$0xf]
      %v2562 = vld [vmem:[%s2518 + $0xac] sm:$0xf]
      %v2563 = vld [vmem:[%s2518 + $0xb0] sm:$0xf]
      %v2564 = vld [vmem:[%s2518 + $0xb4] sm:$0xf]
      %v2565 = vld [vmem:[%s2518 + $0xb8] sm:$0xf]
      %v2566 = vld [vmem:[%s2518 + $0xbc] sm:$0xf]
      %v2567 = vld [vmem:[%s2518 + $0xc0] sm:$0xf]
      %v2568 = vld [vmem:[%s2518 + $0xc4] sm:$0xf]
      %v2569 = vld [vmem:[%s2518 + $0xc8] sm:$0xf]
      %v2570 = vld [vmem:[%s2518 + $0xcc] sm:$0xf]
      %v2571 = vld [vmem:[%s2518 + $0xd0] sm:$0xf]
      %v2572 = vld [vmem:[%s2518 + $0xd4] sm:$0xf]
      %v2573 = vld [vmem:[%s2518 + $0xd8] sm:$0xf]
      %v2574 = vld [vmem:[%s2518 + $0xdc] sm:$0xf]
      %v2575 = vld [vmem:[%s2518 + $0xe0] sm:$0xf]
      %v2576 = vld [vmem:[%s2518 + $0xe4] sm:$0xf]
      %v2577 = vld [vmem:[%s2518 + $0xe8] sm:$0xf]
      %v2578 = vld [vmem:[%s2518 + $0xec] sm:$0xf]
      %v2579 = vld [vmem:[%s2518 + $0xf0] sm:$0xf]
      %v2580 = vld [vmem:[%s2518 + $0xf4] sm:$0xf]
      %v2581 = vld [vmem:[%s2518 + $0xf8] sm:$0xf]
      %v2582 = vld [vmem:[%s2518 + $0xfc] sm:$0xf]
      %v2583 = vld [vmem:[%s2518 + $0x100] sm:$0xf]
      %v2584 = vld [vmem:[%s2518 + $0x104] sm:$0xf]
      %v2585 = vld [vmem:[%s2518 + $0x108] sm:$0xf]
      %v2586 = vld [vmem:[%s2518 + $0x10c] sm:$0xf]
      %v2587 = vld [vmem:[%s2518 + $0x110] sm:$0xf]
      %v2588 = vld [vmem:[%s2518 + $0x114] sm:$0xf]
      %v2589 = vld [vmem:[%s2518 + $0x118] sm:$0xf]
      %v2590 = vld [vmem:[%s2518 + $0x11c] sm:$0xf]
      %v2591 = vld [vmem:[%s2518 + $0x120] sm:$0xf]
      %v2592 = vld [vmem:[%s2518 + $0x124] sm:$0xf]
      %v2593 = vld [vmem:[%s2518 + $0x128] sm:$0xf]
      %v2594 = vld [vmem:[%s2518 + $0x12c] sm:$0xf]
      %v2595 = vld [vmem:[%s2518 + $0x130] sm:$0xf]
      %v2596 = vld [vmem:[%s2518 + $0x134] sm:$0xf]
      %v2597 = vld [vmem:[%s2518 + $0x138] sm:$0xf]
      %v2598 = vld [vmem:[%s2518 + $0x13c] sm:$0xf]
      %v2599 = vld [vmem:[%s2518 + $0x140] sm:$0xf]
      %v2600 = vld [vmem:[%s2518 + $0x144] sm:$0xf]
      %v2601 = vld [vmem:[%s2518 + $0x148] sm:$0xf]
      %v2602 = vld [vmem:[%s2518 + $0x14c] sm:$0xf]
      %v2603 = vld [vmem:[%s2518 + $0x150] sm:$0xf]
      %v2604 = vld [vmem:[%s2518 + $0x154] sm:$0xf]
      %v2605 = vld [vmem:[%s2518 + $0x158] sm:$0xf]
      %v2606 = vld [vmem:[%s2518 + $0x15c] sm:$0xf]
      %v2607 = vld [vmem:[%s2518 + $0x160] sm:$0xf]
      %v2608 = vld [vmem:[%s2518 + $0x164] sm:$0xf]
      %v2609 = vld [vmem:[%s2518 + $0x168] sm:$0xf]
      %v2610 = vld [vmem:[%s2518 + $0x16c] sm:$0xf]
      %v2611 = vld [vmem:[%s2518 + $0x170] sm:$0xf]
      %v2612 = vld [vmem:[%s2518 + $0x174] sm:$0xf]
      %v2613 = vld [vmem:[%s2518 + $0x178] sm:$0xf]
      %v2614 = vld [vmem:[%s2518 + $0x17c] sm:$0xf]
      %v2615 = vld [vmem:[%s2518 + $0x180] sm:$0xf]
      %v2616 = vld [vmem:[%s2518 + $0x184] sm:$0xf]
      %v2617 = vld [vmem:[%s2518 + $0x188] sm:$0xf]
      %v2618 = vld [vmem:[%s2518 + $0x18c] sm:$0xf]
      %v2619 = vld [vmem:[%s2518 + $0x190] sm:$0xf]
      %v2620 = vld [vmem:[%s2518 + $0x194] sm:$0xf]
      %v2621 = vld [vmem:[%s2518 + $0x198] sm:$0xf]
      %v2622 = vld [vmem:[%s2518 + $0x19c] sm:$0xf]
      %v2623 = vld [vmem:[%s2518 + $0x1a0] sm:$0xf]
      %v2624 = vld [vmem:[%s2518 + $0x1a4] sm:$0xf]
      %v2625 = vld [vmem:[%s2518 + $0x1a8] sm:$0xf]
      %v2626 = vld [vmem:[%s2518 + $0x1ac] sm:$0xf]
      %v2627 = vld [vmem:[%s2518 + $0x1b0] sm:$0xf]
      %v2628 = vld [vmem:[%s2518 + $0x1b4] sm:$0xf]
      %v2629 = vld [vmem:[%s2518 + $0x1b8] sm:$0xf]
      %v2630 = vld [vmem:[%s2518 + $0x1bc] sm:$0xf]
      %v2631 = vld [vmem:[%s2518 + $0x1c0] sm:$0xf]
      %v2632 = vld [vmem:[%s2518 + $0x1c4] sm:$0xf]
      %v2633 = vld [vmem:[%s2518 + $0x1c8] sm:$0xf]
      %v2634 = vld [vmem:[%s2518 + $0x1cc] sm:$0xf]
      %v2635 = vld [vmem:[%s2518 + $0x1d0] sm:$0xf]
      %v2636 = vld [vmem:[%s2518 + $0x1d4] sm:$0xf]
      %v2637 = vld [vmem:[%s2518 + $0x1d8] sm:$0xf]
      %v2638 = vld [vmem:[%s2518 + $0x1dc] sm:$0xf]
      %v2639 = vld [vmem:[%s2518 + $0x1e0] sm:$0xf]
      %v2640 = vld [vmem:[%s2518 + $0x1e4] sm:$0xf]
      %v2641 = vld [vmem:[%s2518 + $0x1e8] sm:$0xf]
      %v2642 = vld [vmem:[%s2518 + $0x1ec] sm:$0xf]
      %v2643 = vld [vmem:[%s2518 + $0x1f0] sm:$0xf]
      %v2644 = vld [vmem:[%s2518 + $0x1f4] sm:$0xf]
      %v2645 = vld [vmem:[%s2518 + $0x1f8] sm:$0xf]
      %v2646 = vld [vmem:[%s2518 + $0x1fc] sm:$0xf]
      %s2647 = scalar_lea.vmem %s1, 128
      %v2648 = vld [vmem:[%s2647] sm:$0xf]
      %v2649 = vld [vmem:[%s2647 + $0x4] sm:$0xf]
      %v2650 = vld [vmem:[%s2647 + $0x8] sm:$0xf]
      %v2651 = vld [vmem:[%s2647 + $0xc] sm:$0xf]
      %v2652 = vld [vmem:[%s2647 + $0x10] sm:$0xf]
      %v2653 = vld [vmem:[%s2647 + $0x14] sm:$0xf]
      %v2654 = vld [vmem:[%s2647 + $0x18] sm:$0xf]
      %v2655 = vld [vmem:[%s2647 + $0x1c] sm:$0xf]
      %v2656 = vld [vmem:[%s2647 + $0x20] sm:$0xf]
      %v2657 = vld [vmem:[%s2647 + $0x24] sm:$0xf]
      %v2658 = vld [vmem:[%s2647 + $0x28] sm:$0xf]
      %v2659 = vld [vmem:[%s2647 + $0x2c] sm:$0xf]
      %v2660 = vld [vmem:[%s2647 + $0x30] sm:$0xf]
      %v2661 = vld [vmem:[%s2647 + $0x34] sm:$0xf]
      %v2662 = vld [vmem:[%s2647 + $0x38] sm:$0xf]
      %v2663 = vld [vmem:[%s2647 + $0x3c] sm:$0xf]
      %v2792 = vunpack.c.l.b16 %v2519
      %v2793 = vunpack.c.l.b16 %v2520
      %v2794 = vunpack.c.l.b16 %v2521
      %v2795 = vunpack.c.l.b16 %v2522
      %v2796 = vunpack.c.l.b16 %v2523
      %v2797 = vunpack.c.l.b16 %v2524
      %v2798 = vunpack.c.l.b16 %v2525
      %v2799 = vunpack.c.l.b16 %v2526
      %v2800 = vunpack.c.l.b16 %v2527
      %v2801 = vunpack.c.l.b16 %v2528
      %v2802 = vunpack.c.l.b16 %v2529
      %v2803 = vunpack.c.l.b16 %v2530
      %v2804 = vunpack.c.l.b16 %v2531
      %v2805 = vunpack.c.l.b16 %v2532
      %v2806 = vunpack.c.l.b16 %v2533
      %v2807 = vunpack.c.l.b16 %v2534
      %v2808 = vunpack.c.l.b16 %v2535
      %v2809 = vunpack.c.l.b16 %v2536
      %v2810 = vunpack.c.l.b16 %v2537
      %v2811 = vunpack.c.l.b16 %v2538
      %v2812 = vunpack.c.l.b16 %v2539
      %v2813 = vunpack.c.l.b16 %v2540
      %v2814 = vunpack.c.l.b16 %v2541
      %v2815 = vunpack.c.l.b16 %v2542
      %v2816 = vunpack.c.l.b16 %v2543
      %v2817 = vunpack.c.l.b16 %v2544
      %v2818 = vunpack.c.l.b16 %v2545
      %v2819 = vunpack.c.l.b16 %v2546
      %v2820 = vunpack.c.l.b16 %v2547
      %v2821 = vunpack.c.l.b16 %v2548
      %v2822 = vunpack.c.l.b16 %v2549
      %v2823 = vunpack.c.l.b16 %v2550
      %v2824 = vunpack.c.l.b16 %v2551
      %v2825 = vunpack.c.l.b16 %v2552
      %v2826 = vunpack.c.l.b16 %v2553
      %v2827 = vunpack.c.l.b16 %v2554
      %v2828 = vunpack.c.l.b16 %v2555
      %v2829 = vunpack.c.l.b16 %v2556
      %v2830 = vunpack.c.l.b16 %v2557
      %v2831 = vunpack.c.l.b16 %v2558
      %v2832 = vunpack.c.l.b16 %v2559
      %v2833 = vunpack.c.l.b16 %v2560
      %v2834 = vunpack.c.l.b16 %v2561
      %v2835 = vunpack.c.l.b16 %v2562
      %v2836 = vunpack.c.l.b16 %v2563
      %v2837 = vunpack.c.l.b16 %v2564
      %v2838 = vunpack.c.l.b16 %v2565
      %v2839 = vunpack.c.l.b16 %v2566
      %v2840 = vunpack.c.l.b16 %v2567
      %v2841 = vunpack.c.l.b16 %v2568
      %v2842 = vunpack.c.l.b16 %v2569
      %v2843 = vunpack.c.l.b16 %v2570
      %v2844 = vunpack.c.l.b16 %v2571
      %v2845 = vunpack.c.l.b16 %v2572
      %v2846 = vunpack.c.l.b16 %v2573
      %v2847 = vunpack.c.l.b16 %v2574
      %v2848 = vunpack.c.l.b16 %v2575
      %v2849 = vunpack.c.l.b16 %v2576
      %v2850 = vunpack.c.l.b16 %v2577
      %v2851 = vunpack.c.l.b16 %v2578
      %v2852 = vunpack.c.l.b16 %v2579
      %v2853 = vunpack.c.l.b16 %v2580
      %v2854 = vunpack.c.l.b16 %v2581
      %v2855 = vunpack.c.l.b16 %v2582
      %v2856 = vunpack.c.l.b16 %v2583
      %v2857 = vunpack.c.l.b16 %v2584
      %v2858 = vunpack.c.l.b16 %v2585
      %v2859 = vunpack.c.l.b16 %v2586
      %v2860 = vunpack.c.l.b16 %v2587
      %v2861 = vunpack.c.l.b16 %v2588
      %v2862 = vunpack.c.l.b16 %v2589
      %v2863 = vunpack.c.l.b16 %v2590
      %v2864 = vunpack.c.l.b16 %v2591
      %v2865 = vunpack.c.l.b16 %v2592
      %v2866 = vunpack.c.l.b16 %v2593
      %v2867 = vunpack.c.l.b16 %v2594
      %v2868 = vunpack.c.l.b16 %v2595
      %v2869 = vunpack.c.l.b16 %v2596
      %v2870 = vunpack.c.l.b16 %v2597
      %v2871 = vunpack.c.l.b16 %v2598
      %v2872 = vunpack.c.l.b16 %v2599
      %v2873 = vunpack.c.l.b16 %v2600
      %v2874 = vunpack.c.l.b16 %v2601
      %v2875 = vunpack.c.l.b16 %v2602
      %v2876 = vunpack.c.l.b16 %v2603
      %v2877 = vunpack.c.l.b16 %v2604
      %v2878 = vunpack.c.l.b16 %v2605
      %v2879 = vunpack.c.l.b16 %v2606
      %v2880 = vunpack.c.l.b16 %v2607
      %v2881 = vunpack.c.l.b16 %v2608
      %v2882 = vunpack.c.l.b16 %v2609
      %v2883 = vunpack.c.l.b16 %v2610
      %v2884 = vunpack.c.l.b16 %v2611
      %v2885 = vunpack.c.l.b16 %v2612
      %v2886 = vunpack.c.l.b16 %v2613
      %v2887 = vunpack.c.l.b16 %v2614
      %v2888 = vunpack.c.l.b16 %v2615
      %v2889 = vunpack.c.l.b16 %v2616
      %v2890 = vunpack.c.l.b16 %v2617
      %v2891 = vunpack.c.l.b16 %v2618
      %v2892 = vunpack.c.l.b16 %v2619
      %v2893 = vunpack.c.l.b16 %v2620
      %v2894 = vunpack.c.l.b16 %v2621
      %v2895 = vunpack.c.l.b16 %v2622
      %v2896 = vunpack.c.l.b16 %v2623
      %v2897 = vunpack.c.l.b16 %v2624
      %v2898 = vunpack.c.l.b16 %v2625
      %v2899 = vunpack.c.l.b16 %v2626
      %v2900 = vunpack.c.l.b16 %v2627
      %v2901 = vunpack.c.l.b16 %v2628
      %v2902 = vunpack.c.l.b16 %v2629
      %v2903 = vunpack.c.l.b16 %v2630
      %v2904 = vunpack.c.l.b16 %v2631
      %v2905 = vunpack.c.l.b16 %v2632
      %v2906 = vunpack.c.l.b16 %v2633
      %v2907 = vunpack.c.l.b16 %v2634
      %v2908 = vunpack.c.l.b16 %v2635
      %v2909 = vunpack.c.l.b16 %v2636
      %v2910 = vunpack.c.l.b16 %v2637
      %v2911 = vunpack.c.l.b16 %v2638
      %v2912 = vunpack.c.l.b16 %v2639
      %v2913 = vunpack.c.l.b16 %v2640
      %v2914 = vunpack.c.l.b16 %v2641
      %v2915 = vunpack.c.l.b16 %v2642
      %v2916 = vunpack.c.l.b16 %v2643
      %v2917 = vunpack.c.l.b16 %v2644
      %v2918 = vunpack.c.l.b16 %v2645
      %v2919 = vunpack.c.l.b16 %v2646
      %v2920 = vpack.c.b16 %v2793, %v2792
      %v2921 = vpack.c.b16 %v2795, %v2794
      %v2922 = vpack.c.b16 %v2797, %v2796
      %v2923 = vpack.c.b16 %v2799, %v2798
      %v2924 = vpack.c.b16 %v2801, %v2800
      %v2925 = vpack.c.b16 %v2803, %v2802
      %v2926 = vpack.c.b16 %v2805, %v2804
      %v2927 = vpack.c.b16 %v2807, %v2806
      %v2928 = vpack.c.b16 %v2809, %v2808
      %v2929 = vpack.c.b16 %v2811, %v2810
      %v2930 = vpack.c.b16 %v2813, %v2812
      %v2931 = vpack.c.b16 %v2815, %v2814
      %v2932 = vpack.c.b16 %v2817, %v2816
      %v2933 = vpack.c.b16 %v2819, %v2818
      %v2934 = vpack.c.b16 %v2821, %v2820
      %v2935 = vpack.c.b16 %v2823, %v2822
      %v2936 = vpack.c.b16 %v2825, %v2824
      %v2937 = vpack.c.b16 %v2827, %v2826
      %v2938 = vpack.c.b16 %v2829, %v2828
      %v2939 = vpack.c.b16 %v2831, %v2830
      %v2940 = vpack.c.b16 %v2833, %v2832
      %v2941 = vpack.c.b16 %v2835, %v2834
      %v2942 = vpack.c.b16 %v2837, %v2836
      %v2943 = vpack.c.b16 %v2839, %v2838
      %v2944 = vpack.c.b16 %v2841, %v2840
      %v2945 = vpack.c.b16 %v2843, %v2842
      %v2946 = vpack.c.b16 %v2845, %v2844
      %v2947 = vpack.c.b16 %v2847, %v2846
      %v2948 = vpack.c.b16 %v2849, %v2848
      %v2949 = vpack.c.b16 %v2851, %v2850
      %v2950 = vpack.c.b16 %v2853, %v2852
      %v2951 = vpack.c.b16 %v2855, %v2854
      %v2952 = vpack.c.b16 %v2857, %v2856
      %v2953 = vpack.c.b16 %v2859, %v2858
      %v2954 = vpack.c.b16 %v2861, %v2860
      %v2955 = vpack.c.b16 %v2863, %v2862
      %v2956 = vpack.c.b16 %v2865, %v2864
      %v2957 = vpack.c.b16 %v2867, %v2866
      %v2958 = vpack.c.b16 %v2869, %v2868
      %v2959 = vpack.c.b16 %v2871, %v2870
      %v2960 = vpack.c.b16 %v2873, %v2872
      %v2961 = vpack.c.b16 %v2875, %v2874
      %v2962 = vpack.c.b16 %v2877, %v2876
      %v2963 = vpack.c.b16 %v2879, %v2878
      %v2964 = vpack.c.b16 %v2881, %v2880
      %v2965 = vpack.c.b16 %v2883, %v2882
      %v2966 = vpack.c.b16 %v2885, %v2884
      %v2967 = vpack.c.b16 %v2887, %v2886
      %v2968 = vpack.c.b16 %v2889, %v2888
      %v2969 = vpack.c.b16 %v2891, %v2890
      %v2970 = vpack.c.b16 %v2893, %v2892
      %v2971 = vpack.c.b16 %v2895, %v2894
      %v2972 = vpack.c.b16 %v2897, %v2896
      %v2973 = vpack.c.b16 %v2899, %v2898
      %v2974 = vpack.c.b16 %v2901, %v2900
      %v2975 = vpack.c.b16 %v2903, %v2902
      %v2976 = vpack.c.b16 %v2905, %v2904
      %v2977 = vpack.c.b16 %v2907, %v2906
      %v2978 = vpack.c.b16 %v2909, %v2908
      %v2979 = vpack.c.b16 %v2911, %v2910
      %v2980 = vpack.c.b16 %v2913, %v2912
      %v2981 = vpack.c.b16 %v2915, %v2914
      %v2982 = vpack.c.b16 %v2917, %v2916
      %v2983 = vpack.c.b16 %v2919, %v2918
      %v3064 = vunpack.c.l.b16 %v2648
      %v3065 = vunpack.c.l.b16 %v2649
      %v3066 = vunpack.c.l.b16 %v2650
      %v3067 = vunpack.c.l.b16 %v2651
      %v3068 = vunpack.c.l.b16 %v2652
      %v3069 = vunpack.c.l.b16 %v2653
      %v3070 = vunpack.c.l.b16 %v2654
      %v3071 = vunpack.c.l.b16 %v2655
      %v3072 = vunpack.c.l.b16 %v2656
      %v3073 = vunpack.c.l.b16 %v2657
      %v3074 = vunpack.c.l.b16 %v2658
      %v3075 = vunpack.c.l.b16 %v2659
      %v3076 = vunpack.c.l.b16 %v2660
      %v3077 = vunpack.c.l.b16 %v2661
      %v3078 = vunpack.c.l.b16 %v2662
      %v3079 = vunpack.c.l.b16 %v2663
      %v3080 = vpack.c.b16 %v3065, %v3064
      %v3081 = vpack.c.b16 %v3067, %v3066
      %v3082 = vpack.c.b16 %v3069, %v3068
      %v3083 = vpack.c.b16 %v3071, %v3070
      %v3084 = vpack.c.b16 %v3073, %v3072
      %v3085 = vpack.c.b16 %v3075, %v3074
      %v3086 = vpack.c.b16 %v3077, %v3076
      %v3087 = vpack.c.b16 %v3079, %v3078
      %3096 = vmatprep.subr.bf16.mxu0 0
      %3097 = vmatpush1.bf16.msra.mxu0 %v3080
      %3098 = vmatprep.subr.bf16.mxu0 0
      %3099 = vmatpush1.bf16.msra.mxu0 %v3081
      %3100 = vmatprep.subr.bf16.mxu0 0
      %3101 = vmatpush1.bf16.msra.mxu0 %v3082
      %3102 = vmatprep.subr.bf16.mxu0 0
      %3103 = vmatpush1.bf16.msra.mxu0 %v3083
      %3104 = vmatprep.subr.bf16.mxu0 0
      %3105 = vmatpush1.bf16.msra.mxu0 %v3084
      %3106 = vmatprep.subr.bf16.mxu0 0
      %3107 = vmatpush1.bf16.msra.mxu0 %v3085
      %3108 = vmatprep.subr.bf16.mxu0 0
      %3109 = vmatpush1.bf16.msra.mxu0 %v3086
      %3110 = vmatprep.subr.bf16.mxu0 0
      %3111 = vmatpush1.bf16.msra.mxu0 %v3087
      %3112 = vmatprep.subr.bf16.mxu0 0
      %3113 = vmatpush1.bf16.msra.mxu0 0
      %3114 = vmatprep.subr.bf16.mxu0 0
      %3115 = vmatpush1.bf16.msra.mxu0 0
      %3116 = vmatprep.subr.bf16.mxu0 0
      %3117 = vmatpush1.bf16.msra.mxu0 0
      %3118 = vmatprep.subr.bf16.mxu0 0
      %3119 = vmatpush1.bf16.msra.mxu0 0
      %3120 = vmatprep.subr.bf16.mxu0 0
      %3121 = vmatpush1.bf16.msra.mxu0 0
      %3122 = vmatprep.subr.bf16.mxu0 0
      %3123 = vmatpush1.bf16.msra.mxu0 0
      %3124 = vmatprep.subr.bf16.mxu0 0
      %3125 = vmatpush1.bf16.msra.mxu0 0
      %3126 = vmatprep.subr.bf16.mxu0 0
      %3127 = vmatpush1.bf16.msra.mxu0 0
      %3128 = vmatprep.mubr.bf16.mxu0 0
      %3129 = vmatmul.mubr.bf16.gmra.mrb[0].mxu0 %v2920
      %v3130 = vpop.f32.mrb[0].mxu0
      %v3131 = vadd.f32 0.0, %v3130
      %v3132 = vpop.f32.mrb[0].mxu0
      %v3133 = vpop.f32.mrb[0].mxu0
      %v3134 = vadd.f32 0.0, %v3133
      %v3135 = vpop.f32.mrb[0].mxu0
      %3136 = vmatprep.mubr.bf16.mxu0 0
      %3137 = vmatmul.mubr.bf16.gmra.mrb[0].mxu0 %v2921
      %v3138 = vpop.f32.mrb[0].mxu0
      %v3139 = vadd.f32 0.0, %v3138
      %v3140 = vpop.f32.mrb[0].mxu0
      %v3141 = vpop.f32.mrb[0].mxu0
      %v3142 = vadd.f32 0.0, %v3141
      %v3143 = vpop.f32.mrb[0].mxu0
      %3144 = vmatprep.mubr.bf16.mxu0 0
      %3145 = vmatmul.mubr.bf16.gmra.mrb[0].mxu0 %v2922
      %v3146 = vpop.f32.mrb[0].mxu0
      %v3147 = vadd.f32 0.0, %v3146
      %v3148 = vpop.f32.mrb[0].mxu0
      %v3149 = vpop.f32.mrb[0].mxu0
      %v3150 = vadd.f32 0.0, %v3149
      %v3151 = vpop.f32.mrb[0].mxu0
      %3152 = vmatprep.mubr.bf16.mxu0 0
      %3153 = vmatmul.mubr.bf16.gmra.mrb[0].mxu0 %v2923
      %v3154 = vpop.f32.mrb[0].mxu0
      %v3155 = vadd.f32 0.0, %v3154
      %v3156 = vpop.f32.mrb[0].mxu0
      %v3157 = vpop.f32.mrb[0].mxu0
      %v3158 = vadd.f32 0.0, %v3157
      %v3159 = vpop.f32.mrb[0].mxu0
      %3160 = vmatprep.mubr.bf16.mxu0 0
      %3161 = vmatmul.mubr.bf16.gmra.mrb[0].mxu0 %v2924
      %v3162 = vpop.f32.mrb[0].mxu0
      %v3163 = vadd.f32 0.0, %v3162
      %v3164 = vpop.f32.mrb[0].mxu0
      %v3165 = vpop.f32.mrb[0].mxu0
      %v3166 = vadd.f32 0.0, %v3165
      %v3167 = vpop.f32.mrb[0].mxu0
      %3168 = vmatprep.mubr.bf16.mxu0 0
      %3169 = vmatmul.mubr.bf16.gmra.mrb[0].mxu0 %v2925
      %v3170 = vpop.f32.mrb[0].mxu0
      %v3171 = vadd.f32 0.0, %v3170
      %v3172 = vpop.f32.mrb[0].mxu0
      %v3173 = vpop.f32.mrb[0].mxu0
      %v3174 = vadd.f32 0.0, %v3173
      %v3175 = vpop.f32.mrb[0].mxu0
      %3176 = vmatprep.mubr.bf16.mxu0 0
      %3177 = vmatmul.mubr.bf16.gmra.mrb[0].mxu0 %v2926
      %v3178 = vpop.f32.mrb[0].mxu0
      %v3179 = vadd.f32 0.0, %v3178
      %v3180 = vpop.f32.mrb[0].mxu0
      %v3181 = vpop.f32.mrb[0].mxu0
      %v3182 = vadd.f32 0.0, %v3181
      %v3183 = vpop.f32.mrb[0].mxu0
      %3184 = vmatprep.mubr.bf16.mxu0 0
      %3185 = vmatmul.mubr.bf16.gmra.mrb[0].mxu0 %v2927
      %v3186 = vpop.f32.mrb[0].mxu0
      %v3187 = vadd.f32 0.0, %v3186
      %v3188 = vpop.f32.mrb[0].mxu0
      %v3189 = vpop.f32.mrb[0].mxu0
      %v3190 = vadd.f32 0.0, %v3189
      %v3191 = vpop.f32.mrb[0].mxu0
      %3192 = vmatprep.mubr.bf16.mxu0 0
      %3193 = vmatmul.mubr.bf16.gmra.mrb[0].mxu0 %v2928
      %v3194 = vpop.f32.mrb[0].mxu0
      %v3195 = vadd.f32 0.0, %v3194
      %v3196 = vpop.f32.mrb[0].mxu0
      %v3197 = vpop.f32.mrb[0].mxu0
      %v3198 = vadd.f32 0.0, %v3197
      %v3199 = vpop.f32.mrb[0].mxu0
      %3200 = vmatprep.mubr.bf16.mxu0 0
      %3201 = vmatmul.mubr.bf16.gmra.mrb[0].mxu0 %v2929
      %v3202 = vpop.f32.mrb[0].mxu0
      %v3203 = vadd.f32 0.0, %v3202
      %v3204 = vpop.f32.mrb[0].mxu0
      %v3205 = vpop.f32.mrb[0].mxu0
      %v3206 = vadd.f32 0.0, %v3205
      %v3207 = vpop.f32.mrb[0].mxu0
      %3208 = vmatprep.mubr.bf16.mxu0 0
      %3209 = vmatmul.mubr.bf16.gmra.mrb[0].mxu0 %v2930
      %v3210 = vpop.f32.mrb[0].mxu0
      %v3211 = vadd.f32 0.0, %v3210
      %v3212 = vpop.f32.mrb[0].mxu0
      %v3213 = vpop.f32.mrb[0].mxu0
      %v3214 = vadd.f32 0.0, %v3213
      %v3215 = vpop.f32.mrb[0].mxu0
      %3216 = vmatprep.mubr.bf16.mxu0 0
      %3217 = vmatmul.mubr.bf16.gmra.mrb[0].mxu0 %v2931
      %v3218 = vpop.f32.mrb[0].mxu0
      %v3219 = vadd.f32 0.0, %v3218
      %v3220 = vpop.f32.mrb[0].mxu0
      %v3221 = vpop.f32.mrb[0].mxu0
      %v3222 = vadd.f32 0.0, %v3221
      %v3223 = vpop.f32.mrb[0].mxu0
      %3224 = vmatprep.mubr.bf16.mxu0 0
      %3225 = vmatmul.mubr.bf16.gmra.mrb[0].mxu0 %v2932
      %v3226 = vpop.f32.mrb[0].mxu0
      %v3227 = vadd.f32 0.0, %v3226
      %v3228 = vpop.f32.mrb[0].mxu0
      %v3229 = vpop.f32.mrb[0].mxu0
      %v3230 = vadd.f32 0.0, %v3229
      %v3231 = vpop.f32.mrb[0].mxu0
      %3232 = vmatprep.mubr.bf16.mxu0 0
      %3233 = vmatmul.mubr.bf16.gmra.mrb[0].mxu0 %v2933
      %v3234 = vpop.f32.mrb[0].mxu0
      %v3235 = vadd.f32 0.0, %v3234
      %v3236 = vpop.f32.mrb[0].mxu0
      %v3237 = vpop.f32.mrb[0].mxu0
      %v3238 = vadd.f32 0.0, %v3237
      %v3239 = vpop.f32.mrb[0].mxu0
      %3240 = vmatprep.mubr.bf16.mxu0 0
      %3241 = vmatmul.mubr.bf16.gmra.mrb[0].mxu0 %v2934
      %v3242 = vpop.f32.mrb[0].mxu0
      %v3243 = vadd.f32 0.0, %v3242
      %v3244 = vpop.f32.mrb[0].mxu0
      %v3245 = vpop.f32.mrb[0].mxu0
      %v3246 = vadd.f32 0.0, %v3245
      %v3247 = vpop.f32.mrb[0].mxu0
      %3248 = vmatprep.mubr.bf16.mxu0 0
      %3249 = vmatmul.mubr.bf16.gmra.mrb[0].mxu0 %v2935
      %v3250 = vpop.f32.mrb[0].mxu0
      %v3251 = vadd.f32 0.0, %v3250
      %v3252 = vpop.f32.mrb[0].mxu0
      %v3253 = vpop.f32.mrb[0].mxu0
      %v3254 = vadd.f32 0.0, %v3253
      %v3255 = vpop.f32.mrb[0].mxu0
      %3256 = vmatprep.mubr.bf16.mxu0 0
      %3257 = vmatmul.mubr.bf16.gmra.mrb[0].mxu0 %v2936
      %v3258 = vpop.f32.mrb[0].mxu0
      %v3259 = vadd.f32 0.0, %v3258
      %v3260 = vpop.f32.mrb[0].mxu0
      %v3261 = vpop.f32.mrb[0].mxu0
      %v3262 = vadd.f32 0.0, %v3261
      %v3263 = vpop.f32.mrb[0].mxu0
      %3264 = vmatprep.mubr.bf16.mxu0 0
      %3265 = vmatmul.mubr.bf16.gmra.mrb[0].mxu0 %v2937
      %v3266 = vpop.f32.mrb[0].mxu0
      %v3267 = vadd.f32 0.0, %v3266
      %v3268 = vpop.f32.mrb[0].mxu0
      %v3269 = vpop.f32.mrb[0].mxu0
      %v3270 = vadd.f32 0.0, %v3269
      %v3271 = vpop.f32.mrb[0].mxu0
      %3272 = vmatprep.mubr.bf16.mxu0 0
      %3273 = vmatmul.mubr.bf16.gmra.mrb[0].mxu0 %v2938
      %v3274 = vpop.f32.mrb[0].mxu0
      %v3275 = vadd.f32 0.0, %v3274
      %v3276 = vpop.f32.mrb[0].mxu0
      %v3277 = vpop.f32.mrb[0].mxu0
      %v3278 = vadd.f32 0.0, %v3277
      %v3279 = vpop.f32.mrb[0].mxu0
      %3280 = vmatprep.mubr.bf16.mxu0 0
      %3281 = vmatmul.mubr.bf16.gmra.mrb[0].mxu0 %v2939
      %v3282 = vpop.f32.mrb[0].mxu0
      %v3283 = vadd.f32 0.0, %v3282
      %v3284 = vpop.f32.mrb[0].mxu0
      %v3285 = vpop.f32.mrb[0].mxu0
      %v3286 = vadd.f32 0.0, %v3285
      %v3287 = vpop.f32.mrb[0].mxu0
      %3288 = vmatprep.mubr.bf16.mxu0 0
      %3289 = vmatmul.mubr.bf16.gmra.mrb[0].mxu0 %v2940
      %v3290 = vpop.f32.mrb[0].mxu0
      %v3291 = vadd.f32 0.0, %v3290
      %v3292 = vpop.f32.mrb[0].mxu0
      %v3293 = vpop.f32.mrb[0].mxu0
      %v3294 = vadd.f32 0.0, %v3293
      %v3295 = vpop.f32.mrb[0].mxu0
      %3296 = vmatprep.mubr.bf16.mxu0 0
      %3297 = vmatmul.mubr.bf16.gmra.mrb[0].mxu0 %v2941
      %v3298 = vpop.f32.mrb[0].mxu0
      %v3299 = vadd.f32 0.0, %v3298
      %v3300 = vpop.f32.mrb[0].mxu0
      %v3301 = vpop.f32.mrb[0].mxu0
      %v3302 = vadd.f32 0.0, %v3301
      %v3303 = vpop.f32.mrb[0].mxu0
      %3304 = vmatprep.mubr.bf16.mxu0 0
      %3305 = vmatmul.mubr.bf16.gmra.mrb[0].mxu0 %v2942
      %v3306 = vpop.f32.mrb[0].mxu0
      %v3307 = vadd.f32 0.0, %v3306
      %v3308 = vpop.f32.mrb[0].mxu0
      %v3309 = vpop.f32.mrb[0].mxu0
      %v3310 = vadd.f32 0.0, %v3309
      %v3311 = vpop.f32.mrb[0].mxu0
      %3312 = vmatprep.mubr.bf16.mxu0 0
      %3313 = vmatmul.mubr.bf16.gmra.mrb[0].mxu0 %v2943
      %v3314 = vpop.f32.mrb[0].mxu0
      %v3315 = vadd.f32 0.0, %v3314
      %v3316 = vpop.f32.mrb[0].mxu0
      %v3317 = vpop.f32.mrb[0].mxu0
      %v3318 = vadd.f32 0.0, %v3317
      %v3319 = vpop.f32.mrb[0].mxu0
      %3320 = vmatprep.mubr.bf16.mxu0 0
      %3321 = vmatmul.mubr.bf16.gmra.mrb[0].mxu0 %v2944
      %v3322 = vpop.f32.mrb[0].mxu0
      %v3323 = vadd.f32 0.0, %v3322
      %v3324 = vpop.f32.mrb[0].mxu0
      %v3325 = vpop.f32.mrb[0].mxu0
      %v3326 = vadd.f32 0.0, %v3325
      %v3327 = vpop.f32.mrb[0].mxu0
      %3328 = vmatprep.mubr.bf16.mxu0 0
      %3329 = vmatmul.mubr.bf16.gmra.mrb[0].mxu0 %v2945
      %v3330 = vpop.f32.mrb[0].mxu0
      %v3331 = vadd.f32 0.0, %v3330
      %v3332 = vpop.f32.mrb[0].mxu0
      %v3333 = vpop.f32.mrb[0].mxu0
      %v3334 = vadd.f32 0.0, %v3333
      %v3335 = vpop.f32.mrb[0].mxu0
      %3336 = vmatprep.mubr.bf16.mxu0 0
      %3337 = vmatmul.mubr.bf16.gmra.mrb[0].mxu0 %v2946
      %v3338 = vpop.f32.mrb[0].mxu0
      %v3339 = vadd.f32 0.0, %v3338
      %v3340 = vpop.f32.mrb[0].mxu0
      %v3341 = vpop.f32.mrb[0].mxu0
      %v3342 = vadd.f32 0.0, %v3341
      %v3343 = vpop.f32.mrb[0].mxu0
      %3344 = vmatprep.mubr.bf16.mxu0 0
      %3345 = vmatmul.mubr.bf16.gmra.mrb[0].mxu0 %v2947
      %v3346 = vpop.f32.mrb[0].mxu0
      %v3347 = vadd.f32 0.0, %v3346
      %v3348 = vpop.f32.mrb[0].mxu0
      %v3349 = vpop.f32.mrb[0].mxu0
      %v3350 = vadd.f32 0.0, %v3349
      %v3351 = vpop.f32.mrb[0].mxu0
      %3352 = vmatprep.mubr.bf16.mxu0 0
      %3353 = vmatmul.mubr.bf16.gmra.mrb[0].mxu0 %v2948
      %v3354 = vpop.f32.mrb[0].mxu0
      %v3355 = vadd.f32 0.0, %v3354
      %v3356 = vpop.f32.mrb[0].mxu0
      %v3357 = vpop.f32.mrb[0].mxu0
      %v3358 = vadd.f32 0.0, %v3357
      %v3359 = vpop.f32.mrb[0].mxu0
      %3360 = vmatprep.mubr.bf16.mxu0 0
      %3361 = vmatmul.mubr.bf16.gmra.mrb[0].mxu0 %v2949
      %v3362 = vpop.f32.mrb[0].mxu0
      %v3363 = vadd.f32 0.0, %v3362
      %v3364 = vpop.f32.mrb[0].mxu0
      %v3365 = vpop.f32.mrb[0].mxu0
      %v3366 = vadd.f32 0.0, %v3365
      %v3367 = vpop.f32.mrb[0].mxu0
      %3368 = vmatprep.mubr.bf16.mxu0 0
      %3369 = vmatmul.mubr.bf16.gmra.mrb[0].mxu0 %v2950
      %v3370 = vpop.f32.mrb[0].mxu0
      %v3371 = vadd.f32 0.0, %v3370
      %v3372 = vpop.f32.mrb[0].mxu0
      %v3373 = vpop.f32.mrb[0].mxu0
      %v3374 = vadd.f32 0.0, %v3373
      %v3375 = vpop.f32.mrb[0].mxu0
      %3376 = vmatprep.mubr.bf16.mxu0 0
      %3377 = vmatmul.mubr.bf16.gmra.mrb[0].mxu0 %v2951
      %v3378 = vpop.f32.mrb[0].mxu0
      %v3379 = vadd.f32 0.0, %v3378
      %v3380 = vpop.f32.mrb[0].mxu0
      %v3381 = vpop.f32.mrb[0].mxu0
      %v3382 = vadd.f32 0.0, %v3381
      %v3383 = vpop.f32.mrb[0].mxu0
      %3384 = vmatprep.mubr.bf16.mxu0 0
      %3385 = vmatmul.mubr.bf16.gmra.mrb[0].mxu0 %v2952
      %v3386 = vpop.f32.mrb[0].mxu0
      %v3387 = vadd.f32 0.0, %v3386
      %v3388 = vpop.f32.mrb[0].mxu0
      %v3389 = vpop.f32.mrb[0].mxu0
      %v3390 = vadd.f32 0.0, %v3389
      %v3391 = vpop.f32.mrb[0].mxu0
      %3392 = vmatprep.mubr.bf16.mxu0 0
      %3393 = vmatmul.mubr.bf16.gmra.mrb[0].mxu0 %v2953
      %v3394 = vpop.f32.mrb[0].mxu0
      %v3395 = vadd.f32 0.0, %v3394
      %v3396 = vpop.f32.mrb[0].mxu0
      %v3397 = vpop.f32.mrb[0].mxu0
      %v3398 = vadd.f32 0.0, %v3397
      %v3399 = vpop.f32.mrb[0].mxu0
      %3400 = vmatprep.mubr.bf16.mxu0 0
      %3401 = vmatmul.mubr.bf16.gmra.mrb[0].mxu0 %v2954
      %v3402 = vpop.f32.mrb[0].mxu0
      %v3403 = vadd.f32 0.0, %v3402
      %v3404 = vpop.f32.mrb[0].mxu0
      %v3405 = vpop.f32.mrb[0].mxu0
      %v3406 = vadd.f32 0.0, %v3405
      %v3407 = vpop.f32.mrb[0].mxu0
      %3408 = vmatprep.mubr.bf16.mxu0 0
      %3409 = vmatmul.mubr.bf16.gmra.mrb[0].mxu0 %v2955
      %v3410 = vpop.f32.mrb[0].mxu0
      %v3411 = vadd.f32 0.0, %v3410
      %v3412 = vpop.f32.mrb[0].mxu0
      %v3413 = vpop.f32.mrb[0].mxu0
      %v3414 = vadd.f32 0.0, %v3413
      %v3415 = vpop.f32.mrb[0].mxu0
      %3416 = vmatprep.mubr.bf16.mxu0 0
      %3417 = vmatmul.mubr.bf16.gmra.mrb[0].mxu0 %v2956
      %v3418 = vpop.f32.mrb[0].mxu0
      %v3419 = vadd.f32 0.0, %v3418
      %v3420 = vpop.f32.mrb[0].mxu0
      %v3421 = vpop.f32.mrb[0].mxu0
      %v3422 = vadd.f32 0.0, %v3421
      %v3423 = vpop.f32.mrb[0].mxu0
      %3424 = vmatprep.mubr.bf16.mxu0 0
      %3425 = vmatmul.mubr.bf16.gmra.mrb[0].mxu0 %v2957
      %v3426 = vpop.f32.mrb[0].mxu0
      %v3427 = vadd.f32 0.0, %v3426
      %v3428 = vpop.f32.mrb[0].mxu0
      %v3429 = vpop.f32.mrb[0].mxu0
      %v3430 = vadd.f32 0.0, %v3429
      %v3431 = vpop.f32.mrb[0].mxu0
      %3432 = vmatprep.mubr.bf16.mxu0 0
      %3433 = vmatmul.mubr.bf16.gmra.mrb[0].mxu0 %v2958
      %v3434 = vpop.f32.mrb[0].mxu0
      %v3435 = vadd.f32 0.0, %v3434
      %v3436 = vpop.f32.mrb[0].mxu0
      %v3437 = vpop.f32.mrb[0].mxu0
      %v3438 = vadd.f32 0.0, %v3437
      %v3439 = vpop.f32.mrb[0].mxu0
      %3440 = vmatprep.mubr.bf16.mxu0 0
      %3441 = vmatmul.mubr.bf16.gmra.mrb[0].mxu0 %v2959
      %v3442 = vpop.f32.mrb[0].mxu0
      %v3443 = vadd.f32 0.0, %v3442
      %v3444 = vpop.f32.mrb[0].mxu0
      %v3445 = vpop.f32.mrb[0].mxu0
      %v3446 = vadd.f32 0.0, %v3445
      %v3447 = vpop.f32.mrb[0].mxu0
      %3448 = vmatprep.mubr.bf16.mxu0 0
      %3449 = vmatmul.mubr.bf16.gmra.mrb[0].mxu0 %v2960
      %v3450 = vpop.f32.mrb[0].mxu0
      %v3451 = vadd.f32 0.0, %v3450
      %v3452 = vpop.f32.mrb[0].mxu0
      %v3453 = vpop.f32.mrb[0].mxu0
      %v3454 = vadd.f32 0.0, %v3453
      %v3455 = vpop.f32.mrb[0].mxu0
      %3456 = vmatprep.mubr.bf16.mxu0 0
      %3457 = vmatmul.mubr.bf16.gmra.mrb[0].mxu0 %v2961
      %v3458 = vpop.f32.mrb[0].mxu0
      %v3459 = vadd.f32 0.0, %v3458
      %v3460 = vpop.f32.mrb[0].mxu0
      %v3461 = vpop.f32.mrb[0].mxu0
      %v3462 = vadd.f32 0.0, %v3461
      %v3463 = vpop.f32.mrb[0].mxu0
      %3464 = vmatprep.mubr.bf16.mxu0 0
      %3465 = vmatmul.mubr.bf16.gmra.mrb[0].mxu0 %v2962
      %v3466 = vpop.f32.mrb[0].mxu0
      %v3467 = vadd.f32 0.0, %v3466
      %v3468 = vpop.f32.mrb[0].mxu0
      %v3469 = vpop.f32.mrb[0].mxu0
      %v3470 = vadd.f32 0.0, %v3469
      %v3471 = vpop.f32.mrb[0].mxu0
      %3472 = vmatprep.mubr.bf16.mxu0 0
      %3473 = vmatmul.mubr.bf16.gmra.mrb[0].mxu0 %v2963
      %v3474 = vpop.f32.mrb[0].mxu0
      %v3475 = vadd.f32 0.0, %v3474
      %v3476 = vpop.f32.mrb[0].mxu0
      %v3477 = vpop.f32.mrb[0].mxu0
      %v3478 = vadd.f32 0.0, %v3477
      %v3479 = vpop.f32.mrb[0].mxu0
      %3480 = vmatprep.mubr.bf16.mxu0 0
      %3481 = vmatmul.mubr.bf16.gmra.mrb[0].mxu0 %v2964
      %v3482 = vpop.f32.mrb[0].mxu0
      %v3483 = vadd.f32 0.0, %v3482
      %v3484 = vpop.f32.mrb[0].mxu0
      %v3485 = vpop.f32.mrb[0].mxu0
      %v3486 = vadd.f32 0.0, %v3485
      %v3487 = vpop.f32.mrb[0].mxu0
      %3488 = vmatprep.mubr.bf16.mxu0 0
      %3489 = vmatmul.mubr.bf16.gmra.mrb[0].mxu0 %v2965
      %v3490 = vpop.f32.mrb[0].mxu0
      %v3491 = vadd.f32 0.0, %v3490
      %v3492 = vpop.f32.mrb[0].mxu0
      %v3493 = vpop.f32.mrb[0].mxu0
      %v3494 = vadd.f32 0.0, %v3493
      %v3495 = vpop.f32.mrb[0].mxu0
      %3496 = vmatprep.mubr.bf16.mxu0 0
      %3497 = vmatmul.mubr.bf16.gmra.mrb[0].mxu0 %v2966
      %v3498 = vpop.f32.mrb[0].mxu0
      %v3499 = vadd.f32 0.0, %v3498
      %v3500 = vpop.f32.mrb[0].mxu0
      %v3501 = vpop.f32.mrb[0].mxu0
      %v3502 = vadd.f32 0.0, %v3501
      %v3503 = vpop.f32.mrb[0].mxu0
      %3504 = vmatprep.mubr.bf16.mxu0 0
      %3505 = vmatmul.mubr.bf16.gmra.mrb[0].mxu0 %v2967
      %v3506 = vpop.f32.mrb[0].mxu0
      %v3507 = vadd.f32 0.0, %v3506
      %v3508 = vpop.f32.mrb[0].mxu0
      %v3509 = vpop.f32.mrb[0].mxu0
      %v3510 = vadd.f32 0.0, %v3509
      %v3511 = vpop.f32.mrb[0].mxu0
      %3512 = vmatprep.mubr.bf16.mxu0 0
      %3513 = vmatmul.mubr.bf16.gmra.mrb[0].mxu0 %v2968
      %v3514 = vpop.f32.mrb[0].mxu0
      %v3515 = vadd.f32 0.0, %v3514
      %v3516 = vpop.f32.mrb[0].mxu0
      %v3517 = vpop.f32.mrb[0].mxu0
      %v3518 = vadd.f32 0.0, %v3517
      %v3519 = vpop.f32.mrb[0].mxu0
      %3520 = vmatprep.mubr.bf16.mxu0 0
      %3521 = vmatmul.mubr.bf16.gmra.mrb[0].mxu0 %v2969
      %v3522 = vpop.f32.mrb[0].mxu0
      %v3523 = vadd.f32 0.0, %v3522
      %v3524 = vpop.f32.mrb[0].mxu0
      %v3525 = vpop.f32.mrb[0].mxu0
      %v3526 = vadd.f32 0.0, %v3525
      %v3527 = vpop.f32.mrb[0].mxu0
      %3528 = vmatprep.mubr.bf16.mxu0 0
      %3529 = vmatmul.mubr.bf16.gmra.mrb[0].mxu0 %v2970
      %v3530 = vpop.f32.mrb[0].mxu0
      %v3531 = vadd.f32 0.0, %v3530
      %v3532 = vpop.f32.mrb[0].mxu0
      %v3533 = vpop.f32.mrb[0].mxu0
      %v3534 = vadd.f32 0.0, %v3533
      %v3535 = vpop.f32.mrb[0].mxu0
      %3536 = vmatprep.mubr.bf16.mxu0 0
      %3537 = vmatmul.mubr.bf16.gmra.mrb[0].mxu0 %v2971
      %v3538 = vpop.f32.mrb[0].mxu0
      %v3539 = vadd.f32 0.0, %v3538
      %v3540 = vpop.f32.mrb[0].mxu0
      %v3541 = vpop.f32.mrb[0].mxu0
      %v3542 = vadd.f32 0.0, %v3541
      %v3543 = vpop.f32.mrb[0].mxu0
      %3544 = vmatprep.mubr.bf16.mxu0 0
      %3545 = vmatmul.mubr.bf16.gmra.mrb[0].mxu0 %v2972
      %v3546 = vpop.f32.mrb[0].mxu0
      %v3547 = vadd.f32 0.0, %v3546
      %v3548 = vpop.f32.mrb[0].mxu0
      %v3549 = vpop.f32.mrb[0].mxu0
      %v3550 = vadd.f32 0.0, %v3549
      %v3551 = vpop.f32.mrb[0].mxu0
      %3552 = vmatprep.mubr.bf16.mxu0 0
      %3553 = vmatmul.mubr.bf16.gmra.mrb[0].mxu0 %v2973
      %v3554 = vpop.f32.mrb[0].mxu0
      %v3555 = vadd.f32 0.0, %v3554
      %v3556 = vpop.f32.mrb[0].mxu0
      %v3557 = vpop.f32.mrb[0].mxu0
      %v3558 = vadd.f32 0.0, %v3557
      %v3559 = vpop.f32.mrb[0].mxu0
      %3560 = vmatprep.mubr.bf16.mxu0 0
      %3561 = vmatmul.mubr.bf16.gmra.mrb[0].mxu0 %v2974
      %v3562 = vpop.f32.mrb[0].mxu0
      %v3563 = vadd.f32 0.0, %v3562
      %v3564 = vpop.f32.mrb[0].mxu0
      %v3565 = vpop.f32.mrb[0].mxu0
      %v3566 = vadd.f32 0.0, %v3565
      %v3567 = vpop.f32.mrb[0].mxu0
      %3568 = vmatprep.mubr.bf16.mxu0 0
      %3569 = vmatmul.mubr.bf16.gmra.mrb[0].mxu0 %v2975
      %v3570 = vpop.f32.mrb[0].mxu0
      %v3571 = vadd.f32 0.0, %v3570
      %v3572 = vpop.f32.mrb[0].mxu0
      %v3573 = vpop.f32.mrb[0].mxu0
      %v3574 = vadd.f32 0.0, %v3573
      %v3575 = vpop.f32.mrb[0].mxu0
      %3576 = vmatprep.mubr.bf16.mxu0 0
      %3577 = vmatmul.mubr.bf16.gmra.mrb[0].mxu0 %v2976
      %v3578 = vpop.f32.mrb[0].mxu0
      %v3579 = vadd.f32 0.0, %v3578
      %v3580 = vpop.f32.mrb[0].mxu0
      %v3581 = vpop.f32.mrb[0].mxu0
      %v3582 = vadd.f32 0.0, %v3581
      %v3583 = vpop.f32.mrb[0].mxu0
      %3584 = vmatprep.mubr.bf16.mxu0 0
      %3585 = vmatmul.mubr.bf16.gmra.mrb[0].mxu0 %v2977
      %v3586 = vpop.f32.mrb[0].mxu0
      %v3587 = vadd.f32 0.0, %v3586
      %v3588 = vpop.f32.mrb[0].mxu0
      %v3589 = vpop.f32.mrb[0].mxu0
      %v3590 = vadd.f32 0.0, %v3589
      %v3591 = vpop.f32.mrb[0].mxu0
      %3592 = vmatprep.mubr.bf16.mxu0 0
      %3593 = vmatmul.mubr.bf16.gmra.mrb[0].mxu0 %v2978
      %v3594 = vpop.f32.mrb[0].mxu0
      %v3595 = vadd.f32 0.0, %v3594
      %v3596 = vpop.f32.mrb[0].mxu0
      %v3597 = vpop.f32.mrb[0].mxu0
      %v3598 = vadd.f32 0.0, %v3597
      %v3599 = vpop.f32.mrb[0].mxu0
      %3600 = vmatprep.mubr.bf16.mxu0 0
      %3601 = vmatmul.mubr.bf16.gmra.mrb[0].mxu0 %v2979
      %v3602 = vpop.f32.mrb[0].mxu0
      %v3603 = vadd.f32 0.0, %v3602
      %v3604 = vpop.f32.mrb[0].mxu0
      %v3605 = vpop.f32.mrb[0].mxu0
      %v3606 = vadd.f32 0.0, %v3605
      %v3607 = vpop.f32.mrb[0].mxu0
      %3608 = vmatprep.mubr.bf16.mxu0 0
      %3609 = vmatmul.mubr.bf16.gmra.mrb[0].mxu0 %v2980
      %v3610 = vpop.f32.mrb[0].mxu0
      %v3611 = vadd.f32 0.0, %v3610
      %v3612 = vpop.f32.mrb[0].mxu0
      %v3613 = vpop.f32.mrb[0].mxu0
      %v3614 = vadd.f32 0.0, %v3613
      %v3615 = vpop.f32.mrb[0].mxu0
      %3616 = vmatprep.mubr.bf16.mxu0 0
      %3617 = vmatmul.mubr.bf16.gmra.mrb[0].mxu0 %v2981
      %v3618 = vpop.f32.mrb[0].mxu0
      %v3619 = vadd.f32 0.0, %v3618
      %v3620 = vpop.f32.mrb[0].mxu0
      %v3621 = vpop.f32.mrb[0].mxu0
      %v3622 = vadd.f32 0.0, %v3621
      %v3623 = vpop.f32.mrb[0].mxu0
      %3624 = vmatprep.mubr.bf16.mxu0 0
      %3625 = vmatmul.mubr.bf16.gmra.mrb[0].mxu0 %v2982
      %v3626 = vpop.f32.mrb[0].mxu0
      %v3627 = vadd.f32 0.0, %v3626
      %v3628 = vpop.f32.mrb[0].mxu0
      %v3629 = vpop.f32.mrb[0].mxu0
      %v3630 = vadd.f32 0.0, %v3629
      %v3631 = vpop.f32.mrb[0].mxu0
      %3632 = vmatprep.mubr.bf16.mxu0 0
      %3633 = vmatmul.mubr.bf16.gmra.mrb[0].mxu0 %v2983
      %v3634 = vpop.f32.mrb[0].mxu0
      %v3635 = vadd.f32 0.0, %v3634
      %v3636 = vpop.f32.mrb[0].mxu0
      %v3637 = vpop.f32.mrb[0].mxu0
      %v3638 = vadd.f32 0.0, %v3637
      %v3639 = vpop.f32.mrb[0].mxu0
      %3640 = vdwg.mxu0
      %v3641 = vadd.f32 %v2008, %v3131
      %v3642 = vadd.f32 %v2011, %v3134
      %v3643 = vadd.f32 %v2016, %v3139
      %v3644 = vadd.f32 %v2019, %v3142
      %v3645 = vadd.f32 %v2024, %v3147
      %v3646 = vadd.f32 %v2027, %v3150
      %v3647 = vadd.f32 %v2032, %v3155
      %v3648 = vadd.f32 %v2035, %v3158
      %v3649 = vadd.f32 %v2040, %v3163
      %v3650 = vadd.f32 %v2043, %v3166
      %v3651 = vadd.f32 %v2048, %v3171
      %v3652 = vadd.f32 %v2051, %v3174
      %v3653 = vadd.f32 %v2056, %v3179
      %v3654 = vadd.f32 %v2059, %v3182
      %v3655 = vadd.f32 %v2064, %v3187
      %v3656 = vadd.f32 %v2067, %v3190
      %v3657 = vadd.f32 %v2072, %v3195
      %v3658 = vadd.f32 %v2075, %v3198
      %v3659 = vadd.f32 %v2080, %v3203
      %v3660 = vadd.f32 %v2083, %v3206
      %v3661 = vadd.f32 %v2088, %v3211
      %v3662 = vadd.f32 %v2091, %v3214
      %v3663 = vadd.f32 %v2096, %v3219
      %v3664 = vadd.f32 %v2099, %v3222
      %v3665 = vadd.f32 %v2104, %v3227
      %v3666 = vadd.f32 %v2107, %v3230
      %v3667 = vadd.f32 %v2112, %v3235
      %v3668 = vadd.f32 %v2115, %v3238
      %v3669 = vadd.f32 %v2120, %v3243
      %v3670 = vadd.f32 %v2123, %v3246
      %v3671 = vadd.f32 %v2128, %v3251
      %v3672 = vadd.f32 %v2131, %v3254
      %v3673 = vadd.f32 %v2136, %v3259
      %v3674 = vadd.f32 %v2139, %v3262
      %v3675 = vadd.f32 %v2144, %v3267
      %v3676 = vadd.f32 %v2147, %v3270
      %v3677 = vadd.f32 %v2152, %v3275
      %v3678 = vadd.f32 %v2155, %v3278
      %v3679 = vadd.f32 %v2160, %v3283
      %v3680 = vadd.f32 %v2163, %v3286
      %v3681 = vadd.f32 %v2168, %v3291
      %v3682 = vadd.f32 %v2171, %v3294
      %v3683 = vadd.f32 %v2176, %v3299
      %v3684 = vadd.f32 %v2179, %v3302
      %v3685 = vadd.f32 %v2184, %v3307
      %v3686 = vadd.f32 %v2187, %v3310
      %v3687 = vadd.f32 %v2192, %v3315
      %v3688 = vadd.f32 %v2195, %v3318
      %v3689 = vadd.f32 %v2200, %v3323
      %v3690 = vadd.f32 %v2203, %v3326
      %v3691 = vadd.f32 %v2208, %v3331
      %v3692 = vadd.f32 %v2211, %v3334
      %v3693 = vadd.f32 %v2216, %v3339
      %v3694 = vadd.f32 %v2219, %v3342
      %v3695 = vadd.f32 %v2224, %v3347
      %v3696 = vadd.f32 %v2227, %v3350
      %v3697 = vadd.f32 %v2232, %v3355
      %v3698 = vadd.f32 %v2235, %v3358
      %v3699 = vadd.f32 %v2240, %v3363
      %v3700 = vadd.f32 %v2243, %v3366
      %v3701 = vadd.f32 %v2248, %v3371
      %v3702 = vadd.f32 %v2251, %v3374
      %v3703 = vadd.f32 %v2256, %v3379
      %v3704 = vadd.f32 %v2259, %v3382
      %v3705 = vadd.f32 %v2264, %v3387
      %v3706 = vadd.f32 %v2267, %v3390
      %v3707 = vadd.f32 %v2272, %v3395
      %v3708 = vadd.f32 %v2275, %v3398
      %v3709 = vadd.f32 %v2280, %v3403
      %v3710 = vadd.f32 %v2283, %v3406
      %v3711 = vadd.f32 %v2288, %v3411
      %v3712 = vadd.f32 %v2291, %v3414
      %v3713 = vadd.f32 %v2296, %v3419
      %v3714 = vadd.f32 %v2299, %v3422
      %v3715 = vadd.f32 %v2304, %v3427
      %v3716 = vadd.f32 %v2307, %v3430
      %v3717 = vadd.f32 %v2312, %v3435
      %v3718 = vadd.f32 %v2315, %v3438
      %v3719 = vadd.f32 %v2320, %v3443
      %v3720 = vadd.f32 %v2323, %v3446
      %v3721 = vadd.f32 %v2328, %v3451
      %v3722 = vadd.f32 %v2331, %v3454
      %v3723 = vadd.f32 %v2336, %v3459
      %v3724 = vadd.f32 %v2339, %v3462
      %v3725 = vadd.f32 %v2344, %v3467
      %v3726 = vadd.f32 %v2347, %v3470
      %v3727 = vadd.f32 %v2352, %v3475
      %v3728 = vadd.f32 %v2355, %v3478
      %v3729 = vadd.f32 %v2360, %v3483
      %v3730 = vadd.f32 %v2363, %v3486
      %v3731 = vadd.f32 %v2368, %v3491
      %v3732 = vadd.f32 %v2371, %v3494
      %v3733 = vadd.f32 %v2376, %v3499
      %v3734 = vadd.f32 %v2379, %v3502
      %v3735 = vadd.f32 %v2384, %v3507
      %v3736 = vadd.f32 %v2387, %v3510
      %v3737 = vadd.f32 %v2392, %v3515
      %v3738 = vadd.f32 %v2395, %v3518
      %v3739 = vadd.f32 %v2400, %v3523
      %v3740 = vadd.f32 %v2403, %v3526
      %v3741 = vadd.f32 %v2408, %v3531
      %v3742 = vadd.f32 %v2411, %v3534
      %v3743 = vadd.f32 %v2416, %v3539
      %v3744 = vadd.f32 %v2419, %v3542
      %v3745 = vadd.f32 %v2424, %v3547
      %v3746 = vadd.f32 %v2427, %v3550
      %v3747 = vadd.f32 %v2432, %v3555
      %v3748 = vadd.f32 %v2435, %v3558
      %v3749 = vadd.f32 %v2440, %v3563
      %v3750 = vadd.f32 %v2443, %v3566
      %v3751 = vadd.f32 %v2448, %v3571
      %v3752 = vadd.f32 %v2451, %v3574
      %v3753 = vadd.f32 %v2456, %v3579
      %v3754 = vadd.f32 %v2459, %v3582
      %v3755 = vadd.f32 %v2464, %v3587
      %v3756 = vadd.f32 %v2467, %v3590
      %v3757 = vadd.f32 %v2472, %v3595
      %v3758 = vadd.f32 %v2475, %v3598
      %v3759 = vadd.f32 %v2480, %v3603
      %v3760 = vadd.f32 %v2483, %v3606
      %v3761 = vadd.f32 %v2488, %v3611
      %v3762 = vadd.f32 %v2491, %v3614
      %v3763 = vadd.f32 %v2496, %v3619
      %v3764 = vadd.f32 %v2499, %v3622
      %v3765 = vadd.f32 %v2504, %v3627
      %v3766 = vadd.f32 %v2507, %v3630
      %v3767 = vadd.f32 %v2512, %v3635
      %v3768 = vadd.f32 %v2515, %v3638
      %v3769 = vld [vmem:[%s261] sm:$0xf]
      %v3770 = vld [vmem:[%s261 + $0x4] sm:$0xf]
      %v3771 = vld [vmem:[%s261 + $0x8] sm:$0xf]
      %v3772 = vld [vmem:[%s261 + $0xc] sm:$0xf]
      %v3773 = vld [vmem:[%s261 + $0x10] sm:$0xf]
      %v3774 = vld [vmem:[%s261 + $0x14] sm:$0xf]
      %v3775 = vld [vmem:[%s261 + $0x18] sm:$0xf]
      %v3776 = vld [vmem:[%s261 + $0x1c] sm:$0xf]
      %v3777 = vld [vmem:[%s261 + $0x20] sm:$0xf]
      %v3778 = vld [vmem:[%s261 + $0x24] sm:$0xf]
      %v3779 = vld [vmem:[%s261 + $0x28] sm:$0xf]
      %v3780 = vld [vmem:[%s261 + $0x2c] sm:$0xf]
      %v3781 = vld [vmem:[%s261 + $0x30] sm:$0xf]
      %v3782 = vld [vmem:[%s261 + $0x34] sm:$0xf]
      %v3783 = vld [vmem:[%s261 + $0x38] sm:$0xf]
      %v3784 = vld [vmem:[%s261 + $0x3c] sm:$0xf]
      %v3785 = vld [vmem:[%s261 + $0x40] sm:$0xf]
      %v3786 = vld [vmem:[%s261 + $0x44] sm:$0xf]
      %v3787 = vld [vmem:[%s261 + $0x48] sm:$0xf]
      %v3788 = vld [vmem:[%s261 + $0x4c] sm:$0xf]
      %v3789 = vld [vmem:[%s261 + $0x50] sm:$0xf]
      %v3790 = vld [vmem:[%s261 + $0x54] sm:$0xf]
      %v3791 = vld [vmem:[%s261 + $0x58] sm:$0xf]
      %v3792 = vld [vmem:[%s261 + $0x5c] sm:$0xf]
      %v3793 = vld [vmem:[%s261 + $0x60] sm:$0xf]
      %v3794 = vld [vmem:[%s261 + $0x64] sm:$0xf]
      %v3795 = vld [vmem:[%s261 + $0x68] sm:$0xf]
      %v3796 = vld [vmem:[%s261 + $0x6c] sm:$0xf]
      %v3797 = vld [vmem:[%s261 + $0x70] sm:$0xf]
      %v3798 = vld [vmem:[%s261 + $0x74] sm:$0xf]
      %v3799 = vld [vmem:[%s261 + $0x78] sm:$0xf]
      %v3800 = vld [vmem:[%s261 + $0x7c] sm:$0xf]
      %v3801 = vld [vmem:[%s261 + $0x80] sm:$0xf]
      %v3802 = vld [vmem:[%s261 + $0x84] sm:$0xf]
      %v3803 = vld [vmem:[%s261 + $0x88] sm:$0xf]
      %v3804 = vld [vmem:[%s261 + $0x8c] sm:$0xf]
      %v3805 = vld [vmem:[%s261 + $0x90] sm:$0xf]
      %v3806 = vld [vmem:[%s261 + $0x94] sm:$0xf]
      %v3807 = vld [vmem:[%s261 + $0x98] sm:$0xf]
      %v3808 = vld [vmem:[%s261 + $0x9c] sm:$0xf]
      %v3809 = vld [vmem:[%s261 + $0xa0] sm:$0xf]
      %v3810 = vld [vmem:[%s261 + $0xa4] sm:$0xf]
      %v3811 = vld [vmem:[%s261 + $0xa8] sm:$0xf]
      %v3812 = vld [vmem:[%s261 + $0xac] sm:$0xf]
      %v3813 = vld [vmem:[%s261 + $0xb0] sm:$0xf]
      %v3814 = vld [vmem:[%s261 + $0xb4] sm:$0xf]
      %v3815 = vld [vmem:[%s261 + $0xb8] sm:$0xf]
      %v3816 = vld [vmem:[%s261 + $0xbc] sm:$0xf]
      %v3817 = vld [vmem:[%s261 + $0xc0] sm:$0xf]
      %v3818 = vld [vmem:[%s261 + $0xc4] sm:$0xf]
      %v3819 = vld [vmem:[%s261 + $0xc8] sm:$0xf]
      %v3820 = vld [vmem:[%s261 + $0xcc] sm:$0xf]
      %v3821 = vld [vmem:[%s261 + $0xd0] sm:$0xf]
      %v3822 = vld [vmem:[%s261 + $0xd4] sm:$0xf]
      %v3823 = vld [vmem:[%s261 + $0xd8] sm:$0xf]
      %v3824 = vld [vmem:[%s261 + $0xdc] sm:$0xf]
      %v3825 = vld [vmem:[%s261 + $0xe0] sm:$0xf]
      %v3826 = vld [vmem:[%s261 + $0xe4] sm:$0xf]
      %v3827 = vld [vmem:[%s261 + $0xe8] sm:$0xf]
      %v3828 = vld [vmem:[%s261 + $0xec] sm:$0xf]
      %v3829 = vld [vmem:[%s261 + $0xf0] sm:$0xf]
      %v3830 = vld [vmem:[%s261 + $0xf4] sm:$0xf]
      %v3831 = vld [vmem:[%s261 + $0xf8] sm:$0xf]
      %v3832 = vld [vmem:[%s261 + $0xfc] sm:$0xf]
      %v3833 = vld [vmem:[%s261 + $0x100] sm:$0xf]
      %v3834 = vld [vmem:[%s261 + $0x104] sm:$0xf]
      %v3835 = vld [vmem:[%s261 + $0x108] sm:$0xf]
      %v3836 = vld [vmem:[%s261 + $0x10c] sm:$0xf]
      %v3837 = vld [vmem:[%s261 + $0x110] sm:$0xf]
      %v3838 = vld [vmem:[%s261 + $0x114] sm:$0xf]
      %v3839 = vld [vmem:[%s261 + $0x118] sm:$0xf]
      %v3840 = vld [vmem:[%s261 + $0x11c] sm:$0xf]
      %v3841 = vld [vmem:[%s261 + $0x120] sm:$0xf]
      %v3842 = vld [vmem:[%s261 + $0x124] sm:$0xf]
      %v3843 = vld [vmem:[%s261 + $0x128] sm:$0xf]
      %v3844 = vld [vmem:[%s261 + $0x12c] sm:$0xf]
      %v3845 = vld [vmem:[%s261 + $0x130] sm:$0xf]
      %v3846 = vld [vmem:[%s261 + $0x134] sm:$0xf]
      %v3847 = vld [vmem:[%s261 + $0x138] sm:$0xf]
      %v3848 = vld [vmem:[%s261 + $0x13c] sm:$0xf]
      %v3849 = vld [vmem:[%s261 + $0x140] sm:$0xf]
      %v3850 = vld [vmem:[%s261 + $0x144] sm:$0xf]
      %v3851 = vld [vmem:[%s261 + $0x148] sm:$0xf]
      %v3852 = vld [vmem:[%s261 + $0x14c] sm:$0xf]
      %v3853 = vld [vmem:[%s261 + $0x150] sm:$0xf]
      %v3854 = vld [vmem:[%s261 + $0x154] sm:$0xf]
      %v3855 = vld [vmem:[%s261 + $0x158] sm:$0xf]
      %v3856 = vld [vmem:[%s261 + $0x15c] sm:$0xf]
      %v3857 = vld [vmem:[%s261 + $0x160] sm:$0xf]
      %v3858 = vld [vmem:[%s261 + $0x164] sm:$0xf]
      %v3859 = vld [vmem:[%s261 + $0x168] sm:$0xf]
      %v3860 = vld [vmem:[%s261 + $0x16c] sm:$0xf]
      %v3861 = vld [vmem:[%s261 + $0x170] sm:$0xf]
      %v3862 = vld [vmem:[%s261 + $0x174] sm:$0xf]
      %v3863 = vld [vmem:[%s261 + $0x178] sm:$0xf]
      %v3864 = vld [vmem:[%s261 + $0x17c] sm:$0xf]
      %v3865 = vld [vmem:[%s261 + $0x180] sm:$0xf]
      %v3866 = vld [vmem:[%s261 + $0x184] sm:$0xf]
      %v3867 = vld [vmem:[%s261 + $0x188] sm:$0xf]
      %v3868 = vld [vmem:[%s261 + $0x18c] sm:$0xf]
      %v3869 = vld [vmem:[%s261 + $0x190] sm:$0xf]
      %v3870 = vld [vmem:[%s261 + $0x194] sm:$0xf]
      %v3871 = vld [vmem:[%s261 + $0x198] sm:$0xf]
      %v3872 = vld [vmem:[%s261 + $0x19c] sm:$0xf]
      %v3873 = vld [vmem:[%s261 + $0x1a0] sm:$0xf]
      %v3874 = vld [vmem:[%s261 + $0x1a4] sm:$0xf]
      %v3875 = vld [vmem:[%s261 + $0x1a8] sm:$0xf]
      %v3876 = vld [vmem:[%s261 + $0x1ac] sm:$0xf]
      %v3877 = vld [vmem:[%s261 + $0x1b0] sm:$0xf]
      %v3878 = vld [vmem:[%s261 + $0x1b4] sm:$0xf]
      %v3879 = vld [vmem:[%s261 + $0x1b8] sm:$0xf]
      %v3880 = vld [vmem:[%s261 + $0x1bc] sm:$0xf]
      %v3881 = vld [vmem:[%s261 + $0x1c0] sm:$0xf]
      %v3882 = vld [vmem:[%s261 + $0x1c4] sm:$0xf]
      %v3883 = vld [vmem:[%s261 + $0x1c8] sm:$0xf]
      %v3884 = vld [vmem:[%s261 + $0x1cc] sm:$0xf]
      %v3885 = vld [vmem:[%s261 + $0x1d0] sm:$0xf]
      %v3886 = vld [vmem:[%s261 + $0x1d4] sm:$0xf]
      %v3887 = vld [vmem:[%s261 + $0x1d8] sm:$0xf]
      %v3888 = vld [vmem:[%s261 + $0x1dc] sm:$0xf]
      %v3889 = vld [vmem:[%s261 + $0x1e0] sm:$0xf]
      %v3890 = vld [vmem:[%s261 + $0x1e4] sm:$0xf]
      %v3891 = vld [vmem:[%s261 + $0x1e8] sm:$0xf]
      %v3892 = vld [vmem:[%s261 + $0x1ec] sm:$0xf]
      %v3893 = vld [vmem:[%s261 + $0x1f0] sm:$0xf]
      %v3894 = vld [vmem:[%s261 + $0x1f4] sm:$0xf]
      %v3895 = vld [vmem:[%s261 + $0x1f8] sm:$0xf]
      %v3896 = vld [vmem:[%s261 + $0x1fc] sm:$0xf]
      %v3897 = vunpack.c.l.bf16 %v3769
      %v3898 = vunpack.c.l.bf16 %v3770
      %v3899 = vunpack.c.l.bf16 %v3771
      %v3900 = vunpack.c.l.bf16 %v3772
      %v3901 = vunpack.c.l.bf16 %v3773
      %v3902 = vunpack.c.l.bf16 %v3774
      %v3903 = vunpack.c.l.bf16 %v3775
      %v3904 = vunpack.c.l.bf16 %v3776
      %v3905 = vunpack.c.l.bf16 %v3777
      %v3906 = vunpack.c.l.bf16 %v3778
      %v3907 = vunpack.c.l.bf16 %v3779
      %v3908 = vunpack.c.l.bf16 %v3780
      %v3909 = vunpack.c.l.bf16 %v3781
      %v3910 = vunpack.c.l.bf16 %v3782
      %v3911 = vunpack.c.l.bf16 %v3783
      %v3912 = vunpack.c.l.bf16 %v3784
      %v3913 = vunpack.c.l.bf16 %v3785
      %v3914 = vunpack.c.l.bf16 %v3786
      %v3915 = vunpack.c.l.bf16 %v3787
      %v3916 = vunpack.c.l.bf16 %v3788
      %v3917 = vunpack.c.l.bf16 %v3789
      %v3918 = vunpack.c.l.bf16 %v3790
      %v3919 = vunpack.c.l.bf16 %v3791
      %v3920 = vunpack.c.l.bf16 %v3792
      %v3921 = vunpack.c.l.bf16 %v3793
      %v3922 = vunpack.c.l.bf16 %v3794
      %v3923 = vunpack.c.l.bf16 %v3795
      %v3924 = vunpack.c.l.bf16 %v3796
      %v3925 = vunpack.c.l.bf16 %v3797
      %v3926 = vunpack.c.l.bf16 %v3798
      %v3927 = vunpack.c.l.bf16 %v3799
      %v3928 = vunpack.c.l.bf16 %v3800
      %v3929 = vunpack.c.l.bf16 %v3801
      %v3930 = vunpack.c.l.bf16 %v3802
      %v3931 = vunpack.c.l.bf16 %v3803
      %v3932 = vunpack.c.l.bf16 %v3804
      %v3933 = vunpack.c.l.bf16 %v3805
      %v3934 = vunpack.c.l.bf16 %v3806
      %v3935 = vunpack.c.l.bf16 %v3807
      %v3936 = vunpack.c.l.bf16 %v3808
      %v3937 = vunpack.c.l.bf16 %v3809
      %v3938 = vunpack.c.l.bf16 %v3810
      %v3939 = vunpack.c.l.bf16 %v3811
      %v3940 = vunpack.c.l.bf16 %v3812
      %v3941 = vunpack.c.l.bf16 %v3813
      %v3942 = vunpack.c.l.bf16 %v3814
      %v3943 = vunpack.c.l.bf16 %v3815
      %v3944 = vunpack.c.l.bf16 %v3816
      %v3945 = vunpack.c.l.bf16 %v3817
      %v3946 = vunpack.c.l.bf16 %v3818
      %v3947 = vunpack.c.l.bf16 %v3819
      %v3948 = vunpack.c.l.bf16 %v3820
      %v3949 = vunpack.c.l.bf16 %v3821
      %v3950 = vunpack.c.l.bf16 %v3822
      %v3951 = vunpack.c.l.bf16 %v3823
      %v3952 = vunpack.c.l.bf16 %v3824
      %v3953 = vunpack.c.l.bf16 %v3825
      %v3954 = vunpack.c.l.bf16 %v3826
      %v3955 = vunpack.c.l.bf16 %v3827
      %v3956 = vunpack.c.l.bf16 %v3828
      %v3957 = vunpack.c.l.bf16 %v3829
      %v3958 = vunpack.c.l.bf16 %v3830
      %v3959 = vunpack.c.l.bf16 %v3831
      %v3960 = vunpack.c.l.bf16 %v3832
      %v3961 = vunpack.c.l.bf16 %v3833
      %v3962 = vunpack.c.l.bf16 %v3834
      %v3963 = vunpack.c.l.bf16 %v3835
      %v3964 = vunpack.c.l.bf16 %v3836
      %v3965 = vunpack.c.l.bf16 %v3837
      %v3966 = vunpack.c.l.bf16 %v3838
      %v3967 = vunpack.c.l.bf16 %v3839
      %v3968 = vunpack.c.l.bf16 %v3840
      %v3969 = vunpack.c.l.bf16 %v3841
      %v3970 = vunpack.c.l.bf16 %v3842
      %v3971 = vunpack.c.l.bf16 %v3843
      %v3972 = vunpack.c.l.bf16 %v3844
      %v3973 = vunpack.c.l.bf16 %v3845
      %v3974 = vunpack.c.l.bf16 %v3846
      %v3975 = vunpack.c.l.bf16 %v3847
      %v3976 = vunpack.c.l.bf16 %v3848
      %v3977 = vunpack.c.l.bf16 %v3849
      %v3978 = vunpack.c.l.bf16 %v3850
      %v3979 = vunpack.c.l.bf16 %v3851
      %v3980 = vunpack.c.l.bf16 %v3852
      %v3981 = vunpack.c.l.bf16 %v3853
      %v3982 = vunpack.c.l.bf16 %v3854
      %v3983 = vunpack.c.l.bf16 %v3855
      %v3984 = vunpack.c.l.bf16 %v3856
      %v3985 = vunpack.c.l.bf16 %v3857
      %v3986 = vunpack.c.l.bf16 %v3858
      %v3987 = vunpack.c.l.bf16 %v3859
      %v3988 = vunpack.c.l.bf16 %v3860
      %v3989 = vunpack.c.l.bf16 %v3861
      %v3990 = vunpack.c.l.bf16 %v3862
      %v3991 = vunpack.c.l.bf16 %v3863
      %v3992 = vunpack.c.l.bf16 %v3864
      %v3993 = vunpack.c.l.bf16 %v3865
      %v3994 = vunpack.c.l.bf16 %v3866
      %v3995 = vunpack.c.l.bf16 %v3867
      %v3996 = vunpack.c.l.bf16 %v3868
      %v3997 = vunpack.c.l.bf16 %v3869
      %v3998 = vunpack.c.l.bf16 %v3870
      %v3999 = vunpack.c.l.bf16 %v3871
      %v4000 = vunpack.c.l.bf16 %v3872
      %v4001 = vunpack.c.l.bf16 %v3873
      %v4002 = vunpack.c.l.bf16 %v3874
      %v4003 = vunpack.c.l.bf16 %v3875
      %v4004 = vunpack.c.l.bf16 %v3876
      %v4005 = vunpack.c.l.bf16 %v3877
      %v4006 = vunpack.c.l.bf16 %v3878
      %v4007 = vunpack.c.l.bf16 %v3879
      %v4008 = vunpack.c.l.bf16 %v3880
      %v4009 = vunpack.c.l.bf16 %v3881
      %v4010 = vunpack.c.l.bf16 %v3882
      %v4011 = vunpack.c.l.bf16 %v3883
      %v4012 = vunpack.c.l.bf16 %v3884
      %v4013 = vunpack.c.l.bf16 %v3885
      %v4014 = vunpack.c.l.bf16 %v3886
      %v4015 = vunpack.c.l.bf16 %v3887
      %v4016 = vunpack.c.l.bf16 %v3888
      %v4017 = vunpack.c.l.bf16 %v3889
      %v4018 = vunpack.c.l.bf16 %v3890
      %v4019 = vunpack.c.l.bf16 %v3891
      %v4020 = vunpack.c.l.bf16 %v3892
      %v4021 = vunpack.c.l.bf16 %v3893
      %v4022 = vunpack.c.l.bf16 %v3894
      %v4023 = vunpack.c.l.bf16 %v3895
      %v4024 = vunpack.c.l.bf16 %v3896
      %v4025 = vadd.f32 %v3641, %v3897
      %v4026 = vadd.f32 %v3642, %v3898
      %v4027 = vadd.f32 %v3643, %v3899
      %v4028 = vadd.f32 %v3644, %v3900
      %v4029 = vadd.f32 %v3645, %v3901
      %v4030 = vadd.f32 %v3646, %v3902
      %v4031 = vadd.f32 %v3647, %v3903
      %v4032 = vadd.f32 %v3648, %v3904
      %v4033 = vadd.f32 %v3649, %v3905
      %v4034 = vadd.f32 %v3650, %v3906
      %v4035 = vadd.f32 %v3651, %v3907
      %v4036 = vadd.f32 %v3652, %v3908
      %v4037 = vadd.f32 %v3653, %v3909
      %v4038 = vadd.f32 %v3654, %v3910
      %v4039 = vadd.f32 %v3655, %v3911
      %v4040 = vadd.f32 %v3656, %v3912
      %v4041 = vadd.f32 %v3657, %v3913
      %v4042 = vadd.f32 %v3658, %v3914
      %v4043 = vadd.f32 %v3659, %v3915
      %v4044 = vadd.f32 %v3660, %v3916
      %v4045 = vadd.f32 %v3661, %v3917
      %v4046 = vadd.f32 %v3662, %v3918
      %v4047 = vadd.f32 %v3663, %v3919
      %v4048 = vadd.f32 %v3664, %v3920
      %v4049 = vadd.f32 %v3665, %v3921
      %v4050 = vadd.f32 %v3666, %v3922
      %v4051 = vadd.f32 %v3667, %v3923
      %v4052 = vadd.f32 %v3668, %v3924
      %v4053 = vadd.f32 %v3669, %v3925
      %v4054 = vadd.f32 %v3670, %v3926
      %v4055 = vadd.f32 %v3671, %v3927
      %v4056 = vadd.f32 %v3672, %v3928
      %v4057 = vadd.f32 %v3673, %v3929
      %v4058 = vadd.f32 %v3674, %v3930
      %v4059 = vadd.f32 %v3675, %v3931
      %v4060 = vadd.f32 %v3676, %v3932
      %v4061 = vadd.f32 %v3677, %v3933
      %v4062 = vadd.f32 %v3678, %v3934
      %v4063 = vadd.f32 %v3679, %v3935
      %v4064 = vadd.f32 %v3680, %v3936
      %v4065 = vadd.f32 %v3681, %v3937
      %v4066 = vadd.f32 %v3682, %v3938
      %v4067 = vadd.f32 %v3683, %v3939
      %v4068 = vadd.f32 %v3684, %v3940
      %v4069 = vadd.f32 %v3685, %v3941
      %v4070 = vadd.f32 %v3686, %v3942
      %v4071 = vadd.f32 %v3687, %v3943
      %v4072 = vadd.f32 %v3688, %v3944
      %v4073 = vadd.f32 %v3689, %v3945
      %v4074 = vadd.f32 %v3690, %v3946
      %v4075 = vadd.f32 %v3691, %v3947
      %v4076 = vadd.f32 %v3692, %v3948
      %v4077 = vadd.f32 %v3693, %v3949
      %v4078 = vadd.f32 %v3694, %v3950
      %v4079 = vadd.f32 %v3695, %v3951
      %v4080 = vadd.f32 %v3696, %v3952
      %v4081 = vadd.f32 %v3697, %v3953
      %v4082 = vadd.f32 %v3698, %v3954
      %v4083 = vadd.f32 %v3699, %v3955
      %v4084 = vadd.f32 %v3700, %v3956
      %v4085 = vadd.f32 %v3701, %v3957
      %v4086 = vadd.f32 %v3702, %v3958
      %v4087 = vadd.f32 %v3703, %v3959
      %v4088 = vadd.f32 %v3704, %v3960
      %v4089 = vadd.f32 %v3705, %v3961
      %v4090 = vadd.f32 %v3706, %v3962
      %v4091 = vadd.f32 %v3707, %v3963
      %v4092 = vadd.f32 %v3708, %v3964
      %v4093 = vadd.f32 %v3709, %v3965
      %v4094 = vadd.f32 %v3710, %v3966
      %v4095 = vadd.f32 %v3711, %v3967
      %v4096 = vadd.f32 %v3712, %v3968
      %v4097 = vadd.f32 %v3713, %v3969
      %v4098 = vadd.f32 %v3714, %v3970
      %v4099 = vadd.f32 %v3715, %v3971
      %v4100 = vadd.f32 %v3716, %v3972
      %v4101 = vadd.f32 %v3717, %v3973
      %v4102 = vadd.f32 %v3718, %v3974
      %v4103 = vadd.f32 %v3719, %v3975
      %v4104 = vadd.f32 %v3720, %v3976
      %v4105 = vadd.f32 %v3721, %v3977
      %v4106 = vadd.f32 %v3722, %v3978
      %v4107 = vadd.f32 %v3723, %v3979
      %v4108 = vadd.f32 %v3724, %v3980
      %v4109 = vadd.f32 %v3725, %v3981
      %v4110 = vadd.f32 %v3726, %v3982
      %v4111 = vadd.f32 %v3727, %v3983
      %v4112 = vadd.f32 %v3728, %v3984
      %v4113 = vadd.f32 %v3729, %v3985
      %v4114 = vadd.f32 %v3730, %v3986
      %v4115 = vadd.f32 %v3731, %v3987
      %v4116 = vadd.f32 %v3732, %v3988
      %v4117 = vadd.f32 %v3733, %v3989
      %v4118 = vadd.f32 %v3734, %v3990
      %v4119 = vadd.f32 %v3735, %v3991
      %v4120 = vadd.f32 %v3736, %v3992
      %v4121 = vadd.f32 %v3737, %v3993
      %v4122 = vadd.f32 %v3738, %v3994
      %v4123 = vadd.f32 %v3739, %v3995
      %v4124 = vadd.f32 %v3740, %v3996
      %v4125 = vadd.f32 %v3741, %v3997
      %v4126 = vadd.f32 %v3742, %v3998
      %v4127 = vadd.f32 %v3743, %v3999
      %v4128 = vadd.f32 %v3744, %v4000
      %v4129 = vadd.f32 %v3745, %v4001
      %v4130 = vadd.f32 %v3746, %v4002
      %v4131 = vadd.f32 %v3747, %v4003
      %v4132 = vadd.f32 %v3748, %v4004
      %v4133 = vadd.f32 %v3749, %v4005
      %v4134 = vadd.f32 %v3750, %v4006
      %v4135 = vadd.f32 %v3751, %v4007
      %v4136 = vadd.f32 %v3752, %v4008
      %v4137 = vadd.f32 %v3753, %v4009
      %v4138 = vadd.f32 %v3754, %v4010
      %v4139 = vadd.f32 %v3755, %v4011
      %v4140 = vadd.f32 %v3756, %v4012
      %v4141 = vadd.f32 %v3757, %v4013
      %v4142 = vadd.f32 %v3758, %v4014
      %v4143 = vadd.f32 %v3759, %v4015
      %v4144 = vadd.f32 %v3760, %v4016
      %v4145 = vadd.f32 %v3761, %v4017
      %v4146 = vadd.f32 %v3762, %v4018
      %v4147 = vadd.f32 %v3763, %v4019
      %v4148 = vadd.f32 %v3764, %v4020
      %v4149 = vadd.f32 %v3765, %v4021
      %v4150 = vadd.f32 %v3766, %v4022
      %v4151 = vadd.f32 %v3767, %v4023
      %v4152 = vadd.f32 %v3768, %v4024
      %v4153 = vadd.f32 %v4025, %v4026
      %v4154 = vadd.f32 %v4153, %v4027
      %v4155 = vadd.f32 %v4154, %v4028
      %v4156 = vadd.f32 %v4155, %v4029
      %v4157 = vadd.f32 %v4156, %v4030
      %v4158 = vadd.f32 %v4157, %v4031
      %v4159 = vadd.f32 %v4158, %v4032
      %v4160 = vadd.f32 %v4159, %v4033
      %v4161 = vadd.f32 %v4160, %v4034
      %v4162 = vadd.f32 %v4161, %v4035
      %v4163 = vadd.f32 %v4162, %v4036
      %v4164 = vadd.f32 %v4163, %v4037
      %v4165 = vadd.f32 %v4164, %v4038
      %v4166 = vadd.f32 %v4165, %v4039
      %v4167 = vadd.f32 %v4166, %v4040
      %v4168 = vadd.f32 %v4167, %v4041
      %v4169 = vadd.f32 %v4168, %v4042
      %v4170 = vadd.f32 %v4169, %v4043
      %v4171 = vadd.f32 %v4170, %v4044
      %v4172 = vadd.f32 %v4171, %v4045
      %v4173 = vadd.f32 %v4172, %v4046
      %v4174 = vadd.f32 %v4173, %v4047
      %v4175 = vadd.f32 %v4174, %v4048
      %v4176 = vadd.f32 %v4175, %v4049
      %v4177 = vadd.f32 %v4176, %v4050
      %v4178 = vadd.f32 %v4177, %v4051
      %v4179 = vadd.f32 %v4178, %v4052
      %v4180 = vadd.f32 %v4179, %v4053
      %v4181 = vadd.f32 %v4180, %v4054
      %v4182 = vadd.f32 %v4181, %v4055
      %v4183 = vadd.f32 %v4182, %v4056
      %v4184 = vadd.f32 %v4183, %v4057
      %v4185 = vadd.f32 %v4184, %v4058
      %v4186 = vadd.f32 %v4185, %v4059
      %v4187 = vadd.f32 %v4186, %v4060
      %v4188 = vadd.f32 %v4187, %v4061
      %v4189 = vadd.f32 %v4188, %v4062
      %v4190 = vadd.f32 %v4189, %v4063
      %v4191 = vadd.f32 %v4190, %v4064
      %v4192 = vadd.f32 %v4191, %v4065
      %v4193 = vadd.f32 %v4192, %v4066
      %v4194 = vadd.f32 %v4193, %v4067
      %v4195 = vadd.f32 %v4194, %v4068
      %v4196 = vadd.f32 %v4195, %v4069
      %v4197 = vadd.f32 %v4196, %v4070
      %v4198 = vadd.f32 %v4197, %v4071
      %v4199 = vadd.f32 %v4198, %v4072
      %v4200 = vadd.f32 %v4199, %v4073
      %v4201 = vadd.f32 %v4200, %v4074
      %v4202 = vadd.f32 %v4201, %v4075
      %v4203 = vadd.f32 %v4202, %v4076
      %v4204 = vadd.f32 %v4203, %v4077
      %v4205 = vadd.f32 %v4204, %v4078
      %v4206 = vadd.f32 %v4205, %v4079
      %v4207 = vadd.f32 %v4206, %v4080
      %v4208 = vadd.f32 %v4207, %v4081
      %v4209 = vadd.f32 %v4208, %v4082
      %v4210 = vadd.f32 %v4209, %v4083
      %v4211 = vadd.f32 %v4210, %v4084
      %v4212 = vadd.f32 %v4211, %v4085
      %v4213 = vadd.f32 %v4212, %v4086
      %v4214 = vadd.f32 %v4213, %v4087
      %v4215 = vadd.f32 %v4214, %v4088
      %v4216 = vadd.f32 %v4215, %v4089
      %v4217 = vadd.f32 %v4216, %v4090
      %v4218 = vadd.f32 %v4217, %v4091
      %v4219 = vadd.f32 %v4218, %v4092
      %v4220 = vadd.f32 %v4219, %v4093
      %v4221 = vadd.f32 %v4220, %v4094
      %v4222 = vadd.f32 %v4221, %v4095
      %v4223 = vadd.f32 %v4222, %v4096
      %v4224 = vadd.f32 %v4223, %v4097
      %v4225 = vadd.f32 %v4224, %v4098
      %v4226 = vadd.f32 %v4225, %v4099
      %v4227 = vadd.f32 %v4226, %v4100
      %v4228 = vadd.f32 %v4227, %v4101
      %v4229 = vadd.f32 %v4228, %v4102
      %v4230 = vadd.f32 %v4229, %v4103
      %v4231 = vadd.f32 %v4230, %v4104
      %v4232 = vadd.f32 %v4231, %v4105
      %v4233 = vadd.f32 %v4232, %v4106
      %v4234 = vadd.f32 %v4233, %v4107
      %v4235 = vadd.f32 %v4234, %v4108
      %v4236 = vadd.f32 %v4235, %v4109
      %v4237 = vadd.f32 %v4236, %v4110
      %v4238 = vadd.f32 %v4237, %v4111
      %v4239 = vadd.f32 %v4238, %v4112
      %v4240 = vadd.f32 %v4239, %v4113
      %v4241 = vadd.f32 %v4240, %v4114
      %v4242 = vadd.f32 %v4241, %v4115
      %v4243 = vadd.f32 %v4242, %v4116
      %v4244 = vadd.f32 %v4243, %v4117
      %v4245 = vadd.f32 %v4244, %v4118
      %v4246 = vadd.f32 %v4245, %v4119
      %v4247 = vadd.f32 %v4246, %v4120
      %v4248 = vadd.f32 %v4247, %v4121
      %v4249 = vadd.f32 %v4248, %v4122
      %v4250 = vadd.f32 %v4249, %v4123
      %v4251 = vadd.f32 %v4250, %v4124
      %v4252 = vadd.f32 %v4251, %v4125
      %v4253 = vadd.f32 %v4252, %v4126
      %v4254 = vadd.f32 %v4253, %v4127
      %v4255 = vadd.f32 %v4254, %v4128
      %v4256 = vadd.f32 %v4255, %v4129
      %v4257 = vadd.f32 %v4256, %v4130
      %v4258 = vadd.f32 %v4257, %v4131
      %v4259 = vadd.f32 %v4258, %v4132
      %v4260 = vadd.f32 %v4259, %v4133
      %v4261 = vadd.f32 %v4260, %v4134
      %v4262 = vadd.f32 %v4261, %v4135
      %v4263 = vadd.f32 %v4262, %v4136
      %v4264 = vadd.f32 %v4263, %v4137
      %v4265 = vadd.f32 %v4264, %v4138
      %v4266 = vadd.f32 %v4265, %v4139
      %v4267 = vadd.f32 %v4266, %v4140
      %v4268 = vadd.f32 %v4267, %v4141
      %v4269 = vadd.f32 %v4268, %v4142
      %v4270 = vadd.f32 %v4269, %v4143
      %v4271 = vadd.f32 %v4270, %v4144
      %v4272 = vadd.f32 %v4271, %v4145
      %v4273 = vadd.f32 %v4272, %v4146
      %v4274 = vadd.f32 %v4273, %v4147
      %v4275 = vadd.f32 %v4274, %v4148
      %v4276 = vadd.f32 %v4275, %v4149
      %v4277 = vadd.f32 %v4276, %v4150
      %v4278 = vadd.f32 %v4277, %v4151
      %v4279 = vadd.f32 %v4278, %v4152
      %v4280 = vrot.slane %v4279, 4
      %v4281 = vadd.f32 %v4279, %v4280
      %v4282 = vrot.slane %v4281, 2
      %v4283 = vadd.f32 %v4281, %v4282
      %v4284 = vrot.slane %v4283, 1
      %v4285 = vadd.f32 %v4283, %v4284
      %v4286 = vmul.f32 %v4285, 0.0009765625
      %v4287 = vmul.f32 %v4025, %v4025
      %v4288 = vmul.f32 %v4026, %v4026
      %v4289 = vmul.f32 %v4027, %v4027
      %v4290 = vmul.f32 %v4028, %v4028
      %v4291 = vmul.f32 %v4029, %v4029
      %v4292 = vmul.f32 %v4030, %v4030
      %v4293 = vmul.f32 %v4031, %v4031
      %v4294 = vmul.f32 %v4032, %v4032
      %v4295 = vmul.f32 %v4033, %v4033
      %v4296 = vmul.f32 %v4034, %v4034
      %v4297 = vmul.f32 %v4035, %v4035
      %v4298 = vmul.f32 %v4036, %v4036
      %v4299 = vmul.f32 %v4037, %v4037
      %v4300 = vmul.f32 %v4038, %v4038
      %v4301 = vmul.f32 %v4039, %v4039
      %v4302 = vmul.f32 %v4040, %v4040
      %v4303 = vmul.f32 %v4041, %v4041
      %v4304 = vmul.f32 %v4042, %v4042
      %v4305 = vmul.f32 %v4043, %v4043
      %v4306 = vmul.f32 %v4044, %v4044
      %v4307 = vmul.f32 %v4045, %v4045
      %v4308 = vmul.f32 %v4046, %v4046
      %v4309 = vmul.f32 %v4047, %v4047
      %v4310 = vmul.f32 %v4048, %v4048
      %v4311 = vmul.f32 %v4049, %v4049
      %v4312 = vmul.f32 %v4050, %v4050
      %v4313 = vmul.f32 %v4051, %v4051
      %v4314 = vmul.f32 %v4052, %v4052
      %v4315 = vmul.f32 %v4053, %v4053
      %v4316 = vmul.f32 %v4054, %v4054
      %v4317 = vmul.f32 %v4055, %v4055
      %v4318 = vmul.f32 %v4056, %v4056
      %v4319 = vmul.f32 %v4057, %v4057
      %v4320 = vmul.f32 %v4058, %v4058
      %v4321 = vmul.f32 %v4059, %v4059
      %v4322 = vmul.f32 %v4060, %v4060
      %v4323 = vmul.f32 %v4061, %v4061
      %v4324 = vmul.f32 %v4062, %v4062
      %v4325 = vmul.f32 %v4063, %v4063
      %v4326 = vmul.f32 %v4064, %v4064
      %v4327 = vmul.f32 %v4065, %v4065
      %v4328 = vmul.f32 %v4066, %v4066
      %v4329 = vmul.f32 %v4067, %v4067
      %v4330 = vmul.f32 %v4068, %v4068
      %v4331 = vmul.f32 %v4069, %v4069
      %v4332 = vmul.f32 %v4070, %v4070
      %v4333 = vmul.f32 %v4071, %v4071
      %v4334 = vmul.f32 %v4072, %v4072
      %v4335 = vmul.f32 %v4073, %v4073
      %v4336 = vmul.f32 %v4074, %v4074
      %v4337 = vmul.f32 %v4075, %v4075
      %v4338 = vmul.f32 %v4076, %v4076
      %v4339 = vmul.f32 %v4077, %v4077
      %v4340 = vmul.f32 %v4078, %v4078
      %v4341 = vmul.f32 %v4079, %v4079
      %v4342 = vmul.f32 %v4080, %v4080
      %v4343 = vmul.f32 %v4081, %v4081
      %v4344 = vmul.f32 %v4082, %v4082
      %v4345 = vmul.f32 %v4083, %v4083
      %v4346 = vmul.f32 %v4084, %v4084
      %v4347 = vmul.f32 %v4085, %v4085
      %v4348 = vmul.f32 %v4086, %v4086
      %v4349 = vmul.f32 %v4087, %v4087
      %v4350 = vmul.f32 %v4088, %v4088
      %v4351 = vmul.f32 %v4089, %v4089
      %v4352 = vmul.f32 %v4090, %v4090
      %v4353 = vmul.f32 %v4091, %v4091
      %v4354 = vmul.f32 %v4092, %v4092
      %v4355 = vmul.f32 %v4093, %v4093
      %v4356 = vmul.f32 %v4094, %v4094
      %v4357 = vmul.f32 %v4095, %v4095
      %v4358 = vmul.f32 %v4096, %v4096
      %v4359 = vmul.f32 %v4097, %v4097
      %v4360 = vmul.f32 %v4098, %v4098
      %v4361 = vmul.f32 %v4099, %v4099
      %v4362 = vmul.f32 %v4100, %v4100
      %v4363 = vmul.f32 %v4101, %v4101
      %v4364 = vmul.f32 %v4102, %v4102
      %v4365 = vmul.f32 %v4103, %v4103
      %v4366 = vmul.f32 %v4104, %v4104
      %v4367 = vmul.f32 %v4105, %v4105
      %v4368 = vmul.f32 %v4106, %v4106
      %v4369 = vmul.f32 %v4107, %v4107
      %v4370 = vmul.f32 %v4108, %v4108
      %v4371 = vmul.f32 %v4109, %v4109
      %v4372 = vmul.f32 %v4110, %v4110
      %v4373 = vmul.f32 %v4111, %v4111
      %v4374 = vmul.f32 %v4112, %v4112
      %v4375 = vmul.f32 %v4113, %v4113
      %v4376 = vmul.f32 %v4114, %v4114
      %v4377 = vmul.f32 %v4115, %v4115
      %v4378 = vmul.f32 %v4116, %v4116
      %v4379 = vmul.f32 %v4117, %v4117
      %v4380 = vmul.f32 %v4118, %v4118
      %v4381 = vmul.f32 %v4119, %v4119
      %v4382 = vmul.f32 %v4120, %v4120
      %v4383 = vmul.f32 %v4121, %v4121
      %v4384 = vmul.f32 %v4122, %v4122
      %v4385 = vmul.f32 %v4123, %v4123
      %v4386 = vmul.f32 %v4124, %v4124
      %v4387 = vmul.f32 %v4125, %v4125
      %v4388 = vmul.f32 %v4126, %v4126
      %v4389 = vmul.f32 %v4127, %v4127
      %v4390 = vmul.f32 %v4128, %v4128
      %v4391 = vmul.f32 %v4129, %v4129
      %v4392 = vmul.f32 %v4130, %v4130
      %v4393 = vmul.f32 %v4131, %v4131
      %v4394 = vmul.f32 %v4132, %v4132
      %v4395 = vmul.f32 %v4133, %v4133
      %v4396 = vmul.f32 %v4134, %v4134
      %v4397 = vmul.f32 %v4135, %v4135
      %v4398 = vmul.f32 %v4136, %v4136
      %v4399 = vmul.f32 %v4137, %v4137
      %v4400 = vmul.f32 %v4138, %v4138
      %v4401 = vmul.f32 %v4139, %v4139
      %v4402 = vmul.f32 %v4140, %v4140
      %v4403 = vmul.f32 %v4141, %v4141
      %v4404 = vmul.f32 %v4142, %v4142
      %v4405 = vmul.f32 %v4143, %v4143
      %v4406 = vmul.f32 %v4144, %v4144
      %v4407 = vmul.f32 %v4145, %v4145
      %v4408 = vmul.f32 %v4146, %v4146
      %v4409 = vmul.f32 %v4147, %v4147
      %v4410 = vmul.f32 %v4148, %v4148
      %v4411 = vmul.f32 %v4149, %v4149
      %v4412 = vmul.f32 %v4150, %v4150
      %v4413 = vmul.f32 %v4151, %v4151
      %v4414 = vmul.f32 %v4152, %v4152
      %v4415 = vadd.f32 %v4287, %v4288
      %v4416 = vadd.f32 %v4415, %v4289
      %v4417 = vadd.f32 %v4416, %v4290
      %v4418 = vadd.f32 %v4417, %v4291
      %v4419 = vadd.f32 %v4418, %v4292
      %v4420 = vadd.f32 %v4419, %v4293
      %v4421 = vadd.f32 %v4420, %v4294
      %v4422 = vadd.f32 %v4421, %v4295
      %v4423 = vadd.f32 %v4422, %v4296
      %v4424 = vadd.f32 %v4423, %v4297
      %v4425 = vadd.f32 %v4424, %v4298
      %v4426 = vadd.f32 %v4425, %v4299
      %v4427 = vadd.f32 %v4426, %v4300
      %v4428 = vadd.f32 %v4427, %v4301
      %v4429 = vadd.f32 %v4428, %v4302
      %v4430 = vadd.f32 %v4429, %v4303
      %v4431 = vadd.f32 %v4430, %v4304
      %v4432 = vadd.f32 %v4431, %v4305
      %v4433 = vadd.f32 %v4432, %v4306
      %v4434 = vadd.f32 %v4433, %v4307
      %v4435 = vadd.f32 %v4434, %v4308
      %v4436 = vadd.f32 %v4435, %v4309
      %v4437 = vadd.f32 %v4436, %v4310
      %v4438 = vadd.f32 %v4437, %v4311
      %v4439 = vadd.f32 %v4438, %v4312
      %v4440 = vadd.f32 %v4439, %v4313
      %v4441 = vadd.f32 %v4440, %v4314
      %v4442 = vadd.f32 %v4441, %v4315
      %v4443 = vadd.f32 %v4442, %v4316
      %v4444 = vadd.f32 %v4443, %v4317
      %v4445 = vadd.f32 %v4444, %v4318
      %v4446 = vadd.f32 %v4445, %v4319
      %v4447 = vadd.f32 %v4446, %v4320
      %v4448 = vadd.f32 %v4447, %v4321
      %v4449 = vadd.f32 %v4448, %v4322
      %v4450 = vadd.f32 %v4449, %v4323
      %v4451 = vadd.f32 %v4450, %v4324
      %v4452 = vadd.f32 %v4451, %v4325
      %v4453 = vadd.f32 %v4452, %v4326
      %v4454 = vadd.f32 %v4453, %v4327
      %v4455 = vadd.f32 %v4454, %v4328
      %v4456 = vadd.f32 %v4455, %v4329
      %v4457 = vadd.f32 %v4456, %v4330
      %v4458 = vadd.f32 %v4457, %v4331
      %v4459 = vadd.f32 %v4458, %v4332
      %v4460 = vadd.f32 %v4459, %v4333
      %v4461 = vadd.f32 %v4460, %v4334
      %v4462 = vadd.f32 %v4461, %v4335
      %v4463 = vadd.f32 %v4462, %v4336
      %v4464 = vadd.f32 %v4463, %v4337
      %v4465 = vadd.f32 %v4464, %v4338
      %v4466 = vadd.f32 %v4465, %v4339
      %v4467 = vadd.f32 %v4466, %v4340
      %v4468 = vadd.f32 %v4467, %v4341
      %v4469 = vadd.f32 %v4468, %v4342
      %v4470 = vadd.f32 %v4469, %v4343
      %v4471 = vadd.f32 %v4470, %v4344
      %v4472 = vadd.f32 %v4471, %v4345
      %v4473 = vadd.f32 %v4472, %v4346
      %v4474 = vadd.f32 %v4473, %v4347
      %v4475 = vadd.f32 %v4474, %v4348
      %v4476 = vadd.f32 %v4475, %v4349
      %v4477 = vadd.f32 %v4476, %v4350
      %v4478 = vadd.f32 %v4477, %v4351
      %v4479 = vadd.f32 %v4478, %v4352
      %v4480 = vadd.f32 %v4479, %v4353
      %v4481 = vadd.f32 %v4480, %v4354
      %v4482 = vadd.f32 %v4481, %v4355
      %v4483 = vadd.f32 %v4482, %v4356
      %v4484 = vadd.f32 %v4483, %v4357
      %v4485 = vadd.f32 %v4484, %v4358
      %v4486 = vadd.f32 %v4485, %v4359
      %v4487 = vadd.f32 %v4486, %v4360
      %v4488 = vadd.f32 %v4487, %v4361
      %v4489 = vadd.f32 %v4488, %v4362
      %v4490 = vadd.f32 %v4489, %v4363
      %v4491 = vadd.f32 %v4490, %v4364
      %v4492 = vadd.f32 %v4491, %v4365
      %v4493 = vadd.f32 %v4492, %v4366
      %v4494 = vadd.f32 %v4493, %v4367
      %v4495 = vadd.f32 %v4494, %v4368
      %v4496 = vadd.f32 %v4495, %v4369
      %v4497 = vadd.f32 %v4496, %v4370
      %v4498 = vadd.f32 %v4497, %v4371
      %v4499 = vadd.f32 %v4498, %v4372
      %v4500 = vadd.f32 %v4499, %v4373
      %v4501 = vadd.f32 %v4500, %v4374
      %v4502 = vadd.f32 %v4501, %v4375
      %v4503 = vadd.f32 %v4502, %v4376
      %v4504 = vadd.f32 %v4503, %v4377
      %v4505 = vadd.f32 %v4504, %v4378
      %v4506 = vadd.f32 %v4505, %v4379
      %v4507 = vadd.f32 %v4506, %v4380
      %v4508 = vadd.f32 %v4507, %v4381
      %v4509 = vadd.f32 %v4508, %v4382
      %v4510 = vadd.f32 %v4509, %v4383
      %v4511 = vadd.f32 %v4510, %v4384
      %v4512 = vadd.f32 %v4511, %v4385
      %v4513 = vadd.f32 %v4512, %v4386
      %v4514 = vadd.f32 %v4513, %v4387
      %v4515 = vadd.f32 %v4514, %v4388
      %v4516 = vadd.f32 %v4515, %v4389
      %v4517 = vadd.f32 %v4516, %v4390
      %v4518 = vadd.f32 %v4517, %v4391
      %v4519 = vadd.f32 %v4518, %v4392
      %v4520 = vadd.f32 %v4519, %v4393
      %v4521 = vadd.f32 %v4520, %v4394
      %v4522 = vadd.f32 %v4521, %v4395
      %v4523 = vadd.f32 %v4522, %v4396
      %v4524 = vadd.f32 %v4523, %v4397
      %v4525 = vadd.f32 %v4524, %v4398
      %v4526 = vadd.f32 %v4525, %v4399
      %v4527 = vadd.f32 %v4526, %v4400
      %v4528 = vadd.f32 %v4527, %v4401
      %v4529 = vadd.f32 %v4528, %v4402
      %v4530 = vadd.f32 %v4529, %v4403
      %v4531 = vadd.f32 %v4530, %v4404
      %v4532 = vadd.f32 %v4531, %v4405
      %v4533 = vadd.f32 %v4532, %v4406
      %v4534 = vadd.f32 %v4533, %v4407
      %v4535 = vadd.f32 %v4534, %v4408
      %v4536 = vadd.f32 %v4535, %v4409
      %v4537 = vadd.f32 %v4536, %v4410
      %v4538 = vadd.f32 %v4537, %v4411
      %v4539 = vadd.f32 %v4538, %v4412
      %v4540 = vadd.f32 %v4539, %v4413
      %v4541 = vadd.f32 %v4540, %v4414
      %v4542 = vrot.slane %v4541, 4
      %v4543 = vadd.f32 %v4541, %v4542
      %v4544 = vrot.slane %v4543, 2
      %v4545 = vadd.f32 %v4543, %v4544
      %v4546 = vrot.slane %v4545, 1
      %v4547 = vadd.f32 %v4545, %v4546
      %v4548 = vmul.f32 %v4547, 0.0009765625
      %v4549 = vmul.f32 %v4286, %v4286
      %v4550 = vsub.f32 %v4548, %v4549
      %v4551 = vmax.f32 %v4550, 0.0
      %v4552 = vld [vmem:[%s267] sm:$0x1]
      %v4553 = vsub.f32 %v4025, %v4286
      %v4554 = vsub.f32 %v4026, %v4286
      %v4555 = vsub.f32 %v4027, %v4286
      %v4556 = vsub.f32 %v4028, %v4286
      %v4557 = vsub.f32 %v4029, %v4286
      %v4558 = vsub.f32 %v4030, %v4286
      %v4559 = vsub.f32 %v4031, %v4286
      %v4560 = vsub.f32 %v4032, %v4286
      %v4561 = vsub.f32 %v4033, %v4286
      %v4562 = vsub.f32 %v4034, %v4286
      %v4563 = vsub.f32 %v4035, %v4286
      %v4564 = vsub.f32 %v4036, %v4286
      %v4565 = vsub.f32 %v4037, %v4286
      %v4566 = vsub.f32 %v4038, %v4286
      %v4567 = vsub.f32 %v4039, %v4286
      %v4568 = vsub.f32 %v4040, %v4286
      %v4569 = vsub.f32 %v4041, %v4286
      %v4570 = vsub.f32 %v4042, %v4286
      %v4571 = vsub.f32 %v4043, %v4286
      %v4572 = vsub.f32 %v4044, %v4286
      %v4573 = vsub.f32 %v4045, %v4286
      %v4574 = vsub.f32 %v4046, %v4286
      %v4575 = vsub.f32 %v4047, %v4286
      %v4576 = vsub.f32 %v4048, %v4286
      %v4577 = vsub.f32 %v4049, %v4286
      %v4578 = vsub.f32 %v4050, %v4286
      %v4579 = vsub.f32 %v4051, %v4286
      %v4580 = vsub.f32 %v4052, %v4286
      %v4581 = vsub.f32 %v4053, %v4286
      %v4582 = vsub.f32 %v4054, %v4286
      %v4583 = vsub.f32 %v4055, %v4286
      %v4584 = vsub.f32 %v4056, %v4286
      %v4585 = vsub.f32 %v4057, %v4286
      %v4586 = vsub.f32 %v4058, %v4286
      %v4587 = vsub.f32 %v4059, %v4286
      %v4588 = vsub.f32 %v4060, %v4286
      %v4589 = vsub.f32 %v4061, %v4286
      %v4590 = vsub.f32 %v4062, %v4286
      %v4591 = vsub.f32 %v4063, %v4286
      %v4592 = vsub.f32 %v4064, %v4286
      %v4593 = vsub.f32 %v4065, %v4286
      %v4594 = vsub.f32 %v4066, %v4286
      %v4595 = vsub.f32 %v4067, %v4286
      %v4596 = vsub.f32 %v4068, %v4286
      %v4597 = vsub.f32 %v4069, %v4286
      %v4598 = vsub.f32 %v4070, %v4286
      %v4599 = vsub.f32 %v4071, %v4286
      %v4600 = vsub.f32 %v4072, %v4286
      %v4601 = vsub.f32 %v4073, %v4286
      %v4602 = vsub.f32 %v4074, %v4286
      %v4603 = vsub.f32 %v4075, %v4286
      %v4604 = vsub.f32 %v4076, %v4286
      %v4605 = vsub.f32 %v4077, %v4286
      %v4606 = vsub.f32 %v4078, %v4286
      %v4607 = vsub.f32 %v4079, %v4286
      %v4608 = vsub.f32 %v4080, %v4286
      %v4609 = vsub.f32 %v4081, %v4286
      %v4610 = vsub.f32 %v4082, %v4286
      %v4611 = vsub.f32 %v4083, %v4286
      %v4612 = vsub.f32 %v4084, %v4286
      %v4613 = vsub.f32 %v4085, %v4286
      %v4614 = vsub.f32 %v4086, %v4286
      %v4615 = vsub.f32 %v4087, %v4286
      %v4616 = vsub.f32 %v4088, %v4286
      %v4617 = vsub.f32 %v4089, %v4286
      %v4618 = vsub.f32 %v4090, %v4286
      %v4619 = vsub.f32 %v4091, %v4286
      %v4620 = vsub.f32 %v4092, %v4286
      %v4621 = vsub.f32 %v4093, %v4286
      %v4622 = vsub.f32 %v4094, %v4286
      %v4623 = vsub.f32 %v4095, %v4286
      %v4624 = vsub.f32 %v4096, %v4286
      %v4625 = vsub.f32 %v4097, %v4286
      %v4626 = vsub.f32 %v4098, %v4286
      %v4627 = vsub.f32 %v4099, %v4286
      %v4628 = vsub.f32 %v4100, %v4286
      %v4629 = vsub.f32 %v4101, %v4286
      %v4630 = vsub.f32 %v4102, %v4286
      %v4631 = vsub.f32 %v4103, %v4286
      %v4632 = vsub.f32 %v4104, %v4286
      %v4633 = vsub.f32 %v4105, %v4286
      %v4634 = vsub.f32 %v4106, %v4286
      %v4635 = vsub.f32 %v4107, %v4286
      %v4636 = vsub.f32 %v4108, %v4286
      %v4637 = vsub.f32 %v4109, %v4286
      %v4638 = vsub.f32 %v4110, %v4286
      %v4639 = vsub.f32 %v4111, %v4286
      %v4640 = vsub.f32 %v4112, %v4286
      %v4641 = vsub.f32 %v4113, %v4286
      %v4642 = vsub.f32 %v4114, %v4286
      %v4643 = vsub.f32 %v4115, %v4286
      %v4644 = vsub.f32 %v4116, %v4286
      %v4645 = vsub.f32 %v4117, %v4286
      %v4646 = vsub.f32 %v4118, %v4286
      %v4647 = vsub.f32 %v4119, %v4286
      %v4648 = vsub.f32 %v4120, %v4286
      %v4649 = vsub.f32 %v4121, %v4286
      %v4650 = vsub.f32 %v4122, %v4286
      %v4651 = vsub.f32 %v4123, %v4286
      %v4652 = vsub.f32 %v4124, %v4286
      %v4653 = vsub.f32 %v4125, %v4286
      %v4654 = vsub.f32 %v4126, %v4286
      %v4655 = vsub.f32 %v4127, %v4286
      %v4656 = vsub.f32 %v4128, %v4286
      %v4657 = vsub.f32 %v4129, %v4286
      %v4658 = vsub.f32 %v4130, %v4286
      %v4659 = vsub.f32 %v4131, %v4286
      %v4660 = vsub.f32 %v4132, %v4286
      %v4661 = vsub.f32 %v4133, %v4286
      %v4662 = vsub.f32 %v4134, %v4286
      %v4663 = vsub.f32 %v4135, %v4286
      %v4664 = vsub.f32 %v4136, %v4286
      %v4665 = vsub.f32 %v4137, %v4286
      %v4666 = vsub.f32 %v4138, %v4286
      %v4667 = vsub.f32 %v4139, %v4286
      %v4668 = vsub.f32 %v4140, %v4286
      %v4669 = vsub.f32 %v4141, %v4286
      %v4670 = vsub.f32 %v4142, %v4286
      %v4671 = vsub.f32 %v4143, %v4286
      %v4672 = vsub.f32 %v4144, %v4286
      %v4673 = vsub.f32 %v4145, %v4286
      %v4674 = vsub.f32 %v4146, %v4286
      %v4675 = vsub.f32 %v4147, %v4286
      %v4676 = vsub.f32 %v4148, %v4286
      %v4677 = vsub.f32 %v4149, %v4286
      %v4678 = vsub.f32 %v4150, %v4286
      %v4679 = vsub.f32 %v4151, %v4286
      %v4680 = vsub.f32 %v4152, %v4286
      %v4681 = vadd.f32 %v4551, 1e-05
      %v4682 = vrsqrt.pop %v4681
      %v4683 = vmul.f32 %v4553, %v4682
      %v4684 = vmul.f32 %v4554, %v4682
      %v4685 = vmul.f32 %v4555, %v4682
      %v4686 = vmul.f32 %v4556, %v4682
      %v4687 = vmul.f32 %v4557, %v4682
      %v4688 = vmul.f32 %v4558, %v4682
      %v4689 = vmul.f32 %v4559, %v4682
      %v4690 = vmul.f32 %v4560, %v4682
      %v4691 = vmul.f32 %v4561, %v4682
      %v4692 = vmul.f32 %v4562, %v4682
      %v4693 = vmul.f32 %v4563, %v4682
      %v4694 = vmul.f32 %v4564, %v4682
      %v4695 = vmul.f32 %v4565, %v4682
      %v4696 = vmul.f32 %v4566, %v4682
      %v4697 = vmul.f32 %v4567, %v4682
      %v4698 = vmul.f32 %v4568, %v4682
      %v4699 = vmul.f32 %v4569, %v4682
      %v4700 = vmul.f32 %v4570, %v4682
      %v4701 = vmul.f32 %v4571, %v4682
      %v4702 = vmul.f32 %v4572, %v4682
      %v4703 = vmul.f32 %v4573, %v4682
      %v4704 = vmul.f32 %v4574, %v4682
      %v4705 = vmul.f32 %v4575, %v4682
      %v4706 = vmul.f32 %v4576, %v4682
      %v4707 = vmul.f32 %v4577, %v4682
      %v4708 = vmul.f32 %v4578, %v4682
      %v4709 = vmul.f32 %v4579, %v4682
      %v4710 = vmul.f32 %v4580, %v4682
      %v4711 = vmul.f32 %v4581, %v4682
      %v4712 = vmul.f32 %v4582, %v4682
      %v4713 = vmul.f32 %v4583, %v4682
      %v4714 = vmul.f32 %v4584, %v4682
      %v4715 = vmul.f32 %v4585, %v4682
      %v4716 = vmul.f32 %v4586, %v4682
      %v4717 = vmul.f32 %v4587, %v4682
      %v4718 = vmul.f32 %v4588, %v4682
      %v4719 = vmul.f32 %v4589, %v4682
      %v4720 = vmul.f32 %v4590, %v4682
      %v4721 = vmul.f32 %v4591, %v4682
      %v4722 = vmul.f32 %v4592, %v4682
      %v4723 = vmul.f32 %v4593, %v4682
      %v4724 = vmul.f32 %v4594, %v4682
      %v4725 = vmul.f32 %v4595, %v4682
      %v4726 = vmul.f32 %v4596, %v4682
      %v4727 = vmul.f32 %v4597, %v4682
      %v4728 = vmul.f32 %v4598, %v4682
      %v4729 = vmul.f32 %v4599, %v4682
      %v4730 = vmul.f32 %v4600, %v4682
      %v4731 = vmul.f32 %v4601, %v4682
      %v4732 = vmul.f32 %v4602, %v4682
      %v4733 = vmul.f32 %v4603, %v4682
      %v4734 = vmul.f32 %v4604, %v4682
      %v4735 = vmul.f32 %v4605, %v4682
      %v4736 = vmul.f32 %v4606, %v4682
      %v4737 = vmul.f32 %v4607, %v4682
      %v4738 = vmul.f32 %v4608, %v4682
      %v4739 = vmul.f32 %v4609, %v4682
      %v4740 = vmul.f32 %v4610, %v4682
      %v4741 = vmul.f32 %v4611, %v4682
      %v4742 = vmul.f32 %v4612, %v4682
      %v4743 = vmul.f32 %v4613, %v4682
      %v4744 = vmul.f32 %v4614, %v4682
      %v4745 = vmul.f32 %v4615, %v4682
      %v4746 = vmul.f32 %v4616, %v4682
      %v4747 = vmul.f32 %v4617, %v4682
      %v4748 = vmul.f32 %v4618, %v4682
      %v4749 = vmul.f32 %v4619, %v4682
      %v4750 = vmul.f32 %v4620, %v4682
      %v4751 = vmul.f32 %v4621, %v4682
      %v4752 = vmul.f32 %v4622, %v4682
      %v4753 = vmul.f32 %v4623, %v4682
      %v4754 = vmul.f32 %v4624, %v4682
      %v4755 = vmul.f32 %v4625, %v4682
      %v4756 = vmul.f32 %v4626, %v4682
      %v4757 = vmul.f32 %v4627, %v4682
      %v4758 = vmul.f32 %v4628, %v4682
      %v4759 = vmul.f32 %v4629, %v4682
      %v4760 = vmul.f32 %v4630, %v4682
      %v4761 = vmul.f32 %v4631, %v4682
      %v4762 = vmul.f32 %v4632, %v4682
      %v4763 = vmul.f32 %v4633, %v4682
      %v4764 = vmul.f32 %v4634, %v4682
      %v4765 = vmul.f32 %v4635, %v4682
      %v4766 = vmul.f32 %v4636, %v4682
      %v4767 = vmul.f32 %v4637, %v4682
      %v4768 = vmul.f32 %v4638, %v4682
      %v4769 = vmul.f32 %v4639, %v4682
      %v4770 = vmul.f32 %v4640, %v4682
      %v4771 = vmul.f32 %v4641, %v4682
      %v4772 = vmul.f32 %v4642, %v4682
      %v4773 = vmul.f32 %v4643, %v4682
      %v4774 = vmul.f32 %v4644, %v4682
      %v4775 = vmul.f32 %v4645, %v4682
      %v4776 = vmul.f32 %v4646, %v4682
      %v4777 = vmul.f32 %v4647, %v4682
      %v4778 = vmul.f32 %v4648, %v4682
      %v4779 = vmul.f32 %v4649, %v4682
      %v4780 = vmul.f32 %v4650, %v4682
      %v4781 = vmul.f32 %v4651, %v4682
      %v4782 = vmul.f32 %v4652, %v4682
      %v4783 = vmul.f32 %v4653, %v4682
      %v4784 = vmul.f32 %v4654, %v4682
      %v4785 = vmul.f32 %v4655, %v4682
      %v4786 = vmul.f32 %v4656, %v4682
      %v4787 = vmul.f32 %v4657, %v4682
      %v4788 = vmul.f32 %v4658, %v4682
      %v4789 = vmul.f32 %v4659, %v4682
      %v4790 = vmul.f32 %v4660, %v4682
      %v4791 = vmul.f32 %v4661, %v4682
      %v4792 = vmul.f32 %v4662, %v4682
      %v4793 = vmul.f32 %v4663, %v4682
      %v4794 = vmul.f32 %v4664, %v4682
      %v4795 = vmul.f32 %v4665, %v4682
      %v4796 = vmul.f32 %v4666, %v4682
      %v4797 = vmul.f32 %v4667, %v4682
      %v4798 = vmul.f32 %v4668, %v4682
      %v4799 = vmul.f32 %v4669, %v4682
      %v4800 = vmul.f32 %v4670, %v4682
      %v4801 = vmul.f32 %v4671, %v4682
      %v4802 = vmul.f32 %v4672, %v4682
      %v4803 = vmul.f32 %v4673, %v4682
      %v4804 = vmul.f32 %v4674, %v4682
      %v4805 = vmul.f32 %v4675, %v4682
      %v4806 = vmul.f32 %v4676, %v4682
      %v4807 = vmul.f32 %v4677, %v4682
      %v4808 = vmul.f32 %v4678, %v4682
      %v4809 = vmul.f32 %v4679, %v4682
      %v4810 = vmul.f32 %v4680, %v4682
      %v4812 = vlaneseq
      %v4813 = vshrl.u32 %v4812, 7
      %v4814 = vsub.s32 0, %v4813
      %v4815 = vrot.slane %v4552, %v4814
      %v4817 = vmul.f32 %v4815, %v4683
      %v4818 = vmul.f32 %v4815, %v4684
      %v4819 = vmul.f32 %v4815, %v4685
      %v4820 = vmul.f32 %v4815, %v4686
      %v4821 = vmul.f32 %v4815, %v4687
      %v4822 = vmul.f32 %v4815, %v4688
      %v4823 = vmul.f32 %v4815, %v4689
      %v4824 = vmul.f32 %v4815, %v4690
      %v4825 = vmul.f32 %v4815, %v4691
      %v4826 = vmul.f32 %v4815, %v4692
      %v4827 = vmul.f32 %v4815, %v4693
      %v4828 = vmul.f32 %v4815, %v4694
      %v4829 = vmul.f32 %v4815, %v4695
      %v4830 = vmul.f32 %v4815, %v4696
      %v4831 = vmul.f32 %v4815, %v4697
      %v4832 = vmul.f32 %v4815, %v4698
      %v4833 = vmul.f32 %v4815, %v4699
      %v4834 = vmul.f32 %v4815, %v4700
      %v4835 = vmul.f32 %v4815, %v4701
      %v4836 = vmul.f32 %v4815, %v4702
      %v4837 = vmul.f32 %v4815, %v4703
      %v4838 = vmul.f32 %v4815, %v4704
      %v4839 = vmul.f32 %v4815, %v4705
      %v4840 = vmul.f32 %v4815, %v4706
      %v4841 = vmul.f32 %v4815, %v4707
      %v4842 = vmul.f32 %v4815, %v4708
      %v4843 = vmul.f32 %v4815, %v4709
      %v4844 = vmul.f32 %v4815, %v4710
      %v4845 = vmul.f32 %v4815, %v4711
      %v4846 = vmul.f32 %v4815, %v4712
      %v4847 = vmul.f32 %v4815, %v4713
      %v4848 = vmul.f32 %v4815, %v4714
      %v4849 = vmul.f32 %v4815, %v4715
      %v4850 = vmul.f32 %v4815, %v4716
      %v4851 = vmul.f32 %v4815, %v4717
      %v4852 = vmul.f32 %v4815, %v4718
      %v4853 = vmul.f32 %v4815, %v4719
      %v4854 = vmul.f32 %v4815, %v4720
      %v4855 = vmul.f32 %v4815, %v4721
      %v4856 = vmul.f32 %v4815, %v4722
      %v4857 = vmul.f32 %v4815, %v4723
      %v4858 = vmul.f32 %v4815, %v4724
      %v4859 = vmul.f32 %v4815, %v4725
      %v4860 = vmul.f32 %v4815, %v4726
      %v4861 = vmul.f32 %v4815, %v4727
      %v4862 = vmul.f32 %v4815, %v4728
      %v4863 = vmul.f32 %v4815, %v4729
      %v4864 = vmul.f32 %v4815, %v4730
      %v4865 = vmul.f32 %v4815, %v4731
      %v4866 = vmul.f32 %v4815, %v4732
      %v4867 = vmul.f32 %v4815, %v4733
      %v4868 = vmul.f32 %v4815, %v4734
      %v4869 = vmul.f32 %v4815, %v4735
      %v4870 = vmul.f32 %v4815, %v4736
      %v4871 = vmul.f32 %v4815, %v4737
      %v4872 = vmul.f32 %v4815, %v4738
      %v4873 = vmul.f32 %v4815, %v4739
      %v4874 = vmul.f32 %v4815, %v4740
      %v4875 = vmul.f32 %v4815, %v4741
      %v4876 = vmul.f32 %v4815, %v4742
      %v4877 = vmul.f32 %v4815, %v4743
      %v4878 = vmul.f32 %v4815, %v4744
      %v4879 = vmul.f32 %v4815, %v4745
      %v4880 = vmul.f32 %v4815, %v4746
      %v4881 = vmul.f32 %v4815, %v4747
      %v4882 = vmul.f32 %v4815, %v4748
      %v4883 = vmul.f32 %v4815, %v4749
      %v4884 = vmul.f32 %v4815, %v4750
      %v4885 = vmul.f32 %v4815, %v4751
      %v4886 = vmul.f32 %v4815, %v4752
      %v4887 = vmul.f32 %v4815, %v4753
      %v4888 = vmul.f32 %v4815, %v4754
      %v4889 = vmul.f32 %v4815, %v4755
      %v4890 = vmul.f32 %v4815, %v4756
      %v4891 = vmul.f32 %v4815, %v4757
      %v4892 = vmul.f32 %v4815, %v4758
      %v4893 = vmul.f32 %v4815, %v4759
      %v4894 = vmul.f32 %v4815, %v4760
      %v4895 = vmul.f32 %v4815, %v4761
      %v4896 = vmul.f32 %v4815, %v4762
      %v4897 = vmul.f32 %v4815, %v4763
      %v4898 = vmul.f32 %v4815, %v4764
      %v4899 = vmul.f32 %v4815, %v4765
      %v4900 = vmul.f32 %v4815, %v4766
      %v4901 = vmul.f32 %v4815, %v4767
      %v4902 = vmul.f32 %v4815, %v4768
      %v4903 = vmul.f32 %v4815, %v4769
      %v4904 = vmul.f32 %v4815, %v4770
      %v4905 = vmul.f32 %v4815, %v4771
      %v4906 = vmul.f32 %v4815, %v4772
      %v4907 = vmul.f32 %v4815, %v4773
      %v4908 = vmul.f32 %v4815, %v4774
      %v4909 = vmul.f32 %v4815, %v4775
      %v4910 = vmul.f32 %v4815, %v4776
      %v4911 = vmul.f32 %v4815, %v4777
      %v4912 = vmul.f32 %v4815, %v4778
      %v4913 = vmul.f32 %v4815, %v4779
      %v4914 = vmul.f32 %v4815, %v4780
      %v4915 = vmul.f32 %v4815, %v4781
      %v4916 = vmul.f32 %v4815, %v4782
      %v4917 = vmul.f32 %v4815, %v4783
      %v4918 = vmul.f32 %v4815, %v4784
      %v4919 = vmul.f32 %v4815, %v4785
      %v4920 = vmul.f32 %v4815, %v4786
      %v4921 = vmul.f32 %v4815, %v4787
      %v4922 = vmul.f32 %v4815, %v4788
      %v4923 = vmul.f32 %v4815, %v4789
      %v4924 = vmul.f32 %v4815, %v4790
      %v4925 = vmul.f32 %v4815, %v4791
      %v4926 = vmul.f32 %v4815, %v4792
      %v4927 = vmul.f32 %v4815, %v4793
      %v4928 = vmul.f32 %v4815, %v4794
      %v4929 = vmul.f32 %v4815, %v4795
      %v4930 = vmul.f32 %v4815, %v4796
      %v4931 = vmul.f32 %v4815, %v4797
      %v4932 = vmul.f32 %v4815, %v4798
      %v4933 = vmul.f32 %v4815, %v4799
      %v4934 = vmul.f32 %v4815, %v4800
      %v4935 = vmul.f32 %v4815, %v4801
      %v4936 = vmul.f32 %v4815, %v4802
      %v4937 = vmul.f32 %v4815, %v4803
      %v4938 = vmul.f32 %v4815, %v4804
      %v4939 = vmul.f32 %v4815, %v4805
      %v4940 = vmul.f32 %v4815, %v4806
      %v4941 = vmul.f32 %v4815, %v4807
      %v4942 = vmul.f32 %v4815, %v4808
      %v4943 = vmul.f32 %v4815, %v4809
      %v4944 = vmul.f32 %v4815, %v4810
      %v4945 = vld [vmem:[%s264] sm:$0x1]
      %v4947 = vlaneseq
      %v4948 = vshrl.u32 %v4947, 7
      %v4949 = vsub.s32 0, %v4948
      %v4950 = vrot.slane %v4945, %v4949
      %v4952 = vadd.f32 %v4817, %v4950
      %v4953 = vadd.f32 %v4818, %v4950
      %v4954 = vadd.f32 %v4819, %v4950
      %v4955 = vadd.f32 %v4820, %v4950
      %v4956 = vadd.f32 %v4821, %v4950
      %v4957 = vadd.f32 %v4822, %v4950
      %v4958 = vadd.f32 %v4823, %v4950
      %v4959 = vadd.f32 %v4824, %v4950
      %v4960 = vadd.f32 %v4825, %v4950
      %v4961 = vadd.f32 %v4826, %v4950
      %v4962 = vadd.f32 %v4827, %v4950
      %v4963 = vadd.f32 %v4828, %v4950
      %v4964 = vadd.f32 %v4829, %v4950
      %v4965 = vadd.f32 %v4830, %v4950
      %v4966 = vadd.f32 %v4831, %v4950
      %v4967 = vadd.f32 %v4832, %v4950
      %v4968 = vadd.f32 %v4833, %v4950
      %v4969 = vadd.f32 %v4834, %v4950
      %v4970 = vadd.f32 %v4835, %v4950
      %v4971 = vadd.f32 %v4836, %v4950
      %v4972 = vadd.f32 %v4837, %v4950
      %v4973 = vadd.f32 %v4838, %v4950
      %v4974 = vadd.f32 %v4839, %v4950
      %v4975 = vadd.f32 %v4840, %v4950
      %v4976 = vadd.f32 %v4841, %v4950
      %v4977 = vadd.f32 %v4842, %v4950
      %v4978 = vadd.f32 %v4843, %v4950
      %v4979 = vadd.f32 %v4844, %v4950
      %v4980 = vadd.f32 %v4845, %v4950
      %v4981 = vadd.f32 %v4846, %v4950
      %v4982 = vadd.f32 %v4847, %v4950
      %v4983 = vadd.f32 %v4848, %v4950
      %v4984 = vadd.f32 %v4849, %v4950
      %v4985 = vadd.f32 %v4850, %v4950
      %v4986 = vadd.f32 %v4851, %v4950
      %v4987 = vadd.f32 %v4852, %v4950
      %v4988 = vadd.f32 %v4853, %v4950
      %v4989 = vadd.f32 %v4854, %v4950
      %v4990 = vadd.f32 %v4855, %v4950
      %v4991 = vadd.f32 %v4856, %v4950
      %v4992 = vadd.f32 %v4857, %v4950
      %v4993 = vadd.f32 %v4858, %v4950
      %v4994 = vadd.f32 %v4859, %v4950
      %v4995 = vadd.f32 %v4860, %v4950
      %v4996 = vadd.f32 %v4861, %v4950
      %v4997 = vadd.f32 %v4862, %v4950
      %v4998 = vadd.f32 %v4863, %v4950
      %v4999 = vadd.f32 %v4864, %v4950
      %v5000 = vadd.f32 %v4865, %v4950
      %v5001 = vadd.f32 %v4866, %v4950
      %v5002 = vadd.f32 %v4867, %v4950
      %v5003 = vadd.f32 %v4868, %v4950
      %v5004 = vadd.f32 %v4869, %v4950
      %v5005 = vadd.f32 %v4870, %v4950
      %v5006 = vadd.f32 %v4871, %v4950
      %v5007 = vadd.f32 %v4872, %v4950
      %v5008 = vadd.f32 %v4873, %v4950
      %v5009 = vadd.f32 %v4874, %v4950
      %v5010 = vadd.f32 %v4875, %v4950
      %v5011 = vadd.f32 %v4876, %v4950
      %v5012 = vadd.f32 %v4877, %v4950
      %v5013 = vadd.f32 %v4878, %v4950
      %v5014 = vadd.f32 %v4879, %v4950
      %v5015 = vadd.f32 %v4880, %v4950
      %v5016 = vadd.f32 %v4881, %v4950
      %v5017 = vadd.f32 %v4882, %v4950
      %v5018 = vadd.f32 %v4883, %v4950
      %v5019 = vadd.f32 %v4884, %v4950
      %v5020 = vadd.f32 %v4885, %v4950
      %v5021 = vadd.f32 %v4886, %v4950
      %v5022 = vadd.f32 %v4887, %v4950
      %v5023 = vadd.f32 %v4888, %v4950
      %v5024 = vadd.f32 %v4889, %v4950
      %v5025 = vadd.f32 %v4890, %v4950
      %v5026 = vadd.f32 %v4891, %v4950
      %v5027 = vadd.f32 %v4892, %v4950
      %v5028 = vadd.f32 %v4893, %v4950
      %v5029 = vadd.f32 %v4894, %v4950
      %v5030 = vadd.f32 %v4895, %v4950
      %v5031 = vadd.f32 %v4896, %v4950
      %v5032 = vadd.f32 %v4897, %v4950
      %v5033 = vadd.f32 %v4898, %v4950
      %v5034 = vadd.f32 %v4899, %v4950
      %v5035 = vadd.f32 %v4900, %v4950
      %v5036 = vadd.f32 %v4901, %v4950
      %v5037 = vadd.f32 %v4902, %v4950
      %v5038 = vadd.f32 %v4903, %v4950
      %v5039 = vadd.f32 %v4904, %v4950
      %v5040 = vadd.f32 %v4905, %v4950
      %v5041 = vadd.f32 %v4906, %v4950
      %v5042 = vadd.f32 %v4907, %v4950
      %v5043 = vadd.f32 %v4908, %v4950
      %v5044 = vadd.f32 %v4909, %v4950
      %v5045 = vadd.f32 %v4910, %v4950
      %v5046 = vadd.f32 %v4911, %v4950
      %v5047 = vadd.f32 %v4912, %v4950
      %v5048 = vadd.f32 %v4913, %v4950
      %v5049 = vadd.f32 %v4914, %v4950
      %v5050 = vadd.f32 %v4915, %v4950
      %v5051 = vadd.f32 %v4916, %v4950
      %v5052 = vadd.f32 %v4917, %v4950
      %v5053 = vadd.f32 %v4918, %v4950
      %v5054 = vadd.f32 %v4919, %v4950
      %v5055 = vadd.f32 %v4920, %v4950
      %v5056 = vadd.f32 %v4921, %v4950
      %v5057 = vadd.f32 %v4922, %v4950
      %v5058 = vadd.f32 %v4923, %v4950
      %v5059 = vadd.f32 %v4924, %v4950
      %v5060 = vadd.f32 %v4925, %v4950
      %v5061 = vadd.f32 %v4926, %v4950
      %v5062 = vadd.f32 %v4927, %v4950
      %v5063 = vadd.f32 %v4928, %v4950
      %v5064 = vadd.f32 %v4929, %v4950
      %v5065 = vadd.f32 %v4930, %v4950
      %v5066 = vadd.f32 %v4931, %v4950
      %v5067 = vadd.f32 %v4932, %v4950
      %v5068 = vadd.f32 %v4933, %v4950
      %v5069 = vadd.f32 %v4934, %v4950
      %v5070 = vadd.f32 %v4935, %v4950
      %v5071 = vadd.f32 %v4936, %v4950
      %v5072 = vadd.f32 %v4937, %v4950
      %v5073 = vadd.f32 %v4938, %v4950
      %v5074 = vadd.f32 %v4939, %v4950
      %v5075 = vadd.f32 %v4940, %v4950
      %v5076 = vadd.f32 %v4941, %v4950
      %v5077 = vadd.f32 %v4942, %v4950
      %v5078 = vadd.f32 %v4943, %v4950
      %v5079 = vadd.f32 %v4944, %v4950
      %v5080 = vpack.c.bf16 %v4953, %v4952
      %v5081 = vpack.c.bf16 %v4955, %v4954
      %v5082 = vpack.c.bf16 %v4957, %v4956
      %v5083 = vpack.c.bf16 %v4959, %v4958
      %v5084 = vpack.c.bf16 %v4961, %v4960
      %v5085 = vpack.c.bf16 %v4963, %v4962
      %v5086 = vpack.c.bf16 %v4965, %v4964
      %v5087 = vpack.c.bf16 %v4967, %v4966
      %v5088 = vpack.c.bf16 %v4969, %v4968
      %v5089 = vpack.c.bf16 %v4971, %v4970
      %v5090 = vpack.c.bf16 %v4973, %v4972
      %v5091 = vpack.c.bf16 %v4975, %v4974
      %v5092 = vpack.c.bf16 %v4977, %v4976
      %v5093 = vpack.c.bf16 %v4979, %v4978
      %v5094 = vpack.c.bf16 %v4981, %v4980
      %v5095 = vpack.c.bf16 %v4983, %v4982
      %v5096 = vpack.c.bf16 %v4985, %v4984
      %v5097 = vpack.c.bf16 %v4987, %v4986
      %v5098 = vpack.c.bf16 %v4989, %v4988
      %v5099 = vpack.c.bf16 %v4991, %v4990
      %v5100 = vpack.c.bf16 %v4993, %v4992
      %v5101 = vpack.c.bf16 %v4995, %v4994
      %v5102 = vpack.c.bf16 %v4997, %v4996
      %v5103 = vpack.c.bf16 %v4999, %v4998
      %v5104 = vpack.c.bf16 %v5001, %v5000
      %v5105 = vpack.c.bf16 %v5003, %v5002
      %v5106 = vpack.c.bf16 %v5005, %v5004
      %v5107 = vpack.c.bf16 %v5007, %v5006
      %v5108 = vpack.c.bf16 %v5009, %v5008
      %v5109 = vpack.c.bf16 %v5011, %v5010
      %v5110 = vpack.c.bf16 %v5013, %v5012
      %v5111 = vpack.c.bf16 %v5015, %v5014
      %v5112 = vpack.c.bf16 %v5017, %v5016
      %v5113 = vpack.c.bf16 %v5019, %v5018
      %v5114 = vpack.c.bf16 %v5021, %v5020
      %v5115 = vpack.c.bf16 %v5023, %v5022
      %v5116 = vpack.c.bf16 %v5025, %v5024
      %v5117 = vpack.c.bf16 %v5027, %v5026
      %v5118 = vpack.c.bf16 %v5029, %v5028
      %v5119 = vpack.c.bf16 %v5031, %v5030
      %v5120 = vpack.c.bf16 %v5033, %v5032
      %v5121 = vpack.c.bf16 %v5035, %v5034
      %v5122 = vpack.c.bf16 %v5037, %v5036
      %v5123 = vpack.c.bf16 %v5039, %v5038
      %v5124 = vpack.c.bf16 %v5041, %v5040
      %v5125 = vpack.c.bf16 %v5043, %v5042
      %v5126 = vpack.c.bf16 %v5045, %v5044
      %v5127 = vpack.c.bf16 %v5047, %v5046
      %v5128 = vpack.c.bf16 %v5049, %v5048
      %v5129 = vpack.c.bf16 %v5051, %v5050
      %v5130 = vpack.c.bf16 %v5053, %v5052
      %v5131 = vpack.c.bf16 %v5055, %v5054
      %v5132 = vpack.c.bf16 %v5057, %v5056
      %v5133 = vpack.c.bf16 %v5059, %v5058
      %v5134 = vpack.c.bf16 %v5061, %v5060
      %v5135 = vpack.c.bf16 %v5063, %v5062
      %v5136 = vpack.c.bf16 %v5065, %v5064
      %v5137 = vpack.c.bf16 %v5067, %v5066
      %v5138 = vpack.c.bf16 %v5069, %v5068
      %v5139 = vpack.c.bf16 %v5071, %v5070
      %v5140 = vpack.c.bf16 %v5073, %v5072
      %v5141 = vpack.c.bf16 %v5075, %v5074
      %v5142 = vpack.c.bf16 %v5077, %v5076
      %v5143 = vpack.c.bf16 %v5079, %v5078
      %v5208 = vunpack.c.l.b16 %v5080
      %v5209 = vunpack.c.h.b16 %v5080
      %v5210 = vunpack.c.l.b16 %v5081
      %v5211 = vunpack.c.h.b16 %v5081
      %v5212 = vunpack.c.l.b16 %v5082
      %v5213 = vunpack.c.h.b16 %v5082
      %v5214 = vunpack.c.l.b16 %v5083
      %v5215 = vunpack.c.h.b16 %v5083
      %v5216 = vunpack.c.l.b16 %v5084
      %v5217 = vunpack.c.h.b16 %v5084
      %v5218 = vunpack.c.l.b16 %v5085
      %v5219 = vunpack.c.h.b16 %v5085
      %v5220 = vunpack.c.l.b16 %v5086
      %v5221 = vunpack.c.h.b16 %v5086
      %v5222 = vunpack.c.l.b16 %v5087
      %v5223 = vunpack.c.h.b16 %v5087
      %v5224 = vunpack.c.l.b16 %v5088
      %v5225 = vunpack.c.h.b16 %v5088
      %v5226 = vunpack.c.l.b16 %v5089
      %v5227 = vunpack.c.h.b16 %v5089
      %v5228 = vunpack.c.l.b16 %v5090
      %v5229 = vunpack.c.h.b16 %v5090
      %v5230 = vunpack.c.l.b16 %v5091
      %v5231 = vunpack.c.h.b16 %v5091
      %v5232 = vunpack.c.l.b16 %v5092
      %v5233 = vunpack.c.h.b16 %v5092
      %v5234 = vunpack.c.l.b16 %v5093
      %v5235 = vunpack.c.h.b16 %v5093
      %v5236 = vunpack.c.l.b16 %v5094
      %v5237 = vunpack.c.h.b16 %v5094
      %v5238 = vunpack.c.l.b16 %v5095
      %v5239 = vunpack.c.h.b16 %v5095
      %v5240 = vunpack.c.l.b16 %v5096
      %v5241 = vunpack.c.h.b16 %v5096
      %v5242 = vunpack.c.l.b16 %v5097
      %v5243 = vunpack.c.h.b16 %v5097
      %v5244 = vunpack.c.l.b16 %v5098
      %v5245 = vunpack.c.h.b16 %v5098
      %v5246 = vunpack.c.l.b16 %v5099
      %v5247 = vunpack.c.h.b16 %v5099
      %v5248 = vunpack.c.l.b16 %v5100
      %v5249 = vunpack.c.h.b16 %v5100
      %v5250 = vunpack.c.l.b16 %v5101
      %v5251 = vunpack.c.h.b16 %v5101
      %v5252 = vunpack.c.l.b16 %v5102
      %v5253 = vunpack.c.h.b16 %v5102
      %v5254 = vunpack.c.l.b16 %v5103
      %v5255 = vunpack.c.h.b16 %v5103
      %v5256 = vunpack.c.l.b16 %v5104
      %v5257 = vunpack.c.h.b16 %v5104
      %v5258 = vunpack.c.l.b16 %v5105
      %v5259 = vunpack.c.h.b16 %v5105
      %v5260 = vunpack.c.l.b16 %v5106
      %v5261 = vunpack.c.h.b16 %v5106
      %v5262 = vunpack.c.l.b16 %v5107
      %v5263 = vunpack.c.h.b16 %v5107
      %v5264 = vunpack.c.l.b16 %v5108
      %v5265 = vunpack.c.h.b16 %v5108
      %v5266 = vunpack.c.l.b16 %v5109
      %v5267 = vunpack.c.h.b16 %v5109
      %v5268 = vunpack.c.l.b16 %v5110
      %v5269 = vunpack.c.h.b16 %v5110
      %v5270 = vunpack.c.l.b16 %v5111
      %v5271 = vunpack.c.h.b16 %v5111
      %v5272 = vunpack.c.l.b16 %v5112
      %v5273 = vunpack.c.h.b16 %v5112
      %v5274 = vunpack.c.l.b16 %v5113
      %v5275 = vunpack.c.h.b16 %v5113
      %v5276 = vunpack.c.l.b16 %v5114
      %v5277 = vunpack.c.h.b16 %v5114
      %v5278 = vunpack.c.l.b16 %v5115
      %v5279 = vunpack.c.h.b16 %v5115
      %v5280 = vunpack.c.l.b16 %v5116
      %v5281 = vunpack.c.h.b16 %v5116
      %v5282 = vunpack.c.l.b16 %v5117
      %v5283 = vunpack.c.h.b16 %v5117
      %v5284 = vunpack.c.l.b16 %v5118
      %v5285 = vunpack.c.h.b16 %v5118
      %v5286 = vunpack.c.l.b16 %v5119
      %v5287 = vunpack.c.h.b16 %v5119
      %v5288 = vunpack.c.l.b16 %v5120
      %v5289 = vunpack.c.h.b16 %v5120
      %v5290 = vunpack.c.l.b16 %v5121
      %v5291 = vunpack.c.h.b16 %v5121
      %v5292 = vunpack.c.l.b16 %v5122
      %v5293 = vunpack.c.h.b16 %v5122
      %v5294 = vunpack.c.l.b16 %v5123
      %v5295 = vunpack.c.h.b16 %v5123
      %v5296 = vunpack.c.l.b16 %v5124
      %v5297 = vunpack.c.h.b16 %v5124
      %v5298 = vunpack.c.l.b16 %v5125
      %v5299 = vunpack.c.h.b16 %v5125
      %v5300 = vunpack.c.l.b16 %v5126
      %v5301 = vunpack.c.h.b16 %v5126
      %v5302 = vunpack.c.l.b16 %v5127
      %v5303 = vunpack.c.h.b16 %v5127
      %v5304 = vunpack.c.l.b16 %v5128
      %v5305 = vunpack.c.h.b16 %v5128
      %v5306 = vunpack.c.l.b16 %v5129
      %v5307 = vunpack.c.h.b16 %v5129
      %v5308 = vunpack.c.l.b16 %v5130
      %v5309 = vunpack.c.h.b16 %v5130
      %v5310 = vunpack.c.l.b16 %v5131
      %v5311 = vunpack.c.h.b16 %v5131
      %v5312 = vunpack.c.l.b16 %v5132
      %v5313 = vunpack.c.h.b16 %v5132
      %v5314 = vunpack.c.l.b16 %v5133
      %v5315 = vunpack.c.h.b16 %v5133
      %v5316 = vunpack.c.l.b16 %v5134
      %v5317 = vunpack.c.h.b16 %v5134
      %v5318 = vunpack.c.l.b16 %v5135
      %v5319 = vunpack.c.h.b16 %v5135
      %v5320 = vunpack.c.l.b16 %v5136
      %v5321 = vunpack.c.h.b16 %v5136
      %v5322 = vunpack.c.l.b16 %v5137
      %v5323 = vunpack.c.h.b16 %v5137
      %v5324 = vunpack.c.l.b16 %v5138
      %v5325 = vunpack.c.h.b16 %v5138
      %v5326 = vunpack.c.l.b16 %v5139
      %v5327 = vunpack.c.h.b16 %v5139
      %v5328 = vunpack.c.l.b16 %v5140
      %v5329 = vunpack.c.h.b16 %v5140
      %v5330 = vunpack.c.l.b16 %v5141
      %v5331 = vunpack.c.h.b16 %v5141
      %v5332 = vunpack.c.l.b16 %v5142
      %v5333 = vunpack.c.h.b16 %v5142
      %v5334 = vunpack.c.l.b16 %v5143
      %v5335 = vunpack.c.h.b16 %v5143
      %v5336 = vpack.c.b16 %v5208, %v5208
      %v5337 = vpack.c.b16 %v5209, %v5209
      %v5338 = vpack.c.b16 %v5210, %v5210
      %v5339 = vpack.c.b16 %v5211, %v5211
      %v5340 = vpack.c.b16 %v5212, %v5212
      %v5341 = vpack.c.b16 %v5213, %v5213
      %v5342 = vpack.c.b16 %v5214, %v5214
      %v5343 = vpack.c.b16 %v5215, %v5215
      %v5344 = vpack.c.b16 %v5216, %v5216
      %v5345 = vpack.c.b16 %v5217, %v5217
      %v5346 = vpack.c.b16 %v5218, %v5218
      %v5347 = vpack.c.b16 %v5219, %v5219
      %v5348 = vpack.c.b16 %v5220, %v5220
      %v5349 = vpack.c.b16 %v5221, %v5221
      %v5350 = vpack.c.b16 %v5222, %v5222
      %v5351 = vpack.c.b16 %v5223, %v5223
      %v5352 = vpack.c.b16 %v5224, %v5224
      %v5353 = vpack.c.b16 %v5225, %v5225
      %v5354 = vpack.c.b16 %v5226, %v5226
      %v5355 = vpack.c.b16 %v5227, %v5227
      %v5356 = vpack.c.b16 %v5228, %v5228
      %v5357 = vpack.c.b16 %v5229, %v5229
      %v5358 = vpack.c.b16 %v5230, %v5230
      %v5359 = vpack.c.b16 %v5231, %v5231
      %v5360 = vpack.c.b16 %v5232, %v5232
      %v5361 = vpack.c.b16 %v5233, %v5233
      %v5362 = vpack.c.b16 %v5234, %v5234
      %v5363 = vpack.c.b16 %v5235, %v5235
      %v5364 = vpack.c.b16 %v5236, %v5236
      %v5365 = vpack.c.b16 %v5237, %v5237
      %v5366 = vpack.c.b16 %v5238, %v5238
      %v5367 = vpack.c.b16 %v5239, %v5239
      %v5368 = vpack.c.b16 %v5240, %v5240
      %v5369 = vpack.c.b16 %v5241, %v5241
      %v5370 = vpack.c.b16 %v5242, %v5242
      %v5371 = vpack.c.b16 %v5243, %v5243
      %v5372 = vpack.c.b16 %v5244, %v5244
      %v5373 = vpack.c.b16 %v5245, %v5245
      %v5374 = vpack.c.b16 %v5246, %v5246
      %v5375 = vpack.c.b16 %v5247, %v5247
      %v5376 = vpack.c.b16 %v5248, %v5248
      %v5377 = vpack.c.b16 %v5249, %v5249
      %v5378 = vpack.c.b16 %v5250, %v5250
      %v5379 = vpack.c.b16 %v5251, %v5251
      %v5380 = vpack.c.b16 %v5252, %v5252
      %v5381 = vpack.c.b16 %v5253, %v5253
      %v5382 = vpack.c.b16 %v5254, %v5254
      %v5383 = vpack.c.b16 %v5255, %v5255
      %v5384 = vpack.c.b16 %v5256, %v5256
      %v5385 = vpack.c.b16 %v5257, %v5257
      %v5386 = vpack.c.b16 %v5258, %v5258
      %v5387 = vpack.c.b16 %v5259, %v5259
      %v5388 = vpack.c.b16 %v5260, %v5260
      %v5389 = vpack.c.b16 %v5261, %v5261
      %v5390 = vpack.c.b16 %v5262, %v5262
      %v5391 = vpack.c.b16 %v5263, %v5263
      %v5392 = vpack.c.b16 %v5264, %v5264
      %v5393 = vpack.c.b16 %v5265, %v5265
      %v5394 = vpack.c.b16 %v5266, %v5266
      %v5395 = vpack.c.b16 %v5267, %v5267
      %v5396 = vpack.c.b16 %v5268, %v5268
      %v5397 = vpack.c.b16 %v5269, %v5269
      %v5398 = vpack.c.b16 %v5270, %v5270
      %v5399 = vpack.c.b16 %v5271, %v5271
      %v5400 = vpack.c.b16 %v5272, %v5272
      %v5401 = vpack.c.b16 %v5273, %v5273
      %v5402 = vpack.c.b16 %v5274, %v5274
      %v5403 = vpack.c.b16 %v5275, %v5275
      %v5404 = vpack.c.b16 %v5276, %v5276
      %v5405 = vpack.c.b16 %v5277, %v5277
      %v5406 = vpack.c.b16 %v5278, %v5278
      %v5407 = vpack.c.b16 %v5279, %v5279
      %v5408 = vpack.c.b16 %v5280, %v5280
      %v5409 = vpack.c.b16 %v5281, %v5281
      %v5410 = vpack.c.b16 %v5282, %v5282
      %v5411 = vpack.c.b16 %v5283, %v5283
      %v5412 = vpack.c.b16 %v5284, %v5284
      %v5413 = vpack.c.b16 %v5285, %v5285
      %v5414 = vpack.c.b16 %v5286, %v5286
      %v5415 = vpack.c.b16 %v5287, %v5287
      %v5416 = vpack.c.b16 %v5288, %v5288
      %v5417 = vpack.c.b16 %v5289, %v5289
      %v5418 = vpack.c.b16 %v5290, %v5290
      %v5419 = vpack.c.b16 %v5291, %v5291
      %v5420 = vpack.c.b16 %v5292, %v5292
      %v5421 = vpack.c.b16 %v5293, %v5293
      %v5422 = vpack.c.b16 %v5294, %v5294
      %v5423 = vpack.c.b16 %v5295, %v5295
      %v5424 = vpack.c.b16 %v5296, %v5296
      %v5425 = vpack.c.b16 %v5297, %v5297
      %v5426 = vpack.c.b16 %v5298, %v5298
      %v5427 = vpack.c.b16 %v5299, %v5299
      %v5428 = vpack.c.b16 %v5300, %v5300
      %v5429 = vpack.c.b16 %v5301, %v5301
      %v5430 = vpack.c.b16 %v5302, %v5302
      %v5431 = vpack.c.b16 %v5303, %v5303
      %v5432 = vpack.c.b16 %v5304, %v5304
      %v5433 = vpack.c.b16 %v5305, %v5305
      %v5434 = vpack.c.b16 %v5306, %v5306
      %v5435 = vpack.c.b16 %v5307, %v5307
      %v5436 = vpack.c.b16 %v5308, %v5308
      %v5437 = vpack.c.b16 %v5309, %v5309
      %v5438 = vpack.c.b16 %v5310, %v5310
      %v5439 = vpack.c.b16 %v5311, %v5311
      %v5440 = vpack.c.b16 %v5312, %v5312
      %v5441 = vpack.c.b16 %v5313, %v5313
      %v5442 = vpack.c.b16 %v5314, %v5314
      %v5443 = vpack.c.b16 %v5315, %v5315
      %v5444 = vpack.c.b16 %v5316, %v5316
      %v5445 = vpack.c.b16 %v5317, %v5317
      %v5446 = vpack.c.b16 %v5318, %v5318
      %v5447 = vpack.c.b16 %v5319, %v5319
      %v5448 = vpack.c.b16 %v5320, %v5320
      %v5449 = vpack.c.b16 %v5321, %v5321
      %v5450 = vpack.c.b16 %v5322, %v5322
      %v5451 = vpack.c.b16 %v5323, %v5323
      %v5452 = vpack.c.b16 %v5324, %v5324
      %v5453 = vpack.c.b16 %v5325, %v5325
      %v5454 = vpack.c.b16 %v5326, %v5326
      %v5455 = vpack.c.b16 %v5327, %v5327
      %v5456 = vpack.c.b16 %v5328, %v5328
      %v5457 = vpack.c.b16 %v5329, %v5329
      %v5458 = vpack.c.b16 %v5330, %v5330
      %v5459 = vpack.c.b16 %v5331, %v5331
      %v5460 = vpack.c.b16 %v5332, %v5332
      %v5461 = vpack.c.b16 %v5333, %v5333
      %v5462 = vpack.c.b16 %v5334, %v5334
      %v5463 = vpack.c.b16 %v5335, %v5335
      %5592 = vst [vmem:[%s272] sm:$0xf] %v5336
      %5593 = vst [vmem:[%s272 + $0x4] sm:$0xf] %v5337
      %5594 = vst [vmem:[%s272 + $0x8] sm:$0xf] %v5338
      %5595 = vst [vmem:[%s272 + $0xc] sm:$0xf] %v5339
      %5596 = vst [vmem:[%s272 + $0x10] sm:$0xf] %v5340
      %5597 = vst [vmem:[%s272 + $0x14] sm:$0xf] %v5341
      %5598 = vst [vmem:[%s272 + $0x18] sm:$0xf] %v5342
      %5599 = vst [vmem:[%s272 + $0x1c] sm:$0xf] %v5343
      %5600 = vst [vmem:[%s272 + $0x20] sm:$0xf] %v5344
      %5601 = vst [vmem:[%s272 + $0x24] sm:$0xf] %v5345
      %5602 = vst [vmem:[%s272 + $0x28] sm:$0xf] %v5346
      %5603 = vst [vmem:[%s272 + $0x2c] sm:$0xf] %v5347
      %5604 = vst [vmem:[%s272 + $0x30] sm:$0xf] %v5348
      %5605 = vst [vmem:[%s272 + $0x34] sm:$0xf] %v5349
      %5606 = vst [vmem:[%s272 + $0x38] sm:$0xf] %v5350
      %5607 = vst [vmem:[%s272 + $0x3c] sm:$0xf] %v5351
      %5608 = vst [vmem:[%s272 + $0x40] sm:$0xf] %v5352
      %5609 = vst [vmem:[%s272 + $0x44] sm:$0xf] %v5353
      %5610 = vst [vmem:[%s272 + $0x48] sm:$0xf] %v5354
      %5611 = vst [vmem:[%s272 + $0x4c] sm:$0xf] %v5355
      %5612 = vst [vmem:[%s272 + $0x50] sm:$0xf] %v5356
      %5613 = vst [vmem:[%s272 + $0x54] sm:$0xf] %v5357
      %5614 = vst [vmem:[%s272 + $0x58] sm:$0xf] %v5358
      %5615 = vst [vmem:[%s272 + $0x5c] sm:$0xf] %v5359
      %5616 = vst [vmem:[%s272 + $0x60] sm:$0xf] %v5360
      %5617 = vst [vmem:[%s272 + $0x64] sm:$0xf] %v5361
      %5618 = vst [vmem:[%s272 + $0x68] sm:$0xf] %v5362
      %5619 = vst [vmem:[%s272 + $0x6c] sm:$0xf] %v5363
      %5620 = vst [vmem:[%s272 + $0x70] sm:$0xf] %v5364
      %5621 = vst [vmem:[%s272 + $0x74] sm:$0xf] %v5365
      %5622 = vst [vmem:[%s272 + $0x78] sm:$0xf] %v5366
      %5623 = vst [vmem:[%s272 + $0x7c] sm:$0xf] %v5367
      %5624 = vst [vmem:[%s272 + $0x80] sm:$0xf] %v5368
      %5625 = vst [vmem:[%s272 + $0x84] sm:$0xf] %v5369
      %5626 = vst [vmem:[%s272 + $0x88] sm:$0xf] %v5370
      %5627 = vst [vmem:[%s272 + $0x8c] sm:$0xf] %v5371
      %5628 = vst [vmem:[%s272 + $0x90] sm:$0xf] %v5372
      %5629 = vst [vmem:[%s272 + $0x94] sm:$0xf] %v5373
      %5630 = vst [vmem:[%s272 + $0x98] sm:$0xf] %v5374
      %5631 = vst [vmem:[%s272 + $0x9c] sm:$0xf] %v5375
      %5632 = vst [vmem:[%s272 + $0xa0] sm:$0xf] %v5376
      %5633 = vst [vmem:[%s272 + $0xa4] sm:$0xf] %v5377
      %5634 = vst [vmem:[%s272 + $0xa8] sm:$0xf] %v5378
      %5635 = vst [vmem:[%s272 + $0xac] sm:$0xf] %v5379
      %5636 = vst [vmem:[%s272 + $0xb0] sm:$0xf] %v5380
      %5637 = vst [vmem:[%s272 + $0xb4] sm:$0xf] %v5381
      %5638 = vst [vmem:[%s272 + $0xb8] sm:$0xf] %v5382
      %5639 = vst [vmem:[%s272 + $0xbc] sm:$0xf] %v5383
      %5640 = vst [vmem:[%s272 + $0xc0] sm:$0xf] %v5384
      %5641 = vst [vmem:[%s272 + $0xc4] sm:$0xf] %v5385
      %5642 = vst [vmem:[%s272 + $0xc8] sm:$0xf] %v5386
      %5643 = vst [vmem:[%s272 + $0xcc] sm:$0xf] %v5387
      %5644 = vst [vmem:[%s272 + $0xd0] sm:$0xf] %v5388
      %5645 = vst [vmem:[%s272 + $0xd4] sm:$0xf] %v5389
      %5646 = vst [vmem:[%s272 + $0xd8] sm:$0xf] %v5390
      %5647 = vst [vmem:[%s272 + $0xdc] sm:$0xf] %v5391
      %5648 = vst [vmem:[%s272 + $0xe0] sm:$0xf] %v5392
      %5649 = vst [vmem:[%s272 + $0xe4] sm:$0xf] %v5393
      %5650 = vst [vmem:[%s272 + $0xe8] sm:$0xf] %v5394
      %5651 = vst [vmem:[%s272 + $0xec] sm:$0xf] %v5395
      %5652 = vst [vmem:[%s272 + $0xf0] sm:$0xf] %v5396
      %5653 = vst [vmem:[%s272 + $0xf4] sm:$0xf] %v5397
      %5654 = vst [vmem:[%s272 + $0xf8] sm:$0xf] %v5398
      %5655 = vst [vmem:[%s272 + $0xfc] sm:$0xf] %v5399
      %5656 = vst [vmem:[%s272 + $0x100] sm:$0xf] %v5400
      %5657 = vst [vmem:[%s272 + $0x104] sm:$0xf] %v5401
      %5658 = vst [vmem:[%s272 + $0x108] sm:$0xf] %v5402
      %5659 = vst [vmem:[%s272 + $0x10c] sm:$0xf] %v5403
      %5660 = vst [vmem:[%s272 + $0x110] sm:$0xf] %v5404
      %5661 = vst [vmem:[%s272 + $0x114] sm:$0xf] %v5405
      %5662 = vst [vmem:[%s272 + $0x118] sm:$0xf] %v5406
      %5663 = vst [vmem:[%s272 + $0x11c] sm:$0xf] %v5407
      %5664 = vst [vmem:[%s272 + $0x120] sm:$0xf] %v5408
      %5665 = vst [vmem:[%s272 + $0x124] sm:$0xf] %v5409
      %5666 = vst [vmem:[%s272 + $0x128] sm:$0xf] %v5410
      %5667 = vst [vmem:[%s272 + $0x12c] sm:$0xf] %v5411
      %5668 = vst [vmem:[%s272 + $0x130] sm:$0xf] %v5412
      %5669 = vst [vmem:[%s272 + $0x134] sm:$0xf] %v5413
      %5670 = vst [vmem:[%s272 + $0x138] sm:$0xf] %v5414
      %5671 = vst [vmem:[%s272 + $0x13c] sm:$0xf] %v5415
      %5672 = vst [vmem:[%s272 + $0x140] sm:$0xf] %v5416
      %5673 = vst [vmem:[%s272 + $0x144] sm:$0xf] %v5417
      %5674 = vst [vmem:[%s272 + $0x148] sm:$0xf] %v5418
      %5675 = vst [vmem:[%s272 + $0x14c] sm:$0xf] %v5419
      %5676 = vst [vmem:[%s272 + $0x150] sm:$0xf] %v5420
      %5677 = vst [vmem:[%s272 + $0x154] sm:$0xf] %v5421
      %5678 = vst [vmem:[%s272 + $0x158] sm:$0xf] %v5422
      %5679 = vst [vmem:[%s272 + $0x15c] sm:$0xf] %v5423
      %5680 = vst [vmem:[%s272 + $0x160] sm:$0xf] %v5424
      %5681 = vst [vmem:[%s272 + $0x164] sm:$0xf] %v5425
      %5682 = vst [vmem:[%s272 + $0x168] sm:$0xf] %v5426
      %5683 = vst [vmem:[%s272 + $0x16c] sm:$0xf] %v5427
      %5684 = vst [vmem:[%s272 + $0x170] sm:$0xf] %v5428
      %5685 = vst [vmem:[%s272 + $0x174] sm:$0xf] %v5429
      %5686 = vst [vmem:[%s272 + $0x178] sm:$0xf] %v5430
      %5687 = vst [vmem:[%s272 + $0x17c] sm:$0xf] %v5431
      %5688 = vst [vmem:[%s272 + $0x180] sm:$0xf] %v5432
      %5689 = vst [vmem:[%s272 + $0x184] sm:$0xf] %v5433
      %5690 = vst [vmem:[%s272 + $0x188] sm:$0xf] %v5434
      %5691 = vst [vmem:[%s272 + $0x18c] sm:$0xf] %v5435
      %5692 = vst [vmem:[%s272 + $0x190] sm:$0xf] %v5436
      %5693 = vst [vmem:[%s272 + $0x194] sm:$0xf] %v5437
      %5694 = vst [vmem:[%s272 + $0x198] sm:$0xf] %v5438
      %5695 = vst [vmem:[%s272 + $0x19c] sm:$0xf] %v5439
      %5696 = vst [vmem:[%s272 + $0x1a0] sm:$0xf] %v5440
      %5697 = vst [vmem:[%s272 + $0x1a4] sm:$0xf] %v5441
      %5698 = vst [vmem:[%s272 + $0x1a8] sm:$0xf] %v5442
      %5699 = vst [vmem:[%s272 + $0x1ac] sm:$0xf] %v5443
      %5700 = vst [vmem:[%s272 + $0x1b0] sm:$0xf] %v5444
      %5701 = vst [vmem:[%s272 + $0x1b4] sm:$0xf] %v5445
      %5702 = vst [vmem:[%s272 + $0x1b8] sm:$0xf] %v5446
      %5703 = vst [vmem:[%s272 + $0x1bc] sm:$0xf] %v5447
      %5704 = vst [vmem:[%s272 + $0x1c0] sm:$0xf] %v5448
      %5705 = vst [vmem:[%s272 + $0x1c4] sm:$0xf] %v5449
      %5706 = vst [vmem:[%s272 + $0x1c8] sm:$0xf] %v5450
      %5707 = vst [vmem:[%s272 + $0x1cc] sm:$0xf] %v5451
      %5708 = vst [vmem:[%s272 + $0x1d0] sm:$0xf] %v5452
      %5709 = vst [vmem:[%s272 + $0x1d4] sm:$0xf] %v5453
      %5710 = vst [vmem:[%s272 + $0x1d8] sm:$0xf] %v5454
      %5711 = vst [vmem:[%s272 + $0x1dc] sm:$0xf] %v5455
      %5712 = vst [vmem:[%s272 + $0x1e0] sm:$0xf] %v5456
      %5713 = vst [vmem:[%s272 + $0x1e4] sm:$0xf] %v5457
      %5714 = vst [vmem:[%s272 + $0x1e8] sm:$0xf] %v5458
      %5715 = vst [vmem:[%s272 + $0x1ec] sm:$0xf] %v5459
      %5716 = vst [vmem:[%s272 + $0x1f0] sm:$0xf] %v5460
      %5717 = vst [vmem:[%s272 + $0x1f4] sm:$0xf] %v5461
      %5718 = vst [vmem:[%s272 + $0x1f8] sm:$0xf] %v5462
      %5719 = vst [vmem:[%s272 + $0x1fc] sm:$0xf] %v5463
      %p5720 = scmp.lt.s32.totalorder %s16, 1
      %s5721 = scalar_select %p5720, %s16, 1
      %s5722 = smul.addr %s5721, 128
      %s5723 = smul.addr %s5722, 4
      %s5724 = scalar_lea.vmem %s5, %s5723
      // Predicated region
      $region41: #{style_block_forward.4} parent=39 // pred_check
        %p5725 = pneg %p159
      $region42: #{style_block_forward.4} parent=39 // pred_check_branch
        %5727 = sbr.rel (%p5725) target = $region44
      $region43: #{style_block_forward.4} parent=39 // pred_region
        _
      $region44: #{style_block_forward.4} parent=39 // pred_fallthru
        _
    $region40: #{style_block_forward.4} parent=5 // pred_fallthru
      _
    %p5728 = scmp.le.s32.totalorder 2, %s11
    // Predicated region
    $region45: #{style_block_forward.4} parent=5 // pred_check
      %p5729 = pneg %p5728
    $region46: #{style_block_forward.4} parent=5 // pred_check_branch
      %5731 = sbr.rel (%p5729) target = $region48
    $region47: #{style_block_forward.4} parent=5 // pred_region
      %s5732 = ssub.s32 %s11, 2
      // Predicated region
      $region49: #{style_block_forward.4} parent=47 // pred_check
        %p5733 = pneg %p165
      $region50: #{style_block_forward.4} parent=47 // pred_check_branch
        %5735 = sbr.rel (%p5733) target = $region52
      $region51: #{style_block_forward.4} parent=47 // pred_region
        %p5736 = scmp.lt.s32.totalorder %s17, 1
        %s5737 = scalar_select %p5736, %s17, 1
        %s5738 = smul.addr %s5737, 128
        %s5739 = smul.addr %s5738, 4
        %s5740 = scalar_lea.vmem %s5, %s5739
      $region52: #{style_block_forward.4} parent=47 // pred_fallthru
        _
    $region48: #{style_block_forward.4} parent=5 // pred_fallthru
      _
  $region6: #{style_block_forward.4} parent=0 // loop_footer
    %s15 = sadd.s32 1, %s11
  $region7: #{style_block_forward.4} parent=0 // loop_footer_branch
    %10 = sbr.rel target = $region3
  $region8: #{style_block_forward.4} parent=0 // loop_exit
    _

// kernel: style_block_forward.5
$region0: #{style_block_forward.5}
  #allocation0 [shape = 'u32[]', space=smem, size = 0x4, offset = 0x4, fixed_abs, tag = 'smem constant byte address 0x4 - core index']
  #allocation1 [shape = 'u32[144,128]{1,0:T(1,128)}', space=vmem, size = 0x12000, scoped, tag = 'internal scratch']
  %s0 = inlined_call_operand.vmem [shape: bf16[2,34,32,128], index: 0, kind: input, shape index: {}]
  %s1 = inlined_call_operand.vmem [shape: bf16[3,128,128], index: 1, kind: input, shape index: {}]
  %s2 = inlined_call_operand.vmem [shape: bf16[2,1024,128], index: 2, kind: input, shape index: {}]
  %s3 = inlined_call_operand.vmem [shape: f32[2,1,128], index: 3, kind: input, shape index: {}]
  %s4 = inlined_call_operand.vmem [shape: f32[2,1,128], index: 4, kind: input, shape index: {}]
  %s5 = inlined_call_operand.vmem [shape: bf16[2,1024,128], index: 5, kind: output, shape index: {}]
  %s6 = sld [smem:[#allocation0]]
  $region53: #{style_block_forward.5} parent=0
    _
  %s8 = ssub.s32 1, %s6
  %s9 = scalar_select 0, %s8, %s6
  loop: start=0, step=1, limit=4
  $region2: #{style_block_forward.5} parent=0 // loop_pre_header
    _
  $region3: #{style_block_forward.5} parent=0 // loop_header
    %s11 = sphi 0, %s15
    %p12 = scmp.ge.s32.totalorder %s11, 4
    %s21 = sphi 0, %s23
    %s24 = sphi 0, %s21
    %s25 = sphi 0, %s24
    %s41 = sphi 0, %s25
    %s45 = sphi 0, %s45
    %s47 = sphi 0, %s45
    %s48 = sphi 0, %s47
    %s62 = sphi 0, %s48
    %s68 = sphi 0, %s70
    %s71 = sphi 0, %s68
    %s72 = sphi 0, %s71
    %s88 = sphi 0, %s72
    %s94 = sphi 0, %s96
    %s97 = sphi 0, %s94
    %s98 = sphi 0, %s97
    %s114 = sphi 0, %s98
    %s120 = sphi 0, %s122
    %s123 = sphi 0, %s120
    %s124 = sphi 0, %s123
    %s140 = sphi 0, %s124
    %s146 = sphi 0, %s148
    %s149 = sphi 0, %s146
    %s150 = sphi 0, %s149
    %s166 = sphi 0, %s150
  $region4: #{style_block_forward.5} parent=0 // loop_header_branch
    %14 = sbr.rel (%p12) target = $region8
  $region5: #{style_block_forward.5} parent=0 // loop_body
    %s16 = ssub.s32 %s11, 1
    %s17 = ssub.s32 %s11, 2
    %s18 = sadd.s32 %s11, 1
    %s19 = ssub.s32 %s11, %s18
    %p20 = scmp.eq.s32.totalorder %s19, 0
    %s22 = sadd.s32 %s21, 1
    %s23 = scalar_select %p20, %s21, %s22
    %p26 = pneg %p20
    %p27 = scmp.eq.s32.totalorder %s11, 1
    %p28 = por %p26, %p27
    %p29 = scmp.ne.s32.totalorder %s21, %s24
    %p30 = scmp.eq.s32.totalorder %s11, 0
    %p31 = por %p29, %p30
    %p32 = scmp.ne.s32.totalorder %s21, %s24
    %p33 = scmp.eq.s32.totalorder %s16, 1
    %p34 = por %p32, %p33
    %p35 = scmp.ne.s32.totalorder %s24, %s25
    %p36 = scmp.eq.s32.totalorder %s16, 0
    %p37 = por %p35, %p36
    %p38 = scmp.ne.s32.totalorder %s24, %s25
    %p39 = scmp.eq.s32.totalorder %s17, 1
    %p40 = por %p38, %p39
    %p42 = scmp.ne.s32.totalorder %s25, %s41
    %p43 = scmp.eq.s32.totalorder %s17, 0
    %p44 = por %p42, %p43
    %s46 = sadd.s32 %s45, 1
    %p49 = scmp.eq.s32.totalorder %s11, 1
    %p50 = scmp.ne.s32.totalorder %s45, %s47
    %p51 = scmp.eq.s32.totalorder %s11, 0
    %p52 = por %p50, %p51
    %p53 = scmp.ne.s32.totalorder %s45, %s47
    %p54 = scmp.eq.s32.totalorder %s16, 1
    %p55 = por %p53, %p54
    %p56 = scmp.ne.s32.totalorder %s47, %s48
    %p57 = scmp.eq.s32.totalorder %s16, 0
    %p58 = por %p56, %p57
    %p59 = scmp.ne.s32.totalorder %s47, %s48
    %p60 = scmp.eq.s32.totalorder %s17, 1
    %p61 = por %p59, %p60
    %p63 = scmp.ne.s32.totalorder %s48, %s62
    %p64 = scmp.eq.s32.totalorder %s17, 0
    %p65 = por %p63, %p64
    %s66 = ssub.s32 %s11, %s18
    %p67 = scmp.eq.s32.totalorder %s66, 0
    %s69 = sadd.s32 %s68, 1
    %s70 = scalar_select %p67, %s68, %s69
    %p73 = pneg %p67
    %p74 = scmp.eq.s32.totalorder %s11, 1
    %p75 = por %p73, %p74
    %p76 = scmp.ne.s32.totalorder %s68, %s71
    %p77 = scmp.eq.s32.totalorder %s11, 0
    %p78 = por %p76, %p77
    %p79 = scmp.ne.s32.totalorder %s68, %s71
    %p80 = scmp.eq.s32.totalorder %s16, 1
    %p81 = por %p79, %p80
    %p82 = scmp.ne.s32.totalorder %s71, %s72
    %p83 = scmp.eq.s32.totalorder %s16, 0
    %p84 = por %p82, %p83
    %p85 = scmp.ne.s32.totalorder %s71, %s72
    %p86 = scmp.eq.s32.totalorder %s17, 1
    %p87 = por %p85, %p86
    %p89 = scmp.ne.s32.totalorder %s72, %s88
    %p90 = scmp.eq.s32.totalorder %s17, 0
    %p91 = por %p89, %p90
    %s92 = ssub.s32 %s11, %s18
    %p93 = scmp.eq.s32.totalorder %s92, 0
    %s95 = sadd.s32 %s94, 1
    %s96 = scalar_select %p93, %s94, %s95
    %p99 = pneg %p93
    %p100 = scmp.eq.s32.totalorder %s11, 1
    %p101 = por %p99, %p100
    %p102 = scmp.ne.s32.totalorder %s94, %s97
    %p103 = scmp.eq.s32.totalorder %s11, 0
    %p104 = por %p102, %p103
    %p105 = scmp.ne.s32.totalorder %s94, %s97
    %p106 = scmp.eq.s32.totalorder %s16, 1
    %p107 = por %p105, %p106
    %p108 = scmp.ne.s32.totalorder %s97, %s98
    %p109 = scmp.eq.s32.totalorder %s16, 0
    %p110 = por %p108, %p109
    %p111 = scmp.ne.s32.totalorder %s97, %s98
    %p112 = scmp.eq.s32.totalorder %s17, 1
    %p113 = por %p111, %p112
    %p115 = scmp.ne.s32.totalorder %s98, %s114
    %p116 = scmp.eq.s32.totalorder %s17, 0
    %p117 = por %p115, %p116
    %s118 = ssub.s32 %s11, %s18
    %p119 = scmp.eq.s32.totalorder %s118, 0
    %s121 = sadd.s32 %s120, 1
    %s122 = scalar_select %p119, %s120, %s121
    %p125 = pneg %p119
    %p126 = scmp.eq.s32.totalorder %s11, 1
    %p127 = por %p125, %p126
    %p128 = scmp.ne.s32.totalorder %s120, %s123
    %p129 = scmp.eq.s32.totalorder %s11, 0
    %p130 = por %p128, %p129
    %p131 = scmp.ne.s32.totalorder %s120, %s123
    %p132 = scmp.eq.s32.totalorder %s16, 1
    %p133 = por %p131, %p132
    %p134 = scmp.ne.s32.totalorder %s123, %s124
    %p135 = scmp.eq.s32.totalorder %s16, 0
    %p136 = por %p134, %p135
    %p137 = scmp.ne.s32.totalorder %s123, %s124
    %p138 = scmp.eq.s32.totalorder %s17, 1
    %p139 = por %p137, %p138
    %p141 = scmp.ne.s32.totalorder %s124, %s140
    %p142 = scmp.eq.s32.totalorder %s17, 0
    %p143 = por %p141, %p142
    %s144 = ssub.s32 %s11, %s18
    %p145 = scmp.eq.s32.totalorder %s144, 0
    %s147 = sadd.s32 %s146, 1
    %s148 = scalar_select %p145, %s146, %s147
    %p151 = pneg %p145
    %p152 = scmp.eq.s32.totalorder %s11, 1
    %p153 = por %p151, %p152
    %p154 = scmp.ne.s32.totalorder %s146, %s149
    %p155 = scmp.eq.s32.totalorder %s11, 0
    %p156 = por %p154, %p155
    %p157 = scmp.ne.s32.totalorder %s146, %s149
    %p158 = scmp.eq.s32.totalorder %s16, 1
    %p159 = por %p157, %p158
    %p160 = scmp.ne.s32.totalorder %s149, %s150
    %p161 = scmp.eq.s32.totalorder %s16, 0
    %p162 = por %p160, %p161
    %p163 = scmp.ne.s32.totalorder %s149, %s150
    %p164 = scmp.eq.s32.totalorder %s17, 1
    %p165 = por %p163, %p164
    %p167 = scmp.ne.s32.totalorder %s150, %s166
    %p168 = scmp.eq.s32.totalorder %s17, 0
    %p169 = por %p167, %p168
    %p170 = scmp.le.s32.totalorder 1, %s11
    %p171 = scmp.lt.s32.totalorder %s11, 3
    %p172 = pnand %p170, %p171
    %p173 = pneg %p172
    // Predicated region
    $region9: #{style_block_forward.5} parent=5 // pred_check
      _
    $region10: #{style_block_forward.5} parent=5 // pred_check_branch
      %175 = sbr.rel (%p172) target = $region12
    $region11: #{style_block_forward.5} parent=5 // pred_region
      %s176 = ssub.s32 %s11, 1
      // Predicated region
      $region13: #{style_block_forward.5} parent=11 // pred_check
        %p177 = pneg %p58
      $region14: #{style_block_forward.5} parent=11 // pred_check_branch
        %179 = sbr.rel (%p177) target = $region16
      $region15: #{style_block_forward.5} parent=11 // pred_region
        _
      $region16: #{style_block_forward.5} parent=11 // pred_fallthru
        _
    $region12: #{style_block_forward.5} parent=5 // pred_fallthru
      _
    %p180 = scmp.lt.s32.totalorder %s11, 2
    // Predicated region
    $region17: #{style_block_forward.5} parent=5 // pred_check
      %p181 = pneg %p180
    $region18: #{style_block_forward.5} parent=5 // pred_check_branch
      %183 = sbr.rel (%p181) target = $region20
    $region19: #{style_block_forward.5} parent=5 // pred_region
      // Predicated region
      $region21: #{style_block_forward.5} parent=19 // pred_check
        %p184 = pneg %p31
      $region22: #{style_block_forward.5} parent=19 // pred_check_branch
        %186 = sbr.rel (%p184) target = $region24
      $region23: #{style_block_forward.5} parent=19 // pred_region
        %p187 = scmp.lt.s32.totalorder %s11, 1
        %s188 = scalar_select %p187, %s11, 1
        %s189 = smul.addr %s188, 136
        %s190 = smul.addr %s189, 4
        %s191 = scalar_lea.vmem %s0, %s190
      $region24: #{style_block_forward.5} parent=19 // pred_fallthru
        _
      // Predicated region
      $region25: #{style_block_forward.5} parent=19 // pred_check
        %p192 = pneg %p78
      $region26: #{style_block_forward.5} parent=19 // pred_check_branch
        %194 = sbr.rel (%p192) target = $region28
      $region27: #{style_block_forward.5} parent=19 // pred_region
        %p195 = scmp.lt.s32.totalorder %s11, 1
        %s196 = scalar_select %p195, %s11, 1
        %s197 = smul.addr %s196, 128
        %s198 = smul.addr %s197, 4
        %s199 = scalar_lea.vmem %s2, %s198
      $region28: #{style_block_forward.5} parent=19 // pred_fallthru
        _
      // Predicated region
      $region29: #{style_block_forward.5} parent=19 // pred_check
        %p200 = pneg %p104
      $region30: #{style_block_forward.5} parent=19 // pred_check_branch
        %202 = sbr.rel (%p200) target = $region32
      $region31: #{style_block_forward.5} parent=19 // pred_region
        %p203 = scmp.lt.s32.totalorder %s11, 1
        %s204 = scalar_select %p203, %s11, 1
        %s205 = scalar_lea.vmem %s3, %s204
      $region32: #{style_block_forward.5} parent=19 // pred_fallthru
        _
      // Predicated region
      $region33: #{style_block_forward.5} parent=19 // pred_check
        %p206 = pneg %p130
      $region34: #{style_block_forward.5} parent=19 // pred_check_branch
        %208 = sbr.rel (%p206) target = $region36
      $region35: #{style_block_forward.5} parent=19 // pred_region
        %p209 = scmp.lt.s32.totalorder %s11, 1
        %s210 = scalar_select %p209, %s11, 1
        %s211 = scalar_lea.vmem %s4, %s210
      $region36: #{style_block_forward.5} parent=19 // pred_fallthru
        _
    $region20: #{style_block_forward.5} parent=5 // pred_fallthru
      _
    %p212 = scmp.le.s32.totalorder 1, %s11
    %p213 = scmp.lt.s32.totalorder %s11, 3
    %p214 = pnand %p212, %p213
    %p215 = pneg %p214
    // Predicated region
    $region37: #{style_block_forward.5} parent=5 // pred_check
      _
    $region38: #{style_block_forward.5} parent=5 // pred_check_branch
      %217 = sbr.rel (%p214) target = $region40
    $region39: #{style_block_forward.5} parent=5 // pred_region
      %s218 = ssub.s32 %s11, 1
      %p219 = scmp.lt.s32.totalorder %s16, 1
      %s220 = scalar_select %p219, %s16, 1
      %s221 = smul.addr %s220, 136
      %s222 = smul.addr %s221, 4
      %s223 = scalar_lea.vmem %s0, %s222
      %p224 = pneg %p37
      %p225 = pneg %p34
      %p226 = pneg %p58
      %p227 = pneg %p55
      %p228 = scmp.lt.s32.totalorder %s16, 1
      %s229 = scalar_select %p228, %s16, 1
      %s230 = smul.addr %s229, 128
      %s231 = smul.addr %s230, 4
      %s232 = scalar_lea.vmem %s2, %s231
      %p233 = pneg %p84
      %p234 = pneg %p81
      %p235 = scmp.lt.s32.totalorder %s16, 1
      %s236 = scalar_select %p235, %s16, 1
      %s237 = scalar_lea.vmem %s3, %s236
      %p238 = pneg %p110
      %p239 = pneg %p107
      %p240 = scmp.lt.s32.totalorder %s16, 1
      %s241 = scalar_select %p240, %s16, 1
      %s242 = scalar_lea.vmem %s4, %s241
      %p243 = pneg %p136
      %p244 = pneg %p133
      %p245 = pneg %p162
      %p246 = pneg %p159
      %p247 = scmp.lt.s32.totalorder %s16, 1
      %s248 = scalar_select %p247, %s16, 1
      %s249 = smul.addr %s248, 128
      %s250 = smul.addr %s249, 4
      %s251 = scalar_lea.vmem %s5, %s250
      %p252 = scmp.lt.s32.totalorder %s16, 1
      %s253 = scalar_select %p252, %s16, 1
      %s254 = smul.addr %s253, 136
      %s255 = smul.addr %s254, 4
      %s256 = scalar_lea.vmem %s0, %s255
      %p257 = scmp.lt.s32.totalorder %s16, 1
      %s258 = scalar_select %p257, %s16, 1
      %s259 = smul.addr %s258, 128
      %s260 = smul.addr %s259, 4
      %s261 = scalar_lea.vmem %s2, %s260
      %p262 = scmp.lt.s32.totalorder %s16, 1
      %s263 = scalar_select %p262, %s16, 1
      %s264 = scalar_lea.vmem %s3, %s263
      %p265 = scmp.lt.s32.totalorder %s16, 1
      %s266 = scalar_select %p265, %s16, 1
      %s267 = scalar_lea.vmem %s4, %s266
      %p268 = scmp.lt.s32.totalorder %s16, 1
      %s269 = scalar_select %p268, %s16, 1
      %s270 = smul.addr %s269, 128
      %s271 = smul.addr %s270, 4
      %s272 = scalar_lea.vmem %s5, %s271
      %v274 = vld [vmem:[%s256] sm:$0xf]
      %v275 = vld [vmem:[%s256 + $0x4] sm:$0xf]
      %v276 = vld [vmem:[%s256 + $0x8] sm:$0xf]
      %v277 = vld [vmem:[%s256 + $0xc] sm:$0xf]
      %v278 = vld [vmem:[%s256 + $0x10] sm:$0xf]
      %v279 = vld [vmem:[%s256 + $0x14] sm:$0xf]
      %v280 = vld [vmem:[%s256 + $0x18] sm:$0xf]
      %v281 = vld [vmem:[%s256 + $0x1c] sm:$0xf]
      %v282 = vld [vmem:[%s256 + $0x20] sm:$0xf]
      %v283 = vld [vmem:[%s256 + $0x24] sm:$0xf]
      %v284 = vld [vmem:[%s256 + $0x28] sm:$0xf]
      %v285 = vld [vmem:[%s256 + $0x2c] sm:$0xf]
      %v286 = vld [vmem:[%s256 + $0x30] sm:$0xf]
      %v287 = vld [vmem:[%s256 + $0x34] sm:$0xf]
      %v288 = vld [vmem:[%s256 + $0x38] sm:$0xf]
      %v289 = vld [vmem:[%s256 + $0x3c] sm:$0xf]
      %v290 = vld [vmem:[%s256 + $0x40] sm:$0xf]
      %v291 = vld [vmem:[%s256 + $0x44] sm:$0xf]
      %v292 = vld [vmem:[%s256 + $0x48] sm:$0xf]
      %v293 = vld [vmem:[%s256 + $0x4c] sm:$0xf]
      %v294 = vld [vmem:[%s256 + $0x50] sm:$0xf]
      %v295 = vld [vmem:[%s256 + $0x54] sm:$0xf]
      %v296 = vld [vmem:[%s256 + $0x58] sm:$0xf]
      %v297 = vld [vmem:[%s256 + $0x5c] sm:$0xf]
      %v298 = vld [vmem:[%s256 + $0x60] sm:$0xf]
      %v299 = vld [vmem:[%s256 + $0x64] sm:$0xf]
      %v300 = vld [vmem:[%s256 + $0x68] sm:$0xf]
      %v301 = vld [vmem:[%s256 + $0x6c] sm:$0xf]
      %v302 = vld [vmem:[%s256 + $0x70] sm:$0xf]
      %v303 = vld [vmem:[%s256 + $0x74] sm:$0xf]
      %v304 = vld [vmem:[%s256 + $0x78] sm:$0xf]
      %v305 = vld [vmem:[%s256 + $0x7c] sm:$0xf]
      %v306 = vld [vmem:[%s256 + $0x80] sm:$0xf]
      %v307 = vld [vmem:[%s256 + $0x84] sm:$0xf]
      %v308 = vld [vmem:[%s256 + $0x88] sm:$0xf]
      %v309 = vld [vmem:[%s256 + $0x8c] sm:$0xf]
      %v310 = vld [vmem:[%s256 + $0x90] sm:$0xf]
      %v311 = vld [vmem:[%s256 + $0x94] sm:$0xf]
      %v312 = vld [vmem:[%s256 + $0x98] sm:$0xf]
      %v313 = vld [vmem:[%s256 + $0x9c] sm:$0xf]
      %v314 = vld [vmem:[%s256 + $0xa0] sm:$0xf]
      %v315 = vld [vmem:[%s256 + $0xa4] sm:$0xf]
      %v316 = vld [vmem:[%s256 + $0xa8] sm:$0xf]
      %v317 = vld [vmem:[%s256 + $0xac] sm:$0xf]
      %v318 = vld [vmem:[%s256 + $0xb0] sm:$0xf]
      %v319 = vld [vmem:[%s256 + $0xb4] sm:$0xf]
      %v320 = vld [vmem:[%s256 + $0xb8] sm:$0xf]
      %v321 = vld [vmem:[%s256 + $0xbc] sm:$0xf]
      %v322 = vld [vmem:[%s256 + $0xc0] sm:$0xf]
      %v323 = vld [vmem:[%s256 + $0xc4] sm:$0xf]
      %v324 = vld [vmem:[%s256 + $0xc8] sm:$0xf]
      %v325 = vld [vmem:[%s256 + $0xcc] sm:$0xf]
      %v326 = vld [vmem:[%s256 + $0xd0] sm:$0xf]
      %v327 = vld [vmem:[%s256 + $0xd4] sm:$0xf]
      %v328 = vld [vmem:[%s256 + $0xd8] sm:$0xf]
      %v329 = vld [vmem:[%s256 + $0xdc] sm:$0xf]
      %v330 = vld [vmem:[%s256 + $0xe0] sm:$0xf]
      %v331 = vld [vmem:[%s256 + $0xe4] sm:$0xf]
      %v332 = vld [vmem:[%s256 + $0xe8] sm:$0xf]
      %v333 = vld [vmem:[%s256 + $0xec] sm:$0xf]
      %v334 = vld [vmem:[%s256 + $0xf0] sm:$0xf]
      %v335 = vld [vmem:[%s256 + $0xf4] sm:$0xf]
      %v336 = vld [vmem:[%s256 + $0xf8] sm:$0xf]
      %v337 = vld [vmem:[%s256 + $0xfc] sm:$0xf]
      %v338 = vld [vmem:[%s256 + $0x100] sm:$0xf]
      %v339 = vld [vmem:[%s256 + $0x104] sm:$0xf]
      %v340 = vld [vmem:[%s256 + $0x108] sm:$0xf]
      %v341 = vld [vmem:[%s256 + $0x10c] sm:$0xf]
      %v342 = vld [vmem:[%s256 + $0x110] sm:$0xf]
      %v343 = vld [vmem:[%s256 + $0x114] sm:$0xf]
      %v344 = vld [vmem:[%s256 + $0x118] sm:$0xf]
      %v345 = vld [vmem:[%s256 + $0x11c] sm:$0xf]
      %v346 = vld [vmem:[%s256 + $0x120] sm:$0xf]
      %v347 = vld [vmem:[%s256 + $0x124] sm:$0xf]
      %v348 = vld [vmem:[%s256 + $0x128] sm:$0xf]
      %v349 = vld [vmem:[%s256 + $0x12c] sm:$0xf]
      %v350 = vld [vmem:[%s256 + $0x130] sm:$0xf]
      %v351 = vld [vmem:[%s256 + $0x134] sm:$0xf]
      %v352 = vld [vmem:[%s256 + $0x138] sm:$0xf]
      %v353 = vld [vmem:[%s256 + $0x13c] sm:$0xf]
      %v354 = vld [vmem:[%s256 + $0x140] sm:$0xf]
      %v355 = vld [vmem:[%s256 + $0x144] sm:$0xf]
      %v356 = vld [vmem:[%s256 + $0x148] sm:$0xf]
      %v357 = vld [vmem:[%s256 + $0x14c] sm:$0xf]
      %v358 = vld [vmem:[%s256 + $0x150] sm:$0xf]
      %v359 = vld [vmem:[%s256 + $0x154] sm:$0xf]
      %v360 = vld [vmem:[%s256 + $0x158] sm:$0xf]
      %v361 = vld [vmem:[%s256 + $0x15c] sm:$0xf]
      %v362 = vld [vmem:[%s256 + $0x160] sm:$0xf]
      %v363 = vld [vmem:[%s256 + $0x164] sm:$0xf]
      %v364 = vld [vmem:[%s256 + $0x168] sm:$0xf]
      %v365 = vld [vmem:[%s256 + $0x16c] sm:$0xf]
      %v366 = vld [vmem:[%s256 + $0x170] sm:$0xf]
      %v367 = vld [vmem:[%s256 + $0x174] sm:$0xf]
      %v368 = vld [vmem:[%s256 + $0x178] sm:$0xf]
      %v369 = vld [vmem:[%s256 + $0x17c] sm:$0xf]
      %v370 = vld [vmem:[%s256 + $0x180] sm:$0xf]
      %v371 = vld [vmem:[%s256 + $0x184] sm:$0xf]
      %v372 = vld [vmem:[%s256 + $0x188] sm:$0xf]
      %v373 = vld [vmem:[%s256 + $0x18c] sm:$0xf]
      %v374 = vld [vmem:[%s256 + $0x190] sm:$0xf]
      %v375 = vld [vmem:[%s256 + $0x194] sm:$0xf]
      %v376 = vld [vmem:[%s256 + $0x198] sm:$0xf]
      %v377 = vld [vmem:[%s256 + $0x19c] sm:$0xf]
      %v378 = vld [vmem:[%s256 + $0x1a0] sm:$0xf]
      %v379 = vld [vmem:[%s256 + $0x1a4] sm:$0xf]
      %v380 = vld [vmem:[%s256 + $0x1a8] sm:$0xf]
      %v381 = vld [vmem:[%s256 + $0x1ac] sm:$0xf]
      %v382 = vld [vmem:[%s256 + $0x1b0] sm:$0xf]
      %v383 = vld [vmem:[%s256 + $0x1b4] sm:$0xf]
      %v384 = vld [vmem:[%s256 + $0x1b8] sm:$0xf]
      %v385 = vld [vmem:[%s256 + $0x1bc] sm:$0xf]
      %v386 = vld [vmem:[%s256 + $0x1c0] sm:$0xf]
      %v387 = vld [vmem:[%s256 + $0x1c4] sm:$0xf]
      %v388 = vld [vmem:[%s256 + $0x1c8] sm:$0xf]
      %v389 = vld [vmem:[%s256 + $0x1cc] sm:$0xf]
      %v390 = vld [vmem:[%s256 + $0x1d0] sm:$0xf]
      %v391 = vld [vmem:[%s256 + $0x1d4] sm:$0xf]
      %v392 = vld [vmem:[%s256 + $0x1d8] sm:$0xf]
      %v393 = vld [vmem:[%s256 + $0x1dc] sm:$0xf]
      %v394 = vld [vmem:[%s256 + $0x1e0] sm:$0xf]
      %v395 = vld [vmem:[%s256 + $0x1e4] sm:$0xf]
      %v396 = vld [vmem:[%s256 + $0x1e8] sm:$0xf]
      %v397 = vld [vmem:[%s256 + $0x1ec] sm:$0xf]
      %v398 = vld [vmem:[%s256 + $0x1f0] sm:$0xf]
      %v399 = vld [vmem:[%s256 + $0x1f4] sm:$0xf]
      %v400 = vld [vmem:[%s256 + $0x1f8] sm:$0xf]
      %v401 = vld [vmem:[%s256 + $0x1fc] sm:$0xf]
      %v402 = vld [vmem:[%s1] sm:$0xf]
      %v403 = vld [vmem:[%s1 + $0x4] sm:$0xf]
      %v404 = vld [vmem:[%s1 + $0x8] sm:$0xf]
      %v405 = vld [vmem:[%s1 + $0xc] sm:$0xf]
      %v406 = vld [vmem:[%s1 + $0x10] sm:$0xf]
      %v407 = vld [vmem:[%s1 + $0x14] sm:$0xf]
      %v408 = vld [vmem:[%s1 + $0x18] sm:$0xf]
      %v409 = vld [vmem:[%s1 + $0x1c] sm:$0xf]
      %v410 = vld [vmem:[%s1 + $0x20] sm:$0xf]
      %v411 = vld [vmem:[%s1 + $0x24] sm:$0xf]
      %v412 = vld [vmem:[%s1 + $0x28] sm:$0xf]
      %v413 = vld [vmem:[%s1 + $0x2c] sm:$0xf]
      %v414 = vld [vmem:[%s1 + $0x30] sm:$0xf]
      %v415 = vld [vmem:[%s1 + $0x34] sm:$0xf]
      %v416 = vld [vmem:[%s1 + $0x38] sm:$0xf]
      %v417 = vld [vmem:[%s1 + $0x3c] sm:$0xf]
      %s418 = scalar_lea.vmem %s256, 16
      %v419 = vld [vmem:[%s418] sm:$0xf]
      %v420 = vld [vmem:[%s418 + $0x4] sm:$0xf]
      %v421 = vld [vmem:[%s418 + $0x8] sm:$0xf]
      %v422 = vld [vmem:[%s418 + $0xc] sm:$0xf]
      %v423 = vld [vmem:[%s418 + $0x10] sm:$0xf]
      %v424 = vld [vmem:[%s418 + $0x14] sm:$0xf]
      %v425 = vld [vmem:[%s418 + $0x18] sm:$0xf]
      %v426 = vld [vmem:[%s418 + $0x1c] sm:$0xf]
      %v427 = vld [vmem:[%s418 + $0x20] sm:$0xf]
      %v428 = vld [vmem:[%s418 + $0x24] sm:$0xf]
      %v429 = vld [vmem:[%s418 + $0x28] sm:$0xf]
      %v430 = vld [vmem:[%s418 + $0x2c] sm:$0xf]
      %v431 = vld [vmem:[%s418 + $0x30] sm:$0xf]
      %v432 = vld [vmem:[%s418 + $0x34] sm:$0xf]
      %v433 = vld [vmem:[%s418 + $0x38] sm:$0xf]
      %v434 = vld [vmem:[%s418 + $0x3c] sm:$0xf]
      %v435 = vld [vmem:[%s418 + $0x40] sm:$0xf]
      %v436 = vld [vmem:[%s418 + $0x44] sm:$0xf]
      %v437 = vld [vmem:[%s418 + $0x48] sm:$0xf]
      %v438 = vld [vmem:[%s418 + $0x4c] sm:$0xf]
      %v439 = vld [vmem:[%s418 + $0x50] sm:$0xf]
      %v440 = vld [vmem:[%s418 + $0x54] sm:$0xf]
      %v441 = vld [vmem:[%s418 + $0x58] sm:$0xf]
      %v442 = vld [vmem:[%s418 + $0x5c] sm:$0xf]
      %v443 = vld [vmem:[%s418 + $0x60] sm:$0xf]
      %v444 = vld [vmem:[%s418 + $0x64] sm:$0xf]
      %v445 = vld [vmem:[%s418 + $0x68] sm:$0xf]
      %v446 = vld [vmem:[%s418 + $0x6c] sm:$0xf]
      %v447 = vld [vmem:[%s418 + $0x70] sm:$0xf]
      %v448 = vld [vmem:[%s418 + $0x74] sm:$0xf]
      %v449 = vld [vmem:[%s418 + $0x78] sm:$0xf]
      %v450 = vld [vmem:[%s418 + $0x7c] sm:$0xf]
      %v451 = vld [vmem:[%s418 + $0x80] sm:$0xf]
      %v452 = vld [vmem:[%s418 + $0x84] sm:$0xf]
      %v453 = vld [vmem:[%s418 + $0x88] sm:$0xf]
      %v454 = vld [vmem:[%s418 + $0x8c] sm:$0xf]
      %v455 = vld [vmem:[%s418 + $0x90] sm:$0xf]
      %v456 = vld [vmem:[%s418 + $0x94] sm:$0xf]
      %v457 = vld [vmem:[%s418 + $0x98] sm:$0xf]
      %v458 = vld [vmem:[%s418 + $0x9c] sm:$0xf]
      %v459 = vld [vmem:[%s418 + $0xa0] sm:$0xf]
      %v460 = vld [vmem:[%s418 + $0xa4] sm:$0xf]
      %v461 = vld [vmem:[%s418 + $0xa8] sm:$0xf]
      %v462 = vld [vmem:[%s418 + $0xac] sm:$0xf]
      %v463 = vld [vmem:[%s418 + $0xb0] sm:$0xf]
      %v464 = vld [vmem:[%s418 + $0xb4] sm:$0xf]
      %v465 = vld [vmem:[%s418 + $0xb8] sm:$0xf]
      %v466 = vld [vmem:[%s418 + $0xbc] sm:$0xf]
      %v467 = vld [vmem:[%s418 + $0xc0] sm:$0xf]
      %v468 = vld [vmem:[%s418 + $0xc4] sm:$0xf]
      %v469 = vld [vmem:[%s418 + $0xc8] sm:$0xf]
      %v470 = vld [vmem:[%s418 + $0xcc] sm:$0xf]
      %v471 = vld [vmem:[%s418 + $0xd0] sm:$0xf]
      %v472 = vld [vmem:[%s418 + $0xd4] sm:$0xf]
      %v473 = vld [vmem:[%s418 + $0xd8] sm:$0xf]
      %v474 = vld [vmem:[%s418 + $0xdc] sm:$0xf]
      %v475 = vld [vmem:[%s418 + $0xe0] sm:$0xf]
      %v476 = vld [vmem:[%s418 + $0xe4] sm:$0xf]
      %v477 = vld [vmem:[%s418 + $0xe8] sm:$0xf]
      %v478 = vld [vmem:[%s418 + $0xec] sm:$0xf]
      %v479 = vld [vmem:[%s418 + $0xf0] sm:$0xf]
      %v480 = vld [vmem:[%s418 + $0xf4] sm:$0xf]
      %v481 = vld [vmem:[%s418 + $0xf8] sm:$0xf]
      %v482 = vld [vmem:[%s418 + $0xfc] sm:$0xf]
      %v483 = vld [vmem:[%s418 + $0x100] sm:$0xf]
      %v484 = vld [vmem:[%s418 + $0x104] sm:$0xf]
      %v485 = vld [vmem:[%s418 + $0x108] sm:$0xf]
      %v486 = vld [vmem:[%s418 + $0x10c] sm:$0xf]
      %v487 = vld [vmem:[%s418 + $0x110] sm:$0xf]
      %v488 = vld [vmem:[%s418 + $0x114] sm:$0xf]
      %v489 = vld [vmem:[%s418 + $0x118] sm:$0xf]
      %v490 = vld [vmem:[%s418 + $0x11c] sm:$0xf]
      %v491 = vld [vmem:[%s418 + $0x120] sm:$0xf]
      %v492 = vld [vmem:[%s418 + $0x124] sm:$0xf]
      %v493 = vld [vmem:[%s418 + $0x128] sm:$0xf]
      %v494 = vld [vmem:[%s418 + $0x12c] sm:$0xf]
      %v495 = vld [vmem:[%s418 + $0x130] sm:$0xf]
      %v496 = vld [vmem:[%s418 + $0x134] sm:$0xf]
      %v497 = vld [vmem:[%s418 + $0x138] sm:$0xf]
      %v498 = vld [vmem:[%s418 + $0x13c] sm:$0xf]
      %v499 = vld [vmem:[%s418 + $0x140] sm:$0xf]
      %v500 = vld [vmem:[%s418 + $0x144] sm:$0xf]
      %v501 = vld [vmem:[%s418 + $0x148] sm:$0xf]
      %v502 = vld [vmem:[%s418 + $0x14c] sm:$0xf]
      %v503 = vld [vmem:[%s418 + $0x150] sm:$0xf]
      %v504 = vld [vmem:[%s418 + $0x154] sm:$0xf]
      %v505 = vld [vmem:[%s418 + $0x158] sm:$0xf]
      %v506 = vld [vmem:[%s418 + $0x15c] sm:$0xf]
      %v507 = vld [vmem:[%s418 + $0x160] sm:$0xf]
      %v508 = vld [vmem:[%s418 + $0x164] sm:$0xf]
      %v509 = vld [vmem:[%s418 + $0x168] sm:$0xf]
      %v510 = vld [vmem:[%s418 + $0x16c] sm:$0xf]
      %v511 = vld [vmem:[%s418 + $0x170] sm:$0xf]
      %v512 = vld [vmem:[%s418 + $0x174] sm:$0xf]
      %v513 = vld [vmem:[%s418 + $0x178] sm:$0xf]
      %v514 = vld [vmem:[%s418 + $0x17c] sm:$0xf]
      %v515 = vld [vmem:[%s418 + $0x180] sm:$0xf]
      %v516 = vld [vmem:[%s418 + $0x184] sm:$0xf]
      %v517 = vld [vmem:[%s418 + $0x188] sm:$0xf]
      %v518 = vld [vmem:[%s418 + $0x18c] sm:$0xf]
      %v519 = vld [vmem:[%s418 + $0x190] sm:$0xf]
      %v520 = vld [vmem:[%s418 + $0x194] sm:$0xf]
      %v521 = vld [vmem:[%s418 + $0x198] sm:$0xf]
      %v522 = vld [vmem:[%s418 + $0x19c] sm:$0xf]
      %v523 = vld [vmem:[%s418 + $0x1a0] sm:$0xf]
      %v524 = vld [vmem:[%s418 + $0x1a4] sm:$0xf]
      %v525 = vld [vmem:[%s418 + $0x1a8] sm:$0xf]
      %v526 = vld [vmem:[%s418 + $0x1ac] sm:$0xf]
      %v527 = vld [vmem:[%s418 + $0x1b0] sm:$0xf]
      %v528 = vld [vmem:[%s418 + $0x1b4] sm:$0xf]
      %v529 = vld [vmem:[%s418 + $0x1b8] sm:$0xf]
      %v530 = vld [vmem:[%s418 + $0x1bc] sm:$0xf]
      %v531 = vld [vmem:[%s418 + $0x1c0] sm:$0xf]
      %v532 = vld [vmem:[%s418 + $0x1c4] sm:$0xf]
      %v533 = vld [vmem:[%s418 + $0x1c8] sm:$0xf]
      %v534 = vld [vmem:[%s418 + $0x1cc] sm:$0xf]
      %v535 = vld [vmem:[%s418 + $0x1d0] sm:$0xf]
      %v536 = vld [vmem:[%s418 + $0x1d4] sm:$0xf]
      %v537 = vld [vmem:[%s418 + $0x1d8] sm:$0xf]
      %v538 = vld [vmem:[%s418 + $0x1dc] sm:$0xf]
      %v539 = vld [vmem:[%s418 + $0x1e0] sm:$0xf]
      %v540 = vld [vmem:[%s418 + $0x1e4] sm:$0xf]
      %v541 = vld [vmem:[%s418 + $0x1e8] sm:$0xf]
      %v542 = vld [vmem:[%s418 + $0x1ec] sm:$0xf]
      %v543 = vld [vmem:[%s418 + $0x1f0] sm:$0xf]
      %v544 = vld [vmem:[%s418 + $0x1f4] sm:$0xf]
      %v545 = vld [vmem:[%s418 + $0x1f8] sm:$0xf]
      %v546 = vld [vmem:[%s418 + $0x1fc] sm:$0xf]
      %s547 = scalar_lea.vmem %s1, 64
      %v548 = vld [vmem:[%s547] sm:$0xf]
      %v549 = vld [vmem:[%s547 + $0x4] sm:$0xf]
      %v550 = vld [vmem:[%s547 + $0x8] sm:$0xf]
      %v551 = vld [vmem:[%s547 + $0xc] sm:$0xf]
      %v552 = vld [vmem:[%s547 + $0x10] sm:$0xf]
      %v553 = vld [vmem:[%s547 + $0x14] sm:$0xf]
      %v554 = vld [vmem:[%s547 + $0x18] sm:$0xf]
      %v555 = vld [vmem:[%s547 + $0x1c] sm:$0xf]
      %v556 = vld [vmem:[%s547 + $0x20] sm:$0xf]
      %v557 = vld [vmem:[%s547 + $0x24] sm:$0xf]
      %v558 = vld [vmem:[%s547 + $0x28] sm:$0xf]
      %v559 = vld [vmem:[%s547 + $0x2c] sm:$0xf]
      %v560 = vld [vmem:[%s547 + $0x30] sm:$0xf]
      %v561 = vld [vmem:[%s547 + $0x34] sm:$0xf]
      %v562 = vld [vmem:[%s547 + $0x38] sm:$0xf]
      %v563 = vld [vmem:[%s547 + $0x3c] sm:$0xf]
      %v692 = vunpack.c.l.b16 %v419
      %v693 = vunpack.c.l.b16 %v420
      %v694 = vunpack.c.l.b16 %v421
      %v695 = vunpack.c.l.b16 %v422
      %v696 = vunpack.c.l.b16 %v423
      %v697 = vunpack.c.l.b16 %v424
      %v698 = vunpack.c.l.b16 %v425
      %v699 = vunpack.c.l.b16 %v426
      %v700 = vunpack.c.l.b16 %v427
      %v701 = vunpack.c.l.b16 %v428
      %v702 = vunpack.c.l.b16 %v429
      %v703 = vunpack.c.l.b16 %v430
      %v704 = vunpack.c.l.b16 %v431
      %v705 = vunpack.c.l.b16 %v432
      %v706 = vunpack.c.l.b16 %v433
      %v707 = vunpack.c.l.b16 %v434
      %v708 = vunpack.c.l.b16 %v435
      %v709 = vunpack.c.l.b16 %v436
      %v710 = vunpack.c.l.b16 %v437
      %v711 = vunpack.c.l.b16 %v438
      %v712 = vunpack.c.l.b16 %v439
      %v713 = vunpack.c.l.b16 %v440
      %v714 = vunpack.c.l.b16 %v441
      %v715 = vunpack.c.l.b16 %v442
      %v716 = vunpack.c.l.b16 %v443
      %v717 = vunpack.c.l.b16 %v444
      %v718 = vunpack.c.l.b16 %v445
      %v719 = vunpack.c.l.b16 %v446
      %v720 = vunpack.c.l.b16 %v447
      %v721 = vunpack.c.l.b16 %v448
      %v722 = vunpack.c.l.b16 %v449
      %v723 = vunpack.c.l.b16 %v450
      %v724 = vunpack.c.l.b16 %v451
      %v725 = vunpack.c.l.b16 %v452
      %v726 = vunpack.c.l.b16 %v453
      %v727 = vunpack.c.l.b16 %v454
      %v728 = vunpack.c.l.b16 %v455
      %v729 = vunpack.c.l.b16 %v456
      %v730 = vunpack.c.l.b16 %v457
      %v731 = vunpack.c.l.b16 %v458
      %v732 = vunpack.c.l.b16 %v459
      %v733 = vunpack.c.l.b16 %v460
      %v734 = vunpack.c.l.b16 %v461
      %v735 = vunpack.c.l.b16 %v462
      %v736 = vunpack.c.l.b16 %v463
      %v737 = vunpack.c.l.b16 %v464
      %v738 = vunpack.c.l.b16 %v465
      %v739 = vunpack.c.l.b16 %v466
      %v740 = vunpack.c.l.b16 %v467
      %v741 = vunpack.c.l.b16 %v468
      %v742 = vunpack.c.l.b16 %v469
      %v743 = vunpack.c.l.b16 %v470
      %v744 = vunpack.c.l.b16 %v471
      %v745 = vunpack.c.l.b16 %v472
      %v746 = vunpack.c.l.b16 %v473
      %v747 = vunpack.c.l.b16 %v474
      %v748 = vunpack.c.l.b16 %v475
      %v749 = vunpack.c.l.b16 %v476
      %v750 = vunpack.c.l.b16 %v477
      %v751 = vunpack.c.l.b16 %v478
      %v752 = vunpack.c.l.b16 %v479
      %v753 = vunpack.c.l.b16 %v480
      %v754 = vunpack.c.l.b16 %v481
      %v755 = vunpack.c.l.b16 %v482
      %v756 = vunpack.c.l.b16 %v483
      %v757 = vunpack.c.l.b16 %v484
      %v758 = vunpack.c.l.b16 %v485
      %v759 = vunpack.c.l.b16 %v486
      %v760 = vunpack.c.l.b16 %v487
      %v761 = vunpack.c.l.b16 %v488
      %v762 = vunpack.c.l.b16 %v489
      %v763 = vunpack.c.l.b16 %v490
      %v764 = vunpack.c.l.b16 %v491
      %v765 = vunpack.c.l.b16 %v492
      %v766 = vunpack.c.l.b16 %v493
      %v767 = vunpack.c.l.b16 %v494
      %v768 = vunpack.c.l.b16 %v495
      %v769 = vunpack.c.l.b16 %v496
      %v770 = vunpack.c.l.b16 %v497
      %v771 = vunpack.c.l.b16 %v498
      %v772 = vunpack.c.l.b16 %v499
      %v773 = vunpack.c.l.b16 %v500
      %v774 = vunpack.c.l.b16 %v501
      %v775 = vunpack.c.l.b16 %v502
      %v776 = vunpack.c.l.b16 %v503
      %v777 = vunpack.c.l.b16 %v504
      %v778 = vunpack.c.l.b16 %v505
      %v779 = vunpack.c.l.b16 %v506
      %v780 = vunpack.c.l.b16 %v507
      %v781 = vunpack.c.l.b16 %v508
      %v782 = vunpack.c.l.b16 %v509
      %v783 = vunpack.c.l.b16 %v510
      %v784 = vunpack.c.l.b16 %v511
      %v785 = vunpack.c.l.b16 %v512
      %v786 = vunpack.c.l.b16 %v513
      %v787 = vunpack.c.l.b16 %v514
      %v788 = vunpack.c.l.b16 %v515
      %v789 = vunpack.c.l.b16 %v516
      %v790 = vunpack.c.l.b16 %v517
      %v791 = vunpack.c.l.b16 %v518
      %v792 = vunpack.c.l.b16 %v519
      %v793 = vunpack.c.l.b16 %v520
      %v794 = vunpack.c.l.b16 %v521
      %v795 = vunpack.c.l.b16 %v522
      %v796 = vunpack.c.l.b16 %v523
      %v797 = vunpack.c.l.b16 %v524
      %v798 = vunpack.c.l.b16 %v525
      %v799 = vunpack.c.l.b16 %v526
      %v800 = vunpack.c.l.b16 %v527
      %v801 = vunpack.c.l.b16 %v528
      %v802 = vunpack.c.l.b16 %v529
      %v803 = vunpack.c.l.b16 %v530
      %v804 = vunpack.c.l.b16 %v531
      %v805 = vunpack.c.l.b16 %v532
      %v806 = vunpack.c.l.b16 %v533
      %v807 = vunpack.c.l.b16 %v534
      %v808 = vunpack.c.l.b16 %v535
      %v809 = vunpack.c.l.b16 %v536
      %v810 = vunpack.c.l.b16 %v537
      %v811 = vunpack.c.l.b16 %v538
      %v812 = vunpack.c.l.b16 %v539
      %v813 = vunpack.c.l.b16 %v540
      %v814 = vunpack.c.l.b16 %v541
      %v815 = vunpack.c.l.b16 %v542
      %v816 = vunpack.c.l.b16 %v543
      %v817 = vunpack.c.l.b16 %v544
      %v818 = vunpack.c.l.b16 %v545
      %v819 = vunpack.c.l.b16 %v546
      %v820 = vpack.c.b16 %v693, %v692
      %v821 = vpack.c.b16 %v695, %v694
      %v822 = vpack.c.b16 %v697, %v696
      %v823 = vpack.c.b16 %v699, %v698
      %v824 = vpack.c.b16 %v701, %v700
      %v825 = vpack.c.b16 %v703, %v702
      %v826 = vpack.c.b16 %v705, %v704
      %v827 = vpack.c.b16 %v707, %v706
      %v828 = vpack.c.b16 %v709, %v708
      %v829 = vpack.c.b16 %v711, %v710
      %v830 = vpack.c.b16 %v713, %v712
      %v831 = vpack.c.b16 %v715, %v714
      %v832 = vpack.c.b16 %v717, %v716
      %v833 = vpack.c.b16 %v719, %v718
      %v834 = vpack.c.b16 %v721, %v720
      %v835 = vpack.c.b16 %v723, %v722
      %v836 = vpack.c.b16 %v725, %v724
      %v837 = vpack.c.b16 %v727, %v726
      %v838 = vpack.c.b16 %v729, %v728
      %v839 = vpack.c.b16 %v731, %v730
      %v840 = vpack.c.b16 %v733, %v732
      %v841 = vpack.c.b16 %v735, %v734
      %v842 = vpack.c.b16 %v737, %v736
      %v843 = vpack.c.b16 %v739, %v738
      %v844 = vpack.c.b16 %v741, %v740
      %v845 = vpack.c.b16 %v743, %v742
      %v846 = vpack.c.b16 %v745, %v744
      %v847 = vpack.c.b16 %v747, %v746
      %v848 = vpack.c.b16 %v749, %v748
      %v849 = vpack.c.b16 %v751, %v750
      %v850 = vpack.c.b16 %v753, %v752
      %v851 = vpack.c.b16 %v755, %v754
      %v852 = vpack.c.b16 %v757, %v756
      %v853 = vpack.c.b16 %v759, %v758
      %v854 = vpack.c.b16 %v761, %v760
      %v855 = vpack.c.b16 %v763, %v762
      %v856 = vpack.c.b16 %v765, %v764
      %v857 = vpack.c.b16 %v767, %v766
      %v858 = vpack.c.b16 %v769, %v768
      %v859 = vpack.c.b16 %v771, %v770
      %v860 = vpack.c.b16 %v773, %v772
      %v861 = vpack.c.b16 %v775, %v774
      %v862 = vpack.c.b16 %v777, %v776
      %v863 = vpack.c.b16 %v779, %v778
      %v864 = vpack.c.b16 %v781, %v780
      %v865 = vpack.c.b16 %v783, %v782
      %v866 = vpack.c.b16 %v785, %v784
      %v867 = vpack.c.b16 %v787, %v786
      %v868 = vpack.c.b16 %v789, %v788
      %v869 = vpack.c.b16 %v791, %v790
      %v870 = vpack.c.b16 %v793, %v792
      %v871 = vpack.c.b16 %v795, %v794
      %v872 = vpack.c.b16 %v797, %v796
      %v873 = vpack.c.b16 %v799, %v798
      %v874 = vpack.c.b16 %v801, %v800
      %v875 = vpack.c.b16 %v803, %v802
      %v876 = vpack.c.b16 %v805, %v804
      %v877 = vpack.c.b16 %v807, %v806
      %v878 = vpack.c.b16 %v809, %v808
      %v879 = vpack.c.b16 %v811, %v810
      %v880 = vpack.c.b16 %v813, %v812
      %v881 = vpack.c.b16 %v815, %v814
      %v882 = vpack.c.b16 %v817, %v816
      %v883 = vpack.c.b16 %v819, %v818
      %v964 = vunpack.c.l.b16 %v548
      %v965 = vunpack.c.l.b16 %v549
      %v966 = vunpack.c.l.b16 %v550
      %v967 = vunpack.c.l.b16 %v551
      %v968 = vunpack.c.l.b16 %v552
      %v969 = vunpack.c.l.b16 %v553
      %v970 = vunpack.c.l.b16 %v554
      %v971 = vunpack.c.l.b16 %v555
      %v972 = vunpack.c.l.b16 %v556
      %v973 = vunpack.c.l.b16 %v557
      %v974 = vunpack.c.l.b16 %v558
      %v975 = vunpack.c.l.b16 %v559
      %v976 = vunpack.c.l.b16 %v560
      %v977 = vunpack.c.l.b16 %v561
      %v978 = vunpack.c.l.b16 %v562
      %v979 = vunpack.c.l.b16 %v563
      %v980 = vpack.c.b16 %v965, %v964
      %v981 = vpack.c.b16 %v967, %v966
      %v982 = vpack.c.b16 %v969, %v968
      %v983 = vpack.c.b16 %v971, %v970
      %v984 = vpack.c.b16 %v973, %v972
      %v985 = vpack.c.b16 %v975, %v974
      %v986 = vpack.c.b16 %v977, %v976
      %v987 = vpack.c.b16 %v979, %v978
      %996 = vmatprep.subr.bf16.mxu0 0
      %997 = vmatpush1.bf16.msra.mxu0 %v980
      %998 = vmatprep.subr.bf16.mxu0 0
      %999 = vmatpush1.bf16.msra.mxu0 %v981
      %1000 = vmatprep.subr.bf16.mxu0 0
      %1001 = vmatpush1.bf16.msra.mxu0 %v982
      %1002 = vmatprep.subr.bf16.mxu0 0
      %1003 = vmatpush1.bf16.msra.mxu0 %v983
      %1004 = vmatprep.subr.bf16.mxu0 0
      %1005 = vmatpush1.bf16.msra.mxu0 %v984
      %1006 = vmatprep.subr.bf16.mxu0 0
      %1007 = vmatpush1.bf16.msra.mxu0 %v985
      %1008 = vmatprep.subr.bf16.mxu0 0
      %1009 = vmatpush1.bf16.msra.mxu0 %v986
      %1010 = vmatprep.subr.bf16.mxu0 0
      %1011 = vmatpush1.bf16.msra.mxu0 %v987
      %1012 = vmatprep.subr.bf16.mxu0 0
      %1013 = vmatpush1.bf16.msra.mxu0 0
      %1014 = vmatprep.subr.bf16.mxu0 0
      %1015 = vmatpush1.bf16.msra.mxu0 0
      %1016 = vmatprep.subr.bf16.mxu0 0
      %1017 = vmatpush1.bf16.msra.mxu0 0
      %1018 = vmatprep.subr.bf16.mxu0 0
      %1019 = vmatpush1.bf16.msra.mxu0 0
      %1020 = vmatprep.subr.bf16.mxu0 0
      %1021 = vmatpush1.bf16.msra.mxu0 0
      %1022 = vmatprep.subr.bf16.mxu0 0
      %1023 = vmatpush1.bf16.msra.mxu0 0
      %1024 = vmatprep.subr.bf16.mxu0 0
      %1025 = vmatpush1.bf16.msra.mxu0 0
      %1026 = vmatprep.subr.bf16.mxu0 0
      %1027 = vmatpush1.bf16.msra.mxu0 0
      %1028 = vmatprep.mubr.bf16.mxu0 0
      %1029 = vmatmul.mubr.bf16.gmra.mrb[0].mxu0 %v820
      %v1030 = vpop.f32.mrb[0].mxu0
      %v1031 = vadd.f32 0.0, %v1030
      %v1032 = vpop.f32.mrb[0].mxu0
      %v1033 = vpop.f32.mrb[0].mxu0
      %v1034 = vadd.f32 0.0, %v1033
      %v1035 = vpop.f32.mrb[0].mxu0
      %1036 = vmatprep.mubr.bf16.mxu0 0
      %1037 = vmatmul.mubr.bf16.gmra.mrb[0].mxu0 %v821
      %v1038 = vpop.f32.mrb[0].mxu0
      %v1039 = vadd.f32 0.0, %v1038
      %v1040 = vpop.f32.mrb[0].mxu0
      %v1041 = vpop.f32.mrb[0].mxu0
      %v1042 = vadd.f32 0.0, %v1041
      %v1043 = vpop.f32.mrb[0].mxu0
      %1044 = vmatprep.mubr.bf16.mxu0 0
      %1045 = vmatmul.mubr.bf16.gmra.mrb[0].mxu0 %v822
      %v1046 = vpop.f32.mrb[0].mxu0
      %v1047 = vadd.f32 0.0, %v1046
      %v1048 = vpop.f32.mrb[0].mxu0
      %v1049 = vpop.f32.mrb[0].mxu0
      %v1050 = vadd.f32 0.0, %v1049
      %v1051 = vpop.f32.mrb[0].mxu0
      %1052 = vmatprep.mubr.bf16.mxu0 0
      %1053 = vmatmul.mubr.bf16.gmra.mrb[0].mxu0 %v823
      %v1054 = vpop.f32.mrb[0].mxu0
      %v1055 = vadd.f32 0.0, %v1054
      %v1056 = vpop.f32.mrb[0].mxu0
      %v1057 = vpop.f32.mrb[0].mxu0
      %v1058 = vadd.f32 0.0, %v1057
      %v1059 = vpop.f32.mrb[0].mxu0
      %1060 = vmatprep.mubr.bf16.mxu0 0
      %1061 = vmatmul.mubr.bf16.gmra.mrb[0].mxu0 %v824
      %v1062 = vpop.f32.mrb[0].mxu0
      %v1063 = vadd.f32 0.0, %v1062
      %v1064 = vpop.f32.mrb[0].mxu0
      %v1065 = vpop.f32.mrb[0].mxu0
      %v1066 = vadd.f32 0.0, %v1065
      %v1067 = vpop.f32.mrb[0].mxu0
      %1068 = vmatprep.mubr.bf16.mxu0 0
      %1069 = vmatmul.mubr.bf16.gmra.mrb[0].mxu0 %v825
      %v1070 = vpop.f32.mrb[0].mxu0
      %v1071 = vadd.f32 0.0, %v1070
      %v1072 = vpop.f32.mrb[0].mxu0
      %v1073 = vpop.f32.mrb[0].mxu0
      %v1074 = vadd.f32 0.0, %v1073
      %v1075 = vpop.f32.mrb[0].mxu0
      %1076 = vmatprep.mubr.bf16.mxu0 0
      %1077 = vmatmul.mubr.bf16.gmra.mrb[0].mxu0 %v826
      %v1078 = vpop.f32.mrb[0].mxu0
      %v1079 = vadd.f32 0.0, %v1078
      %v1080 = vpop.f32.mrb[0].mxu0
      %v1081 = vpop.f32.mrb[0].mxu0
      %v1082 = vadd.f32 0.0, %v1081
      %v1083 = vpop.f32.mrb[0].mxu0
      %1084 = vmatprep.mubr.bf16.mxu0 0
      %1085 = vmatmul.mubr.bf16.gmra.mrb[0].mxu0 %v827
      %v1086 = vpop.f32.mrb[0].mxu0
      %v1087 = vadd.f32 0.0, %v1086
      %v1088 = vpop.f32.mrb[0].mxu0
      %v1089 = vpop.f32.mrb[0].mxu0
      %v1090 = vadd.f32 0.0, %v1089
      %v1091 = vpop.f32.mrb[0].mxu0
      %1092 = vmatprep.mubr.bf16.mxu0 0
      %1093 = vmatmul.mubr.bf16.gmra.mrb[0].mxu0 %v828
      %v1094 = vpop.f32.mrb[0].mxu0
      %v1095 = vadd.f32 0.0, %v1094
      %v1096 = vpop.f32.mrb[0].mxu0
      %v1097 = vpop.f32.mrb[0].mxu0
      %v1098 = vadd.f32 0.0, %v1097
      %v1099 = vpop.f32.mrb[0].mxu0
      %1100 = vmatprep.mubr.bf16.mxu0 0
      %1101 = vmatmul.mubr.bf16.gmra.mrb[0].mxu0 %v829
      %v1102 = vpop.f32.mrb[0].mxu0
      %v1103 = vadd.f32 0.0, %v1102
      %v1104 = vpop.f32.mrb[0].mxu0
      %v1105 = vpop.f32.mrb[0].mxu0
      %v1106 = vadd.f32 0.0, %v1105
      %v1107 = vpop.f32.mrb[0].mxu0
      %1108 = vmatprep.mubr.bf16.mxu0 0
      %1109 = vmatmul.mubr.bf16.gmra.mrb[0].mxu0 %v830
      %v1110 = vpop.f32.mrb[0].mxu0
      %v1111 = vadd.f32 0.0, %v1110
      %v1112 = vpop.f32.mrb[0].mxu0
      %v1113 = vpop.f32.mrb[0].mxu0
      %v1114 = vadd.f32 0.0, %v1113
      %v1115 = vpop.f32.mrb[0].mxu0
      %1116 = vmatprep.mubr.bf16.mxu0 0
      %1117 = vmatmul.mubr.bf16.gmra.mrb[0].mxu0 %v831
      %v1118 = vpop.f32.mrb[0].mxu0
      %v1119 = vadd.f32 0.0, %v1118
      %v1120 = vpop.f32.mrb[0].mxu0
      %v1121 = vpop.f32.mrb[0].mxu0
      %v1122 = vadd.f32 0.0, %v1121
      %v1123 = vpop.f32.mrb[0].mxu0
      %1124 = vmatprep.mubr.bf16.mxu0 0
      %1125 = vmatmul.mubr.bf16.gmra.mrb[0].mxu0 %v832
      %v1126 = vpop.f32.mrb[0].mxu0
      %v1127 = vadd.f32 0.0, %v1126
      %v1128 = vpop.f32.mrb[0].mxu0
      %v1129 = vpop.f32.mrb[0].mxu0
      %v1130 = vadd.f32 0.0, %v1129
      %v1131 = vpop.f32.mrb[0].mxu0
      %1132 = vmatprep.mubr.bf16.mxu0 0
      %1133 = vmatmul.mubr.bf16.gmra.mrb[0].mxu0 %v833
      %v1134 = vpop.f32.mrb[0].mxu0
      %v1135 = vadd.f32 0.0, %v1134
      %v1136 = vpop.f32.mrb[0].mxu0
      %v1137 = vpop.f32.mrb[0].mxu0
      %v1138 = vadd.f32 0.0, %v1137
      %v1139 = vpop.f32.mrb[0].mxu0
      %1140 = vmatprep.mubr.bf16.mxu0 0
      %1141 = vmatmul.mubr.bf16.gmra.mrb[0].mxu0 %v834
      %v1142 = vpop.f32.mrb[0].mxu0
      %v1143 = vadd.f32 0.0, %v1142
      %v1144 = vpop.f32.mrb[0].mxu0
      %v1145 = vpop.f32.mrb[0].mxu0
      %v1146 = vadd.f32 0.0, %v1145
      %v1147 = vpop.f32.mrb[0].mxu0
      %1148 = vmatprep.mubr.bf16.mxu0 0
      %1149 = vmatmul.mubr.bf16.gmra.mrb[0].mxu0 %v835
      %v1150 = vpop.f32.mrb[0].mxu0
      %v1151 = vadd.f32 0.0, %v1150
      %v1152 = vpop.f32.mrb[0].mxu0
      %v1153 = vpop.f32.mrb[0].mxu0
      %v1154 = vadd.f32 0.0, %v1153
      %v1155 = vpop.f32.mrb[0].mxu0
      %1156 = vmatprep.mubr.bf16.mxu0 0
      %1157 = vmatmul.mubr.bf16.gmra.mrb[0].mxu0 %v836
      %v1158 = vpop.f32.mrb[0].mxu0
      %v1159 = vadd.f32 0.0, %v1158
      %v1160 = vpop.f32.mrb[0].mxu0
      %v1161 = vpop.f32.mrb[0].mxu0
      %v1162 = vadd.f32 0.0, %v1161
      %v1163 = vpop.f32.mrb[0].mxu0
      %1164 = vmatprep.mubr.bf16.mxu0 0
      %1165 = vmatmul.mubr.bf16.gmra.mrb[0].mxu0 %v837
      %v1166 = vpop.f32.mrb[0].mxu0
      %v1167 = vadd.f32 0.0, %v1166
      %v1168 = vpop.f32.mrb[0].mxu0
      %v1169 = vpop.f32.mrb[0].mxu0
      %v1170 = vadd.f32 0.0, %v1169
      %v1171 = vpop.f32.mrb[0].mxu0
      %1172 = vmatprep.mubr.bf16.mxu0 0
      %1173 = vmatmul.mubr.bf16.gmra.mrb[0].mxu0 %v838
      %v1174 = vpop.f32.mrb[0].mxu0
      %v1175 = vadd.f32 0.0, %v1174
      %v1176 = vpop.f32.mrb[0].mxu0
      %v1177 = vpop.f32.mrb[0].mxu0
      %v1178 = vadd.f32 0.0, %v1177
      %v1179 = vpop.f32.mrb[0].mxu0
      %1180 = vmatprep.mubr.bf16.mxu0 0
      %1181 = vmatmul.mubr.bf16.gmra.mrb[0].mxu0 %v839
      %v1182 = vpop.f32.mrb[0].mxu0
      %v1183 = vadd.f32 0.0, %v1182
      %v1184 = vpop.f32.mrb[0].mxu0
      %v1185 = vpop.f32.mrb[0].mxu0
      %v1186 = vadd.f32 0.0, %v1185
      %v1187 = vpop.f32.mrb[0].mxu0
      %1188 = vmatprep.mubr.bf16.mxu0 0
      %1189 = vmatmul.mubr.bf16.gmra.mrb[0].mxu0 %v840
      %v1190 = vpop.f32.mrb[0].mxu0
      %v1191 = vadd.f32 0.0, %v1190
      %v1192 = vpop.f32.mrb[0].mxu0
      %v1193 = vpop.f32.mrb[0].mxu0
      %v1194 = vadd.f32 0.0, %v1193
      %v1195 = vpop.f32.mrb[0].mxu0
      %1196 = vmatprep.mubr.bf16.mxu0 0
      %1197 = vmatmul.mubr.bf16.gmra.mrb[0].mxu0 %v841
      %v1198 = vpop.f32.mrb[0].mxu0
      %v1199 = vadd.f32 0.0, %v1198
      %v1200 = vpop.f32.mrb[0].mxu0
      %v1201 = vpop.f32.mrb[0].mxu0
      %v1202 = vadd.f32 0.0, %v1201
      %v1203 = vpop.f32.mrb[0].mxu0
      %1204 = vmatprep.mubr.bf16.mxu0 0
      %1205 = vmatmul.mubr.bf16.gmra.mrb[0].mxu0 %v842
      %v1206 = vpop.f32.mrb[0].mxu0
      %v1207 = vadd.f32 0.0, %v1206
      %v1208 = vpop.f32.mrb[0].mxu0
      %v1209 = vpop.f32.mrb[0].mxu0
      %v1210 = vadd.f32 0.0, %v1209
      %v1211 = vpop.f32.mrb[0].mxu0
      %1212 = vmatprep.mubr.bf16.mxu0 0
      %1213 = vmatmul.mubr.bf16.gmra.mrb[0].mxu0 %v843
      %v1214 = vpop.f32.mrb[0].mxu0
      %v1215 = vadd.f32 0.0, %v1214
      %v1216 = vpop.f32.mrb[0].mxu0
      %v1217 = vpop.f32.mrb[0].mxu0
      %v1218 = vadd.f32 0.0, %v1217
      %v1219 = vpop.f32.mrb[0].mxu0
      %1220 = vmatprep.mubr.bf16.mxu0 0
      %1221 = vmatmul.mubr.bf16.gmra.mrb[0].mxu0 %v844
      %v1222 = vpop.f32.mrb[0].mxu0
      %v1223 = vadd.f32 0.0, %v1222
      %v1224 = vpop.f32.mrb[0].mxu0
      %v1225 = vpop.f32.mrb[0].mxu0
      %v1226 = vadd.f32 0.0, %v1225
      %v1227 = vpop.f32.mrb[0].mxu0
      %1228 = vmatprep.mubr.bf16.mxu0 0
      %1229 = vmatmul.mubr.bf16.gmra.mrb[0].mxu0 %v845
      %v1230 = vpop.f32.mrb[0].mxu0
      %v1231 = vadd.f32 0.0, %v1230
      %v1232 = vpop.f32.mrb[0].mxu0
      %v1233 = vpop.f32.mrb[0].mxu0
      %v1234 = vadd.f32 0.0, %v1233
      %v1235 = vpop.f32.mrb[0].mxu0
      %1236 = vmatprep.mubr.bf16.mxu0 0
      %1237 = vmatmul.mubr.bf16.gmra.mrb[0].mxu0 %v846
      %v1238 = vpop.f32.mrb[0].mxu0
      %v1239 = vadd.f32 0.0, %v1238
      %v1240 = vpop.f32.mrb[0].mxu0
      %v1241 = vpop.f32.mrb[0].mxu0
      %v1242 = vadd.f32 0.0, %v1241
      %v1243 = vpop.f32.mrb[0].mxu0
      %1244 = vmatprep.mubr.bf16.mxu0 0
      %1245 = vmatmul.mubr.bf16.gmra.mrb[0].mxu0 %v847
      %v1246 = vpop.f32.mrb[0].mxu0
      %v1247 = vadd.f32 0.0, %v1246
      %v1248 = vpop.f32.mrb[0].mxu0
      %v1249 = vpop.f32.mrb[0].mxu0
      %v1250 = vadd.f32 0.0, %v1249
      %v1251 = vpop.f32.mrb[0].mxu0
      %1252 = vmatprep.mubr.bf16.mxu0 0
      %1253 = vmatmul.mubr.bf16.gmra.mrb[0].mxu0 %v848
      %v1254 = vpop.f32.mrb[0].mxu0
      %v1255 = vadd.f32 0.0, %v1254
      %v1256 = vpop.f32.mrb[0].mxu0
      %v1257 = vpop.f32.mrb[0].mxu0
      %v1258 = vadd.f32 0.0, %v1257
      %v1259 = vpop.f32.mrb[0].mxu0
      %1260 = vmatprep.mubr.bf16.mxu0 0
      %1261 = vmatmul.mubr.bf16.gmra.mrb[0].mxu0 %v849
      %v1262 = vpop.f32.mrb[0].mxu0
      %v1263 = vadd.f32 0.0, %v1262
      %v1264 = vpop.f32.mrb[0].mxu0
      %v1265 = vpop.f32.mrb[0].mxu0
      %v1266 = vadd.f32 0.0, %v1265
      %v1267 = vpop.f32.mrb[0].mxu0
      %1268 = vmatprep.mubr.bf16.mxu0 0
      %1269 = vmatmul.mubr.bf16.gmra.mrb[0].mxu0 %v850
      %v1270 = vpop.f32.mrb[0].mxu0
      %v1271 = vadd.f32 0.0, %v1270
      %v1272 = vpop.f32.mrb[0].mxu0
      %v1273 = vpop.f32.mrb[0].mxu0
      %v1274 = vadd.f32 0.0, %v1273
      %v1275 = vpop.f32.mrb[0].mxu0
      %1276 = vmatprep.mubr.bf16.mxu0 0
      %1277 = vmatmul.mubr.bf16.gmra.mrb[0].mxu0 %v851
      %v1278 = vpop.f32.mrb[0].mxu0
      %v1279 = vadd.f32 0.0, %v1278
      %v1280 = vpop.f32.mrb[0].mxu0
      %v1281 = vpop.f32.mrb[0].mxu0
      %v1282 = vadd.f32 0.0, %v1281
      %v1283 = vpop.f32.mrb[0].mxu0
      %1284 = vmatprep.mubr.bf16.mxu0 0
      %1285 = vmatmul.mubr.bf16.gmra.mrb[0].mxu0 %v852
      %v1286 = vpop.f32.mrb[0].mxu0
      %v1287 = vadd.f32 0.0, %v1286
      %v1288 = vpop.f32.mrb[0].mxu0
      %v1289 = vpop.f32.mrb[0].mxu0
      %v1290 = vadd.f32 0.0, %v1289
      %v1291 = vpop.f32.mrb[0].mxu0
      %1292 = vmatprep.mubr.bf16.mxu0 0
      %1293 = vmatmul.mubr.bf16.gmra.mrb[0].mxu0 %v853
      %v1294 = vpop.f32.mrb[0].mxu0
      %v1295 = vadd.f32 0.0, %v1294
      %v1296 = vpop.f32.mrb[0].mxu0
      %v1297 = vpop.f32.mrb[0].mxu0
      %v1298 = vadd.f32 0.0, %v1297
      %v1299 = vpop.f32.mrb[0].mxu0
      %1300 = vmatprep.mubr.bf16.mxu0 0
      %1301 = vmatmul.mubr.bf16.gmra.mrb[0].mxu0 %v854
      %v1302 = vpop.f32.mrb[0].mxu0
      %v1303 = vadd.f32 0.0, %v1302
      %v1304 = vpop.f32.mrb[0].mxu0
      %v1305 = vpop.f32.mrb[0].mxu0
      %v1306 = vadd.f32 0.0, %v1305
      %v1307 = vpop.f32.mrb[0].mxu0
      %1308 = vmatprep.mubr.bf16.mxu0 0
      %1309 = vmatmul.mubr.bf16.gmra.mrb[0].mxu0 %v855
      %v1310 = vpop.f32.mrb[0].mxu0
      %v1311 = vadd.f32 0.0, %v1310
      %v1312 = vpop.f32.mrb[0].mxu0
      %v1313 = vpop.f32.mrb[0].mxu0
      %v1314 = vadd.f32 0.0, %v1313
      %v1315 = vpop.f32.mrb[0].mxu0
      %1316 = vmatprep.mubr.bf16.mxu0 0
      %1317 = vmatmul.mubr.bf16.gmra.mrb[0].mxu0 %v856
      %v1318 = vpop.f32.mrb[0].mxu0
      %v1319 = vadd.f32 0.0, %v1318
      %v1320 = vpop.f32.mrb[0].mxu0
      %v1321 = vpop.f32.mrb[0].mxu0
      %v1322 = vadd.f32 0.0, %v1321
      %v1323 = vpop.f32.mrb[0].mxu0
      %1324 = vmatprep.mubr.bf16.mxu0 0
      %1325 = vmatmul.mubr.bf16.gmra.mrb[0].mxu0 %v857
      %v1326 = vpop.f32.mrb[0].mxu0
      %v1327 = vadd.f32 0.0, %v1326
      %v1328 = vpop.f32.mrb[0].mxu0
      %v1329 = vpop.f32.mrb[0].mxu0
      %v1330 = vadd.f32 0.0, %v1329
      %v1331 = vpop.f32.mrb[0].mxu0
      %1332 = vmatprep.mubr.bf16.mxu0 0
      %1333 = vmatmul.mubr.bf16.gmra.mrb[0].mxu0 %v858
      %v1334 = vpop.f32.mrb[0].mxu0
      %v1335 = vadd.f32 0.0, %v1334
      %v1336 = vpop.f32.mrb[0].mxu0
      %v1337 = vpop.f32.mrb[0].mxu0
      %v1338 = vadd.f32 0.0, %v1337
      %v1339 = vpop.f32.mrb[0].mxu0
      %1340 = vmatprep.mubr.bf16.mxu0 0
      %1341 = vmatmul.mubr.bf16.gmra.mrb[0].mxu0 %v859
      %v1342 = vpop.f32.mrb[0].mxu0
      %v1343 = vadd.f32 0.0, %v1342
      %v1344 = vpop.f32.mrb[0].mxu0
      %v1345 = vpop.f32.mrb[0].mxu0
      %v1346 = vadd.f32 0.0, %v1345
      %v1347 = vpop.f32.mrb[0].mxu0
      %1348 = vmatprep.mubr.bf16.mxu0 0
      %1349 = vmatmul.mubr.bf16.gmra.mrb[0].mxu0 %v860
      %v1350 = vpop.f32.mrb[0].mxu0
      %v1351 = vadd.f32 0.0, %v1350
      %v1352 = vpop.f32.mrb[0].mxu0
      %v1353 = vpop.f32.mrb[0].mxu0
      %v1354 = vadd.f32 0.0, %v1353
      %v1355 = vpop.f32.mrb[0].mxu0
      %1356 = vmatprep.mubr.bf16.mxu0 0
      %1357 = vmatmul.mubr.bf16.gmra.mrb[0].mxu0 %v861
      %v1358 = vpop.f32.mrb[0].mxu0
      %v1359 = vadd.f32 0.0, %v1358
      %v1360 = vpop.f32.mrb[0].mxu0
      %v1361 = vpop.f32.mrb[0].mxu0
      %v1362 = vadd.f32 0.0, %v1361
      %v1363 = vpop.f32.mrb[0].mxu0
      %1364 = vmatprep.mubr.bf16.mxu0 0
      %1365 = vmatmul.mubr.bf16.gmra.mrb[0].mxu0 %v862
      %v1366 = vpop.f32.mrb[0].mxu0
      %v1367 = vadd.f32 0.0, %v1366
      %v1368 = vpop.f32.mrb[0].mxu0
      %v1369 = vpop.f32.mrb[0].mxu0
      %v1370 = vadd.f32 0.0, %v1369
      %v1371 = vpop.f32.mrb[0].mxu0
      %1372 = vmatprep.mubr.bf16.mxu0 0
      %1373 = vmatmul.mubr.bf16.gmra.mrb[0].mxu0 %v863
      %v1374 = vpop.f32.mrb[0].mxu0
      %v1375 = vadd.f32 0.0, %v1374
      %v1376 = vpop.f32.mrb[0].mxu0
      %v1377 = vpop.f32.mrb[0].mxu0
      %v1378 = vadd.f32 0.0, %v1377
      %v1379 = vpop.f32.mrb[0].mxu0
      %1380 = vmatprep.mubr.bf16.mxu0 0
      %1381 = vmatmul.mubr.bf16.gmra.mrb[0].mxu0 %v864
      %v1382 = vpop.f32.mrb[0].mxu0
      %v1383 = vadd.f32 0.0, %v1382
      %v1384 = vpop.f32.mrb[0].mxu0
      %v1385 = vpop.f32.mrb[0].mxu0
      %v1386 = vadd.f32 0.0, %v1385
      %v1387 = vpop.f32.mrb[0].mxu0
      %1388 = vmatprep.mubr.bf16.mxu0 0
      %1389 = vmatmul.mubr.bf16.gmra.mrb[0].mxu0 %v865
      %v1390 = vpop.f32.mrb[0].mxu0
      %v1391 = vadd.f32 0.0, %v1390
      %v1392 = vpop.f32.mrb[0].mxu0
      %v1393 = vpop.f32.mrb[0].mxu0
      %v1394 = vadd.f32 0.0, %v1393
      %v1395 = vpop.f32.mrb[0].mxu0
      %1396 = vmatprep.mubr.bf16.mxu0 0
      %1397 = vmatmul.mubr.bf16.gmra.mrb[0].mxu0 %v866
      %v1398 = vpop.f32.mrb[0].mxu0
      %v1399 = vadd.f32 0.0, %v1398
      %v1400 = vpop.f32.mrb[0].mxu0
      %v1401 = vpop.f32.mrb[0].mxu0
      %v1402 = vadd.f32 0.0, %v1401
      %v1403 = vpop.f32.mrb[0].mxu0
      %1404 = vmatprep.mubr.bf16.mxu0 0
      %1405 = vmatmul.mubr.bf16.gmra.mrb[0].mxu0 %v867
      %v1406 = vpop.f32.mrb[0].mxu0
      %v1407 = vadd.f32 0.0, %v1406
      %v1408 = vpop.f32.mrb[0].mxu0
      %v1409 = vpop.f32.mrb[0].mxu0
      %v1410 = vadd.f32 0.0, %v1409
      %v1411 = vpop.f32.mrb[0].mxu0
      %1412 = vmatprep.mubr.bf16.mxu0 0
      %1413 = vmatmul.mubr.bf16.gmra.mrb[0].mxu0 %v868
      %v1414 = vpop.f32.mrb[0].mxu0
      %v1415 = vadd.f32 0.0, %v1414
      %v1416 = vpop.f32.mrb[0].mxu0
      %v1417 = vpop.f32.mrb[0].mxu0
      %v1418 = vadd.f32 0.0, %v1417
      %v1419 = vpop.f32.mrb[0].mxu0
      %1420 = vmatprep.mubr.bf16.mxu0 0
      %1421 = vmatmul.mubr.bf16.gmra.mrb[0].mxu0 %v869
      %v1422 = vpop.f32.mrb[0].mxu0
      %v1423 = vadd.f32 0.0, %v1422
      %v1424 = vpop.f32.mrb[0].mxu0
      %v1425 = vpop.f32.mrb[0].mxu0
      %v1426 = vadd.f32 0.0, %v1425
      %v1427 = vpop.f32.mrb[0].mxu0
      %1428 = vmatprep.mubr.bf16.mxu0 0
      %1429 = vmatmul.mubr.bf16.gmra.mrb[0].mxu0 %v870
      %v1430 = vpop.f32.mrb[0].mxu0
      %v1431 = vadd.f32 0.0, %v1430
      %v1432 = vpop.f32.mrb[0].mxu0
      %v1433 = vpop.f32.mrb[0].mxu0
      %v1434 = vadd.f32 0.0, %v1433
      %v1435 = vpop.f32.mrb[0].mxu0
      %1436 = vmatprep.mubr.bf16.mxu0 0
      %1437 = vmatmul.mubr.bf16.gmra.mrb[0].mxu0 %v871
      %v1438 = vpop.f32.mrb[0].mxu0
      %v1439 = vadd.f32 0.0, %v1438
      %v1440 = vpop.f32.mrb[0].mxu0
      %v1441 = vpop.f32.mrb[0].mxu0
      %v1442 = vadd.f32 0.0, %v1441
      %v1443 = vpop.f32.mrb[0].mxu0
      %1444 = vmatprep.mubr.bf16.mxu0 0
      %1445 = vmatmul.mubr.bf16.gmra.mrb[0].mxu0 %v872
      %v1446 = vpop.f32.mrb[0].mxu0
      %v1447 = vadd.f32 0.0, %v1446
      %v1448 = vpop.f32.mrb[0].mxu0
      %v1449 = vpop.f32.mrb[0].mxu0
      %v1450 = vadd.f32 0.0, %v1449
      %v1451 = vpop.f32.mrb[0].mxu0
      %1452 = vmatprep.mubr.bf16.mxu0 0
      %1453 = vmatmul.mubr.bf16.gmra.mrb[0].mxu0 %v873
      %v1454 = vpop.f32.mrb[0].mxu0
      %v1455 = vadd.f32 0.0, %v1454
      %v1456 = vpop.f32.mrb[0].mxu0
      %v1457 = vpop.f32.mrb[0].mxu0
      %v1458 = vadd.f32 0.0, %v1457
      %v1459 = vpop.f32.mrb[0].mxu0
      %1460 = vmatprep.mubr.bf16.mxu0 0
      %1461 = vmatmul.mubr.bf16.gmra.mrb[0].mxu0 %v874
      %v1462 = vpop.f32.mrb[0].mxu0
      %v1463 = vadd.f32 0.0, %v1462
      %v1464 = vpop.f32.mrb[0].mxu0
      %v1465 = vpop.f32.mrb[0].mxu0
      %v1466 = vadd.f32 0.0, %v1465
      %v1467 = vpop.f32.mrb[0].mxu0
      %1468 = vmatprep.mubr.bf16.mxu0 0
      %1469 = vmatmul.mubr.bf16.gmra.mrb[0].mxu0 %v875
      %v1470 = vpop.f32.mrb[0].mxu0
      %v1471 = vadd.f32 0.0, %v1470
      %v1472 = vpop.f32.mrb[0].mxu0
      %v1473 = vpop.f32.mrb[0].mxu0
      %v1474 = vadd.f32 0.0, %v1473
      %v1475 = vpop.f32.mrb[0].mxu0
      %1476 = vmatprep.mubr.bf16.mxu0 0
      %1477 = vmatmul.mubr.bf16.gmra.mrb[0].mxu0 %v876
      %v1478 = vpop.f32.mrb[0].mxu0
      %v1479 = vadd.f32 0.0, %v1478
      %v1480 = vpop.f32.mrb[0].mxu0
      %v1481 = vpop.f32.mrb[0].mxu0
      %v1482 = vadd.f32 0.0, %v1481
      %v1483 = vpop.f32.mrb[0].mxu0
      %1484 = vmatprep.mubr.bf16.mxu0 0
      %1485 = vmatmul.mubr.bf16.gmra.mrb[0].mxu0 %v877
      %v1486 = vpop.f32.mrb[0].mxu0
      %v1487 = vadd.f32 0.0, %v1486
      %v1488 = vpop.f32.mrb[0].mxu0
      %v1489 = vpop.f32.mrb[0].mxu0
      %v1490 = vadd.f32 0.0, %v1489
      %v1491 = vpop.f32.mrb[0].mxu0
      %1492 = vmatprep.mubr.bf16.mxu0 0
      %1493 = vmatmul.mubr.bf16.gmra.mrb[0].mxu0 %v878
      %v1494 = vpop.f32.mrb[0].mxu0
      %v1495 = vadd.f32 0.0, %v1494
      %v1496 = vpop.f32.mrb[0].mxu0
      %v1497 = vpop.f32.mrb[0].mxu0
      %v1498 = vadd.f32 0.0, %v1497
      %v1499 = vpop.f32.mrb[0].mxu0
      %1500 = vmatprep.mubr.bf16.mxu0 0
      %1501 = vmatmul.mubr.bf16.gmra.mrb[0].mxu0 %v879
      %v1502 = vpop.f32.mrb[0].mxu0
      %v1503 = vadd.f32 0.0, %v1502
      %v1504 = vpop.f32.mrb[0].mxu0
      %v1505 = vpop.f32.mrb[0].mxu0
      %v1506 = vadd.f32 0.0, %v1505
      %v1507 = vpop.f32.mrb[0].mxu0
      %1508 = vmatprep.mubr.bf16.mxu0 0
      %1509 = vmatmul.mubr.bf16.gmra.mrb[0].mxu0 %v880
      %v1510 = vpop.f32.mrb[0].mxu0
      %v1511 = vadd.f32 0.0, %v1510
      %v1512 = vpop.f32.mrb[0].mxu0
      %v1513 = vpop.f32.mrb[0].mxu0
      %v1514 = vadd.f32 0.0, %v1513
      %v1515 = vpop.f32.mrb[0].mxu0
      %1516 = vmatprep.mubr.bf16.mxu0 0
      %1517 = vmatmul.mubr.bf16.gmra.mrb[0].mxu0 %v881
      %v1518 = vpop.f32.mrb[0].mxu0
      %v1519 = vadd.f32 0.0, %v1518
      %v1520 = vpop.f32.mrb[0].mxu0
      %v1521 = vpop.f32.mrb[0].mxu0
      %v1522 = vadd.f32 0.0, %v1521
      %v1523 = vpop.f32.mrb[0].mxu0
      %1524 = vmatprep.mubr.bf16.mxu0 0
      %1525 = vmatmul.mubr.bf16.gmra.mrb[0].mxu0 %v882
      %v1526 = vpop.f32.mrb[0].mxu0
      %v1527 = vadd.f32 0.0, %v1526
      %v1528 = vpop.f32.mrb[0].mxu0
      %v1529 = vpop.f32.mrb[0].mxu0
      %v1530 = vadd.f32 0.0, %v1529
      %v1531 = vpop.f32.mrb[0].mxu0
      %1532 = vmatprep.mubr.bf16.mxu0 0
      %1533 = vmatmul.mubr.bf16.gmra.mrb[0].mxu0 %v883
      %v1534 = vpop.f32.mrb[0].mxu0
      %v1535 = vadd.f32 0.0, %v1534
      %v1536 = vpop.f32.mrb[0].mxu0
      %v1537 = vpop.f32.mrb[0].mxu0
      %v1538 = vadd.f32 0.0, %v1537
      %v1539 = vpop.f32.mrb[0].mxu0
      %1540 = vdwg.mxu0
      %v1669 = vunpack.c.l.b16 %v274
      %v1670 = vunpack.c.l.b16 %v275
      %v1671 = vunpack.c.l.b16 %v276
      %v1672 = vunpack.c.l.b16 %v277
      %v1673 = vunpack.c.l.b16 %v278
      %v1674 = vunpack.c.l.b16 %v279
      %v1675 = vunpack.c.l.b16 %v280
      %v1676 = vunpack.c.l.b16 %v281
      %v1677 = vunpack.c.l.b16 %v282
      %v1678 = vunpack.c.l.b16 %v283
      %v1679 = vunpack.c.l.b16 %v284
      %v1680 = vunpack.c.l.b16 %v285
      %v1681 = vunpack.c.l.b16 %v286
      %v1682 = vunpack.c.l.b16 %v287
      %v1683 = vunpack.c.l.b16 %v288
      %v1684 = vunpack.c.l.b16 %v289
      %v1685 = vunpack.c.l.b16 %v290
      %v1686 = vunpack.c.l.b16 %v291
      %v1687 = vunpack.c.l.b16 %v292
      %v1688 = vunpack.c.l.b16 %v293
      %v1689 = vunpack.c.l.b16 %v294
      %v1690 = vunpack.c.l.b16 %v295
      %v1691 = vunpack.c.l.b16 %v296
      %v1692 = vunpack.c.l.b16 %v297
      %v1693 = vunpack.c.l.b16 %v298
      %v1694 = vunpack.c.l.b16 %v299
      %v1695 = vunpack.c.l.b16 %v300
      %v1696 = vunpack.c.l.b16 %v301
      %v1697 = vunpack.c.l.b16 %v302
      %v1698 = vunpack.c.l.b16 %v303
      %v1699 = vunpack.c.l.b16 %v304
      %v1700 = vunpack.c.l.b16 %v305
      %v1701 = vunpack.c.l.b16 %v306
      %v1702 = vunpack.c.l.b16 %v307
      %v1703 = vunpack.c.l.b16 %v308
      %v1704 = vunpack.c.l.b16 %v309
      %v1705 = vunpack.c.l.b16 %v310
      %v1706 = vunpack.c.l.b16 %v311
      %v1707 = vunpack.c.l.b16 %v312
      %v1708 = vunpack.c.l.b16 %v313
      %v1709 = vunpack.c.l.b16 %v314
      %v1710 = vunpack.c.l.b16 %v315
      %v1711 = vunpack.c.l.b16 %v316
      %v1712 = vunpack.c.l.b16 %v317
      %v1713 = vunpack.c.l.b16 %v318
      %v1714 = vunpack.c.l.b16 %v319
      %v1715 = vunpack.c.l.b16 %v320
      %v1716 = vunpack.c.l.b16 %v321
      %v1717 = vunpack.c.l.b16 %v322
      %v1718 = vunpack.c.l.b16 %v323
      %v1719 = vunpack.c.l.b16 %v324
      %v1720 = vunpack.c.l.b16 %v325
      %v1721 = vunpack.c.l.b16 %v326
      %v1722 = vunpack.c.l.b16 %v327
      %v1723 = vunpack.c.l.b16 %v328
      %v1724 = vunpack.c.l.b16 %v329
      %v1725 = vunpack.c.l.b16 %v330
      %v1726 = vunpack.c.l.b16 %v331
      %v1727 = vunpack.c.l.b16 %v332
      %v1728 = vunpack.c.l.b16 %v333
      %v1729 = vunpack.c.l.b16 %v334
      %v1730 = vunpack.c.l.b16 %v335
      %v1731 = vunpack.c.l.b16 %v336
      %v1732 = vunpack.c.l.b16 %v337
      %v1733 = vunpack.c.l.b16 %v338
      %v1734 = vunpack.c.l.b16 %v339
      %v1735 = vunpack.c.l.b16 %v340
      %v1736 = vunpack.c.l.b16 %v341
      %v1737 = vunpack.c.l.b16 %v342
      %v1738 = vunpack.c.l.b16 %v343
      %v1739 = vunpack.c.l.b16 %v344
      %v1740 = vunpack.c.l.b16 %v345
      %v1741 = vunpack.c.l.b16 %v346
      %v1742 = vunpack.c.l.b16 %v347
      %v1743 = vunpack.c.l.b16 %v348
      %v1744 = vunpack.c.l.b16 %v349
      %v1745 = vunpack.c.l.b16 %v350
      %v1746 = vunpack.c.l.b16 %v351
      %v1747 = vunpack.c.l.b16 %v352
      %v1748 = vunpack.c.l.b16 %v353
      %v1749 = vunpack.c.l.b16 %v354
      %v1750 = vunpack.c.l.b16 %v355
      %v1751 = vunpack.c.l.b16 %v356
      %v1752 = vunpack.c.l.b16 %v357
      %v1753 = vunpack.c.l.b16 %v358
      %v1754 = vunpack.c.l.b16 %v359
      %v1755 = vunpack.c.l.b16 %v360
      %v1756 = vunpack.c.l.b16 %v361
      %v1757 = vunpack.c.l.b16 %v362
      %v1758 = vunpack.c.l.b16 %v363
      %v1759 = vunpack.c.l.b16 %v364
      %v1760 = vunpack.c.l.b16 %v365
      %v1761 = vunpack.c.l.b16 %v366
      %v1762 = vunpack.c.l.b16 %v367
      %v1763 = vunpack.c.l.b16 %v368
      %v1764 = vunpack.c.l.b16 %v369
      %v1765 = vunpack.c.l.b16 %v370
      %v1766 = vunpack.c.l.b16 %v371
      %v1767 = vunpack.c.l.b16 %v372
      %v1768 = vunpack.c.l.b16 %v373
      %v1769 = vunpack.c.l.b16 %v374
      %v1770 = vunpack.c.l.b16 %v375
      %v1771 = vunpack.c.l.b16 %v376
      %v1772 = vunpack.c.l.b16 %v377
      %v1773 = vunpack.c.l.b16 %v378
      %v1774 = vunpack.c.l.b16 %v379
      %v1775 = vunpack.c.l.b16 %v380
      %v1776 = vunpack.c.l.b16 %v381
      %v1777 = vunpack.c.l.b16 %v382
      %v1778 = vunpack.c.l.b16 %v383
      %v1779 = vunpack.c.l.b16 %v384
      %v1780 = vunpack.c.l.b16 %v385
      %v1781 = vunpack.c.l.b16 %v386
      %v1782 = vunpack.c.l.b16 %v387
      %v1783 = vunpack.c.l.b16 %v388
      %v1784 = vunpack.c.l.b16 %v389
      %v1785 = vunpack.c.l.b16 %v390
      %v1786 = vunpack.c.l.b16 %v391
      %v1787 = vunpack.c.l.b16 %v392
      %v1788 = vunpack.c.l.b16 %v393
      %v1789 = vunpack.c.l.b16 %v394
      %v1790 = vunpack.c.l.b16 %v395
      %v1791 = vunpack.c.l.b16 %v396
      %v1792 = vunpack.c.l.b16 %v397
      %v1793 = vunpack.c.l.b16 %v398
      %v1794 = vunpack.c.l.b16 %v399
      %v1795 = vunpack.c.l.b16 %v400
      %v1796 = vunpack.c.l.b16 %v401
      %v1797 = vpack.c.b16 %v1670, %v1669
      %v1798 = vpack.c.b16 %v1672, %v1671
      %v1799 = vpack.c.b16 %v1674, %v1673
      %v1800 = vpack.c.b16 %v1676, %v1675
      %v1801 = vpack.c.b16 %v1678, %v1677
      %v1802 = vpack.c.b16 %v1680, %v1679
      %v1803 = vpack.c.b16 %v1682, %v1681
      %v1804 = vpack.c.b16 %v1684, %v1683
      %v1805 = vpack.c.b16 %v1686, %v1685
      %v1806 = vpack.c.b16 %v1688, %v1687
      %v1807 = vpack.c.b16 %v1690, %v1689
      %v1808 = vpack.c.b16 %v1692, %v1691
      %v1809 = vpack.c.b16 %v1694, %v1693
      %v1810 = vpack.c.b16 %v1696, %v1695
      %v1811 = vpack.c.b16 %v1698, %v1697
      %v1812 = vpack.c.b16 %v1700, %v1699
      %v1813 = vpack.c.b16 %v1702, %v1701
      %v1814 = vpack.c.b16 %v1704, %v1703
      %v1815 = vpack.c.b16 %v1706, %v1705
      %v1816 = vpack.c.b16 %v1708, %v1707
      %v1817 = vpack.c.b16 %v1710, %v1709
      %v1818 = vpack.c.b16 %v1712, %v1711
      %v1819 = vpack.c.b16 %v1714, %v1713
      %v1820 = vpack.c.b16 %v1716, %v1715
      %v1821 = vpack.c.b16 %v1718, %v1717
      %v1822 = vpack.c.b16 %v1720, %v1719
      %v1823 = vpack.c.b16 %v1722, %v1721
      %v1824 = vpack.c.b16 %v1724, %v1723
      %v1825 = vpack.c.b16 %v1726, %v1725
      %v1826 = vpack.c.b16 %v1728, %v1727
      %v1827 = vpack.c.b16 %v1730, %v1729
      %v1828 = vpack.c.b16 %v1732, %v1731
      %v1829 = vpack.c.b16 %v1734, %v1733
      %v1830 = vpack.c.b16 %v1736, %v1735
      %v1831 = vpack.c.b16 %v1738, %v1737
      %v1832 = vpack.c.b16 %v1740, %v1739
      %v1833 = vpack.c.b16 %v1742, %v1741
      %v1834 = vpack.c.b16 %v1744, %v1743
      %v1835 = vpack.c.b16 %v1746, %v1745
      %v1836 = vpack.c.b16 %v1748, %v1747
      %v1837 = vpack.c.b16 %v1750, %v1749
      %v1838 = vpack.c.b16 %v1752, %v1751
      %v1839 = vpack.c.b16 %v1754, %v1753
      %v1840 = vpack.c.b16 %v1756, %v1755
      %v1841 = vpack.c.b16 %v1758, %v1757
      %v1842 = vpack.c.b16 %v1760, %v1759
      %v1843 = vpack.c.b16 %v1762, %v1761
      %v1844 = vpack.c.b16 %v1764, %v1763
      %v1845 = vpack.c.b16 %v1766, %v1765
      %v1846 = vpack.c.b16 %v1768, %v1767
      %v1847 = vpack.c.b16 %v1770, %v1769
      %v1848 = vpack.c.b16 %v1772, %v1771
      %v1849 = vpack.c.b16 %v1774, %v1773
      %v1850 = vpack.c.b16 %v1776, %v1775
      %v1851 = vpack.c.b16 %v1778, %v1777
      %v1852 = vpack.c.b16 %v1780, %v1779
      %v1853 = vpack.c.b16 %v1782, %v1781
      %v1854 = vpack.c.b16 %v1784, %v1783
      %v1855 = vpack.c.b16 %v1786, %v1785
      %v1856 = vpack.c.b16 %v1788, %v1787
      %v1857 = vpack.c.b16 %v1790, %v1789
      %v1858 = vpack.c.b16 %v1792, %v1791
      %v1859 = vpack.c.b16 %v1794, %v1793
      %v1860 = vpack.c.b16 %v1796, %v1795
      %v1941 = vunpack.c.l.b16 %v402
      %v1942 = vunpack.c.l.b16 %v403
      %v1943 = vunpack.c.l.b16 %v404
      %v1944 = vunpack.c.l.b16 %v405
      %v1945 = vunpack.c.l.b16 %v406
      %v1946 = vunpack.c.l.b16 %v407
      %v1947 = vunpack.c.l.b16 %v408
      %v1948 = vunpack.c.l.b16 %v409
      %v1949 = vunpack.c.l.b16 %v410
      %v1950 = vunpack.c.l.b16 %v411
      %v1951 = vunpack.c.l.b16 %v412
      %v1952 = vunpack.c.l.b16 %v413
      %v1953 = vunpack.c.l.b16 %v414
      %v1954 = vunpack.c.l.b16 %v415
      %v1955 = vunpack.c.l.b16 %v416
      %v1956 = vunpack.c.l.b16 %v417
      %v1957 = vpack.c.b16 %v1942, %v1941
      %v1958 = vpack.c.b16 %v1944, %v1943
      %v1959 = vpack.c.b16 %v1946, %v1945
      %v1960 = vpack.c.b16 %v1948, %v1947
      %v1961 = vpack.c.b16 %v1950, %v1949
      %v1962 = vpack.c.b16 %v1952, %v1951
      %v1963 = vpack.c.b16 %v1954, %v1953
      %v1964 = vpack.c.b16 %v1956, %v1955
      %1973 = vmatprep.subr.bf16.mxu0 0
      %1974 = vmatpush1.bf16.msra.mxu0 %v1957
      %1975 = vmatprep.subr.bf16.mxu0 0
      %1976 = vmatpush1.bf16.msra.mxu0 %v1958
      %1977 = vmatprep.subr.bf16.mxu0 0
      %1978 = vmatpush1.bf16.msra.mxu0 %v1959
      %1979 = vmatprep.subr.bf16.mxu0 0
      %1980 = vmatpush1.bf16.msra.mxu0 %v1960
      %1981 = vmatprep.subr.bf16.mxu0 0
      %1982 = vmatpush1.bf16.msra.mxu0 %v1961
      %1983 = vmatprep.subr.bf16.mxu0 0
      %1984 = vmatpush1.bf16.msra.mxu0 %v1962
      %1985 = vmatprep.subr.bf16.mxu0 0
      %1986 = vmatpush1.bf16.msra.mxu0 %v1963
      %1987 = vmatprep.subr.bf16.mxu0 0
      %1988 = vmatpush1.bf16.msra.mxu0 %v1964
      %1989 = vmatprep.subr.bf16.mxu0 0
      %1990 = vmatpush1.bf16.msra.mxu0 0
      %1991 = vmatprep.subr.bf16.mxu0 0
      %1992 = vmatpush1.bf16.msra.mxu0 0
      %1993 = vmatprep.subr.bf16.mxu0 0
      %1994 = vmatpush1.bf16.msra.mxu0 0
      %1995 = vmatprep.subr.bf16.mxu0 0
      %1996 = vmatpush1.bf16.msra.mxu0 0
      %1997 = vmatprep.subr.bf16.mxu0 0
      %1998 = vmatpush1.bf16.msra.mxu0 0
      %1999 = vmatprep.subr.bf16.mxu0 0
      %2000 = vmatpush1.bf16.msra.mxu0 0
      %2001 = vmatprep.subr.bf16.mxu0 0
      %2002 = vmatpush1.bf16.msra.mxu0 0
      %2003 = vmatprep.subr.bf16.mxu0 0
      %2004 = vmatpush1.bf16.msra.mxu0 0
      %2005 = vmatprep.mubr.bf16.mxu0 0
      %2006 = vmatmul.mubr.bf16.gmra.mrb[0].mxu0 %v1797
      %v2007 = vpop.f32.mrb[0].mxu0
      %v2008 = vadd.f32 %v1031, %v2007
      %v2009 = vpop.f32.mrb[0].mxu0
      %v2010 = vpop.f32.mrb[0].mxu0
      %v2011 = vadd.f32 %v1034, %v2010
      %v2012 = vpop.f32.mrb[0].mxu0
      %2013 = vmatprep.mubr.bf16.mxu0 0
      %2014 = vmatmul.mubr.bf16.gmra.mrb[0].mxu0 %v1798
      %v2015 = vpop.f32.mrb[0].mxu0
      %v2016 = vadd.f32 %v1039, %v2015
      %v2017 = vpop.f32.mrb[0].mxu0
      %v2018 = vpop.f32.mrb[0].mxu0
      %v2019 = vadd.f32 %v1042, %v2018
      %v2020 = vpop.f32.mrb[0].mxu0
      %2021 = vmatprep.mubr.bf16.mxu0 0
      %2022 = vmatmul.mubr.bf16.gmra.mrb[0].mxu0 %v1799
      %v2023 = vpop.f32.mrb[0].mxu0
      %v2024 = vadd.f32 %v1047, %v2023
      %v2025 = vpop.f32.mrb[0].mxu0
      %v2026 = vpop.f32.mrb[0].mxu0
      %v2027 = vadd.f32 %v1050, %v2026
      %v2028 = vpop.f32.mrb[0].mxu0
      %2029 = vmatprep.mubr.bf16.mxu0 0
      %2030 = vmatmul.mubr.bf16.gmra.mrb[0].mxu0 %v1800
      %v2031 = vpop.f32.mrb[0].mxu0
      %v2032 = vadd.f32 %v1055, %v2031
      %v2033 = vpop.f32.mrb[0].mxu0
      %v2034 = vpop.f32.mrb[0].mxu0
      %v2035 = vadd.f32 %v1058, %v2034
      %v2036 = vpop.f32.mrb[0].mxu0
      %2037 = vmatprep.mubr.bf16.mxu0 0
      %2038 = vmatmul.mubr.bf16.gmra.mrb[0].mxu0 %v1801
      %v2039 = vpop.f32.mrb[0].mxu0
      %v2040 = vadd.f32 %v1063, %v2039
      %v2041 = vpop.f32.mrb[0].mxu0
      %v2042 = vpop.f32.mrb[0].mxu0
      %v2043 = vadd.f32 %v1066, %v2042
      %v2044 = vpop.f32.mrb[0].mxu0
      %2045 = vmatprep.mubr.bf16.mxu0 0
      %2046 = vmatmul.mubr.bf16.gmra.mrb[0].mxu0 %v1802
      %v2047 = vpop.f32.mrb[0].mxu0
      %v2048 = vadd.f32 %v1071, %v2047
      %v2049 = vpop.f32.mrb[0].mxu0
      %v2050 = vpop.f32.mrb[0].mxu0
      %v2051 = vadd.f32 %v1074, %v2050
      %v2052 = vpop.f32.mrb[0].mxu0
      %2053 = vmatprep.mubr.bf16.mxu0 0
      %2054 = vmatmul.mubr.bf16.gmra.mrb[0].mxu0 %v1803
      %v2055 = vpop.f32.mrb[0].mxu0
      %v2056 = vadd.f32 %v1079, %v2055
      %v2057 = vpop.f32.mrb[0].mxu0
      %v2058 = vpop.f32.mrb[0].mxu0
      %v2059 = vadd.f32 %v1082, %v2058
      %v2060 = vpop.f32.mrb[0].mxu0
      %2061 = vmatprep.mubr.bf16.mxu0 0
      %2062 = vmatmul.mubr.bf16.gmra.mrb[0].mxu0 %v1804
      %v2063 = vpop.f32.mrb[0].mxu0
      %v2064 = vadd.f32 %v1087, %v2063
      %v2065 = vpop.f32.mrb[0].mxu0
      %v2066 = vpop.f32.mrb[0].mxu0
      %v2067 = vadd.f32 %v1090, %v2066
      %v2068 = vpop.f32.mrb[0].mxu0
      %2069 = vmatprep.mubr.bf16.mxu0 0
      %2070 = vmatmul.mubr.bf16.gmra.mrb[0].mxu0 %v1805
      %v2071 = vpop.f32.mrb[0].mxu0
      %v2072 = vadd.f32 %v1095, %v2071
      %v2073 = vpop.f32.mrb[0].mxu0
      %v2074 = vpop.f32.mrb[0].mxu0
      %v2075 = vadd.f32 %v1098, %v2074
      %v2076 = vpop.f32.mrb[0].mxu0
      %2077 = vmatprep.mubr.bf16.mxu0 0
      %2078 = vmatmul.mubr.bf16.gmra.mrb[0].mxu0 %v1806
      %v2079 = vpop.f32.mrb[0].mxu0
      %v2080 = vadd.f32 %v1103, %v2079
      %v2081 = vpop.f32.mrb[0].mxu0
      %v2082 = vpop.f32.mrb[0].mxu0
      %v2083 = vadd.f32 %v1106, %v2082
      %v2084 = vpop.f32.mrb[0].mxu0
      %2085 = vmatprep.mubr.bf16.mxu0 0
      %2086 = vmatmul.mubr.bf16.gmra.mrb[0].mxu0 %v1807
      %v2087 = vpop.f32.mrb[0].mxu0
      %v2088 = vadd.f32 %v1111, %v2087
      %v2089 = vpop.f32.mrb[0].mxu0
      %v2090 = vpop.f32.mrb[0].mxu0
      %v2091 = vadd.f32 %v1114, %v2090
      %v2092 = vpop.f32.mrb[0].mxu0
      %2093 = vmatprep.mubr.bf16.mxu0 0
      %2094 = vmatmul.mubr.bf16.gmra.mrb[0].mxu0 %v1808
      %v2095 = vpop.f32.mrb[0].mxu0
      %v2096 = vadd.f32 %v1119, %v2095
      %v2097 = vpop.f32.mrb[0].mxu0
      %v2098 = vpop.f32.mrb[0].mxu0
      %v2099 = vadd.f32 %v1122, %v2098
      %v2100 = vpop.f32.mrb[0].mxu0
      %2101 = vmatprep.mubr.bf16.mxu0 0
      %2102 = vmatmul.mubr.bf16.gmra.mrb[0].mxu0 %v1809
      %v2103 = vpop.f32.mrb[0].mxu0
      %v2104 = vadd.f32 %v1127, %v2103
      %v2105 = vpop.f32.mrb[0].mxu0
      %v2106 = vpop.f32.mrb[0].mxu0
      %v2107 = vadd.f32 %v1130, %v2106
      %v2108 = vpop.f32.mrb[0].mxu0
      %2109 = vmatprep.mubr.bf16.mxu0 0
      %2110 = vmatmul.mubr.bf16.gmra.mrb[0].mxu0 %v1810
      %v2111 = vpop.f32.mrb[0].mxu0
      %v2112 = vadd.f32 %v1135, %v2111
      %v2113 = vpop.f32.mrb[0].mxu0
      %v2114 = vpop.f32.mrb[0].mxu0
      %v2115 = vadd.f32 %v1138, %v2114
      %v2116 = vpop.f32.mrb[0].mxu0
      %2117 = vmatprep.mubr.bf16.mxu0 0
      %2118 = vmatmul.mubr.bf16.gmra.mrb[0].mxu0 %v1811
      %v2119 = vpop.f32.mrb[0].mxu0
      %v2120 = vadd.f32 %v1143, %v2119
      %v2121 = vpop.f32.mrb[0].mxu0
      %v2122 = vpop.f32.mrb[0].mxu0
      %v2123 = vadd.f32 %v1146, %v2122
      %v2124 = vpop.f32.mrb[0].mxu0
      %2125 = vmatprep.mubr.bf16.mxu0 0
      %2126 = vmatmul.mubr.bf16.gmra.mrb[0].mxu0 %v1812
      %v2127 = vpop.f32.mrb[0].mxu0
      %v2128 = vadd.f32 %v1151, %v2127
      %v2129 = vpop.f32.mrb[0].mxu0
      %v2130 = vpop.f32.mrb[0].mxu0
      %v2131 = vadd.f32 %v1154, %v2130
      %v2132 = vpop.f32.mrb[0].mxu0
      %2133 = vmatprep.mubr.bf16.mxu0 0
      %2134 = vmatmul.mubr.bf16.gmra.mrb[0].mxu0 %v1813
      %v2135 = vpop.f32.mrb[0].mxu0
      %v2136 = vadd.f32 %v1159, %v2135
      %v2137 = vpop.f32.mrb[0].mxu0
      %v2138 = vpop.f32.mrb[0].mxu0
      %v2139 = vadd.f32 %v1162, %v2138
      %v2140 = vpop.f32.mrb[0].mxu0
      %2141 = vmatprep.mubr.bf16.mxu0 0
      %2142 = vmatmul.mubr.bf16.gmra.mrb[0].mxu0 %v1814
      %v2143 = vpop.f32.mrb[0].mxu0
      %v2144 = vadd.f32 %v1167, %v2143
      %v2145 = vpop.f32.mrb[0].mxu0
      %v2146 = vpop.f32.mrb[0].mxu0
      %v2147 = vadd.f32 %v1170, %v2146
      %v2148 = vpop.f32.mrb[0].mxu0
      %2149 = vmatprep.mubr.bf16.mxu0 0
      %2150 = vmatmul.mubr.bf16.gmra.mrb[0].mxu0 %v1815
      %v2151 = vpop.f32.mrb[0].mxu0
      %v2152 = vadd.f32 %v1175, %v2151
      %v2153 = vpop.f32.mrb[0].mxu0
      %v2154 = vpop.f32.mrb[0].mxu0
      %v2155 = vadd.f32 %v1178, %v2154
      %v2156 = vpop.f32.mrb[0].mxu0
      %2157 = vmatprep.mubr.bf16.mxu0 0
      %2158 = vmatmul.mubr.bf16.gmra.mrb[0].mxu0 %v1816
      %v2159 = vpop.f32.mrb[0].mxu0
      %v2160 = vadd.f32 %v1183, %v2159
      %v2161 = vpop.f32.mrb[0].mxu0
      %v2162 = vpop.f32.mrb[0].mxu0
      %v2163 = vadd.f32 %v1186, %v2162
      %v2164 = vpop.f32.mrb[0].mxu0
      %2165 = vmatprep.mubr.bf16.mxu0 0
      %2166 = vmatmul.mubr.bf16.gmra.mrb[0].mxu0 %v1817
      %v2167 = vpop.f32.mrb[0].mxu0
      %v2168 = vadd.f32 %v1191, %v2167
      %v2169 = vpop.f32.mrb[0].mxu0
      %v2170 = vpop.f32.mrb[0].mxu0
      %v2171 = vadd.f32 %v1194, %v2170
      %v2172 = vpop.f32.mrb[0].mxu0
      %2173 = vmatprep.mubr.bf16.mxu0 0
      %2174 = vmatmul.mubr.bf16.gmra.mrb[0].mxu0 %v1818
      %v2175 = vpop.f32.mrb[0].mxu0
      %v2176 = vadd.f32 %v1199, %v2175
      %v2177 = vpop.f32.mrb[0].mxu0
      %v2178 = vpop.f32.mrb[0].mxu0
      %v2179 = vadd.f32 %v1202, %v2178
      %v2180 = vpop.f32.mrb[0].mxu0
      %2181 = vmatprep.mubr.bf16.mxu0 0
      %2182 = vmatmul.mubr.bf16.gmra.mrb[0].mxu0 %v1819
      %v2183 = vpop.f32.mrb[0].mxu0
      %v2184 = vadd.f32 %v1207, %v2183
      %v2185 = vpop.f32.mrb[0].mxu0
      %v2186 = vpop.f32.mrb[0].mxu0
      %v2187 = vadd.f32 %v1210, %v2186
      %v2188 = vpop.f32.mrb[0].mxu0
      %2189 = vmatprep.mubr.bf16.mxu0 0
      %2190 = vmatmul.mubr.bf16.gmra.mrb[0].mxu0 %v1820
      %v2191 = vpop.f32.mrb[0].mxu0
      %v2192 = vadd.f32 %v1215, %v2191
      %v2193 = vpop.f32.mrb[0].mxu0
      %v2194 = vpop.f32.mrb[0].mxu0
      %v2195 = vadd.f32 %v1218, %v2194
      %v2196 = vpop.f32.mrb[0].mxu0
      %2197 = vmatprep.mubr.bf16.mxu0 0
      %2198 = vmatmul.mubr.bf16.gmra.mrb[0].mxu0 %v1821
      %v2199 = vpop.f32.mrb[0].mxu0
      %v2200 = vadd.f32 %v1223, %v2199
      %v2201 = vpop.f32.mrb[0].mxu0
      %v2202 = vpop.f32.mrb[0].mxu0
      %v2203 = vadd.f32 %v1226, %v2202
      %v2204 = vpop.f32.mrb[0].mxu0
      %2205 = vmatprep.mubr.bf16.mxu0 0
      %2206 = vmatmul.mubr.bf16.gmra.mrb[0].mxu0 %v1822
      %v2207 = vpop.f32.mrb[0].mxu0
      %v2208 = vadd.f32 %v1231, %v2207
      %v2209 = vpop.f32.mrb[0].mxu0
      %v2210 = vpop.f32.mrb[0].mxu0
      %v2211 = vadd.f32 %v1234, %v2210
      %v2212 = vpop.f32.mrb[0].mxu0
      %2213 = vmatprep.mubr.bf16.mxu0 0
      %2214 = vmatmul.mubr.bf16.gmra.mrb[0].mxu0 %v1823
      %v2215 = vpop.f32.mrb[0].mxu0
      %v2216 = vadd.f32 %v1239, %v2215
      %v2217 = vpop.f32.mrb[0].mxu0
      %v2218 = vpop.f32.mrb[0].mxu0
      %v2219 = vadd.f32 %v1242, %v2218
      %v2220 = vpop.f32.mrb[0].mxu0
      %2221 = vmatprep.mubr.bf16.mxu0 0
      %2222 = vmatmul.mubr.bf16.gmra.mrb[0].mxu0 %v1824
      %v2223 = vpop.f32.mrb[0].mxu0
      %v2224 = vadd.f32 %v1247, %v2223
      %v2225 = vpop.f32.mrb[0].mxu0
      %v2226 = vpop.f32.mrb[0].mxu0
      %v2227 = vadd.f32 %v1250, %v2226
      %v2228 = vpop.f32.mrb[0].mxu0
      %2229 = vmatprep.mubr.bf16.mxu0 0
      %2230 = vmatmul.mubr.bf16.gmra.mrb[0].mxu0 %v1825
      %v2231 = vpop.f32.mrb[0].mxu0
      %v2232 = vadd.f32 %v1255, %v2231
      %v2233 = vpop.f32.mrb[0].mxu0
      %v2234 = vpop.f32.mrb[0].mxu0
      %v2235 = vadd.f32 %v1258, %v2234
      %v2236 = vpop.f32.mrb[0].mxu0
      %2237 = vmatprep.mubr.bf16.mxu0 0
      %2238 = vmatmul.mubr.bf16.gmra.mrb[0].mxu0 %v1826
      %v2239 = vpop.f32.mrb[0].mxu0
      %v2240 = vadd.f32 %v1263, %v2239
      %v2241 = vpop.f32.mrb[0].mxu0
      %v2242 = vpop.f32.mrb[0].mxu0
      %v2243 = vadd.f32 %v1266, %v2242
      %v2244 = vpop.f32.mrb[0].mxu0
      %2245 = vmatprep.mubr.bf16.mxu0 0
      %2246 = vmatmul.mubr.bf16.gmra.mrb[0].mxu0 %v1827
      %v2247 = vpop.f32.mrb[0].mxu0
      %v2248 = vadd.f32 %v1271, %v2247
      %v2249 = vpop.f32.mrb[0].mxu0
      %v2250 = vpop.f32.mrb[0].mxu0
      %v2251 = vadd.f32 %v1274, %v2250
      %v2252 = vpop.f32.mrb[0].mxu0
      %2253 = vmatprep.mubr.bf16.mxu0 0
      %2254 = vmatmul.mubr.bf16.gmra.mrb[0].mxu0 %v1828
      %v2255 = vpop.f32.mrb[0].mxu0
      %v2256 = vadd.f32 %v1279, %v2255
      %v2257 = vpop.f32.mrb[0].mxu0
      %v2258 = vpop.f32.mrb[0].mxu0
      %v2259 = vadd.f32 %v1282, %v2258
      %v2260 = vpop.f32.mrb[0].mxu0
      %2261 = vmatprep.mubr.bf16.mxu0 0
      %2262 = vmatmul.mubr.bf16.gmra.mrb[0].mxu0 %v1829
      %v2263 = vpop.f32.mrb[0].mxu0
      %v2264 = vadd.f32 %v1287, %v2263
      %v2265 = vpop.f32.mrb[0].mxu0
      %v2266 = vpop.f32.mrb[0].mxu0
      %v2267 = vadd.f32 %v1290, %v2266
      %v2268 = vpop.f32.mrb[0].mxu0
      %2269 = vmatprep.mubr.bf16.mxu0 0
      %2270 = vmatmul.mubr.bf16.gmra.mrb[0].mxu0 %v1830
      %v2271 = vpop.f32.mrb[0].mxu0
      %v2272 = vadd.f32 %v1295, %v2271
      %v2273 = vpop.f32.mrb[0].mxu0
      %v2274 = vpop.f32.mrb[0].mxu0
      %v2275 = vadd.f32 %v1298, %v2274
      %v2276 = vpop.f32.mrb[0].mxu0
      %2277 = vmatprep.mubr.bf16.mxu0 0
      %2278 = vmatmul.mubr.bf16.gmra.mrb[0].mxu0 %v1831
      %v2279 = vpop.f32.mrb[0].mxu0
      %v2280 = vadd.f32 %v1303, %v2279
      %v2281 = vpop.f32.mrb[0].mxu0
      %v2282 = vpop.f32.mrb[0].mxu0
      %v2283 = vadd.f32 %v1306, %v2282
      %v2284 = vpop.f32.mrb[0].mxu0
      %2285 = vmatprep.mubr.bf16.mxu0 0
      %2286 = vmatmul.mubr.bf16.gmra.mrb[0].mxu0 %v1832
      %v2287 = vpop.f32.mrb[0].mxu0
      %v2288 = vadd.f32 %v1311, %v2287
      %v2289 = vpop.f32.mrb[0].mxu0
      %v2290 = vpop.f32.mrb[0].mxu0
      %v2291 = vadd.f32 %v1314, %v2290
      %v2292 = vpop.f32.mrb[0].mxu0
      %2293 = vmatprep.mubr.bf16.mxu0 0
      %2294 = vmatmul.mubr.bf16.gmra.mrb[0].mxu0 %v1833
      %v2295 = vpop.f32.mrb[0].mxu0
      %v2296 = vadd.f32 %v1319, %v2295
      %v2297 = vpop.f32.mrb[0].mxu0
      %v2298 = vpop.f32.mrb[0].mxu0
      %v2299 = vadd.f32 %v1322, %v2298
      %v2300 = vpop.f32.mrb[0].mxu0
      %2301 = vmatprep.mubr.bf16.mxu0 0
      %2302 = vmatmul.mubr.bf16.gmra.mrb[0].mxu0 %v1834
      %v2303 = vpop.f32.mrb[0].mxu0
      %v2304 = vadd.f32 %v1327, %v2303
      %v2305 = vpop.f32.mrb[0].mxu0
      %v2306 = vpop.f32.mrb[0].mxu0
      %v2307 = vadd.f32 %v1330, %v2306
      %v2308 = vpop.f32.mrb[0].mxu0
      %2309 = vmatprep.mubr.bf16.mxu0 0
      %2310 = vmatmul.mubr.bf16.gmra.mrb[0].mxu0 %v1835
      %v2311 = vpop.f32.mrb[0].mxu0
      %v2312 = vadd.f32 %v1335, %v2311
      %v2313 = vpop.f32.mrb[0].mxu0
      %v2314 = vpop.f32.mrb[0].mxu0
      %v2315 = vadd.f32 %v1338, %v2314
      %v2316 = vpop.f32.mrb[0].mxu0
      %2317 = vmatprep.mubr.bf16.mxu0 0
      %2318 = vmatmul.mubr.bf16.gmra.mrb[0].mxu0 %v1836
      %v2319 = vpop.f32.mrb[0].mxu0
      %v2320 = vadd.f32 %v1343, %v2319
      %v2321 = vpop.f32.mrb[0].mxu0
      %v2322 = vpop.f32.mrb[0].mxu0
      %v2323 = vadd.f32 %v1346, %v2322
      %v2324 = vpop.f32.mrb[0].mxu0
      %2325 = vmatprep.mubr.bf16.mxu0 0
      %2326 = vmatmul.mubr.bf16.gmra.mrb[0].mxu0 %v1837
      %v2327 = vpop.f32.mrb[0].mxu0
      %v2328 = vadd.f32 %v1351, %v2327
      %v2329 = vpop.f32.mrb[0].mxu0
      %v2330 = vpop.f32.mrb[0].mxu0
      %v2331 = vadd.f32 %v1354, %v2330
      %v2332 = vpop.f32.mrb[0].mxu0
      %2333 = vmatprep.mubr.bf16.mxu0 0
      %2334 = vmatmul.mubr.bf16.gmra.mrb[0].mxu0 %v1838
      %v2335 = vpop.f32.mrb[0].mxu0
      %v2336 = vadd.f32 %v1359, %v2335
      %v2337 = vpop.f32.mrb[0].mxu0
      %v2338 = vpop.f32.mrb[0].mxu0
      %v2339 = vadd.f32 %v1362, %v2338
      %v2340 = vpop.f32.mrb[0].mxu0
      %2341 = vmatprep.mubr.bf16.mxu0 0
      %2342 = vmatmul.mubr.bf16.gmra.mrb[0].mxu0 %v1839
      %v2343 = vpop.f32.mrb[0].mxu0
      %v2344 = vadd.f32 %v1367, %v2343
      %v2345 = vpop.f32.mrb[0].mxu0
      %v2346 = vpop.f32.mrb[0].mxu0
      %v2347 = vadd.f32 %v1370, %v2346
      %v2348 = vpop.f32.mrb[0].mxu0
      %2349 = vmatprep.mubr.bf16.mxu0 0
      %2350 = vmatmul.mubr.bf16.gmra.mrb[0].mxu0 %v1840
      %v2351 = vpop.f32.mrb[0].mxu0
      %v2352 = vadd.f32 %v1375, %v2351
      %v2353 = vpop.f32.mrb[0].mxu0
      %v2354 = vpop.f32.mrb[0].mxu0
      %v2355 = vadd.f32 %v1378, %v2354
      %v2356 = vpop.f32.mrb[0].mxu0
      %2357 = vmatprep.mubr.bf16.mxu0 0
      %2358 = vmatmul.mubr.bf16.gmra.mrb[0].mxu0 %v1841
      %v2359 = vpop.f32.mrb[0].mxu0
      %v2360 = vadd.f32 %v1383, %v2359
      %v2361 = vpop.f32.mrb[0].mxu0
      %v2362 = vpop.f32.mrb[0].mxu0
      %v2363 = vadd.f32 %v1386, %v2362
      %v2364 = vpop.f32.mrb[0].mxu0
      %2365 = vmatprep.mubr.bf16.mxu0 0
      %2366 = vmatmul.mubr.bf16.gmra.mrb[0].mxu0 %v1842
      %v2367 = vpop.f32.mrb[0].mxu0
      %v2368 = vadd.f32 %v1391, %v2367
      %v2369 = vpop.f32.mrb[0].mxu0
      %v2370 = vpop.f32.mrb[0].mxu0
      %v2371 = vadd.f32 %v1394, %v2370
      %v2372 = vpop.f32.mrb[0].mxu0
      %2373 = vmatprep.mubr.bf16.mxu0 0
      %2374 = vmatmul.mubr.bf16.gmra.mrb[0].mxu0 %v1843
      %v2375 = vpop.f32.mrb[0].mxu0
      %v2376 = vadd.f32 %v1399, %v2375
      %v2377 = vpop.f32.mrb[0].mxu0
      %v2378 = vpop.f32.mrb[0].mxu0
      %v2379 = vadd.f32 %v1402, %v2378
      %v2380 = vpop.f32.mrb[0].mxu0
      %2381 = vmatprep.mubr.bf16.mxu0 0
      %2382 = vmatmul.mubr.bf16.gmra.mrb[0].mxu0 %v1844
      %v2383 = vpop.f32.mrb[0].mxu0
      %v2384 = vadd.f32 %v1407, %v2383
      %v2385 = vpop.f32.mrb[0].mxu0
      %v2386 = vpop.f32.mrb[0].mxu0
      %v2387 = vadd.f32 %v1410, %v2386
      %v2388 = vpop.f32.mrb[0].mxu0
      %2389 = vmatprep.mubr.bf16.mxu0 0
      %2390 = vmatmul.mubr.bf16.gmra.mrb[0].mxu0 %v1845
      %v2391 = vpop.f32.mrb[0].mxu0
      %v2392 = vadd.f32 %v1415, %v2391
      %v2393 = vpop.f32.mrb[0].mxu0
      %v2394 = vpop.f32.mrb[0].mxu0
      %v2395 = vadd.f32 %v1418, %v2394
      %v2396 = vpop.f32.mrb[0].mxu0
      %2397 = vmatprep.mubr.bf16.mxu0 0
      %2398 = vmatmul.mubr.bf16.gmra.mrb[0].mxu0 %v1846
      %v2399 = vpop.f32.mrb[0].mxu0
      %v2400 = vadd.f32 %v1423, %v2399
      %v2401 = vpop.f32.mrb[0].mxu0
      %v2402 = vpop.f32.mrb[0].mxu0
      %v2403 = vadd.f32 %v1426, %v2402
      %v2404 = vpop.f32.mrb[0].mxu0
      %2405 = vmatprep.mubr.bf16.mxu0 0
      %2406 = vmatmul.mubr.bf16.gmra.mrb[0].mxu0 %v1847
      %v2407 = vpop.f32.mrb[0].mxu0
      %v2408 = vadd.f32 %v1431, %v2407
      %v2409 = vpop.f32.mrb[0].mxu0
      %v2410 = vpop.f32.mrb[0].mxu0
      %v2411 = vadd.f32 %v1434, %v2410
      %v2412 = vpop.f32.mrb[0].mxu0
      %2413 = vmatprep.mubr.bf16.mxu0 0
      %2414 = vmatmul.mubr.bf16.gmra.mrb[0].mxu0 %v1848
      %v2415 = vpop.f32.mrb[0].mxu0
      %v2416 = vadd.f32 %v1439, %v2415
      %v2417 = vpop.f32.mrb[0].mxu0
      %v2418 = vpop.f32.mrb[0].mxu0
      %v2419 = vadd.f32 %v1442, %v2418
      %v2420 = vpop.f32.mrb[0].mxu0
      %2421 = vmatprep.mubr.bf16.mxu0 0
      %2422 = vmatmul.mubr.bf16.gmra.mrb[0].mxu0 %v1849
      %v2423 = vpop.f32.mrb[0].mxu0
      %v2424 = vadd.f32 %v1447, %v2423
      %v2425 = vpop.f32.mrb[0].mxu0
      %v2426 = vpop.f32.mrb[0].mxu0
      %v2427 = vadd.f32 %v1450, %v2426
      %v2428 = vpop.f32.mrb[0].mxu0
      %2429 = vmatprep.mubr.bf16.mxu0 0
      %2430 = vmatmul.mubr.bf16.gmra.mrb[0].mxu0 %v1850
      %v2431 = vpop.f32.mrb[0].mxu0
      %v2432 = vadd.f32 %v1455, %v2431
      %v2433 = vpop.f32.mrb[0].mxu0
      %v2434 = vpop.f32.mrb[0].mxu0
      %v2435 = vadd.f32 %v1458, %v2434
      %v2436 = vpop.f32.mrb[0].mxu0
      %2437 = vmatprep.mubr.bf16.mxu0 0
      %2438 = vmatmul.mubr.bf16.gmra.mrb[0].mxu0 %v1851
      %v2439 = vpop.f32.mrb[0].mxu0
      %v2440 = vadd.f32 %v1463, %v2439
      %v2441 = vpop.f32.mrb[0].mxu0
      %v2442 = vpop.f32.mrb[0].mxu0
      %v2443 = vadd.f32 %v1466, %v2442
      %v2444 = vpop.f32.mrb[0].mxu0
      %2445 = vmatprep.mubr.bf16.mxu0 0
      %2446 = vmatmul.mubr.bf16.gmra.mrb[0].mxu0 %v1852
      %v2447 = vpop.f32.mrb[0].mxu0
      %v2448 = vadd.f32 %v1471, %v2447
      %v2449 = vpop.f32.mrb[0].mxu0
      %v2450 = vpop.f32.mrb[0].mxu0
      %v2451 = vadd.f32 %v1474, %v2450
      %v2452 = vpop.f32.mrb[0].mxu0
      %2453 = vmatprep.mubr.bf16.mxu0 0
      %2454 = vmatmul.mubr.bf16.gmra.mrb[0].mxu0 %v1853
      %v2455 = vpop.f32.mrb[0].mxu0
      %v2456 = vadd.f32 %v1479, %v2455
      %v2457 = vpop.f32.mrb[0].mxu0
      %v2458 = vpop.f32.mrb[0].mxu0
      %v2459 = vadd.f32 %v1482, %v2458
      %v2460 = vpop.f32.mrb[0].mxu0
      %2461 = vmatprep.mubr.bf16.mxu0 0
      %2462 = vmatmul.mubr.bf16.gmra.mrb[0].mxu0 %v1854
      %v2463 = vpop.f32.mrb[0].mxu0
      %v2464 = vadd.f32 %v1487, %v2463
      %v2465 = vpop.f32.mrb[0].mxu0
      %v2466 = vpop.f32.mrb[0].mxu0
      %v2467 = vadd.f32 %v1490, %v2466
      %v2468 = vpop.f32.mrb[0].mxu0
      %2469 = vmatprep.mubr.bf16.mxu0 0
      %2470 = vmatmul.mubr.bf16.gmra.mrb[0].mxu0 %v1855
      %v2471 = vpop.f32.mrb[0].mxu0
      %v2472 = vadd.f32 %v1495, %v2471
      %v2473 = vpop.f32.mrb[0].mxu0
      %v2474 = vpop.f32.mrb[0].mxu0
      %v2475 = vadd.f32 %v1498, %v2474
      %v2476 = vpop.f32.mrb[0].mxu0
      %2477 = vmatprep.mubr.bf16.mxu0 0
      %2478 = vmatmul.mubr.bf16.gmra.mrb[0].mxu0 %v1856
      %v2479 = vpop.f32.mrb[0].mxu0
      %v2480 = vadd.f32 %v1503, %v2479
      %v2481 = vpop.f32.mrb[0].mxu0
      %v2482 = vpop.f32.mrb[0].mxu0
      %v2483 = vadd.f32 %v1506, %v2482
      %v2484 = vpop.f32.mrb[0].mxu0
      %2485 = vmatprep.mubr.bf16.mxu0 0
      %2486 = vmatmul.mubr.bf16.gmra.mrb[0].mxu0 %v1857
      %v2487 = vpop.f32.mrb[0].mxu0
      %v2488 = vadd.f32 %v1511, %v2487
      %v2489 = vpop.f32.mrb[0].mxu0
      %v2490 = vpop.f32.mrb[0].mxu0
      %v2491 = vadd.f32 %v1514, %v2490
      %v2492 = vpop.f32.mrb[0].mxu0
      %2493 = vmatprep.mubr.bf16.mxu0 0
      %2494 = vmatmul.mubr.bf16.gmra.mrb[0].mxu0 %v1858
      %v2495 = vpop.f32.mrb[0].mxu0
      %v2496 = vadd.f32 %v1519, %v2495
      %v2497 = vpop.f32.mrb[0].mxu0
      %v2498 = vpop.f32.mrb[0].mxu0
      %v2499 = vadd.f32 %v1522, %v2498
      %v2500 = vpop.f32.mrb[0].mxu0
      %2501 = vmatprep.mubr.bf16.mxu0 0
      %2502 = vmatmul.mubr.bf16.gmra.mrb[0].mxu0 %v1859
      %v2503 = vpop.f32.mrb[0].mxu0
      %v2504 = vadd.f32 %v1527, %v2503
      %v2505 = vpop.f32.mrb[0].mxu0
      %v2506 = vpop.f32.mrb[0].mxu0
      %v2507 = vadd.f32 %v1530, %v2506
      %v2508 = vpop.f32.mrb[0].mxu0
      %2509 = vmatprep.mubr.bf16.mxu0 0
      %2510 = vmatmul.mubr.bf16.gmra.mrb[0].mxu0 %v1860
      %v2511 = vpop.f32.mrb[0].mxu0
      %v2512 = vadd.f32 %v1535, %v2511
      %v2513 = vpop.f32.mrb[0].mxu0
      %v2514 = vpop.f32.mrb[0].mxu0
      %v2515 = vadd.f32 %v1538, %v2514
      %v2516 = vpop.f32.mrb[0].mxu0
      %2517 = vdwg.mxu0
      %s2518 = scalar_lea.vmem %s256, 32
      %v2519 = vld [vmem:[%s2518] sm:$0xf]
      %v2520 = vld [vmem:[%s2518 + $0x4] sm:$0xf]
      %v2521 = vld [vmem:[%s2518 + $0x8] sm:$0xf]
      %v2522 = vld [vmem:[%s2518 + $0xc] sm:$0xf]
      %v2523 = vld [vmem:[%s2518 + $0x10] sm:$0xf]
      %v2524 = vld [vmem:[%s2518 + $0x14] sm:$0xf]
      %v2525 = vld [vmem:[%s2518 + $0x18] sm:$0xf]
      %v2526 = vld [vmem:[%s2518 + $0x1c] sm:$0xf]
      %v2527 = vld [vmem:[%s2518 + $0x20] sm:$0xf]
      %v2528 = vld [vmem:[%s2518 + $0x24] sm:$0xf]
      %v2529 = vld [vmem:[%s2518 + $0x28] sm:$0xf]
      %v2530 = vld [vmem:[%s2518 + $0x2c] sm:$0xf]
      %v2531 = vld [vmem:[%s2518 + $0x30] sm:$0xf]
      %v2532 = vld [vmem:[%s2518 + $0x34] sm:$0xf]
      %v2533 = vld [vmem:[%s2518 + $0x38] sm:$0xf]
      %v2534 = vld [vmem:[%s2518 + $0x3c] sm:$0xf]
      %v2535 = vld [vmem:[%s2518 + $0x40] sm:$0xf]
      %v2536 = vld [vmem:[%s2518 + $0x44] sm:$0xf]
      %v2537 = vld [vmem:[%s2518 + $0x48] sm:$0xf]
      %v2538 = vld [vmem:[%s2518 + $0x4c] sm:$0xf]
      %v2539 = vld [vmem:[%s2518 + $0x50] sm:$0xf]
      %v2540 = vld [vmem:[%s2518 + $0x54] sm:$0xf]
      %v2541 = vld [vmem:[%s2518 + $0x58] sm:$0xf]
      %v2542 = vld [vmem:[%s2518 + $0x5c] sm:$0xf]
      %v2543 = vld [vmem:[%s2518 + $0x60] sm:$0xf]
      %v2544 = vld [vmem:[%s2518 + $0x64] sm:$0xf]
      %v2545 = vld [vmem:[%s2518 + $0x68] sm:$0xf]
      %v2546 = vld [vmem:[%s2518 + $0x6c] sm:$0xf]
      %v2547 = vld [vmem:[%s2518 + $0x70] sm:$0xf]
      %v2548 = vld [vmem:[%s2518 + $0x74] sm:$0xf]
      %v2549 = vld [vmem:[%s2518 + $0x78] sm:$0xf]
      %v2550 = vld [vmem:[%s2518 + $0x7c] sm:$0xf]
      %v2551 = vld [vmem:[%s2518 + $0x80] sm:$0xf]
      %v2552 = vld [vmem:[%s2518 + $0x84] sm:$0xf]
      %v2553 = vld [vmem:[%s2518 + $0x88] sm:$0xf]
      %v2554 = vld [vmem:[%s2518 + $0x8c] sm:$0xf]
      %v2555 = vld [vmem:[%s2518 + $0x90] sm:$0xf]
      %v2556 = vld [vmem:[%s2518 + $0x94] sm:$0xf]
      %v2557 = vld [vmem:[%s2518 + $0x98] sm:$0xf]
      %v2558 = vld [vmem:[%s2518 + $0x9c] sm:$0xf]
      %v2559 = vld [vmem:[%s2518 + $0xa0] sm:$0xf]
      %v2560 = vld [vmem:[%s2518 + $0xa4] sm:$0xf]
      %v2561 = vld [vmem:[%s2518 + $0xa8] sm:$0xf]
      %v2562 = vld [vmem:[%s2518 + $0xac] sm:$0xf]
      %v2563 = vld [vmem:[%s2518 + $0xb0] sm:$0xf]
      %v2564 = vld [vmem:[%s2518 + $0xb4] sm:$0xf]
      %v2565 = vld [vmem:[%s2518 + $0xb8] sm:$0xf]
      %v2566 = vld [vmem:[%s2518 + $0xbc] sm:$0xf]
      %v2567 = vld [vmem:[%s2518 + $0xc0] sm:$0xf]
      %v2568 = vld [vmem:[%s2518 + $0xc4] sm:$0xf]
      %v2569 = vld [vmem:[%s2518 + $0xc8] sm:$0xf]
      %v2570 = vld [vmem:[%s2518 + $0xcc] sm:$0xf]
      %v2571 = vld [vmem:[%s2518 + $0xd0] sm:$0xf]
      %v2572 = vld [vmem:[%s2518 + $0xd4] sm:$0xf]
      %v2573 = vld [vmem:[%s2518 + $0xd8] sm:$0xf]
      %v2574 = vld [vmem:[%s2518 + $0xdc] sm:$0xf]
      %v2575 = vld [vmem:[%s2518 + $0xe0] sm:$0xf]
      %v2576 = vld [vmem:[%s2518 + $0xe4] sm:$0xf]
      %v2577 = vld [vmem:[%s2518 + $0xe8] sm:$0xf]
      %v2578 = vld [vmem:[%s2518 + $0xec] sm:$0xf]
      %v2579 = vld [vmem:[%s2518 + $0xf0] sm:$0xf]
      %v2580 = vld [vmem:[%s2518 + $0xf4] sm:$0xf]
      %v2581 = vld [vmem:[%s2518 + $0xf8] sm:$0xf]
      %v2582 = vld [vmem:[%s2518 + $0xfc] sm:$0xf]
      %v2583 = vld [vmem:[%s2518 + $0x100] sm:$0xf]
      %v2584 = vld [vmem:[%s2518 + $0x104] sm:$0xf]
      %v2585 = vld [vmem:[%s2518 + $0x108] sm:$0xf]
      %v2586 = vld [vmem:[%s2518 + $0x10c] sm:$0xf]
      %v2587 = vld [vmem:[%s2518 + $0x110] sm:$0xf]
      %v2588 = vld [vmem:[%s2518 + $0x114] sm:$0xf]
      %v2589 = vld [vmem:[%s2518 + $0x118] sm:$0xf]
      %v2590 = vld [vmem:[%s2518 + $0x11c] sm:$0xf]
      %v2591 = vld [vmem:[%s2518 + $0x120] sm:$0xf]
      %v2592 = vld [vmem:[%s2518 + $0x124] sm:$0xf]
      %v2593 = vld [vmem:[%s2518 + $0x128] sm:$0xf]
      %v2594 = vld [vmem:[%s2518 + $0x12c] sm:$0xf]
      %v2595 = vld [vmem:[%s2518 + $0x130] sm:$0xf]
      %v2596 = vld [vmem:[%s2518 + $0x134] sm:$0xf]
      %v2597 = vld [vmem:[%s2518 + $0x138] sm:$0xf]
      %v2598 = vld [vmem:[%s2518 + $0x13c] sm:$0xf]
      %v2599 = vld [vmem:[%s2518 + $0x140] sm:$0xf]
      %v2600 = vld [vmem:[%s2518 + $0x144] sm:$0xf]
      %v2601 = vld [vmem:[%s2518 + $0x148] sm:$0xf]
      %v2602 = vld [vmem:[%s2518 + $0x14c] sm:$0xf]
      %v2603 = vld [vmem:[%s2518 + $0x150] sm:$0xf]
      %v2604 = vld [vmem:[%s2518 + $0x154] sm:$0xf]
      %v2605 = vld [vmem:[%s2518 + $0x158] sm:$0xf]
      %v2606 = vld [vmem:[%s2518 + $0x15c] sm:$0xf]
      %v2607 = vld [vmem:[%s2518 + $0x160] sm:$0xf]
      %v2608 = vld [vmem:[%s2518 + $0x164] sm:$0xf]
      %v2609 = vld [vmem:[%s2518 + $0x168] sm:$0xf]
      %v2610 = vld [vmem:[%s2518 + $0x16c] sm:$0xf]
      %v2611 = vld [vmem:[%s2518 + $0x170] sm:$0xf]
      %v2612 = vld [vmem:[%s2518 + $0x174] sm:$0xf]
      %v2613 = vld [vmem:[%s2518 + $0x178] sm:$0xf]
      %v2614 = vld [vmem:[%s2518 + $0x17c] sm:$0xf]
      %v2615 = vld [vmem:[%s2518 + $0x180] sm:$0xf]
      %v2616 = vld [vmem:[%s2518 + $0x184] sm:$0xf]
      %v2617 = vld [vmem:[%s2518 + $0x188] sm:$0xf]
      %v2618 = vld [vmem:[%s2518 + $0x18c] sm:$0xf]
      %v2619 = vld [vmem:[%s2518 + $0x190] sm:$0xf]
      %v2620 = vld [vmem:[%s2518 + $0x194] sm:$0xf]
      %v2621 = vld [vmem:[%s2518 + $0x198] sm:$0xf]
      %v2622 = vld [vmem:[%s2518 + $0x19c] sm:$0xf]
      %v2623 = vld [vmem:[%s2518 + $0x1a0] sm:$0xf]
      %v2624 = vld [vmem:[%s2518 + $0x1a4] sm:$0xf]
      %v2625 = vld [vmem:[%s2518 + $0x1a8] sm:$0xf]
      %v2626 = vld [vmem:[%s2518 + $0x1ac] sm:$0xf]
      %v2627 = vld [vmem:[%s2518 + $0x1b0] sm:$0xf]
      %v2628 = vld [vmem:[%s2518 + $0x1b4] sm:$0xf]
      %v2629 = vld [vmem:[%s2518 + $0x1b8] sm:$0xf]
      %v2630 = vld [vmem:[%s2518 + $0x1bc] sm:$0xf]
      %v2631 = vld [vmem:[%s2518 + $0x1c0] sm:$0xf]
      %v2632 = vld [vmem:[%s2518 + $0x1c4] sm:$0xf]
      %v2633 = vld [vmem:[%s2518 + $0x1c8] sm:$0xf]
      %v2634 = vld [vmem:[%s2518 + $0x1cc] sm:$0xf]
      %v2635 = vld [vmem:[%s2518 + $0x1d0] sm:$0xf]
      %v2636 = vld [vmem:[%s2518 + $0x1d4] sm:$0xf]
      %v2637 = vld [vmem:[%s2518 + $0x1d8] sm:$0xf]
      %v2638 = vld [vmem:[%s2518 + $0x1dc] sm:$0xf]
      %v2639 = vld [vmem:[%s2518 + $0x1e0] sm:$0xf]
      %v2640 = vld [vmem:[%s2518 + $0x1e4] sm:$0xf]
      %v2641 = vld [vmem:[%s2518 + $0x1e8] sm:$0xf]
      %v2642 = vld [vmem:[%s2518 + $0x1ec] sm:$0xf]
      %v2643 = vld [vmem:[%s2518 + $0x1f0] sm:$0xf]
      %v2644 = vld [vmem:[%s2518 + $0x1f4] sm:$0xf]
      %v2645 = vld [vmem:[%s2518 + $0x1f8] sm:$0xf]
      %v2646 = vld [vmem:[%s2518 + $0x1fc] sm:$0xf]
      %s2647 = scalar_lea.vmem %s1, 128
      %v2648 = vld [vmem:[%s2647] sm:$0xf]
      %v2649 = vld [vmem:[%s2647 + $0x4] sm:$0xf]
      %v2650 = vld [vmem:[%s2647 + $0x8] sm:$0xf]
      %v2651 = vld [vmem:[%s2647 + $0xc] sm:$0xf]
      %v2652 = vld [vmem:[%s2647 + $0x10] sm:$0xf]
      %v2653 = vld [vmem:[%s2647 + $0x14] sm:$0xf]
      %v2654 = vld [vmem:[%s2647 + $0x18] sm:$0xf]
      %v2655 = vld [vmem:[%s2647 + $0x1c] sm:$0xf]
      %v2656 = vld [vmem:[%s2647 + $0x20] sm:$0xf]
      %v2657 = vld [vmem:[%s2647 + $0x24] sm:$0xf]
      %v2658 = vld [vmem:[%s2647 + $0x28] sm:$0xf]
      %v2659 = vld [vmem:[%s2647 + $0x2c] sm:$0xf]
      %v2660 = vld [vmem:[%s2647 + $0x30] sm:$0xf]
      %v2661 = vld [vmem:[%s2647 + $0x34] sm:$0xf]
      %v2662 = vld [vmem:[%s2647 + $0x38] sm:$0xf]
      %v2663 = vld [vmem:[%s2647 + $0x3c] sm:$0xf]
      %v2792 = vunpack.c.l.b16 %v2519
      %v2793 = vunpack.c.l.b16 %v2520
      %v2794 = vunpack.c.l.b16 %v2521
      %v2795 = vunpack.c.l.b16 %v2522
      %v2796 = vunpack.c.l.b16 %v2523
      %v2797 = vunpack.c.l.b16 %v2524
      %v2798 = vunpack.c.l.b16 %v2525
      %v2799 = vunpack.c.l.b16 %v2526
      %v2800 = vunpack.c.l.b16 %v2527
      %v2801 = vunpack.c.l.b16 %v2528
      %v2802 = vunpack.c.l.b16 %v2529
      %v2803 = vunpack.c.l.b16 %v2530
      %v2804 = vunpack.c.l.b16 %v2531
      %v2805 = vunpack.c.l.b16 %v2532
      %v2806 = vunpack.c.l.b16 %v2533
      %v2807 = vunpack.c.l.b16 %v2534
      %v2808 = vunpack.c.l.b16 %v2535
      %v2809 = vunpack.c.l.b16 %v2536
      %v2810 = vunpack.c.l.b16 %v2537
      %v2811 = vunpack.c.l.b16 %v2538
      %v2812 = vunpack.c.l.b16 %v2539
      %v2813 = vunpack.c.l.b16 %v2540
      %v2814 = vunpack.c.l.b16 %v2541
      %v2815 = vunpack.c.l.b16 %v2542
      %v2816 = vunpack.c.l.b16 %v2543
      %v2817 = vunpack.c.l.b16 %v2544
      %v2818 = vunpack.c.l.b16 %v2545
      %v2819 = vunpack.c.l.b16 %v2546
      %v2820 = vunpack.c.l.b16 %v2547
      %v2821 = vunpack.c.l.b16 %v2548
      %v2822 = vunpack.c.l.b16 %v2549
      %v2823 = vunpack.c.l.b16 %v2550
      %v2824 = vunpack.c.l.b16 %v2551
      %v2825 = vunpack.c.l.b16 %v2552
      %v2826 = vunpack.c.l.b16 %v2553
      %v2827 = vunpack.c.l.b16 %v2554
      %v2828 = vunpack.c.l.b16 %v2555
      %v2829 = vunpack.c.l.b16 %v2556
      %v2830 = vunpack.c.l.b16 %v2557
      %v2831 = vunpack.c.l.b16 %v2558
      %v2832 = vunpack.c.l.b16 %v2559
      %v2833 = vunpack.c.l.b16 %v2560
      %v2834 = vunpack.c.l.b16 %v2561
      %v2835 = vunpack.c.l.b16 %v2562
      %v2836 = vunpack.c.l.b16 %v2563
      %v2837 = vunpack.c.l.b16 %v2564
      %v2838 = vunpack.c.l.b16 %v2565
      %v2839 = vunpack.c.l.b16 %v2566
      %v2840 = vunpack.c.l.b16 %v2567
      %v2841 = vunpack.c.l.b16 %v2568
      %v2842 = vunpack.c.l.b16 %v2569
      %v2843 = vunpack.c.l.b16 %v2570
      %v2844 = vunpack.c.l.b16 %v2571
      %v2845 = vunpack.c.l.b16 %v2572
      %v2846 = vunpack.c.l.b16 %v2573
      %v2847 = vunpack.c.l.b16 %v2574
      %v2848 = vunpack.c.l.b16 %v2575
      %v2849 = vunpack.c.l.b16 %v2576
      %v2850 = vunpack.c.l.b16 %v2577
      %v2851 = vunpack.c.l.b16 %v2578
      %v2852 = vunpack.c.l.b16 %v2579
      %v2853 = vunpack.c.l.b16 %v2580
      %v2854 = vunpack.c.l.b16 %v2581
      %v2855 = vunpack.c.l.b16 %v2582
      %v2856 = vunpack.c.l.b16 %v2583
      %v2857 = vunpack.c.l.b16 %v2584
      %v2858 = vunpack.c.l.b16 %v2585
      %v2859 = vunpack.c.l.b16 %v2586
      %v2860 = vunpack.c.l.b16 %v2587
      %v2861 = vunpack.c.l.b16 %v2588
      %v2862 = vunpack.c.l.b16 %v2589
      %v2863 = vunpack.c.l.b16 %v2590
      %v2864 = vunpack.c.l.b16 %v2591
      %v2865 = vunpack.c.l.b16 %v2592
      %v2866 = vunpack.c.l.b16 %v2593
      %v2867 = vunpack.c.l.b16 %v2594
      %v2868 = vunpack.c.l.b16 %v2595
      %v2869 = vunpack.c.l.b16 %v2596
      %v2870 = vunpack.c.l.b16 %v2597
      %v2871 = vunpack.c.l.b16 %v2598
      %v2872 = vunpack.c.l.b16 %v2599
      %v2873 = vunpack.c.l.b16 %v2600
      %v2874 = vunpack.c.l.b16 %v2601
      %v2875 = vunpack.c.l.b16 %v2602
      %v2876 = vunpack.c.l.b16 %v2603
      %v2877 = vunpack.c.l.b16 %v2604
      %v2878 = vunpack.c.l.b16 %v2605
      %v2879 = vunpack.c.l.b16 %v2606
      %v2880 = vunpack.c.l.b16 %v2607
      %v2881 = vunpack.c.l.b16 %v2608
      %v2882 = vunpack.c.l.b16 %v2609
      %v2883 = vunpack.c.l.b16 %v2610
      %v2884 = vunpack.c.l.b16 %v2611
      %v2885 = vunpack.c.l.b16 %v2612
      %v2886 = vunpack.c.l.b16 %v2613
      %v2887 = vunpack.c.l.b16 %v2614
      %v2888 = vunpack.c.l.b16 %v2615
      %v2889 = vunpack.c.l.b16 %v2616
      %v2890 = vunpack.c.l.b16 %v2617
      %v2891 = vunpack.c.l.b16 %v2618
      %v2892 = vunpack.c.l.b16 %v2619
      %v2893 = vunpack.c.l.b16 %v2620
      %v2894 = vunpack.c.l.b16 %v2621
      %v2895 = vunpack.c.l.b16 %v2622
      %v2896 = vunpack.c.l.b16 %v2623
      %v2897 = vunpack.c.l.b16 %v2624
      %v2898 = vunpack.c.l.b16 %v2625
      %v2899 = vunpack.c.l.b16 %v2626
      %v2900 = vunpack.c.l.b16 %v2627
      %v2901 = vunpack.c.l.b16 %v2628
      %v2902 = vunpack.c.l.b16 %v2629
      %v2903 = vunpack.c.l.b16 %v2630
      %v2904 = vunpack.c.l.b16 %v2631
      %v2905 = vunpack.c.l.b16 %v2632
      %v2906 = vunpack.c.l.b16 %v2633
      %v2907 = vunpack.c.l.b16 %v2634
      %v2908 = vunpack.c.l.b16 %v2635
      %v2909 = vunpack.c.l.b16 %v2636
      %v2910 = vunpack.c.l.b16 %v2637
      %v2911 = vunpack.c.l.b16 %v2638
      %v2912 = vunpack.c.l.b16 %v2639
      %v2913 = vunpack.c.l.b16 %v2640
      %v2914 = vunpack.c.l.b16 %v2641
      %v2915 = vunpack.c.l.b16 %v2642
      %v2916 = vunpack.c.l.b16 %v2643
      %v2917 = vunpack.c.l.b16 %v2644
      %v2918 = vunpack.c.l.b16 %v2645
      %v2919 = vunpack.c.l.b16 %v2646
      %v2920 = vpack.c.b16 %v2793, %v2792
      %v2921 = vpack.c.b16 %v2795, %v2794
      %v2922 = vpack.c.b16 %v2797, %v2796
      %v2923 = vpack.c.b16 %v2799, %v2798
      %v2924 = vpack.c.b16 %v2801, %v2800
      %v2925 = vpack.c.b16 %v2803, %v2802
      %v2926 = vpack.c.b16 %v2805, %v2804
      %v2927 = vpack.c.b16 %v2807, %v2806
      %v2928 = vpack.c.b16 %v2809, %v2808
      %v2929 = vpack.c.b16 %v2811, %v2810
      %v2930 = vpack.c.b16 %v2813, %v2812
      %v2931 = vpack.c.b16 %v2815, %v2814
      %v2932 = vpack.c.b16 %v2817, %v2816
      %v2933 = vpack.c.b16 %v2819, %v2818
      %v2934 = vpack.c.b16 %v2821, %v2820
      %v2935 = vpack.c.b16 %v2823, %v2822
      %v2936 = vpack.c.b16 %v2825, %v2824
      %v2937 = vpack.c.b16 %v2827, %v2826
      %v2938 = vpack.c.b16 %v2829, %v2828
      %v2939 = vpack.c.b16 %v2831, %v2830
      %v2940 = vpack.c.b16 %v2833, %v2832
      %v2941 = vpack.c.b16 %v2835, %v2834
      %v2942 = vpack.c.b16 %v2837, %v2836
      %v2943 = vpack.c.b16 %v2839, %v2838
      %v2944 = vpack.c.b16 %v2841, %v2840
      %v2945 = vpack.c.b16 %v2843, %v2842
      %v2946 = vpack.c.b16 %v2845, %v2844
      %v2947 = vpack.c.b16 %v2847, %v2846
      %v2948 = vpack.c.b16 %v2849, %v2848
      %v2949 = vpack.c.b16 %v2851, %v2850
      %v2950 = vpack.c.b16 %v2853, %v2852
      %v2951 = vpack.c.b16 %v2855, %v2854
      %v2952 = vpack.c.b16 %v2857, %v2856
      %v2953 = vpack.c.b16 %v2859, %v2858
      %v2954 = vpack.c.b16 %v2861, %v2860
      %v2955 = vpack.c.b16 %v2863, %v2862
      %v2956 = vpack.c.b16 %v2865, %v2864
      %v2957 = vpack.c.b16 %v2867, %v2866
      %v2958 = vpack.c.b16 %v2869, %v2868
      %v2959 = vpack.c.b16 %v2871, %v2870
      %v2960 = vpack.c.b16 %v2873, %v2872
      %v2961 = vpack.c.b16 %v2875, %v2874
      %v2962 = vpack.c.b16 %v2877, %v2876
      %v2963 = vpack.c.b16 %v2879, %v2878
      %v2964 = vpack.c.b16 %v2881, %v2880
      %v2965 = vpack.c.b16 %v2883, %v2882
      %v2966 = vpack.c.b16 %v2885, %v2884
      %v2967 = vpack.c.b16 %v2887, %v2886
      %v2968 = vpack.c.b16 %v2889, %v2888
      %v2969 = vpack.c.b16 %v2891, %v2890
      %v2970 = vpack.c.b16 %v2893, %v2892
      %v2971 = vpack.c.b16 %v2895, %v2894
      %v2972 = vpack.c.b16 %v2897, %v2896
      %v2973 = vpack.c.b16 %v2899, %v2898
      %v2974 = vpack.c.b16 %v2901, %v2900
      %v2975 = vpack.c.b16 %v2903, %v2902
      %v2976 = vpack.c.b16 %v2905, %v2904
      %v2977 = vpack.c.b16 %v2907, %v2906
      %v2978 = vpack.c.b16 %v2909, %v2908
      %v2979 = vpack.c.b16 %v2911, %v2910
      %v2980 = vpack.c.b16 %v2913, %v2912
      %v2981 = vpack.c.b16 %v2915, %v2914
      %v2982 = vpack.c.b16 %v2917, %v2916
      %v2983 = vpack.c.b16 %v2919, %v2918
      %v3064 = vunpack.c.l.b16 %v2648
      %v3065 = vunpack.c.l.b16 %v2649
      %v3066 = vunpack.c.l.b16 %v2650
      %v3067 = vunpack.c.l.b16 %v2651
      %v3068 = vunpack.c.l.b16 %v2652
      %v3069 = vunpack.c.l.b16 %v2653
      %v3070 = vunpack.c.l.b16 %v2654
      %v3071 = vunpack.c.l.b16 %v2655
      %v3072 = vunpack.c.l.b16 %v2656
      %v3073 = vunpack.c.l.b16 %v2657
      %v3074 = vunpack.c.l.b16 %v2658
      %v3075 = vunpack.c.l.b16 %v2659
      %v3076 = vunpack.c.l.b16 %v2660
      %v3077 = vunpack.c.l.b16 %v2661
      %v3078 = vunpack.c.l.b16 %v2662
      %v3079 = vunpack.c.l.b16 %v2663
      %v3080 = vpack.c.b16 %v3065, %v3064
      %v3081 = vpack.c.b16 %v3067, %v3066
      %v3082 = vpack.c.b16 %v3069, %v3068
      %v3083 = vpack.c.b16 %v3071, %v3070
      %v3084 = vpack.c.b16 %v3073, %v3072
      %v3085 = vpack.c.b16 %v3075, %v3074
      %v3086 = vpack.c.b16 %v3077, %v3076
      %v3087 = vpack.c.b16 %v3079, %v3078
      %3096 = vmatprep.subr.bf16.mxu0 0
      %3097 = vmatpush1.bf16.msra.mxu0 %v3080
      %3098 = vmatprep.subr.bf16.mxu0 0
      %3099 = vmatpush1.bf16.msra.mxu0 %v3081
      %3100 = vmatprep.subr.bf16.mxu0 0
      %3101 = vmatpush1.bf16.msra.mxu0 %v3082
      %3102 = vmatprep.subr.bf16.mxu0 0
      %3103 = vmatpush1.bf16.msra.mxu0 %v3083
      %3104 = vmatprep.subr.bf16.mxu0 0
      %3105 = vmatpush1.bf16.msra.mxu0 %v3084
      %3106 = vmatprep.subr.bf16.mxu0 0
      %3107 = vmatpush1.bf16.msra.mxu0 %v3085
      %3108 = vmatprep.subr.bf16.mxu0 0
      %3109 = vmatpush1.bf16.msra.mxu0 %v3086
      %3110 = vmatprep.subr.bf16.mxu0 0
      %3111 = vmatpush1.bf16.msra.mxu0 %v3087
      %3112 = vmatprep.subr.bf16.mxu0 0
      %3113 = vmatpush1.bf16.msra.mxu0 0
      %3114 = vmatprep.subr.bf16.mxu0 0
      %3115 = vmatpush1.bf16.msra.mxu0 0
      %3116 = vmatprep.subr.bf16.mxu0 0
      %3117 = vmatpush1.bf16.msra.mxu0 0
      %3118 = vmatprep.subr.bf16.mxu0 0
      %3119 = vmatpush1.bf16.msra.mxu0 0
      %3120 = vmatprep.subr.bf16.mxu0 0
      %3121 = vmatpush1.bf16.msra.mxu0 0
      %3122 = vmatprep.subr.bf16.mxu0 0
      %3123 = vmatpush1.bf16.msra.mxu0 0
      %3124 = vmatprep.subr.bf16.mxu0 0
      %3125 = vmatpush1.bf16.msra.mxu0 0
      %3126 = vmatprep.subr.bf16.mxu0 0
      %3127 = vmatpush1.bf16.msra.mxu0 0
      %3128 = vmatprep.mubr.bf16.mxu0 0
      %3129 = vmatmul.mubr.bf16.gmra.mrb[0].mxu0 %v2920
      %v3130 = vpop.f32.mrb[0].mxu0
      %v3131 = vadd.f32 0.0, %v3130
      %v3132 = vpop.f32.mrb[0].mxu0
      %v3133 = vpop.f32.mrb[0].mxu0
      %v3134 = vadd.f32 0.0, %v3133
      %v3135 = vpop.f32.mrb[0].mxu0
      %3136 = vmatprep.mubr.bf16.mxu0 0
      %3137 = vmatmul.mubr.bf16.gmra.mrb[0].mxu0 %v2921
      %v3138 = vpop.f32.mrb[0].mxu0
      %v3139 = vadd.f32 0.0, %v3138
      %v3140 = vpop.f32.mrb[0].mxu0
      %v3141 = vpop.f32.mrb[0].mxu0
      %v3142 = vadd.f32 0.0, %v3141
      %v3143 = vpop.f32.mrb[0].mxu0
      %3144 = vmatprep.mubr.bf16.mxu0 0
      %3145 = vmatmul.mubr.bf16.gmra.mrb[0].mxu0 %v2922
      %v3146 = vpop.f32.mrb[0].mxu0
      %v3147 = vadd.f32 0.0, %v3146
      %v3148 = vpop.f32.mrb[0].mxu0
      %v3149 = vpop.f32.mrb[0].mxu0
      %v3150 = vadd.f32 0.0, %v3149
      %v3151 = vpop.f32.mrb[0].mxu0
      %3152 = vmatprep.mubr.bf16.mxu0 0
      %3153 = vmatmul.mubr.bf16.gmra.mrb[0].mxu0 %v2923
      %v3154 = vpop.f32.mrb[0].mxu0
      %v3155 = vadd.f32 0.0, %v3154
      %v3156 = vpop.f32.mrb[0].mxu0
      %v3157 = vpop.f32.mrb[0].mxu0
      %v3158 = vadd.f32 0.0, %v3157
      %v3159 = vpop.f32.mrb[0].mxu0
      %3160 = vmatprep.mubr.bf16.mxu0 0
      %3161 = vmatmul.mubr.bf16.gmra.mrb[0].mxu0 %v2924
      %v3162 = vpop.f32.mrb[0].mxu0
      %v3163 = vadd.f32 0.0, %v3162
      %v3164 = vpop.f32.mrb[0].mxu0
      %v3165 = vpop.f32.mrb[0].mxu0
      %v3166 = vadd.f32 0.0, %v3165
      %v3167 = vpop.f32.mrb[0].mxu0
      %3168 = vmatprep.mubr.bf16.mxu0 0
      %3169 = vmatmul.mubr.bf16.gmra.mrb[0].mxu0 %v2925
      %v3170 = vpop.f32.mrb[0].mxu0
      %v3171 = vadd.f32 0.0, %v3170
      %v3172 = vpop.f32.mrb[0].mxu0
      %v3173 = vpop.f32.mrb[0].mxu0
      %v3174 = vadd.f32 0.0, %v3173
      %v3175 = vpop.f32.mrb[0].mxu0
      %3176 = vmatprep.mubr.bf16.mxu0 0
      %3177 = vmatmul.mubr.bf16.gmra.mrb[0].mxu0 %v2926
      %v3178 = vpop.f32.mrb[0].mxu0
      %v3179 = vadd.f32 0.0, %v3178
      %v3180 = vpop.f32.mrb[0].mxu0
      %v3181 = vpop.f32.mrb[0].mxu0
      %v3182 = vadd.f32 0.0, %v3181
      %v3183 = vpop.f32.mrb[0].mxu0
      %3184 = vmatprep.mubr.bf16.mxu0 0
      %3185 = vmatmul.mubr.bf16.gmra.mrb[0].mxu0 %v2927
      %v3186 = vpop.f32.mrb[0].mxu0
      %v3187 = vadd.f32 0.0, %v3186
      %v3188 = vpop.f32.mrb[0].mxu0
      %v3189 = vpop.f32.mrb[0].mxu0
      %v3190 = vadd.f32 0.0, %v3189
      %v3191 = vpop.f32.mrb[0].mxu0
      %3192 = vmatprep.mubr.bf16.mxu0 0
      %3193 = vmatmul.mubr.bf16.gmra.mrb[0].mxu0 %v2928
      %v3194 = vpop.f32.mrb[0].mxu0
      %v3195 = vadd.f32 0.0, %v3194
      %v3196 = vpop.f32.mrb[0].mxu0
      %v3197 = vpop.f32.mrb[0].mxu0
      %v3198 = vadd.f32 0.0, %v3197
      %v3199 = vpop.f32.mrb[0].mxu0
      %3200 = vmatprep.mubr.bf16.mxu0 0
      %3201 = vmatmul.mubr.bf16.gmra.mrb[0].mxu0 %v2929
      %v3202 = vpop.f32.mrb[0].mxu0
      %v3203 = vadd.f32 0.0, %v3202
      %v3204 = vpop.f32.mrb[0].mxu0
      %v3205 = vpop.f32.mrb[0].mxu0
      %v3206 = vadd.f32 0.0, %v3205
      %v3207 = vpop.f32.mrb[0].mxu0
      %3208 = vmatprep.mubr.bf16.mxu0 0
      %3209 = vmatmul.mubr.bf16.gmra.mrb[0].mxu0 %v2930
      %v3210 = vpop.f32.mrb[0].mxu0
      %v3211 = vadd.f32 0.0, %v3210
      %v3212 = vpop.f32.mrb[0].mxu0
      %v3213 = vpop.f32.mrb[0].mxu0
      %v3214 = vadd.f32 0.0, %v3213
      %v3215 = vpop.f32.mrb[0].mxu0
      %3216 = vmatprep.mubr.bf16.mxu0 0
      %3217 = vmatmul.mubr.bf16.gmra.mrb[0].mxu0 %v2931
      %v3218 = vpop.f32.mrb[0].mxu0
      %v3219 = vadd.f32 0.0, %v3218
      %v3220 = vpop.f32.mrb[0].mxu0
      %v3221 = vpop.f32.mrb[0].mxu0
      %v3222 = vadd.f32 0.0, %v3221
      %v3223 = vpop.f32.mrb[0].mxu0
      %3224 = vmatprep.mubr.bf16.mxu0 0
      %3225 = vmatmul.mubr.bf16.gmra.mrb[0].mxu0 %v2932
      %v3226 = vpop.f32.mrb[0].mxu0
      %v3227 = vadd.f32 0.0, %v3226
      %v3228 = vpop.f32.mrb[0].mxu0
      %v3229 = vpop.f32.mrb[0].mxu0
      %v3230 = vadd.f32 0.0, %v3229
      %v3231 = vpop.f32.mrb[0].mxu0
      %3232 = vmatprep.mubr.bf16.mxu0 0
      %3233 = vmatmul.mubr.bf16.gmra.mrb[0].mxu0 %v2933
      %v3234 = vpop.f32.mrb[0].mxu0
      %v3235 = vadd.f32 0.0, %v3234
      %v3236 = vpop.f32.mrb[0].mxu0
      %v3237 = vpop.f32.mrb[0].mxu0
      %v3238 = vadd.f32 0.0, %v3237
      %v3239 = vpop.f32.mrb[0].mxu0
      %3240 = vmatprep.mubr.bf16.mxu0 0
      %3241 = vmatmul.mubr.bf16.gmra.mrb[0].mxu0 %v2934
      %v3242 = vpop.f32.mrb[0].mxu0
      %v3243 = vadd.f32 0.0, %v3242
      %v3244 = vpop.f32.mrb[0].mxu0
      %v3245 = vpop.f32.mrb[0].mxu0
      %v3246 = vadd.f32 0.0, %v3245
      %v3247 = vpop.f32.mrb[0].mxu0
      %3248 = vmatprep.mubr.bf16.mxu0 0
      %3249 = vmatmul.mubr.bf16.gmra.mrb[0].mxu0 %v2935
      %v3250 = vpop.f32.mrb[0].mxu0
      %v3251 = vadd.f32 0.0, %v3250
      %v3252 = vpop.f32.mrb[0].mxu0
      %v3253 = vpop.f32.mrb[0].mxu0
      %v3254 = vadd.f32 0.0, %v3253
      %v3255 = vpop.f32.mrb[0].mxu0
      %3256 = vmatprep.mubr.bf16.mxu0 0
      %3257 = vmatmul.mubr.bf16.gmra.mrb[0].mxu0 %v2936
      %v3258 = vpop.f32.mrb[0].mxu0
      %v3259 = vadd.f32 0.0, %v3258
      %v3260 = vpop.f32.mrb[0].mxu0
      %v3261 = vpop.f32.mrb[0].mxu0
      %v3262 = vadd.f32 0.0, %v3261
      %v3263 = vpop.f32.mrb[0].mxu0
      %3264 = vmatprep.mubr.bf16.mxu0 0
      %3265 = vmatmul.mubr.bf16.gmra.mrb[0].mxu0 %v2937
      %v3266 = vpop.f32.mrb[0].mxu0
      %v3267 = vadd.f32 0.0, %v3266
      %v3268 = vpop.f32.mrb[0].mxu0
      %v3269 = vpop.f32.mrb[0].mxu0
      %v3270 = vadd.f32 0.0, %v3269
      %v3271 = vpop.f32.mrb[0].mxu0
      %3272 = vmatprep.mubr.bf16.mxu0 0
      %3273 = vmatmul.mubr.bf16.gmra.mrb[0].mxu0 %v2938
      %v3274 = vpop.f32.mrb[0].mxu0
      %v3275 = vadd.f32 0.0, %v3274
      %v3276 = vpop.f32.mrb[0].mxu0
      %v3277 = vpop.f32.mrb[0].mxu0
      %v3278 = vadd.f32 0.0, %v3277
      %v3279 = vpop.f32.mrb[0].mxu0
      %3280 = vmatprep.mubr.bf16.mxu0 0
      %3281 = vmatmul.mubr.bf16.gmra.mrb[0].mxu0 %v2939
      %v3282 = vpop.f32.mrb[0].mxu0
      %v3283 = vadd.f32 0.0, %v3282
      %v3284 = vpop.f32.mrb[0].mxu0
      %v3285 = vpop.f32.mrb[0].mxu0
      %v3286 = vadd.f32 0.0, %v3285
      %v3287 = vpop.f32.mrb[0].mxu0
      %3288 = vmatprep.mubr.bf16.mxu0 0
      %3289 = vmatmul.mubr.bf16.gmra.mrb[0].mxu0 %v2940
      %v3290 = vpop.f32.mrb[0].mxu0
      %v3291 = vadd.f32 0.0, %v3290
      %v3292 = vpop.f32.mrb[0].mxu0
      %v3293 = vpop.f32.mrb[0].mxu0
      %v3294 = vadd.f32 0.0, %v3293
      %v3295 = vpop.f32.mrb[0].mxu0
      %3296 = vmatprep.mubr.bf16.mxu0 0
      %3297 = vmatmul.mubr.bf16.gmra.mrb[0].mxu0 %v2941
      %v3298 = vpop.f32.mrb[0].mxu0
      %v3299 = vadd.f32 0.0, %v3298
      %v3300 = vpop.f32.mrb[0].mxu0
      %v3301 = vpop.f32.mrb[0].mxu0
      %v3302 = vadd.f32 0.0, %v3301
      %v3303 = vpop.f32.mrb[0].mxu0
      %3304 = vmatprep.mubr.bf16.mxu0 0
      %3305 = vmatmul.mubr.bf16.gmra.mrb[0].mxu0 %v2942
      %v3306 = vpop.f32.mrb[0].mxu0
      %v3307 = vadd.f32 0.0, %v3306
      %v3308 = vpop.f32.mrb[0].mxu0
      %v3309 = vpop.f32.mrb[0].mxu0
      %v3310 = vadd.f32 0.0, %v3309
      %v3311 = vpop.f32.mrb[0].mxu0
      %3312 = vmatprep.mubr.bf16.mxu0 0
      %3313 = vmatmul.mubr.bf16.gmra.mrb[0].mxu0 %v2943
      %v3314 = vpop.f32.mrb[0].mxu0
      %v3315 = vadd.f32 0.0, %v3314
      %v3316 = vpop.f32.mrb[0].mxu0
      %v3317 = vpop.f32.mrb[0].mxu0
      %v3318 = vadd.f32 0.0, %v3317
      %v3319 = vpop.f32.mrb[0].mxu0
      %3320 = vmatprep.mubr.bf16.mxu0 0
      %3321 = vmatmul.mubr.bf16.gmra.mrb[0].mxu0 %v2944
      %v3322 = vpop.f32.mrb[0].mxu0
      %v3323 = vadd.f32 0.0, %v3322
      %v3324 = vpop.f32.mrb[0].mxu0
      %v3325 = vpop.f32.mrb[0].mxu0
      %v3326 = vadd.f32 0.0, %v3325
      %v3327 = vpop.f32.mrb[0].mxu0
      %3328 = vmatprep.mubr.bf16.mxu0 0
      %3329 = vmatmul.mubr.bf16.gmra.mrb[0].mxu0 %v2945
      %v3330 = vpop.f32.mrb[0].mxu0
      %v3331 = vadd.f32 0.0, %v3330
      %v3332 = vpop.f32.mrb[0].mxu0
      %v3333 = vpop.f32.mrb[0].mxu0
      %v3334 = vadd.f32 0.0, %v3333
      %v3335 = vpop.f32.mrb[0].mxu0
      %3336 = vmatprep.mubr.bf16.mxu0 0
      %3337 = vmatmul.mubr.bf16.gmra.mrb[0].mxu0 %v2946
      %v3338 = vpop.f32.mrb[0].mxu0
      %v3339 = vadd.f32 0.0, %v3338
      %v3340 = vpop.f32.mrb[0].mxu0
      %v3341 = vpop.f32.mrb[0].mxu0
      %v3342 = vadd.f32 0.0, %v3341
      %v3343 = vpop.f32.mrb[0].mxu0
      %3344 = vmatprep.mubr.bf16.mxu0 0
      %3345 = vmatmul.mubr.bf16.gmra.mrb[0].mxu0 %v2947
      %v3346 = vpop.f32.mrb[0].mxu0
      %v3347 = vadd.f32 0.0, %v3346
      %v3348 = vpop.f32.mrb[0].mxu0
      %v3349 = vpop.f32.mrb[0].mxu0
      %v3350 = vadd.f32 0.0, %v3349
      %v3351 = vpop.f32.mrb[0].mxu0
      %3352 = vmatprep.mubr.bf16.mxu0 0
      %3353 = vmatmul.mubr.bf16.gmra.mrb[0].mxu0 %v2948
      %v3354 = vpop.f32.mrb[0].mxu0
      %v3355 = vadd.f32 0.0, %v3354
      %v3356 = vpop.f32.mrb[0].mxu0
      %v3357 = vpop.f32.mrb[0].mxu0
      %v3358 = vadd.f32 0.0, %v3357
      %v3359 = vpop.f32.mrb[0].mxu0
      %3360 = vmatprep.mubr.bf16.mxu0 0
      %3361 = vmatmul.mubr.bf16.gmra.mrb[0].mxu0 %v2949
      %v3362 = vpop.f32.mrb[0].mxu0
      %v3363 = vadd.f32 0.0, %v3362
      %v3364 = vpop.f32.mrb[0].mxu0
      %v3365 = vpop.f32.mrb[0].mxu0
      %v3366 = vadd.f32 0.0, %v3365
      %v3367 = vpop.f32.mrb[0].mxu0
      %3368 = vmatprep.mubr.bf16.mxu0 0
      %3369 = vmatmul.mubr.bf16.gmra.mrb[0].mxu0 %v2950
      %v3370 = vpop.f32.mrb[0].mxu0
      %v3371 = vadd.f32 0.0, %v3370
      %v3372 = vpop.f32.mrb[0].mxu0
      %v3373 = vpop.f32.mrb[0].mxu0
      %v3374 = vadd.f32 0.0, %v3373
      %v3375 = vpop.f32.mrb[0].mxu0
      %3376 = vmatprep.mubr.bf16.mxu0 0
      %3377 = vmatmul.mubr.bf16.gmra.mrb[0].mxu0 %v2951
      %v3378 = vpop.f32.mrb[0].mxu0
      %v3379 = vadd.f32 0.0, %v3378
      %v3380 = vpop.f32.mrb[0].mxu0
      %v3381 = vpop.f32.mrb[0].mxu0
      %v3382 = vadd.f32 0.0, %v3381
      %v3383 = vpop.f32.mrb[0].mxu0
      %3384 = vmatprep.mubr.bf16.mxu0 0
      %3385 = vmatmul.mubr.bf16.gmra.mrb[0].mxu0 %v2952
      %v3386 = vpop.f32.mrb[0].mxu0
      %v3387 = vadd.f32 0.0, %v3386
      %v3388 = vpop.f32.mrb[0].mxu0
      %v3389 = vpop.f32.mrb[0].mxu0
      %v3390 = vadd.f32 0.0, %v3389
      %v3391 = vpop.f32.mrb[0].mxu0
      %3392 = vmatprep.mubr.bf16.mxu0 0
      %3393 = vmatmul.mubr.bf16.gmra.mrb[0].mxu0 %v2953
      %v3394 = vpop.f32.mrb[0].mxu0
      %v3395 = vadd.f32 0.0, %v3394
      %v3396 = vpop.f32.mrb[0].mxu0
      %v3397 = vpop.f32.mrb[0].mxu0
      %v3398 = vadd.f32 0.0, %v3397
      %v3399 = vpop.f32.mrb[0].mxu0
      %3400 = vmatprep.mubr.bf16.mxu0 0
      %3401 = vmatmul.mubr.bf16.gmra.mrb[0].mxu0 %v2954
      %v3402 = vpop.f32.mrb[0].mxu0
      %v3403 = vadd.f32 0.0, %v3402
      %v3404 = vpop.f32.mrb[0].mxu0
      %v3405 = vpop.f32.mrb[0].mxu0
      %v3406 = vadd.f32 0.0, %v3405
      %v3407 = vpop.f32.mrb[0].mxu0
      %3408 = vmatprep.mubr.bf16.mxu0 0
      %3409 = vmatmul.mubr.bf16.gmra.mrb[0].mxu0 %v2955
      %v3410 = vpop.f32.mrb[0].mxu0
      %v3411 = vadd.f32 0.0, %v3410
      %v3412 = vpop.f32.mrb[0].mxu0
      %v3413 = vpop.f32.mrb[0].mxu0
      %v3414 = vadd.f32 0.0, %v3413
      %v3415 = vpop.f32.mrb[0].mxu0
      %3416 = vmatprep.mubr.bf16.mxu0 0
      %3417 = vmatmul.mubr.bf16.gmra.mrb[0].mxu0 %v2956
      %v3418 = vpop.f32.mrb[0].mxu0
      %v3419 = vadd.f32 0.0, %v3418
      %v3420 = vpop.f32.mrb[0].mxu0
      %v3421 = vpop.f32.mrb[0].mxu0
      %v3422 = vadd.f32 0.0, %v3421
      %v3423 = vpop.f32.mrb[0].mxu0
      %3424 = vmatprep.mubr.bf16.mxu0 0
      %3425 = vmatmul.mubr.bf16.gmra.mrb[0].mxu0 %v2957
      %v3426 = vpop.f32.mrb[0].mxu0
      %v3427 = vadd.f32 0.0, %v3426
      %v3428 = vpop.f32.mrb[0].mxu0
      %v3429 = vpop.f32.mrb[0].mxu0
      %v3430 = vadd.f32 0.0, %v3429
      %v3431 = vpop.f32.mrb[0].mxu0
      %3432 = vmatprep.mubr.bf16.mxu0 0
      %3433 = vmatmul.mubr.bf16.gmra.mrb[0].mxu0 %v2958
      %v3434 = vpop.f32.mrb[0].mxu0
      %v3435 = vadd.f32 0.0, %v3434
      %v3436 = vpop.f32.mrb[0].mxu0
      %v3437 = vpop.f32.mrb[0].mxu0
      %v3438 = vadd.f32 0.0, %v3437
      %v3439 = vpop.f32.mrb[0].mxu0
      %3440 = vmatprep.mubr.bf16.mxu0 0
      %3441 = vmatmul.mubr.bf16.gmra.mrb[0].mxu0 %v2959
      %v3442 = vpop.f32.mrb[0].mxu0
      %v3443 = vadd.f32 0.0, %v3442
      %v3444 = vpop.f32.mrb[0].mxu0
      %v3445 = vpop.f32.mrb[0].mxu0
      %v3446 = vadd.f32 0.0, %v3445
      %v3447 = vpop.f32.mrb[0].mxu0
      %3448 = vmatprep.mubr.bf16.mxu0 0
      %3449 = vmatmul.mubr.bf16.gmra.mrb[0].mxu0 %v2960
      %v3450 = vpop.f32.mrb[0].mxu0
      %v3451 = vadd.f32 0.0, %v3450
      %v3452 = vpop.f32.mrb[0].mxu0
      %v3453 = vpop.f32.mrb[0].mxu0
      %v3454 = vadd.f32 0.0, %v3453
      %v3455 = vpop.f32.mrb[0].mxu0
      %3456 = vmatprep.mubr.bf16.mxu0 0
      %3457 = vmatmul.mubr.bf16.gmra.mrb[0].mxu0 %v2961
      %v3458 = vpop.f32.mrb[0].mxu0
      %v3459 = vadd.f32 0.0, %v3458
      %v3460 = vpop.f32.mrb[0].mxu0
      %v3461 = vpop.f32.mrb[0].mxu0
      %v3462 = vadd.f32 0.0, %v3461
      %v3463 = vpop.f32.mrb[0].mxu0
      %3464 = vmatprep.mubr.bf16.mxu0 0
      %3465 = vmatmul.mubr.bf16.gmra.mrb[0].mxu0 %v2962
      %v3466 = vpop.f32.mrb[0].mxu0
      %v3467 = vadd.f32 0.0, %v3466
      %v3468 = vpop.f32.mrb[0].mxu0
      %v3469 = vpop.f32.mrb[0].mxu0
      %v3470 = vadd.f32 0.0, %v3469
      %v3471 = vpop.f32.mrb[0].mxu0
      %3472 = vmatprep.mubr.bf16.mxu0 0
      %3473 = vmatmul.mubr.bf16.gmra.mrb[0].mxu0 %v2963
      %v3474 = vpop.f32.mrb[0].mxu0
      %v3475 = vadd.f32 0.0, %v3474
      %v3476 = vpop.f32.mrb[0].mxu0
      %v3477 = vpop.f32.mrb[0].mxu0
      %v3478 = vadd.f32 0.0, %v3477
      %v3479 = vpop.f32.mrb[0].mxu0
      %3480 = vmatprep.mubr.bf16.mxu0 0
      %3481 = vmatmul.mubr.bf16.gmra.mrb[0].mxu0 %v2964
      %v3482 = vpop.f32.mrb[0].mxu0
      %v3483 = vadd.f32 0.0, %v3482
      %v3484 = vpop.f32.mrb[0].mxu0
      %v3485 = vpop.f32.mrb[0].mxu0
      %v3486 = vadd.f32 0.0, %v3485
      %v3487 = vpop.f32.mrb[0].mxu0
      %3488 = vmatprep.mubr.bf16.mxu0 0
      %3489 = vmatmul.mubr.bf16.gmra.mrb[0].mxu0 %v2965
      %v3490 = vpop.f32.mrb[0].mxu0
      %v3491 = vadd.f32 0.0, %v3490
      %v3492 = vpop.f32.mrb[0].mxu0
      %v3493 = vpop.f32.mrb[0].mxu0
      %v3494 = vadd.f32 0.0, %v3493
      %v3495 = vpop.f32.mrb[0].mxu0
      %3496 = vmatprep.mubr.bf16.mxu0 0
      %3497 = vmatmul.mubr.bf16.gmra.mrb[0].mxu0 %v2966
      %v3498 = vpop.f32.mrb[0].mxu0
      %v3499 = vadd.f32 0.0, %v3498
      %v3500 = vpop.f32.mrb[0].mxu0
      %v3501 = vpop.f32.mrb[0].mxu0
      %v3502 = vadd.f32 0.0, %v3501
      %v3503 = vpop.f32.mrb[0].mxu0
      %3504 = vmatprep.mubr.bf16.mxu0 0
      %3505 = vmatmul.mubr.bf16.gmra.mrb[0].mxu0 %v2967
      %v3506 = vpop.f32.mrb[0].mxu0
      %v3507 = vadd.f32 0.0, %v3506
      %v3508 = vpop.f32.mrb[0].mxu0
      %v3509 = vpop.f32.mrb[0].mxu0
      %v3510 = vadd.f32 0.0, %v3509
      %v3511 = vpop.f32.mrb[0].mxu0
      %3512 = vmatprep.mubr.bf16.mxu0 0
      %3513 = vmatmul.mubr.bf16.gmra.mrb[0].mxu0 %v2968
      %v3514 = vpop.f32.mrb[0].mxu0
      %v3515 = vadd.f32 0.0, %v3514
      %v3516 = vpop.f32.mrb[0].mxu0
      %v3517 = vpop.f32.mrb[0].mxu0
      %v3518 = vadd.f32 0.0, %v3517
      %v3519 = vpop.f32.mrb[0].mxu0
      %3520 = vmatprep.mubr.bf16.mxu0 0
      %3521 = vmatmul.mubr.bf16.gmra.mrb[0].mxu0 %v2969
      %v3522 = vpop.f32.mrb[0].mxu0
      %v3523 = vadd.f32 0.0, %v3522
      %v3524 = vpop.f32.mrb[0].mxu0
      %v3525 = vpop.f32.mrb[0].mxu0
      %v3526 = vadd.f32 0.0, %v3525
      %v3527 = vpop.f32.mrb[0].mxu0
      %3528 = vmatprep.mubr.bf16.mxu0 0
      %3529 = vmatmul.mubr.bf16.gmra.mrb[0].mxu0 %v2970
      %v3530 = vpop.f32.mrb[0].mxu0
      %v3531 = vadd.f32 0.0, %v3530
      %v3532 = vpop.f32.mrb[0].mxu0
      %v3533 = vpop.f32.mrb[0].mxu0
      %v3534 = vadd.f32 0.0, %v3533
      %v3535 = vpop.f32.mrb[0].mxu0
      %3536 = vmatprep.mubr.bf16.mxu0 0
      %3537 = vmatmul.mubr.bf16.gmra.mrb[0].mxu0 %v2971
      %v3538 = vpop.f32.mrb[0].mxu0
      %v3539 = vadd.f32 0.0, %v3538
      %v3540 = vpop.f32.mrb[0].mxu0
      %v3541 = vpop.f32.mrb[0].mxu0
      %v3542 = vadd.f32 0.0, %v3541
      %v3543 = vpop.f32.mrb[0].mxu0
      %3544 = vmatprep.mubr.bf16.mxu0 0
      %3545 = vmatmul.mubr.bf16.gmra.mrb[0].mxu0 %v2972
      %v3546 = vpop.f32.mrb[0].mxu0
      %v3547 = vadd.f32 0.0, %v3546
      %v3548 = vpop.f32.mrb[0].mxu0
      %v3549 = vpop.f32.mrb[0].mxu0
      %v3550 = vadd.f32 0.0, %v3549
      %v3551 = vpop.f32.mrb[0].mxu0
      %3552 = vmatprep.mubr.bf16.mxu0 0
      %3553 = vmatmul.mubr.bf16.gmra.mrb[0].mxu0 %v2973
      %v3554 = vpop.f32.mrb[0].mxu0
      %v3555 = vadd.f32 0.0, %v3554
      %v3556 = vpop.f32.mrb[0].mxu0
      %v3557 = vpop.f32.mrb[0].mxu0
      %v3558 = vadd.f32 0.0, %v3557
      %v3559 = vpop.f32.mrb[0].mxu0
      %3560 = vmatprep.mubr.bf16.mxu0 0
      %3561 = vmatmul.mubr.bf16.gmra.mrb[0].mxu0 %v2974
      %v3562 = vpop.f32.mrb[0].mxu0
      %v3563 = vadd.f32 0.0, %v3562
      %v3564 = vpop.f32.mrb[0].mxu0
      %v3565 = vpop.f32.mrb[0].mxu0
      %v3566 = vadd.f32 0.0, %v3565
      %v3567 = vpop.f32.mrb[0].mxu0
      %3568 = vmatprep.mubr.bf16.mxu0 0
      %3569 = vmatmul.mubr.bf16.gmra.mrb[0].mxu0 %v2975
      %v3570 = vpop.f32.mrb[0].mxu0
      %v3571 = vadd.f32 0.0, %v3570
      %v3572 = vpop.f32.mrb[0].mxu0
      %v3573 = vpop.f32.mrb[0].mxu0
      %v3574 = vadd.f32 0.0, %v3573
      %v3575 = vpop.f32.mrb[0].mxu0
      %3576 = vmatprep.mubr.bf16.mxu0 0
      %3577 = vmatmul.mubr.bf16.gmra.mrb[0].mxu0 %v2976
      %v3578 = vpop.f32.mrb[0].mxu0
      %v3579 = vadd.f32 0.0, %v3578
      %v3580 = vpop.f32.mrb[0].mxu0
      %v3581 = vpop.f32.mrb[0].mxu0
      %v3582 = vadd.f32 0.0, %v3581
      %v3583 = vpop.f32.mrb[0].mxu0
      %3584 = vmatprep.mubr.bf16.mxu0 0
      %3585 = vmatmul.mubr.bf16.gmra.mrb[0].mxu0 %v2977
      %v3586 = vpop.f32.mrb[0].mxu0
      %v3587 = vadd.f32 0.0, %v3586
      %v3588 = vpop.f32.mrb[0].mxu0
      %v3589 = vpop.f32.mrb[0].mxu0
      %v3590 = vadd.f32 0.0, %v3589
      %v3591 = vpop.f32.mrb[0].mxu0
      %3592 = vmatprep.mubr.bf16.mxu0 0
      %3593 = vmatmul.mubr.bf16.gmra.mrb[0].mxu0 %v2978
      %v3594 = vpop.f32.mrb[0].mxu0
      %v3595 = vadd.f32 0.0, %v3594
      %v3596 = vpop.f32.mrb[0].mxu0
      %v3597 = vpop.f32.mrb[0].mxu0
      %v3598 = vadd.f32 0.0, %v3597
      %v3599 = vpop.f32.mrb[0].mxu0
      %3600 = vmatprep.mubr.bf16.mxu0 0
      %3601 = vmatmul.mubr.bf16.gmra.mrb[0].mxu0 %v2979
      %v3602 = vpop.f32.mrb[0].mxu0
      %v3603 = vadd.f32 0.0, %v3602
      %v3604 = vpop.f32.mrb[0].mxu0
      %v3605 = vpop.f32.mrb[0].mxu0
      %v3606 = vadd.f32 0.0, %v3605
      %v3607 = vpop.f32.mrb[0].mxu0
      %3608 = vmatprep.mubr.bf16.mxu0 0
      %3609 = vmatmul.mubr.bf16.gmra.mrb[0].mxu0 %v2980
      %v3610 = vpop.f32.mrb[0].mxu0
      %v3611 = vadd.f32 0.0, %v3610
      %v3612 = vpop.f32.mrb[0].mxu0
      %v3613 = vpop.f32.mrb[0].mxu0
      %v3614 = vadd.f32 0.0, %v3613
      %v3615 = vpop.f32.mrb[0].mxu0
      %3616 = vmatprep.mubr.bf16.mxu0 0
      %3617 = vmatmul.mubr.bf16.gmra.mrb[0].mxu0 %v2981
      %v3618 = vpop.f32.mrb[0].mxu0
      %v3619 = vadd.f32 0.0, %v3618
      %v3620 = vpop.f32.mrb[0].mxu0
      %v3621 = vpop.f32.mrb[0].mxu0
      %v3622 = vadd.f32 0.0, %v3621
      %v3623 = vpop.f32.mrb[0].mxu0
      %3624 = vmatprep.mubr.bf16.mxu0 0
      %3625 = vmatmul.mubr.bf16.gmra.mrb[0].mxu0 %v2982
      %v3626 = vpop.f32.mrb[0].mxu0
      %v3627 = vadd.f32 0.0, %v3626
      %v3628 = vpop.f32.mrb[0].mxu0
      %v3629 = vpop.f32.mrb[0].mxu0
      %v3630 = vadd.f32 0.0, %v3629
      %v3631 = vpop.f32.mrb[0].mxu0
      %3632 = vmatprep.mubr.bf16.mxu0 0
      %3633 = vmatmul.mubr.bf16.gmra.mrb[0].mxu0 %v2983
      %v3634 = vpop.f32.mrb[0].mxu0
      %v3635 = vadd.f32 0.0, %v3634
      %v3636 = vpop.f32.mrb[0].mxu0
      %v3637 = vpop.f32.mrb[0].mxu0
      %v3638 = vadd.f32 0.0, %v3637
      %v3639 = vpop.f32.mrb[0].mxu0
      %3640 = vdwg.mxu0
      %v3641 = vadd.f32 %v2008, %v3131
      %v3642 = vadd.f32 %v2011, %v3134
      %v3643 = vadd.f32 %v2016, %v3139
      %v3644 = vadd.f32 %v2019, %v3142
      %v3645 = vadd.f32 %v2024, %v3147
      %v3646 = vadd.f32 %v2027, %v3150
      %v3647 = vadd.f32 %v2032, %v3155
      %v3648 = vadd.f32 %v2035, %v3158
      %v3649 = vadd.f32 %v2040, %v3163
      %v3650 = vadd.f32 %v2043, %v3166
      %v3651 = vadd.f32 %v2048, %v3171
      %v3652 = vadd.f32 %v2051, %v3174
      %v3653 = vadd.f32 %v2056, %v3179
      %v3654 = vadd.f32 %v2059, %v3182
      %v3655 = vadd.f32 %v2064, %v3187
      %v3656 = vadd.f32 %v2067, %v3190
      %v3657 = vadd.f32 %v2072, %v3195
      %v3658 = vadd.f32 %v2075, %v3198
      %v3659 = vadd.f32 %v2080, %v3203
      %v3660 = vadd.f32 %v2083, %v3206
      %v3661 = vadd.f32 %v2088, %v3211
      %v3662 = vadd.f32 %v2091, %v3214
      %v3663 = vadd.f32 %v2096, %v3219
      %v3664 = vadd.f32 %v2099, %v3222
      %v3665 = vadd.f32 %v2104, %v3227
      %v3666 = vadd.f32 %v2107, %v3230
      %v3667 = vadd.f32 %v2112, %v3235
      %v3668 = vadd.f32 %v2115, %v3238
      %v3669 = vadd.f32 %v2120, %v3243
      %v3670 = vadd.f32 %v2123, %v3246
      %v3671 = vadd.f32 %v2128, %v3251
      %v3672 = vadd.f32 %v2131, %v3254
      %v3673 = vadd.f32 %v2136, %v3259
      %v3674 = vadd.f32 %v2139, %v3262
      %v3675 = vadd.f32 %v2144, %v3267
      %v3676 = vadd.f32 %v2147, %v3270
      %v3677 = vadd.f32 %v2152, %v3275
      %v3678 = vadd.f32 %v2155, %v3278
      %v3679 = vadd.f32 %v2160, %v3283
      %v3680 = vadd.f32 %v2163, %v3286
      %v3681 = vadd.f32 %v2168, %v3291
      %v3682 = vadd.f32 %v2171, %v3294
      %v3683 = vadd.f32 %v2176, %v3299
      %v3684 = vadd.f32 %v2179, %v3302
      %v3685 = vadd.f32 %v2184, %v3307
      %v3686 = vadd.f32 %v2187, %v3310
      %v3687 = vadd.f32 %v2192, %v3315
      %v3688 = vadd.f32 %v2195, %v3318
      %v3689 = vadd.f32 %v2200, %v3323
      %v3690 = vadd.f32 %v2203, %v3326
      %v3691 = vadd.f32 %v2208, %v3331
      %v3692 = vadd.f32 %v2211, %v3334
      %v3693 = vadd.f32 %v2216, %v3339
      %v3694 = vadd.f32 %v2219, %v3342
      %v3695 = vadd.f32 %v2224, %v3347
      %v3696 = vadd.f32 %v2227, %v3350
      %v3697 = vadd.f32 %v2232, %v3355
      %v3698 = vadd.f32 %v2235, %v3358
      %v3699 = vadd.f32 %v2240, %v3363
      %v3700 = vadd.f32 %v2243, %v3366
      %v3701 = vadd.f32 %v2248, %v3371
      %v3702 = vadd.f32 %v2251, %v3374
      %v3703 = vadd.f32 %v2256, %v3379
      %v3704 = vadd.f32 %v2259, %v3382
      %v3705 = vadd.f32 %v2264, %v3387
      %v3706 = vadd.f32 %v2267, %v3390
      %v3707 = vadd.f32 %v2272, %v3395
      %v3708 = vadd.f32 %v2275, %v3398
      %v3709 = vadd.f32 %v2280, %v3403
      %v3710 = vadd.f32 %v2283, %v3406
      %v3711 = vadd.f32 %v2288, %v3411
      %v3712 = vadd.f32 %v2291, %v3414
      %v3713 = vadd.f32 %v2296, %v3419
      %v3714 = vadd.f32 %v2299, %v3422
      %v3715 = vadd.f32 %v2304, %v3427
      %v3716 = vadd.f32 %v2307, %v3430
      %v3717 = vadd.f32 %v2312, %v3435
      %v3718 = vadd.f32 %v2315, %v3438
      %v3719 = vadd.f32 %v2320, %v3443
      %v3720 = vadd.f32 %v2323, %v3446
      %v3721 = vadd.f32 %v2328, %v3451
      %v3722 = vadd.f32 %v2331, %v3454
      %v3723 = vadd.f32 %v2336, %v3459
      %v3724 = vadd.f32 %v2339, %v3462
      %v3725 = vadd.f32 %v2344, %v3467
      %v3726 = vadd.f32 %v2347, %v3470
      %v3727 = vadd.f32 %v2352, %v3475
      %v3728 = vadd.f32 %v2355, %v3478
      %v3729 = vadd.f32 %v2360, %v3483
      %v3730 = vadd.f32 %v2363, %v3486
      %v3731 = vadd.f32 %v2368, %v3491
      %v3732 = vadd.f32 %v2371, %v3494
      %v3733 = vadd.f32 %v2376, %v3499
      %v3734 = vadd.f32 %v2379, %v3502
      %v3735 = vadd.f32 %v2384, %v3507
      %v3736 = vadd.f32 %v2387, %v3510
      %v3737 = vadd.f32 %v2392, %v3515
      %v3738 = vadd.f32 %v2395, %v3518
      %v3739 = vadd.f32 %v2400, %v3523
      %v3740 = vadd.f32 %v2403, %v3526
      %v3741 = vadd.f32 %v2408, %v3531
      %v3742 = vadd.f32 %v2411, %v3534
      %v3743 = vadd.f32 %v2416, %v3539
      %v3744 = vadd.f32 %v2419, %v3542
      %v3745 = vadd.f32 %v2424, %v3547
      %v3746 = vadd.f32 %v2427, %v3550
      %v3747 = vadd.f32 %v2432, %v3555
      %v3748 = vadd.f32 %v2435, %v3558
      %v3749 = vadd.f32 %v2440, %v3563
      %v3750 = vadd.f32 %v2443, %v3566
      %v3751 = vadd.f32 %v2448, %v3571
      %v3752 = vadd.f32 %v2451, %v3574
      %v3753 = vadd.f32 %v2456, %v3579
      %v3754 = vadd.f32 %v2459, %v3582
      %v3755 = vadd.f32 %v2464, %v3587
      %v3756 = vadd.f32 %v2467, %v3590
      %v3757 = vadd.f32 %v2472, %v3595
      %v3758 = vadd.f32 %v2475, %v3598
      %v3759 = vadd.f32 %v2480, %v3603
      %v3760 = vadd.f32 %v2483, %v3606
      %v3761 = vadd.f32 %v2488, %v3611
      %v3762 = vadd.f32 %v2491, %v3614
      %v3763 = vadd.f32 %v2496, %v3619
      %v3764 = vadd.f32 %v2499, %v3622
      %v3765 = vadd.f32 %v2504, %v3627
      %v3766 = vadd.f32 %v2507, %v3630
      %v3767 = vadd.f32 %v2512, %v3635
      %v3768 = vadd.f32 %v2515, %v3638
      %v3769 = vld [vmem:[%s261] sm:$0xf]
      %v3770 = vld [vmem:[%s261 + $0x4] sm:$0xf]
      %v3771 = vld [vmem:[%s261 + $0x8] sm:$0xf]
      %v3772 = vld [vmem:[%s261 + $0xc] sm:$0xf]
      %v3773 = vld [vmem:[%s261 + $0x10] sm:$0xf]
      %v3774 = vld [vmem:[%s261 + $0x14] sm:$0xf]
      %v3775 = vld [vmem:[%s261 + $0x18] sm:$0xf]
      %v3776 = vld [vmem:[%s261 + $0x1c] sm:$0xf]
      %v3777 = vld [vmem:[%s261 + $0x20] sm:$0xf]
      %v3778 = vld [vmem:[%s261 + $0x24] sm:$0xf]
      %v3779 = vld [vmem:[%s261 + $0x28] sm:$0xf]
      %v3780 = vld [vmem:[%s261 + $0x2c] sm:$0xf]
      %v3781 = vld [vmem:[%s261 + $0x30] sm:$0xf]
      %v3782 = vld [vmem:[%s261 + $0x34] sm:$0xf]
      %v3783 = vld [vmem:[%s261 + $0x38] sm:$0xf]
      %v3784 = vld [vmem:[%s261 + $0x3c] sm:$0xf]
      %v3785 = vld [vmem:[%s261 + $0x40] sm:$0xf]
      %v3786 = vld [vmem:[%s261 + $0x44] sm:$0xf]
      %v3787 = vld [vmem:[%s261 + $0x48] sm:$0xf]
      %v3788 = vld [vmem:[%s261 + $0x4c] sm:$0xf]
      %v3789 = vld [vmem:[%s261 + $0x50] sm:$0xf]
      %v3790 = vld [vmem:[%s261 + $0x54] sm:$0xf]
      %v3791 = vld [vmem:[%s261 + $0x58] sm:$0xf]
      %v3792 = vld [vmem:[%s261 + $0x5c] sm:$0xf]
      %v3793 = vld [vmem:[%s261 + $0x60] sm:$0xf]
      %v3794 = vld [vmem:[%s261 + $0x64] sm:$0xf]
      %v3795 = vld [vmem:[%s261 + $0x68] sm:$0xf]
      %v3796 = vld [vmem:[%s261 + $0x6c] sm:$0xf]
      %v3797 = vld [vmem:[%s261 + $0x70] sm:$0xf]
      %v3798 = vld [vmem:[%s261 + $0x74] sm:$0xf]
      %v3799 = vld [vmem:[%s261 + $0x78] sm:$0xf]
      %v3800 = vld [vmem:[%s261 + $0x7c] sm:$0xf]
      %v3801 = vld [vmem:[%s261 + $0x80] sm:$0xf]
      %v3802 = vld [vmem:[%s261 + $0x84] sm:$0xf]
      %v3803 = vld [vmem:[%s261 + $0x88] sm:$0xf]
      %v3804 = vld [vmem:[%s261 + $0x8c] sm:$0xf]
      %v3805 = vld [vmem:[%s261 + $0x90] sm:$0xf]
      %v3806 = vld [vmem:[%s261 + $0x94] sm:$0xf]
      %v3807 = vld [vmem:[%s261 + $0x98] sm:$0xf]
      %v3808 = vld [vmem:[%s261 + $0x9c] sm:$0xf]
      %v3809 = vld [vmem:[%s261 + $0xa0] sm:$0xf]
      %v3810 = vld [vmem:[%s261 + $0xa4] sm:$0xf]
      %v3811 = vld [vmem:[%s261 + $0xa8] sm:$0xf]
      %v3812 = vld [vmem:[%s261 + $0xac] sm:$0xf]
      %v3813 = vld [vmem:[%s261 + $0xb0] sm:$0xf]
      %v3814 = vld [vmem:[%s261 + $0xb4] sm:$0xf]
      %v3815 = vld [vmem:[%s261 + $0xb8] sm:$0xf]
      %v3816 = vld [vmem:[%s261 + $0xbc] sm:$0xf]
      %v3817 = vld [vmem:[%s261 + $0xc0] sm:$0xf]
      %v3818 = vld [vmem:[%s261 + $0xc4] sm:$0xf]
      %v3819 = vld [vmem:[%s261 + $0xc8] sm:$0xf]
      %v3820 = vld [vmem:[%s261 + $0xcc] sm:$0xf]
      %v3821 = vld [vmem:[%s261 + $0xd0] sm:$0xf]
      %v3822 = vld [vmem:[%s261 + $0xd4] sm:$0xf]
      %v3823 = vld [vmem:[%s261 + $0xd8] sm:$0xf]
      %v3824 = vld [vmem:[%s261 + $0xdc] sm:$0xf]
      %v3825 = vld [vmem:[%s261 + $0xe0] sm:$0xf]
      %v3826 = vld [vmem:[%s261 + $0xe4] sm:$0xf]
      %v3827 = vld [vmem:[%s261 + $0xe8] sm:$0xf]
      %v3828 = vld [vmem:[%s261 + $0xec] sm:$0xf]
      %v3829 = vld [vmem:[%s261 + $0xf0] sm:$0xf]
      %v3830 = vld [vmem:[%s261 + $0xf4] sm:$0xf]
      %v3831 = vld [vmem:[%s261 + $0xf8] sm:$0xf]
      %v3832 = vld [vmem:[%s261 + $0xfc] sm:$0xf]
      %v3833 = vld [vmem:[%s261 + $0x100] sm:$0xf]
      %v3834 = vld [vmem:[%s261 + $0x104] sm:$0xf]
      %v3835 = vld [vmem:[%s261 + $0x108] sm:$0xf]
      %v3836 = vld [vmem:[%s261 + $0x10c] sm:$0xf]
      %v3837 = vld [vmem:[%s261 + $0x110] sm:$0xf]
      %v3838 = vld [vmem:[%s261 + $0x114] sm:$0xf]
      %v3839 = vld [vmem:[%s261 + $0x118] sm:$0xf]
      %v3840 = vld [vmem:[%s261 + $0x11c] sm:$0xf]
      %v3841 = vld [vmem:[%s261 + $0x120] sm:$0xf]
      %v3842 = vld [vmem:[%s261 + $0x124] sm:$0xf]
      %v3843 = vld [vmem:[%s261 + $0x128] sm:$0xf]
      %v3844 = vld [vmem:[%s261 + $0x12c] sm:$0xf]
      %v3845 = vld [vmem:[%s261 + $0x130] sm:$0xf]
      %v3846 = vld [vmem:[%s261 + $0x134] sm:$0xf]
      %v3847 = vld [vmem:[%s261 + $0x138] sm:$0xf]
      %v3848 = vld [vmem:[%s261 + $0x13c] sm:$0xf]
      %v3849 = vld [vmem:[%s261 + $0x140] sm:$0xf]
      %v3850 = vld [vmem:[%s261 + $0x144] sm:$0xf]
      %v3851 = vld [vmem:[%s261 + $0x148] sm:$0xf]
      %v3852 = vld [vmem:[%s261 + $0x14c] sm:$0xf]
      %v3853 = vld [vmem:[%s261 + $0x150] sm:$0xf]
      %v3854 = vld [vmem:[%s261 + $0x154] sm:$0xf]
      %v3855 = vld [vmem:[%s261 + $0x158] sm:$0xf]
      %v3856 = vld [vmem:[%s261 + $0x15c] sm:$0xf]
      %v3857 = vld [vmem:[%s261 + $0x160] sm:$0xf]
      %v3858 = vld [vmem:[%s261 + $0x164] sm:$0xf]
      %v3859 = vld [vmem:[%s261 + $0x168] sm:$0xf]
      %v3860 = vld [vmem:[%s261 + $0x16c] sm:$0xf]
      %v3861 = vld [vmem:[%s261 + $0x170] sm:$0xf]
      %v3862 = vld [vmem:[%s261 + $0x174] sm:$0xf]
      %v3863 = vld [vmem:[%s261 + $0x178] sm:$0xf]
      %v3864 = vld [vmem:[%s261 + $0x17c] sm:$0xf]
      %v3865 = vld [vmem:[%s261 + $0x180] sm:$0xf]
      %v3866 = vld [vmem:[%s261 + $0x184] sm:$0xf]
      %v3867 = vld [vmem:[%s261 + $0x188] sm:$0xf]
      %v3868 = vld [vmem:[%s261 + $0x18c] sm:$0xf]
      %v3869 = vld [vmem:[%s261 + $0x190] sm:$0xf]
      %v3870 = vld [vmem:[%s261 + $0x194] sm:$0xf]
      %v3871 = vld [vmem:[%s261 + $0x198] sm:$0xf]
      %v3872 = vld [vmem:[%s261 + $0x19c] sm:$0xf]
      %v3873 = vld [vmem:[%s261 + $0x1a0] sm:$0xf]
      %v3874 = vld [vmem:[%s261 + $0x1a4] sm:$0xf]
      %v3875 = vld [vmem:[%s261 + $0x1a8] sm:$0xf]
      %v3876 = vld [vmem:[%s261 + $0x1ac] sm:$0xf]
      %v3877 = vld [vmem:[%s261 + $0x1b0] sm:$0xf]
      %v3878 = vld [vmem:[%s261 + $0x1b4] sm:$0xf]
      %v3879 = vld [vmem:[%s261 + $0x1b8] sm:$0xf]
      %v3880 = vld [vmem:[%s261 + $0x1bc] sm:$0xf]
      %v3881 = vld [vmem:[%s261 + $0x1c0] sm:$0xf]
      %v3882 = vld [vmem:[%s261 + $0x1c4] sm:$0xf]
      %v3883 = vld [vmem:[%s261 + $0x1c8] sm:$0xf]
      %v3884 = vld [vmem:[%s261 + $0x1cc] sm:$0xf]
      %v3885 = vld [vmem:[%s261 + $0x1d0] sm:$0xf]
      %v3886 = vld [vmem:[%s261 + $0x1d4] sm:$0xf]
      %v3887 = vld [vmem:[%s261 + $0x1d8] sm:$0xf]
      %v3888 = vld [vmem:[%s261 + $0x1dc] sm:$0xf]
      %v3889 = vld [vmem:[%s261 + $0x1e0] sm:$0xf]
      %v3890 = vld [vmem:[%s261 + $0x1e4] sm:$0xf]
      %v3891 = vld [vmem:[%s261 + $0x1e8] sm:$0xf]
      %v3892 = vld [vmem:[%s261 + $0x1ec] sm:$0xf]
      %v3893 = vld [vmem:[%s261 + $0x1f0] sm:$0xf]
      %v3894 = vld [vmem:[%s261 + $0x1f4] sm:$0xf]
      %v3895 = vld [vmem:[%s261 + $0x1f8] sm:$0xf]
      %v3896 = vld [vmem:[%s261 + $0x1fc] sm:$0xf]
      %v3897 = vunpack.c.l.bf16 %v3769
      %v3898 = vunpack.c.l.bf16 %v3770
      %v3899 = vunpack.c.l.bf16 %v3771
      %v3900 = vunpack.c.l.bf16 %v3772
      %v3901 = vunpack.c.l.bf16 %v3773
      %v3902 = vunpack.c.l.bf16 %v3774
      %v3903 = vunpack.c.l.bf16 %v3775
      %v3904 = vunpack.c.l.bf16 %v3776
      %v3905 = vunpack.c.l.bf16 %v3777
      %v3906 = vunpack.c.l.bf16 %v3778
      %v3907 = vunpack.c.l.bf16 %v3779
      %v3908 = vunpack.c.l.bf16 %v3780
      %v3909 = vunpack.c.l.bf16 %v3781
      %v3910 = vunpack.c.l.bf16 %v3782
      %v3911 = vunpack.c.l.bf16 %v3783
      %v3912 = vunpack.c.l.bf16 %v3784
      %v3913 = vunpack.c.l.bf16 %v3785
      %v3914 = vunpack.c.l.bf16 %v3786
      %v3915 = vunpack.c.l.bf16 %v3787
      %v3916 = vunpack.c.l.bf16 %v3788
      %v3917 = vunpack.c.l.bf16 %v3789
      %v3918 = vunpack.c.l.bf16 %v3790
      %v3919 = vunpack.c.l.bf16 %v3791
      %v3920 = vunpack.c.l.bf16 %v3792
      %v3921 = vunpack.c.l.bf16 %v3793
      %v3922 = vunpack.c.l.bf16 %v3794
      %v3923 = vunpack.c.l.bf16 %v3795
      %v3924 = vunpack.c.l.bf16 %v3796
      %v3925 = vunpack.c.l.bf16 %v3797
      %v3926 = vunpack.c.l.bf16 %v3798
      %v3927 = vunpack.c.l.bf16 %v3799
      %v3928 = vunpack.c.l.bf16 %v3800
      %v3929 = vunpack.c.l.bf16 %v3801
      %v3930 = vunpack.c.l.bf16 %v3802
      %v3931 = vunpack.c.l.bf16 %v3803
      %v3932 = vunpack.c.l.bf16 %v3804
      %v3933 = vunpack.c.l.bf16 %v3805
      %v3934 = vunpack.c.l.bf16 %v3806
      %v3935 = vunpack.c.l.bf16 %v3807
      %v3936 = vunpack.c.l.bf16 %v3808
      %v3937 = vunpack.c.l.bf16 %v3809
      %v3938 = vunpack.c.l.bf16 %v3810
      %v3939 = vunpack.c.l.bf16 %v3811
      %v3940 = vunpack.c.l.bf16 %v3812
      %v3941 = vunpack.c.l.bf16 %v3813
      %v3942 = vunpack.c.l.bf16 %v3814
      %v3943 = vunpack.c.l.bf16 %v3815
      %v3944 = vunpack.c.l.bf16 %v3816
      %v3945 = vunpack.c.l.bf16 %v3817
      %v3946 = vunpack.c.l.bf16 %v3818
      %v3947 = vunpack.c.l.bf16 %v3819
      %v3948 = vunpack.c.l.bf16 %v3820
      %v3949 = vunpack.c.l.bf16 %v3821
      %v3950 = vunpack.c.l.bf16 %v3822
      %v3951 = vunpack.c.l.bf16 %v3823
      %v3952 = vunpack.c.l.bf16 %v3824
      %v3953 = vunpack.c.l.bf16 %v3825
      %v3954 = vunpack.c.l.bf16 %v3826
      %v3955 = vunpack.c.l.bf16 %v3827
      %v3956 = vunpack.c.l.bf16 %v3828
      %v3957 = vunpack.c.l.bf16 %v3829
      %v3958 = vunpack.c.l.bf16 %v3830
      %v3959 = vunpack.c.l.bf16 %v3831
      %v3960 = vunpack.c.l.bf16 %v3832
      %v3961 = vunpack.c.l.bf16 %v3833
      %v3962 = vunpack.c.l.bf16 %v3834
      %v3963 = vunpack.c.l.bf16 %v3835
      %v3964 = vunpack.c.l.bf16 %v3836
      %v3965 = vunpack.c.l.bf16 %v3837
      %v3966 = vunpack.c.l.bf16 %v3838
      %v3967 = vunpack.c.l.bf16 %v3839
      %v3968 = vunpack.c.l.bf16 %v3840
      %v3969 = vunpack.c.l.bf16 %v3841
      %v3970 = vunpack.c.l.bf16 %v3842
      %v3971 = vunpack.c.l.bf16 %v3843
      %v3972 = vunpack.c.l.bf16 %v3844
      %v3973 = vunpack.c.l.bf16 %v3845
      %v3974 = vunpack.c.l.bf16 %v3846
      %v3975 = vunpack.c.l.bf16 %v3847
      %v3976 = vunpack.c.l.bf16 %v3848
      %v3977 = vunpack.c.l.bf16 %v3849
      %v3978 = vunpack.c.l.bf16 %v3850
      %v3979 = vunpack.c.l.bf16 %v3851
      %v3980 = vunpack.c.l.bf16 %v3852
      %v3981 = vunpack.c.l.bf16 %v3853
      %v3982 = vunpack.c.l.bf16 %v3854
      %v3983 = vunpack.c.l.bf16 %v3855
      %v3984 = vunpack.c.l.bf16 %v3856
      %v3985 = vunpack.c.l.bf16 %v3857
      %v3986 = vunpack.c.l.bf16 %v3858
      %v3987 = vunpack.c.l.bf16 %v3859
      %v3988 = vunpack.c.l.bf16 %v3860
      %v3989 = vunpack.c.l.bf16 %v3861
      %v3990 = vunpack.c.l.bf16 %v3862
      %v3991 = vunpack.c.l.bf16 %v3863
      %v3992 = vunpack.c.l.bf16 %v3864
      %v3993 = vunpack.c.l.bf16 %v3865
      %v3994 = vunpack.c.l.bf16 %v3866
      %v3995 = vunpack.c.l.bf16 %v3867
      %v3996 = vunpack.c.l.bf16 %v3868
      %v3997 = vunpack.c.l.bf16 %v3869
      %v3998 = vunpack.c.l.bf16 %v3870
      %v3999 = vunpack.c.l.bf16 %v3871
      %v4000 = vunpack.c.l.bf16 %v3872
      %v4001 = vunpack.c.l.bf16 %v3873
      %v4002 = vunpack.c.l.bf16 %v3874
      %v4003 = vunpack.c.l.bf16 %v3875
      %v4004 = vunpack.c.l.bf16 %v3876
      %v4005 = vunpack.c.l.bf16 %v3877
      %v4006 = vunpack.c.l.bf16 %v3878
      %v4007 = vunpack.c.l.bf16 %v3879
      %v4008 = vunpack.c.l.bf16 %v3880
      %v4009 = vunpack.c.l.bf16 %v3881
      %v4010 = vunpack.c.l.bf16 %v3882
      %v4011 = vunpack.c.l.bf16 %v3883
      %v4012 = vunpack.c.l.bf16 %v3884
      %v4013 = vunpack.c.l.bf16 %v3885
      %v4014 = vunpack.c.l.bf16 %v3886
      %v4015 = vunpack.c.l.bf16 %v3887
      %v4016 = vunpack.c.l.bf16 %v3888
      %v4017 = vunpack.c.l.bf16 %v3889
      %v4018 = vunpack.c.l.bf16 %v3890
      %v4019 = vunpack.c.l.bf16 %v3891
      %v4020 = vunpack.c.l.bf16 %v3892
      %v4021 = vunpack.c.l.bf16 %v3893
      %v4022 = vunpack.c.l.bf16 %v3894
      %v4023 = vunpack.c.l.bf16 %v3895
      %v4024 = vunpack.c.l.bf16 %v3896
      %v4025 = vadd.f32 %v3641, %v3897
      %v4026 = vadd.f32 %v3642, %v3898
      %v4027 = vadd.f32 %v3643, %v3899
      %v4028 = vadd.f32 %v3644, %v3900
      %v4029 = vadd.f32 %v3645, %v3901
      %v4030 = vadd.f32 %v3646, %v3902
      %v4031 = vadd.f32 %v3647, %v3903
      %v4032 = vadd.f32 %v3648, %v3904
      %v4033 = vadd.f32 %v3649, %v3905
      %v4034 = vadd.f32 %v3650, %v3906
      %v4035 = vadd.f32 %v3651, %v3907
      %v4036 = vadd.f32 %v3652, %v3908
      %v4037 = vadd.f32 %v3653, %v3909
      %v4038 = vadd.f32 %v3654, %v3910
      %v4039 = vadd.f32 %v3655, %v3911
      %v4040 = vadd.f32 %v3656, %v3912
      %v4041 = vadd.f32 %v3657, %v3913
      %v4042 = vadd.f32 %v3658, %v3914
      %v4043 = vadd.f32 %v3659, %v3915
      %v4044 = vadd.f32 %v3660, %v3916
      %v4045 = vadd.f32 %v3661, %v3917
      %v4046 = vadd.f32 %v3662, %v3918
      %v4047 = vadd.f32 %v3663, %v3919
      %v4048 = vadd.f32 %v3664, %v3920
      %v4049 = vadd.f32 %v3665, %v3921
      %v4050 = vadd.f32 %v3666, %v3922
      %v4051 = vadd.f32 %v3667, %v3923
      %v4052 = vadd.f32 %v3668, %v3924
      %v4053 = vadd.f32 %v3669, %v3925
      %v4054 = vadd.f32 %v3670, %v3926
      %v4055 = vadd.f32 %v3671, %v3927
      %v4056 = vadd.f32 %v3672, %v3928
      %v4057 = vadd.f32 %v3673, %v3929
      %v4058 = vadd.f32 %v3674, %v3930
      %v4059 = vadd.f32 %v3675, %v3931
      %v4060 = vadd.f32 %v3676, %v3932
      %v4061 = vadd.f32 %v3677, %v3933
      %v4062 = vadd.f32 %v3678, %v3934
      %v4063 = vadd.f32 %v3679, %v3935
      %v4064 = vadd.f32 %v3680, %v3936
      %v4065 = vadd.f32 %v3681, %v3937
      %v4066 = vadd.f32 %v3682, %v3938
      %v4067 = vadd.f32 %v3683, %v3939
      %v4068 = vadd.f32 %v3684, %v3940
      %v4069 = vadd.f32 %v3685, %v3941
      %v4070 = vadd.f32 %v3686, %v3942
      %v4071 = vadd.f32 %v3687, %v3943
      %v4072 = vadd.f32 %v3688, %v3944
      %v4073 = vadd.f32 %v3689, %v3945
      %v4074 = vadd.f32 %v3690, %v3946
      %v4075 = vadd.f32 %v3691, %v3947
      %v4076 = vadd.f32 %v3692, %v3948
      %v4077 = vadd.f32 %v3693, %v3949
      %v4078 = vadd.f32 %v3694, %v3950
      %v4079 = vadd.f32 %v3695, %v3951
      %v4080 = vadd.f32 %v3696, %v3952
      %v4081 = vadd.f32 %v3697, %v3953
      %v4082 = vadd.f32 %v3698, %v3954
      %v4083 = vadd.f32 %v3699, %v3955
      %v4084 = vadd.f32 %v3700, %v3956
      %v4085 = vadd.f32 %v3701, %v3957
      %v4086 = vadd.f32 %v3702, %v3958
      %v4087 = vadd.f32 %v3703, %v3959
      %v4088 = vadd.f32 %v3704, %v3960
      %v4089 = vadd.f32 %v3705, %v3961
      %v4090 = vadd.f32 %v3706, %v3962
      %v4091 = vadd.f32 %v3707, %v3963
      %v4092 = vadd.f32 %v3708, %v3964
      %v4093 = vadd.f32 %v3709, %v3965
      %v4094 = vadd.f32 %v3710, %v3966
      %v4095 = vadd.f32 %v3711, %v3967
      %v4096 = vadd.f32 %v3712, %v3968
      %v4097 = vadd.f32 %v3713, %v3969
      %v4098 = vadd.f32 %v3714, %v3970
      %v4099 = vadd.f32 %v3715, %v3971
      %v4100 = vadd.f32 %v3716, %v3972
      %v4101 = vadd.f32 %v3717, %v3973
      %v4102 = vadd.f32 %v3718, %v3974
      %v4103 = vadd.f32 %v3719, %v3975
      %v4104 = vadd.f32 %v3720, %v3976
      %v4105 = vadd.f32 %v3721, %v3977
      %v4106 = vadd.f32 %v3722, %v3978
      %v4107 = vadd.f32 %v3723, %v3979
      %v4108 = vadd.f32 %v3724, %v3980
      %v4109 = vadd.f32 %v3725, %v3981
      %v4110 = vadd.f32 %v3726, %v3982
      %v4111 = vadd.f32 %v3727, %v3983
      %v4112 = vadd.f32 %v3728, %v3984
      %v4113 = vadd.f32 %v3729, %v3985
      %v4114 = vadd.f32 %v3730, %v3986
      %v4115 = vadd.f32 %v3731, %v3987
      %v4116 = vadd.f32 %v3732, %v3988
      %v4117 = vadd.f32 %v3733, %v3989
      %v4118 = vadd.f32 %v3734, %v3990
      %v4119 = vadd.f32 %v3735, %v3991
      %v4120 = vadd.f32 %v3736, %v3992
      %v4121 = vadd.f32 %v3737, %v3993
      %v4122 = vadd.f32 %v3738, %v3994
      %v4123 = vadd.f32 %v3739, %v3995
      %v4124 = vadd.f32 %v3740, %v3996
      %v4125 = vadd.f32 %v3741, %v3997
      %v4126 = vadd.f32 %v3742, %v3998
      %v4127 = vadd.f32 %v3743, %v3999
      %v4128 = vadd.f32 %v3744, %v4000
      %v4129 = vadd.f32 %v3745, %v4001
      %v4130 = vadd.f32 %v3746, %v4002
      %v4131 = vadd.f32 %v3747, %v4003
      %v4132 = vadd.f32 %v3748, %v4004
      %v4133 = vadd.f32 %v3749, %v4005
      %v4134 = vadd.f32 %v3750, %v4006
      %v4135 = vadd.f32 %v3751, %v4007
      %v4136 = vadd.f32 %v3752, %v4008
      %v4137 = vadd.f32 %v3753, %v4009
      %v4138 = vadd.f32 %v3754, %v4010
      %v4139 = vadd.f32 %v3755, %v4011
      %v4140 = vadd.f32 %v3756, %v4012
      %v4141 = vadd.f32 %v3757, %v4013
      %v4142 = vadd.f32 %v3758, %v4014
      %v4143 = vadd.f32 %v3759, %v4015
      %v4144 = vadd.f32 %v3760, %v4016
      %v4145 = vadd.f32 %v3761, %v4017
      %v4146 = vadd.f32 %v3762, %v4018
      %v4147 = vadd.f32 %v3763, %v4019
      %v4148 = vadd.f32 %v3764, %v4020
      %v4149 = vadd.f32 %v3765, %v4021
      %v4150 = vadd.f32 %v3766, %v4022
      %v4151 = vadd.f32 %v3767, %v4023
      %v4152 = vadd.f32 %v3768, %v4024
      %v4153 = vadd.f32 %v4025, %v4026
      %v4154 = vadd.f32 %v4153, %v4027
      %v4155 = vadd.f32 %v4154, %v4028
      %v4156 = vadd.f32 %v4155, %v4029
      %v4157 = vadd.f32 %v4156, %v4030
      %v4158 = vadd.f32 %v4157, %v4031
      %v4159 = vadd.f32 %v4158, %v4032
      %v4160 = vadd.f32 %v4159, %v4033
      %v4161 = vadd.f32 %v4160, %v4034
      %v4162 = vadd.f32 %v4161, %v4035
      %v4163 = vadd.f32 %v4162, %v4036
      %v4164 = vadd.f32 %v4163, %v4037
      %v4165 = vadd.f32 %v4164, %v4038
      %v4166 = vadd.f32 %v4165, %v4039
      %v4167 = vadd.f32 %v4166, %v4040
      %v4168 = vadd.f32 %v4167, %v4041
      %v4169 = vadd.f32 %v4168, %v4042
      %v4170 = vadd.f32 %v4169, %v4043
      %v4171 = vadd.f32 %v4170, %v4044
      %v4172 = vadd.f32 %v4171, %v4045
      %v4173 = vadd.f32 %v4172, %v4046
      %v4174 = vadd.f32 %v4173, %v4047
      %v4175 = vadd.f32 %v4174, %v4048
      %v4176 = vadd.f32 %v4175, %v4049
      %v4177 = vadd.f32 %v4176, %v4050
      %v4178 = vadd.f32 %v4177, %v4051
      %v4179 = vadd.f32 %v4178, %v4052
      %v4180 = vadd.f32 %v4179, %v4053
      %v4181 = vadd.f32 %v4180, %v4054
      %v4182 = vadd.f32 %v4181, %v4055
      %v4183 = vadd.f32 %v4182, %v4056
      %v4184 = vadd.f32 %v4183, %v4057
      %v4185 = vadd.f32 %v4184, %v4058
      %v4186 = vadd.f32 %v4185, %v4059
      %v4187 = vadd.f32 %v4186, %v4060
      %v4188 = vadd.f32 %v4187, %v4061
      %v4189 = vadd.f32 %v4188, %v4062
      %v4190 = vadd.f32 %v4189, %v4063
      %v4191 = vadd.f32 %v4190, %v4064
      %v4192 = vadd.f32 %v4191, %v4065
      %v4193 = vadd.f32 %v4192, %v4066
      %v4194 = vadd.f32 %v4193, %v4067
      %v4195 = vadd.f32 %v4194, %v4068
      %v4196 = vadd.f32 %v4195, %v4069
      %v4197 = vadd.f32 %v4196, %v4070
      %v4198 = vadd.f32 %v4197, %v4071
      %v4199 = vadd.f32 %v4198, %v4072
      %v4200 = vadd.f32 %v4199, %v4073
      %v4201 = vadd.f32 %v4200, %v4074
      %v4202 = vadd.f32 %v4201, %v4075
      %v4203 = vadd.f32 %v4202, %v4076
      %v4204 = vadd.f32 %v4203, %v4077
      %v4205 = vadd.f32 %v4204, %v4078
      %v4206 = vadd.f32 %v4205, %v4079
      %v4207 = vadd.f32 %v4206, %v4080
      %v4208 = vadd.f32 %v4207, %v4081
      %v4209 = vadd.f32 %v4208, %v4082
      %v4210 = vadd.f32 %v4209, %v4083
      %v4211 = vadd.f32 %v4210, %v4084
      %v4212 = vadd.f32 %v4211, %v4085
      %v4213 = vadd.f32 %v4212, %v4086
      %v4214 = vadd.f32 %v4213, %v4087
      %v4215 = vadd.f32 %v4214, %v4088
      %v4216 = vadd.f32 %v4215, %v4089
      %v4217 = vadd.f32 %v4216, %v4090
      %v4218 = vadd.f32 %v4217, %v4091
      %v4219 = vadd.f32 %v4218, %v4092
      %v4220 = vadd.f32 %v4219, %v4093
      %v4221 = vadd.f32 %v4220, %v4094
      %v4222 = vadd.f32 %v4221, %v4095
      %v4223 = vadd.f32 %v4222, %v4096
      %v4224 = vadd.f32 %v4223, %v4097
      %v4225 = vadd.f32 %v4224, %v4098
      %v4226 = vadd.f32 %v4225, %v4099
      %v4227 = vadd.f32 %v4226, %v4100
      %v4228 = vadd.f32 %v4227, %v4101
      %v4229 = vadd.f32 %v4228, %v4102
      %v4230 = vadd.f32 %v4229, %v4103
      %v4231 = vadd.f32 %v4230, %v4104
      %v4232 = vadd.f32 %v4231, %v4105
      %v4233 = vadd.f32 %v4232, %v4106
      %v4234 = vadd.f32 %v4233, %v4107
      %v4235 = vadd.f32 %v4234, %v4108
      %v4236 = vadd.f32 %v4235, %v4109
      %v4237 = vadd.f32 %v4236, %v4110
      %v4238 = vadd.f32 %v4237, %v4111
      %v4239 = vadd.f32 %v4238, %v4112
      %v4240 = vadd.f32 %v4239, %v4113
      %v4241 = vadd.f32 %v4240, %v4114
      %v4242 = vadd.f32 %v4241, %v4115
      %v4243 = vadd.f32 %v4242, %v4116
      %v4244 = vadd.f32 %v4243, %v4117
      %v4245 = vadd.f32 %v4244, %v4118
      %v4246 = vadd.f32 %v4245, %v4119
      %v4247 = vadd.f32 %v4246, %v4120
      %v4248 = vadd.f32 %v4247, %v4121
      %v4249 = vadd.f32 %v4248, %v4122
      %v4250 = vadd.f32 %v4249, %v4123
      %v4251 = vadd.f32 %v4250, %v4124
      %v4252 = vadd.f32 %v4251, %v4125
      %v4253 = vadd.f32 %v4252, %v4126
      %v4254 = vadd.f32 %v4253, %v4127
      %v4255 = vadd.f32 %v4254, %v4128
      %v4256 = vadd.f32 %v4255, %v4129
      %v4257 = vadd.f32 %v4256, %v4130
      %v4258 = vadd.f32 %v4257, %v4131
      %v4259 = vadd.f32 %v4258, %v4132
      %v4260 = vadd.f32 %v4259, %v4133
      %v4261 = vadd.f32 %v4260, %v4134
      %v4262 = vadd.f32 %v4261, %v4135
      %v4263 = vadd.f32 %v4262, %v4136
      %v4264 = vadd.f32 %v4263, %v4137
      %v4265 = vadd.f32 %v4264, %v4138
      %v4266 = vadd.f32 %v4265, %v4139
      %v4267 = vadd.f32 %v4266, %v4140
      %v4268 = vadd.f32 %v4267, %v4141
      %v4269 = vadd.f32 %v4268, %v4142
      %v4270 = vadd.f32 %v4269, %v4143
      %v4271 = vadd.f32 %v4270, %v4144
      %v4272 = vadd.f32 %v4271, %v4145
      %v4273 = vadd.f32 %v4272, %v4146
      %v4274 = vadd.f32 %v4273, %v4147
      %v4275 = vadd.f32 %v4274, %v4148
      %v4276 = vadd.f32 %v4275, %v4149
      %v4277 = vadd.f32 %v4276, %v4150
      %v4278 = vadd.f32 %v4277, %v4151
      %v4279 = vadd.f32 %v4278, %v4152
      %v4280 = vrot.slane %v4279, 4
      %v4281 = vadd.f32 %v4279, %v4280
      %v4282 = vrot.slane %v4281, 2
      %v4283 = vadd.f32 %v4281, %v4282
      %v4284 = vrot.slane %v4283, 1
      %v4285 = vadd.f32 %v4283, %v4284
      %v4286 = vmul.f32 %v4285, 0.0009765625
      %v4287 = vmul.f32 %v4025, %v4025
      %v4288 = vmul.f32 %v4026, %v4026
      %v4289 = vmul.f32 %v4027, %v4027
      %v4290 = vmul.f32 %v4028, %v4028
      %v4291 = vmul.f32 %v4029, %v4029
      %v4292 = vmul.f32 %v4030, %v4030
      %v4293 = vmul.f32 %v4031, %v4031
      %v4294 = vmul.f32 %v4032, %v4032
      %v4295 = vmul.f32 %v4033, %v4033
      %v4296 = vmul.f32 %v4034, %v4034
      %v4297 = vmul.f32 %v4035, %v4035
      %v4298 = vmul.f32 %v4036, %v4036
      %v4299 = vmul.f32 %v4037, %v4037
      %v4300 = vmul.f32 %v4038, %v4038
      %v4301 = vmul.f32 %v4039, %v4039
      %v4302 = vmul.f32 %v4040, %v4040
      %v4303 = vmul.f32 %v4041, %v4041
      %v4304 = vmul.f32 %v4042, %v4042
      %v4305 = vmul.f32 %v4043, %v4043
      %v4306 = vmul.f32 %v4044, %v4044
      %v4307 = vmul.f32 %v4045, %v4045
      %v4308 = vmul.f32 %v4046, %v4046
      %v4309 = vmul.f32 %v4047, %v4047
      %v4310 = vmul.f32 %v4048, %v4048
      %v4311 = vmul.f32 %v4049, %v4049
      %v4312 = vmul.f32 %v4050, %v4050
      %v4313 = vmul.f32 %v4051, %v4051
      %v4314 = vmul.f32 %v4052, %v4052
      %v4315 = vmul.f32 %v4053, %v4053
      %v4316 = vmul.f32 %v4054, %v4054
      %v4317 = vmul.f32 %v4055, %v4055
      %v4318 = vmul.f32 %v4056, %v4056
      %v4319 = vmul.f32 %v4057, %v4057
      %v4320 = vmul.f32 %v4058, %v4058
      %v4321 = vmul.f32 %v4059, %v4059
      %v4322 = vmul.f32 %v4060, %v4060
      %v4323 = vmul.f32 %v4061, %v4061
      %v4324 = vmul.f32 %v4062, %v4062
      %v4325 = vmul.f32 %v4063, %v4063
      %v4326 = vmul.f32 %v4064, %v4064
      %v4327 = vmul.f32 %v4065, %v4065
      %v4328 = vmul.f32 %v4066, %v4066
      %v4329 = vmul.f32 %v4067, %v4067
      %v4330 = vmul.f32 %v4068, %v4068
      %v4331 = vmul.f32 %v4069, %v4069
      %v4332 = vmul.f32 %v4070, %v4070
      %v4333 = vmul.f32 %v4071, %v4071
      %v4334 = vmul.f32 %v4072, %v4072
      %v4335 = vmul.f32 %v4073, %v4073
      %v4336 = vmul.f32 %v4074, %v4074
      %v4337 = vmul.f32 %v4075, %v4075
      %v4338 = vmul.f32 %v4076, %v4076
      %v4339 = vmul.f32 %v4077, %v4077
      %v4340 = vmul.f32 %v4078, %v4078
      %v4341 = vmul.f32 %v4079, %v4079
      %v4342 = vmul.f32 %v4080, %v4080
      %v4343 = vmul.f32 %v4081, %v4081
      %v4344 = vmul.f32 %v4082, %v4082
      %v4345 = vmul.f32 %v4083, %v4083
      %v4346 = vmul.f32 %v4084, %v4084
      %v4347 = vmul.f32 %v4085, %v4085
      %v4348 = vmul.f32 %v4086, %v4086
      %v4349 = vmul.f32 %v4087, %v4087
      %v4350 = vmul.f32 %v4088, %v4088
      %v4351 = vmul.f32 %v4089, %v4089
      %v4352 = vmul.f32 %v4090, %v4090
      %v4353 = vmul.f32 %v4091, %v4091
      %v4354 = vmul.f32 %v4092, %v4092
      %v4355 = vmul.f32 %v4093, %v4093
      %v4356 = vmul.f32 %v4094, %v4094
      %v4357 = vmul.f32 %v4095, %v4095
      %v4358 = vmul.f32 %v4096, %v4096
      %v4359 = vmul.f32 %v4097, %v4097
      %v4360 = vmul.f32 %v4098, %v4098
      %v4361 = vmul.f32 %v4099, %v4099
      %v4362 = vmul.f32 %v4100, %v4100
      %v4363 = vmul.f32 %v4101, %v4101
      %v4364 = vmul.f32 %v4102, %v4102
      %v4365 = vmul.f32 %v4103, %v4103
      %v4366 = vmul.f32 %v4104, %v4104
      %v4367 = vmul.f32 %v4105, %v4105
      %v4368 = vmul.f32 %v4106, %v4106
      %v4369 = vmul.f32 %v4107, %v4107
      %v4370 = vmul.f32 %v4108, %v4108
      %v4371 = vmul.f32 %v4109, %v4109
      %v4372 = vmul.f32 %v4110, %v4110
      %v4373 = vmul.f32 %v4111, %v4111
      %v4374 = vmul.f32 %v4112, %v4112
      %v4375 = vmul.f32 %v4113, %v4113
      %v4376 = vmul.f32 %v4114, %v4114
      %v4377 = vmul.f32 %v4115, %v4115
      %v4378 = vmul.f32 %v4116, %v4116
      %v4379 = vmul.f32 %v4117, %v4117
      %v4380 = vmul.f32 %v4118, %v4118
      %v4381 = vmul.f32 %v4119, %v4119
      %v4382 = vmul.f32 %v4120, %v4120
      %v4383 = vmul.f32 %v4121, %v4121
      %v4384 = vmul.f32 %v4122, %v4122
      %v4385 = vmul.f32 %v4123, %v4123
      %v4386 = vmul.f32 %v4124, %v4124
      %v4387 = vmul.f32 %v4125, %v4125
      %v4388 = vmul.f32 %v4126, %v4126
      %v4389 = vmul.f32 %v4127, %v4127
      %v4390 = vmul.f32 %v4128, %v4128
      %v4391 = vmul.f32 %v4129, %v4129
      %v4392 = vmul.f32 %v4130, %v4130
      %v4393 = vmul.f32 %v4131, %v4131
      %v4394 = vmul.f32 %v4132, %v4132
      %v4395 = vmul.f32 %v4133, %v4133
      %v4396 = vmul.f32 %v4134, %v4134
      %v4397 = vmul.f32 %v4135, %v4135
      %v4398 = vmul.f32 %v4136, %v4136
      %v4399 = vmul.f32 %v4137, %v4137
      %v4400 = vmul.f32 %v4138, %v4138
      %v4401 = vmul.f32 %v4139, %v4139
      %v4402 = vmul.f32 %v4140, %v4140
      %v4403 = vmul.f32 %v4141, %v4141
      %v4404 = vmul.f32 %v4142, %v4142
      %v4405 = vmul.f32 %v4143, %v4143
      %v4406 = vmul.f32 %v4144, %v4144
      %v4407 = vmul.f32 %v4145, %v4145
      %v4408 = vmul.f32 %v4146, %v4146
      %v4409 = vmul.f32 %v4147, %v4147
      %v4410 = vmul.f32 %v4148, %v4148
      %v4411 = vmul.f32 %v4149, %v4149
      %v4412 = vmul.f32 %v4150, %v4150
      %v4413 = vmul.f32 %v4151, %v4151
      %v4414 = vmul.f32 %v4152, %v4152
      %v4415 = vadd.f32 %v4287, %v4288
      %v4416 = vadd.f32 %v4415, %v4289
      %v4417 = vadd.f32 %v4416, %v4290
      %v4418 = vadd.f32 %v4417, %v4291
      %v4419 = vadd.f32 %v4418, %v4292
      %v4420 = vadd.f32 %v4419, %v4293
      %v4421 = vadd.f32 %v4420, %v4294
      %v4422 = vadd.f32 %v4421, %v4295
      %v4423 = vadd.f32 %v4422, %v4296
      %v4424 = vadd.f32 %v4423, %v4297
      %v4425 = vadd.f32 %v4424, %v4298
      %v4426 = vadd.f32 %v4425, %v4299
      %v4427 = vadd.f32 %v4426, %v4300
      %v4428 = vadd.f32 %v4427, %v4301
      %v4429 = vadd.f32 %v4428, %v4302
      %v4430 = vadd.f32 %v4429, %v4303
      %v4431 = vadd.f32 %v4430, %v4304
      %v4432 = vadd.f32 %v4431, %v4305
      %v4433 = vadd.f32 %v4432, %v4306
      %v4434 = vadd.f32 %v4433, %v4307
      %v4435 = vadd.f32 %v4434, %v4308
      %v4436 = vadd.f32 %v4435, %v4309
      %v4437 = vadd.f32 %v4436, %v4310
      %v4438 = vadd.f32 %v4437, %v4311
      %v4439 = vadd.f32 %v4438, %v4312
      %v4440 = vadd.f32 %v4439, %v4313
      %v4441 = vadd.f32 %v4440, %v4314
      %v4442 = vadd.f32 %v4441, %v4315
      %v4443 = vadd.f32 %v4442, %v4316
      %v4444 = vadd.f32 %v4443, %v4317
      %v4445 = vadd.f32 %v4444, %v4318
      %v4446 = vadd.f32 %v4445, %v4319
      %v4447 = vadd.f32 %v4446, %v4320
      %v4448 = vadd.f32 %v4447, %v4321
      %v4449 = vadd.f32 %v4448, %v4322
      %v4450 = vadd.f32 %v4449, %v4323
      %v4451 = vadd.f32 %v4450, %v4324
      %v4452 = vadd.f32 %v4451, %v4325
      %v4453 = vadd.f32 %v4452, %v4326
      %v4454 = vadd.f32 %v4453, %v4327
      %v4455 = vadd.f32 %v4454, %v4328
      %v4456 = vadd.f32 %v4455, %v4329
      %v4457 = vadd.f32 %v4456, %v4330
      %v4458 = vadd.f32 %v4457, %v4331
      %v4459 = vadd.f32 %v4458, %v4332
      %v4460 = vadd.f32 %v4459, %v4333
      %v4461 = vadd.f32 %v4460, %v4334
      %v4462 = vadd.f32 %v4461, %v4335
      %v4463 = vadd.f32 %v4462, %v4336
      %v4464 = vadd.f32 %v4463, %v4337
      %v4465 = vadd.f32 %v4464, %v4338
      %v4466 = vadd.f32 %v4465, %v4339
      %v4467 = vadd.f32 %v4466, %v4340
      %v4468 = vadd.f32 %v4467, %v4341
      %v4469 = vadd.f32 %v4468, %v4342
      %v4470 = vadd.f32 %v4469, %v4343
      %v4471 = vadd.f32 %v4470, %v4344
      %v4472 = vadd.f32 %v4471, %v4345
      %v4473 = vadd.f32 %v4472, %v4346
      %v4474 = vadd.f32 %v4473, %v4347
      %v4475 = vadd.f32 %v4474, %v4348
      %v4476 = vadd.f32 %v4475, %v4349
      %v4477 = vadd.f32 %v4476, %v4350
      %v4478 = vadd.f32 %v4477, %v4351
      %v4479 = vadd.f32 %v4478, %v4352
      %v4480 = vadd.f32 %v4479, %v4353
      %v4481 = vadd.f32 %v4480, %v4354
      %v4482 = vadd.f32 %v4481, %v4355
      %v4483 = vadd.f32 %v4482, %v4356
      %v4484 = vadd.f32 %v4483, %v4357
      %v4485 = vadd.f32 %v4484, %v4358
      %v4486 = vadd.f32 %v4485, %v4359
      %v4487 = vadd.f32 %v4486, %v4360
      %v4488 = vadd.f32 %v4487, %v4361
      %v4489 = vadd.f32 %v4488, %v4362
      %v4490 = vadd.f32 %v4489, %v4363
      %v4491 = vadd.f32 %v4490, %v4364
      %v4492 = vadd.f32 %v4491, %v4365
      %v4493 = vadd.f32 %v4492, %v4366
      %v4494 = vadd.f32 %v4493, %v4367
      %v4495 = vadd.f32 %v4494, %v4368
      %v4496 = vadd.f32 %v4495, %v4369
      %v4497 = vadd.f32 %v4496, %v4370
      %v4498 = vadd.f32 %v4497, %v4371
      %v4499 = vadd.f32 %v4498, %v4372
      %v4500 = vadd.f32 %v4499, %v4373
      %v4501 = vadd.f32 %v4500, %v4374
      %v4502 = vadd.f32 %v4501, %v4375
      %v4503 = vadd.f32 %v4502, %v4376
      %v4504 = vadd.f32 %v4503, %v4377
      %v4505 = vadd.f32 %v4504, %v4378
      %v4506 = vadd.f32 %v4505, %v4379
      %v4507 = vadd.f32 %v4506, %v4380
      %v4508 = vadd.f32 %v4507, %v4381
      %v4509 = vadd.f32 %v4508, %v4382
      %v4510 = vadd.f32 %v4509, %v4383
      %v4511 = vadd.f32 %v4510, %v4384
      %v4512 = vadd.f32 %v4511, %v4385
      %v4513 = vadd.f32 %v4512, %v4386
      %v4514 = vadd.f32 %v4513, %v4387
      %v4515 = vadd.f32 %v4514, %v4388
      %v4516 = vadd.f32 %v4515, %v4389
      %v4517 = vadd.f32 %v4516, %v4390
      %v4518 = vadd.f32 %v4517, %v4391
      %v4519 = vadd.f32 %v4518, %v4392
      %v4520 = vadd.f32 %v4519, %v4393
      %v4521 = vadd.f32 %v4520, %v4394
      %v4522 = vadd.f32 %v4521, %v4395
      %v4523 = vadd.f32 %v4522, %v4396
      %v4524 = vadd.f32 %v4523, %v4397
      %v4525 = vadd.f32 %v4524, %v4398
      %v4526 = vadd.f32 %v4525, %v4399
      %v4527 = vadd.f32 %v4526, %v4400
      %v4528 = vadd.f32 %v4527, %v4401
      %v4529 = vadd.f32 %v4528, %v4402
      %v4530 = vadd.f32 %v4529, %v4403
      %v4531 = vadd.f32 %v4530, %v4404
      %v4532 = vadd.f32 %v4531, %v4405
      %v4533 = vadd.f32 %v4532, %v4406
      %v4534 = vadd.f32 %v4533, %v4407
      %v4535 = vadd.f32 %v4534, %v4408
      %v4536 = vadd.f32 %v4535, %v4409
      %v4537 = vadd.f32 %v4536, %v4410
      %v4538 = vadd.f32 %v4537, %v4411
      %v4539 = vadd.f32 %v4538, %v4412
      %v4540 = vadd.f32 %v4539, %v4413
      %v4541 = vadd.f32 %v4540, %v4414
      %v4542 = vrot.slane %v4541, 4
      %v4543 = vadd.f32 %v4541, %v4542
      %v4544 = vrot.slane %v4543, 2
      %v4545 = vadd.f32 %v4543, %v4544
      %v4546 = vrot.slane %v4545, 1
      %v4547 = vadd.f32 %v4545, %v4546
      %v4548 = vmul.f32 %v4547, 0.0009765625
      %v4549 = vmul.f32 %v4286, %v4286
      %v4550 = vsub.f32 %v4548, %v4549
      %v4551 = vmax.f32 %v4550, 0.0
      %v4552 = vld [vmem:[%s267] sm:$0x1]
      %v4553 = vsub.f32 %v4025, %v4286
      %v4554 = vsub.f32 %v4026, %v4286
      %v4555 = vsub.f32 %v4027, %v4286
      %v4556 = vsub.f32 %v4028, %v4286
      %v4557 = vsub.f32 %v4029, %v4286
      %v4558 = vsub.f32 %v4030, %v4286
      %v4559 = vsub.f32 %v4031, %v4286
      %v4560 = vsub.f32 %v4032, %v4286
      %v4561 = vsub.f32 %v4033, %v4286
      %v4562 = vsub.f32 %v4034, %v4286
      %v4563 = vsub.f32 %v4035, %v4286
      %v4564 = vsub.f32 %v4036, %v4286
      %v4565 = vsub.f32 %v4037, %v4286
      %v4566 = vsub.f32 %v4038, %v4286
      %v4567 = vsub.f32 %v4039, %v4286
      %v4568 = vsub.f32 %v4040, %v4286
      %v4569 = vsub.f32 %v4041, %v4286
      %v4570 = vsub.f32 %v4042, %v4286
      %v4571 = vsub.f32 %v4043, %v4286
      %v4572 = vsub.f32 %v4044, %v4286
      %v4573 = vsub.f32 %v4045, %v4286
      %v4574 = vsub.f32 %v4046, %v4286
      %v4575 = vsub.f32 %v4047, %v4286
      %v4576 = vsub.f32 %v4048, %v4286
      %v4577 = vsub.f32 %v4049, %v4286
      %v4578 = vsub.f32 %v4050, %v4286
      %v4579 = vsub.f32 %v4051, %v4286
      %v4580 = vsub.f32 %v4052, %v4286
      %v4581 = vsub.f32 %v4053, %v4286
      %v4582 = vsub.f32 %v4054, %v4286
      %v4583 = vsub.f32 %v4055, %v4286
      %v4584 = vsub.f32 %v4056, %v4286
      %v4585 = vsub.f32 %v4057, %v4286
      %v4586 = vsub.f32 %v4058, %v4286
      %v4587 = vsub.f32 %v4059, %v4286
      %v4588 = vsub.f32 %v4060, %v4286
      %v4589 = vsub.f32 %v4061, %v4286
      %v4590 = vsub.f32 %v4062, %v4286
      %v4591 = vsub.f32 %v4063, %v4286
      %v4592 = vsub.f32 %v4064, %v4286
      %v4593 = vsub.f32 %v4065, %v4286
      %v4594 = vsub.f32 %v4066, %v4286
      %v4595 = vsub.f32 %v4067, %v4286
      %v4596 = vsub.f32 %v4068, %v4286
      %v4597 = vsub.f32 %v4069, %v4286
      %v4598 = vsub.f32 %v4070, %v4286
      %v4599 = vsub.f32 %v4071, %v4286
      %v4600 = vsub.f32 %v4072, %v4286
      %v4601 = vsub.f32 %v4073, %v4286
      %v4602 = vsub.f32 %v4074, %v4286
      %v4603 = vsub.f32 %v4075, %v4286
      %v4604 = vsub.f32 %v4076, %v4286
      %v4605 = vsub.f32 %v4077, %v4286
      %v4606 = vsub.f32 %v4078, %v4286
      %v4607 = vsub.f32 %v4079, %v4286
      %v4608 = vsub.f32 %v4080, %v4286
      %v4609 = vsub.f32 %v4081, %v4286
      %v4610 = vsub.f32 %v4082, %v4286
      %v4611 = vsub.f32 %v4083, %v4286
      %v4612 = vsub.f32 %v4084, %v4286
      %v4613 = vsub.f32 %v4085, %v4286
      %v4614 = vsub.f32 %v4086, %v4286
      %v4615 = vsub.f32 %v4087, %v4286
      %v4616 = vsub.f32 %v4088, %v4286
      %v4617 = vsub.f32 %v4089, %v4286
      %v4618 = vsub.f32 %v4090, %v4286
      %v4619 = vsub.f32 %v4091, %v4286
      %v4620 = vsub.f32 %v4092, %v4286
      %v4621 = vsub.f32 %v4093, %v4286
      %v4622 = vsub.f32 %v4094, %v4286
      %v4623 = vsub.f32 %v4095, %v4286
      %v4624 = vsub.f32 %v4096, %v4286
      %v4625 = vsub.f32 %v4097, %v4286
      %v4626 = vsub.f32 %v4098, %v4286
      %v4627 = vsub.f32 %v4099, %v4286
      %v4628 = vsub.f32 %v4100, %v4286
      %v4629 = vsub.f32 %v4101, %v4286
      %v4630 = vsub.f32 %v4102, %v4286
      %v4631 = vsub.f32 %v4103, %v4286
      %v4632 = vsub.f32 %v4104, %v4286
      %v4633 = vsub.f32 %v4105, %v4286
      %v4634 = vsub.f32 %v4106, %v4286
      %v4635 = vsub.f32 %v4107, %v4286
      %v4636 = vsub.f32 %v4108, %v4286
      %v4637 = vsub.f32 %v4109, %v4286
      %v4638 = vsub.f32 %v4110, %v4286
      %v4639 = vsub.f32 %v4111, %v4286
      %v4640 = vsub.f32 %v4112, %v4286
      %v4641 = vsub.f32 %v4113, %v4286
      %v4642 = vsub.f32 %v4114, %v4286
      %v4643 = vsub.f32 %v4115, %v4286
      %v4644 = vsub.f32 %v4116, %v4286
      %v4645 = vsub.f32 %v4117, %v4286
      %v4646 = vsub.f32 %v4118, %v4286
      %v4647 = vsub.f32 %v4119, %v4286
      %v4648 = vsub.f32 %v4120, %v4286
      %v4649 = vsub.f32 %v4121, %v4286
      %v4650 = vsub.f32 %v4122, %v4286
      %v4651 = vsub.f32 %v4123, %v4286
      %v4652 = vsub.f32 %v4124, %v4286
      %v4653 = vsub.f32 %v4125, %v4286
      %v4654 = vsub.f32 %v4126, %v4286
      %v4655 = vsub.f32 %v4127, %v4286
      %v4656 = vsub.f32 %v4128, %v4286
      %v4657 = vsub.f32 %v4129, %v4286
      %v4658 = vsub.f32 %v4130, %v4286
      %v4659 = vsub.f32 %v4131, %v4286
      %v4660 = vsub.f32 %v4132, %v4286
      %v4661 = vsub.f32 %v4133, %v4286
      %v4662 = vsub.f32 %v4134, %v4286
      %v4663 = vsub.f32 %v4135, %v4286
      %v4664 = vsub.f32 %v4136, %v4286
      %v4665 = vsub.f32 %v4137, %v4286
      %v4666 = vsub.f32 %v4138, %v4286
      %v4667 = vsub.f32 %v4139, %v4286
      %v4668 = vsub.f32 %v4140, %v4286
      %v4669 = vsub.f32 %v4141, %v4286
      %v4670 = vsub.f32 %v4142, %v4286
      %v4671 = vsub.f32 %v4143, %v4286
      %v4672 = vsub.f32 %v4144, %v4286
      %v4673 = vsub.f32 %v4145, %v4286
      %v4674 = vsub.f32 %v4146, %v4286
      %v4675 = vsub.f32 %v4147, %v4286
      %v4676 = vsub.f32 %v4148, %v4286
      %v4677 = vsub.f32 %v4149, %v4286
      %v4678 = vsub.f32 %v4150, %v4286
      %v4679 = vsub.f32 %v4151, %v4286
      %v4680 = vsub.f32 %v4152, %v4286
      %v4681 = vadd.f32 %v4551, 1e-05
      %v4682 = vrsqrt.pop %v4681
      %v4683 = vmul.f32 %v4553, %v4682
      %v4684 = vmul.f32 %v4554, %v4682
      %v4685 = vmul.f32 %v4555, %v4682
      %v4686 = vmul.f32 %v4556, %v4682
      %v4687 = vmul.f32 %v4557, %v4682
      %v4688 = vmul.f32 %v4558, %v4682
      %v4689 = vmul.f32 %v4559, %v4682
      %v4690 = vmul.f32 %v4560, %v4682
      %v4691 = vmul.f32 %v4561, %v4682
      %v4692 = vmul.f32 %v4562, %v4682
      %v4693 = vmul.f32 %v4563, %v4682
      %v4694 = vmul.f32 %v4564, %v4682
      %v4695 = vmul.f32 %v4565, %v4682
      %v4696 = vmul.f32 %v4566, %v4682
      %v4697 = vmul.f32 %v4567, %v4682
      %v4698 = vmul.f32 %v4568, %v4682
      %v4699 = vmul.f32 %v4569, %v4682
      %v4700 = vmul.f32 %v4570, %v4682
      %v4701 = vmul.f32 %v4571, %v4682
      %v4702 = vmul.f32 %v4572, %v4682
      %v4703 = vmul.f32 %v4573, %v4682
      %v4704 = vmul.f32 %v4574, %v4682
      %v4705 = vmul.f32 %v4575, %v4682
      %v4706 = vmul.f32 %v4576, %v4682
      %v4707 = vmul.f32 %v4577, %v4682
      %v4708 = vmul.f32 %v4578, %v4682
      %v4709 = vmul.f32 %v4579, %v4682
      %v4710 = vmul.f32 %v4580, %v4682
      %v4711 = vmul.f32 %v4581, %v4682
      %v4712 = vmul.f32 %v4582, %v4682
      %v4713 = vmul.f32 %v4583, %v4682
      %v4714 = vmul.f32 %v4584, %v4682
      %v4715 = vmul.f32 %v4585, %v4682
      %v4716 = vmul.f32 %v4586, %v4682
      %v4717 = vmul.f32 %v4587, %v4682
      %v4718 = vmul.f32 %v4588, %v4682
      %v4719 = vmul.f32 %v4589, %v4682
      %v4720 = vmul.f32 %v4590, %v4682
      %v4721 = vmul.f32 %v4591, %v4682
      %v4722 = vmul.f32 %v4592, %v4682
      %v4723 = vmul.f32 %v4593, %v4682
      %v4724 = vmul.f32 %v4594, %v4682
      %v4725 = vmul.f32 %v4595, %v4682
      %v4726 = vmul.f32 %v4596, %v4682
      %v4727 = vmul.f32 %v4597, %v4682
      %v4728 = vmul.f32 %v4598, %v4682
      %v4729 = vmul.f32 %v4599, %v4682
      %v4730 = vmul.f32 %v4600, %v4682
      %v4731 = vmul.f32 %v4601, %v4682
      %v4732 = vmul.f32 %v4602, %v4682
      %v4733 = vmul.f32 %v4603, %v4682
      %v4734 = vmul.f32 %v4604, %v4682
      %v4735 = vmul.f32 %v4605, %v4682
      %v4736 = vmul.f32 %v4606, %v4682
      %v4737 = vmul.f32 %v4607, %v4682
      %v4738 = vmul.f32 %v4608, %v4682
      %v4739 = vmul.f32 %v4609, %v4682
      %v4740 = vmul.f32 %v4610, %v4682
      %v4741 = vmul.f32 %v4611, %v4682
      %v4742 = vmul.f32 %v4612, %v4682
      %v4743 = vmul.f32 %v4613, %v4682
      %v4744 = vmul.f32 %v4614, %v4682
      %v4745 = vmul.f32 %v4615, %v4682
      %v4746 = vmul.f32 %v4616, %v4682
      %v4747 = vmul.f32 %v4617, %v4682
      %v4748 = vmul.f32 %v4618, %v4682
      %v4749 = vmul.f32 %v4619, %v4682
      %v4750 = vmul.f32 %v4620, %v4682
      %v4751 = vmul.f32 %v4621, %v4682
      %v4752 = vmul.f32 %v4622, %v4682
      %v4753 = vmul.f32 %v4623, %v4682
      %v4754 = vmul.f32 %v4624, %v4682
      %v4755 = vmul.f32 %v4625, %v4682
      %v4756 = vmul.f32 %v4626, %v4682
      %v4757 = vmul.f32 %v4627, %v4682
      %v4758 = vmul.f32 %v4628, %v4682
      %v4759 = vmul.f32 %v4629, %v4682
      %v4760 = vmul.f32 %v4630, %v4682
      %v4761 = vmul.f32 %v4631, %v4682
      %v4762 = vmul.f32 %v4632, %v4682
      %v4763 = vmul.f32 %v4633, %v4682
      %v4764 = vmul.f32 %v4634, %v4682
      %v4765 = vmul.f32 %v4635, %v4682
      %v4766 = vmul.f32 %v4636, %v4682
      %v4767 = vmul.f32 %v4637, %v4682
      %v4768 = vmul.f32 %v4638, %v4682
      %v4769 = vmul.f32 %v4639, %v4682
      %v4770 = vmul.f32 %v4640, %v4682
      %v4771 = vmul.f32 %v4641, %v4682
      %v4772 = vmul.f32 %v4642, %v4682
      %v4773 = vmul.f32 %v4643, %v4682
      %v4774 = vmul.f32 %v4644, %v4682
      %v4775 = vmul.f32 %v4645, %v4682
      %v4776 = vmul.f32 %v4646, %v4682
      %v4777 = vmul.f32 %v4647, %v4682
      %v4778 = vmul.f32 %v4648, %v4682
      %v4779 = vmul.f32 %v4649, %v4682
      %v4780 = vmul.f32 %v4650, %v4682
      %v4781 = vmul.f32 %v4651, %v4682
      %v4782 = vmul.f32 %v4652, %v4682
      %v4783 = vmul.f32 %v4653, %v4682
      %v4784 = vmul.f32 %v4654, %v4682
      %v4785 = vmul.f32 %v4655, %v4682
      %v4786 = vmul.f32 %v4656, %v4682
      %v4787 = vmul.f32 %v4657, %v4682
      %v4788 = vmul.f32 %v4658, %v4682
      %v4789 = vmul.f32 %v4659, %v4682
      %v4790 = vmul.f32 %v4660, %v4682
      %v4791 = vmul.f32 %v4661, %v4682
      %v4792 = vmul.f32 %v4662, %v4682
      %v4793 = vmul.f32 %v4663, %v4682
      %v4794 = vmul.f32 %v4664, %v4682
      %v4795 = vmul.f32 %v4665, %v4682
      %v4796 = vmul.f32 %v4666, %v4682
      %v4797 = vmul.f32 %v4667, %v4682
      %v4798 = vmul.f32 %v4668, %v4682
      %v4799 = vmul.f32 %v4669, %v4682
      %v4800 = vmul.f32 %v4670, %v4682
      %v4801 = vmul.f32 %v4671, %v4682
      %v4802 = vmul.f32 %v4672, %v4682
      %v4803 = vmul.f32 %v4673, %v4682
      %v4804 = vmul.f32 %v4674, %v4682
      %v4805 = vmul.f32 %v4675, %v4682
      %v4806 = vmul.f32 %v4676, %v4682
      %v4807 = vmul.f32 %v4677, %v4682
      %v4808 = vmul.f32 %v4678, %v4682
      %v4809 = vmul.f32 %v4679, %v4682
      %v4810 = vmul.f32 %v4680, %v4682
      %v4812 = vlaneseq
      %v4813 = vshrl.u32 %v4812, 7
      %v4814 = vsub.s32 0, %v4813
      %v4815 = vrot.slane %v4552, %v4814
      %v4817 = vmul.f32 %v4815, %v4683
      %v4818 = vmul.f32 %v4815, %v4684
      %v4819 = vmul.f32 %v4815, %v4685
      %v4820 = vmul.f32 %v4815, %v4686
      %v4821 = vmul.f32 %v4815, %v4687
      %v4822 = vmul.f32 %v4815, %v4688
      %v4823 = vmul.f32 %v4815, %v4689
      %v4824 = vmul.f32 %v4815, %v4690
      %v4825 = vmul.f32 %v4815, %v4691
      %v4826 = vmul.f32 %v4815, %v4692
      %v4827 = vmul.f32 %v4815, %v4693
      %v4828 = vmul.f32 %v4815, %v4694
      %v4829 = vmul.f32 %v4815, %v4695
      %v4830 = vmul.f32 %v4815, %v4696
      %v4831 = vmul.f32 %v4815, %v4697
      %v4832 = vmul.f32 %v4815, %v4698
      %v4833 = vmul.f32 %v4815, %v4699
      %v4834 = vmul.f32 %v4815, %v4700
      %v4835 = vmul.f32 %v4815, %v4701
      %v4836 = vmul.f32 %v4815, %v4702
      %v4837 = vmul.f32 %v4815, %v4703
      %v4838 = vmul.f32 %v4815, %v4704
      %v4839 = vmul.f32 %v4815, %v4705
      %v4840 = vmul.f32 %v4815, %v4706
      %v4841 = vmul.f32 %v4815, %v4707
      %v4842 = vmul.f32 %v4815, %v4708
      %v4843 = vmul.f32 %v4815, %v4709
      %v4844 = vmul.f32 %v4815, %v4710
      %v4845 = vmul.f32 %v4815, %v4711
      %v4846 = vmul.f32 %v4815, %v4712
      %v4847 = vmul.f32 %v4815, %v4713
      %v4848 = vmul.f32 %v4815, %v4714
      %v4849 = vmul.f32 %v4815, %v4715
      %v4850 = vmul.f32 %v4815, %v4716
      %v4851 = vmul.f32 %v4815, %v4717
      %v4852 = vmul.f32 %v4815, %v4718
      %v4853 = vmul.f32 %v4815, %v4719
      %v4854 = vmul.f32 %v4815, %v4720
      %v4855 = vmul.f32 %v4815, %v4721
      %v4856 = vmul.f32 %v4815, %v4722
      %v4857 = vmul.f32 %v4815, %v4723
      %v4858 = vmul.f32 %v4815, %v4724
      %v4859 = vmul.f32 %v4815, %v4725
      %v4860 = vmul.f32 %v4815, %v4726
      %v4861 = vmul.f32 %v4815, %v4727
      %v4862 = vmul.f32 %v4815, %v4728
      %v4863 = vmul.f32 %v4815, %v4729
      %v4864 = vmul.f32 %v4815, %v4730
      %v4865 = vmul.f32 %v4815, %v4731
      %v4866 = vmul.f32 %v4815, %v4732
      %v4867 = vmul.f32 %v4815, %v4733
      %v4868 = vmul.f32 %v4815, %v4734
      %v4869 = vmul.f32 %v4815, %v4735
      %v4870 = vmul.f32 %v4815, %v4736
      %v4871 = vmul.f32 %v4815, %v4737
      %v4872 = vmul.f32 %v4815, %v4738
      %v4873 = vmul.f32 %v4815, %v4739
      %v4874 = vmul.f32 %v4815, %v4740
      %v4875 = vmul.f32 %v4815, %v4741
      %v4876 = vmul.f32 %v4815, %v4742
      %v4877 = vmul.f32 %v4815, %v4743
      %v4878 = vmul.f32 %v4815, %v4744
      %v4879 = vmul.f32 %v4815, %v4745
      %v4880 = vmul.f32 %v4815, %v4746
      %v4881 = vmul.f32 %v4815, %v4747
      %v4882 = vmul.f32 %v4815, %v4748
      %v4883 = vmul.f32 %v4815, %v4749
      %v4884 = vmul.f32 %v4815, %v4750
      %v4885 = vmul.f32 %v4815, %v4751
      %v4886 = vmul.f32 %v4815, %v4752
      %v4887 = vmul.f32 %v4815, %v4753
      %v4888 = vmul.f32 %v4815, %v4754
      %v4889 = vmul.f32 %v4815, %v4755
      %v4890 = vmul.f32 %v4815, %v4756
      %v4891 = vmul.f32 %v4815, %v4757
      %v4892 = vmul.f32 %v4815, %v4758
      %v4893 = vmul.f32 %v4815, %v4759
      %v4894 = vmul.f32 %v4815, %v4760
      %v4895 = vmul.f32 %v4815, %v4761
      %v4896 = vmul.f32 %v4815, %v4762
      %v4897 = vmul.f32 %v4815, %v4763
      %v4898 = vmul.f32 %v4815, %v4764
      %v4899 = vmul.f32 %v4815, %v4765
      %v4900 = vmul.f32 %v4815, %v4766
      %v4901 = vmul.f32 %v4815, %v4767
      %v4902 = vmul.f32 %v4815, %v4768
      %v4903 = vmul.f32 %v4815, %v4769
      %v4904 = vmul.f32 %v4815, %v4770
      %v4905 = vmul.f32 %v4815, %v4771
      %v4906 = vmul.f32 %v4815, %v4772
      %v4907 = vmul.f32 %v4815, %v4773
      %v4908 = vmul.f32 %v4815, %v4774
      %v4909 = vmul.f32 %v4815, %v4775
      %v4910 = vmul.f32 %v4815, %v4776
      %v4911 = vmul.f32 %v4815, %v4777
      %v4912 = vmul.f32 %v4815, %v4778
      %v4913 = vmul.f32 %v4815, %v4779
      %v4914 = vmul.f32 %v4815, %v4780
      %v4915 = vmul.f32 %v4815, %v4781
      %v4916 = vmul.f32 %v4815, %v4782
      %v4917 = vmul.f32 %v4815, %v4783
      %v4918 = vmul.f32 %v4815, %v4784
      %v4919 = vmul.f32 %v4815, %v4785
      %v4920 = vmul.f32 %v4815, %v4786
      %v4921 = vmul.f32 %v4815, %v4787
      %v4922 = vmul.f32 %v4815, %v4788
      %v4923 = vmul.f32 %v4815, %v4789
      %v4924 = vmul.f32 %v4815, %v4790
      %v4925 = vmul.f32 %v4815, %v4791
      %v4926 = vmul.f32 %v4815, %v4792
      %v4927 = vmul.f32 %v4815, %v4793
      %v4928 = vmul.f32 %v4815, %v4794
      %v4929 = vmul.f32 %v4815, %v4795
      %v4930 = vmul.f32 %v4815, %v4796
      %v4931 = vmul.f32 %v4815, %v4797
      %v4932 = vmul.f32 %v4815, %v4798
      %v4933 = vmul.f32 %v4815, %v4799
      %v4934 = vmul.f32 %v4815, %v4800
      %v4935 = vmul.f32 %v4815, %v4801
      %v4936 = vmul.f32 %v4815, %v4802
      %v4937 = vmul.f32 %v4815, %v4803
      %v4938 = vmul.f32 %v4815, %v4804
      %v4939 = vmul.f32 %v4815, %v4805
      %v4940 = vmul.f32 %v4815, %v4806
      %v4941 = vmul.f32 %v4815, %v4807
      %v4942 = vmul.f32 %v4815, %v4808
      %v4943 = vmul.f32 %v4815, %v4809
      %v4944 = vmul.f32 %v4815, %v4810
      %v4945 = vld [vmem:[%s264] sm:$0x1]
      %v4947 = vlaneseq
      %v4948 = vshrl.u32 %v4947, 7
      %v4949 = vsub.s32 0, %v4948
      %v4950 = vrot.slane %v4945, %v4949
      %v4952 = vadd.f32 %v4817, %v4950
      %v4953 = vadd.f32 %v4818, %v4950
      %v4954 = vadd.f32 %v4819, %v4950
      %v4955 = vadd.f32 %v4820, %v4950
      %v4956 = vadd.f32 %v4821, %v4950
      %v4957 = vadd.f32 %v4822, %v4950
      %v4958 = vadd.f32 %v4823, %v4950
      %v4959 = vadd.f32 %v4824, %v4950
      %v4960 = vadd.f32 %v4825, %v4950
      %v4961 = vadd.f32 %v4826, %v4950
      %v4962 = vadd.f32 %v4827, %v4950
      %v4963 = vadd.f32 %v4828, %v4950
      %v4964 = vadd.f32 %v4829, %v4950
      %v4965 = vadd.f32 %v4830, %v4950
      %v4966 = vadd.f32 %v4831, %v4950
      %v4967 = vadd.f32 %v4832, %v4950
      %v4968 = vadd.f32 %v4833, %v4950
      %v4969 = vadd.f32 %v4834, %v4950
      %v4970 = vadd.f32 %v4835, %v4950
      %v4971 = vadd.f32 %v4836, %v4950
      %v4972 = vadd.f32 %v4837, %v4950
      %v4973 = vadd.f32 %v4838, %v4950
      %v4974 = vadd.f32 %v4839, %v4950
      %v4975 = vadd.f32 %v4840, %v4950
      %v4976 = vadd.f32 %v4841, %v4950
      %v4977 = vadd.f32 %v4842, %v4950
      %v4978 = vadd.f32 %v4843, %v4950
      %v4979 = vadd.f32 %v4844, %v4950
      %v4980 = vadd.f32 %v4845, %v4950
      %v4981 = vadd.f32 %v4846, %v4950
      %v4982 = vadd.f32 %v4847, %v4950
      %v4983 = vadd.f32 %v4848, %v4950
      %v4984 = vadd.f32 %v4849, %v4950
      %v4985 = vadd.f32 %v4850, %v4950
      %v4986 = vadd.f32 %v4851, %v4950
      %v4987 = vadd.f32 %v4852, %v4950
      %v4988 = vadd.f32 %v4853, %v4950
      %v4989 = vadd.f32 %v4854, %v4950
      %v4990 = vadd.f32 %v4855, %v4950
      %v4991 = vadd.f32 %v4856, %v4950
      %v4992 = vadd.f32 %v4857, %v4950
      %v4993 = vadd.f32 %v4858, %v4950
      %v4994 = vadd.f32 %v4859, %v4950
      %v4995 = vadd.f32 %v4860, %v4950
      %v4996 = vadd.f32 %v4861, %v4950
      %v4997 = vadd.f32 %v4862, %v4950
      %v4998 = vadd.f32 %v4863, %v4950
      %v4999 = vadd.f32 %v4864, %v4950
      %v5000 = vadd.f32 %v4865, %v4950
      %v5001 = vadd.f32 %v4866, %v4950
      %v5002 = vadd.f32 %v4867, %v4950
      %v5003 = vadd.f32 %v4868, %v4950
      %v5004 = vadd.f32 %v4869, %v4950
      %v5005 = vadd.f32 %v4870, %v4950
      %v5006 = vadd.f32 %v4871, %v4950
      %v5007 = vadd.f32 %v4872, %v4950
      %v5008 = vadd.f32 %v4873, %v4950
      %v5009 = vadd.f32 %v4874, %v4950
      %v5010 = vadd.f32 %v4875, %v4950
      %v5011 = vadd.f32 %v4876, %v4950
      %v5012 = vadd.f32 %v4877, %v4950
      %v5013 = vadd.f32 %v4878, %v4950
      %v5014 = vadd.f32 %v4879, %v4950
      %v5015 = vadd.f32 %v4880, %v4950
      %v5016 = vadd.f32 %v4881, %v4950
      %v5017 = vadd.f32 %v4882, %v4950
      %v5018 = vadd.f32 %v4883, %v4950
      %v5019 = vadd.f32 %v4884, %v4950
      %v5020 = vadd.f32 %v4885, %v4950
      %v5021 = vadd.f32 %v4886, %v4950
      %v5022 = vadd.f32 %v4887, %v4950
      %v5023 = vadd.f32 %v4888, %v4950
      %v5024 = vadd.f32 %v4889, %v4950
      %v5025 = vadd.f32 %v4890, %v4950
      %v5026 = vadd.f32 %v4891, %v4950
      %v5027 = vadd.f32 %v4892, %v4950
      %v5028 = vadd.f32 %v4893, %v4950
      %v5029 = vadd.f32 %v4894, %v4950
      %v5030 = vadd.f32 %v4895, %v4950
      %v5031 = vadd.f32 %v4896, %v4950
      %v5032 = vadd.f32 %v4897, %v4950
      %v5033 = vadd.f32 %v4898, %v4950
      %v5034 = vadd.f32 %v4899, %v4950
      %v5035 = vadd.f32 %v4900, %v4950
      %v5036 = vadd.f32 %v4901, %v4950
      %v5037 = vadd.f32 %v4902, %v4950
      %v5038 = vadd.f32 %v4903, %v4950
      %v5039 = vadd.f32 %v4904, %v4950
      %v5040 = vadd.f32 %v4905, %v4950
      %v5041 = vadd.f32 %v4906, %v4950
      %v5042 = vadd.f32 %v4907, %v4950
      %v5043 = vadd.f32 %v4908, %v4950
      %v5044 = vadd.f32 %v4909, %v4950
      %v5045 = vadd.f32 %v4910, %v4950
      %v5046 = vadd.f32 %v4911, %v4950
      %v5047 = vadd.f32 %v4912, %v4950
      %v5048 = vadd.f32 %v4913, %v4950
      %v5049 = vadd.f32 %v4914, %v4950
      %v5050 = vadd.f32 %v4915, %v4950
      %v5051 = vadd.f32 %v4916, %v4950
      %v5052 = vadd.f32 %v4917, %v4950
      %v5053 = vadd.f32 %v4918, %v4950
      %v5054 = vadd.f32 %v4919, %v4950
      %v5055 = vadd.f32 %v4920, %v4950
      %v5056 = vadd.f32 %v4921, %v4950
      %v5057 = vadd.f32 %v4922, %v4950
      %v5058 = vadd.f32 %v4923, %v4950
      %v5059 = vadd.f32 %v4924, %v4950
      %v5060 = vadd.f32 %v4925, %v4950
      %v5061 = vadd.f32 %v4926, %v4950
      %v5062 = vadd.f32 %v4927, %v4950
      %v5063 = vadd.f32 %v4928, %v4950
      %v5064 = vadd.f32 %v4929, %v4950
      %v5065 = vadd.f32 %v4930, %v4950
      %v5066 = vadd.f32 %v4931, %v4950
      %v5067 = vadd.f32 %v4932, %v4950
      %v5068 = vadd.f32 %v4933, %v4950
      %v5069 = vadd.f32 %v4934, %v4950
      %v5070 = vadd.f32 %v4935, %v4950
      %v5071 = vadd.f32 %v4936, %v4950
      %v5072 = vadd.f32 %v4937, %v4950
      %v5073 = vadd.f32 %v4938, %v4950
      %v5074 = vadd.f32 %v4939, %v4950
      %v5075 = vadd.f32 %v4940, %v4950
      %v5076 = vadd.f32 %v4941, %v4950
      %v5077 = vadd.f32 %v4942, %v4950
      %v5078 = vadd.f32 %v4943, %v4950
      %v5079 = vadd.f32 %v4944, %v4950
      %vm5080 = vcmp.ge.f32.partialorder %v4952, 0.0
      %vm5081 = vcmp.ge.f32.partialorder %v4953, 0.0
      %vm5082 = vcmp.ge.f32.partialorder %v4954, 0.0
      %vm5083 = vcmp.ge.f32.partialorder %v4955, 0.0
      %vm5084 = vcmp.ge.f32.partialorder %v4956, 0.0
      %vm5085 = vcmp.ge.f32.partialorder %v4957, 0.0
      %vm5086 = vcmp.ge.f32.partialorder %v4958, 0.0
      %vm5087 = vcmp.ge.f32.partialorder %v4959, 0.0
      %vm5088 = vcmp.ge.f32.partialorder %v4960, 0.0
      %vm5089 = vcmp.ge.f32.partialorder %v4961, 0.0
      %vm5090 = vcmp.ge.f32.partialorder %v4962, 0.0
      %vm5091 = vcmp.ge.f32.partialorder %v4963, 0.0
      %vm5092 = vcmp.ge.f32.partialorder %v4964, 0.0
      %vm5093 = vcmp.ge.f32.partialorder %v4965, 0.0
      %vm5094 = vcmp.ge.f32.partialorder %v4966, 0.0
      %vm5095 = vcmp.ge.f32.partialorder %v4967, 0.0
      %vm5096 = vcmp.ge.f32.partialorder %v4968, 0.0
      %vm5097 = vcmp.ge.f32.partialorder %v4969, 0.0
      %vm5098 = vcmp.ge.f32.partialorder %v4970, 0.0
      %vm5099 = vcmp.ge.f32.partialorder %v4971, 0.0
      %vm5100 = vcmp.ge.f32.partialorder %v4972, 0.0
      %vm5101 = vcmp.ge.f32.partialorder %v4973, 0.0
      %vm5102 = vcmp.ge.f32.partialorder %v4974, 0.0
      %vm5103 = vcmp.ge.f32.partialorder %v4975, 0.0
      %vm5104 = vcmp.ge.f32.partialorder %v4976, 0.0
      %vm5105 = vcmp.ge.f32.partialorder %v4977, 0.0
      %vm5106 = vcmp.ge.f32.partialorder %v4978, 0.0
      %vm5107 = vcmp.ge.f32.partialorder %v4979, 0.0
      %vm5108 = vcmp.ge.f32.partialorder %v4980, 0.0
      %vm5109 = vcmp.ge.f32.partialorder %v4981, 0.0
      %vm5110 = vcmp.ge.f32.partialorder %v4982, 0.0
      %vm5111 = vcmp.ge.f32.partialorder %v4983, 0.0
      %vm5112 = vcmp.ge.f32.partialorder %v4984, 0.0
      %vm5113 = vcmp.ge.f32.partialorder %v4985, 0.0
      %vm5114 = vcmp.ge.f32.partialorder %v4986, 0.0
      %vm5115 = vcmp.ge.f32.partialorder %v4987, 0.0
      %vm5116 = vcmp.ge.f32.partialorder %v4988, 0.0
      %vm5117 = vcmp.ge.f32.partialorder %v4989, 0.0
      %vm5118 = vcmp.ge.f32.partialorder %v4990, 0.0
      %vm5119 = vcmp.ge.f32.partialorder %v4991, 0.0
      %vm5120 = vcmp.ge.f32.partialorder %v4992, 0.0
      %vm5121 = vcmp.ge.f32.partialorder %v4993, 0.0
      %vm5122 = vcmp.ge.f32.partialorder %v4994, 0.0
      %vm5123 = vcmp.ge.f32.partialorder %v4995, 0.0
      %vm5124 = vcmp.ge.f32.partialorder %v4996, 0.0
      %vm5125 = vcmp.ge.f32.partialorder %v4997, 0.0
      %vm5126 = vcmp.ge.f32.partialorder %v4998, 0.0
      %vm5127 = vcmp.ge.f32.partialorder %v4999, 0.0
      %vm5128 = vcmp.ge.f32.partialorder %v5000, 0.0
      %vm5129 = vcmp.ge.f32.partialorder %v5001, 0.0
      %vm5130 = vcmp.ge.f32.partialorder %v5002, 0.0
      %vm5131 = vcmp.ge.f32.partialorder %v5003, 0.0
      %vm5132 = vcmp.ge.f32.partialorder %v5004, 0.0
      %vm5133 = vcmp.ge.f32.partialorder %v5005, 0.0
      %vm5134 = vcmp.ge.f32.partialorder %v5006, 0.0
      %vm5135 = vcmp.ge.f32.partialorder %v5007, 0.0
      %vm5136 = vcmp.ge.f32.partialorder %v5008, 0.0
      %vm5137 = vcmp.ge.f32.partialorder %v5009, 0.0
      %vm5138 = vcmp.ge.f32.partialorder %v5010, 0.0
      %vm5139 = vcmp.ge.f32.partialorder %v5011, 0.0
      %vm5140 = vcmp.ge.f32.partialorder %v5012, 0.0
      %vm5141 = vcmp.ge.f32.partialorder %v5013, 0.0
      %vm5142 = vcmp.ge.f32.partialorder %v5014, 0.0
      %vm5143 = vcmp.ge.f32.partialorder %v5015, 0.0
      %vm5144 = vcmp.ge.f32.partialorder %v5016, 0.0
      %vm5145 = vcmp.ge.f32.partialorder %v5017, 0.0
      %vm5146 = vcmp.ge.f32.partialorder %v5018, 0.0
      %vm5147 = vcmp.ge.f32.partialorder %v5019, 0.0
      %vm5148 = vcmp.ge.f32.partialorder %v5020, 0.0
      %vm5149 = vcmp.ge.f32.partialorder %v5021, 0.0
      %vm5150 = vcmp.ge.f32.partialorder %v5022, 0.0
      %vm5151 = vcmp.ge.f32.partialorder %v5023, 0.0
      %vm5152 = vcmp.ge.f32.partialorder %v5024, 0.0
      %vm5153 = vcmp.ge.f32.partialorder %v5025, 0.0
      %vm5154 = vcmp.ge.f32.partialorder %v5026, 0.0
      %vm5155 = vcmp.ge.f32.partialorder %v5027, 0.0
      %vm5156 = vcmp.ge.f32.partialorder %v5028, 0.0
      %vm5157 = vcmp.ge.f32.partialorder %v5029, 0.0
      %vm5158 = vcmp.ge.f32.partialorder %v5030, 0.0
      %vm5159 = vcmp.ge.f32.partialorder %v5031, 0.0
      %vm5160 = vcmp.ge.f32.partialorder %v5032, 0.0
      %vm5161 = vcmp.ge.f32.partialorder %v5033, 0.0
      %vm5162 = vcmp.ge.f32.partialorder %v5034, 0.0
      %vm5163 = vcmp.ge.f32.partialorder %v5035, 0.0
      %vm5164 = vcmp.ge.f32.partialorder %v5036, 0.0
      %vm5165 = vcmp.ge.f32.partialorder %v5037, 0.0
      %vm5166 = vcmp.ge.f32.partialorder %v5038, 0.0
      %vm5167 = vcmp.ge.f32.partialorder %v5039, 0.0
      %vm5168 = vcmp.ge.f32.partialorder %v5040, 0.0
      %vm5169 = vcmp.ge.f32.partialorder %v5041, 0.0
      %vm5170 = vcmp.ge.f32.partialorder %v5042, 0.0
      %vm5171 = vcmp.ge.f32.partialorder %v5043, 0.0
      %vm5172 = vcmp.ge.f32.partialorder %v5044, 0.0
      %vm5173 = vcmp.ge.f32.partialorder %v5045, 0.0
      %vm5174 = vcmp.ge.f32.partialorder %v5046, 0.0
      %vm5175 = vcmp.ge.f32.partialorder %v5047, 0.0
      %vm5176 = vcmp.ge.f32.partialorder %v5048, 0.0
      %vm5177 = vcmp.ge.f32.partialorder %v5049, 0.0
      %vm5178 = vcmp.ge.f32.partialorder %v5050, 0.0
      %vm5179 = vcmp.ge.f32.partialorder %v5051, 0.0
      %vm5180 = vcmp.ge.f32.partialorder %v5052, 0.0
      %vm5181 = vcmp.ge.f32.partialorder %v5053, 0.0
      %vm5182 = vcmp.ge.f32.partialorder %v5054, 0.0
      %vm5183 = vcmp.ge.f32.partialorder %v5055, 0.0
      %vm5184 = vcmp.ge.f32.partialorder %v5056, 0.0
      %vm5185 = vcmp.ge.f32.partialorder %v5057, 0.0
      %vm5186 = vcmp.ge.f32.partialorder %v5058, 0.0
      %vm5187 = vcmp.ge.f32.partialorder %v5059, 0.0
      %vm5188 = vcmp.ge.f32.partialorder %v5060, 0.0
      %vm5189 = vcmp.ge.f32.partialorder %v5061, 0.0
      %vm5190 = vcmp.ge.f32.partialorder %v5062, 0.0
      %vm5191 = vcmp.ge.f32.partialorder %v5063, 0.0
      %vm5192 = vcmp.ge.f32.partialorder %v5064, 0.0
      %vm5193 = vcmp.ge.f32.partialorder %v5065, 0.0
      %vm5194 = vcmp.ge.f32.partialorder %v5066, 0.0
      %vm5195 = vcmp.ge.f32.partialorder %v5067, 0.0
      %vm5196 = vcmp.ge.f32.partialorder %v5068, 0.0
      %vm5197 = vcmp.ge.f32.partialorder %v5069, 0.0
      %vm5198 = vcmp.ge.f32.partialorder %v5070, 0.0
      %vm5199 = vcmp.ge.f32.partialorder %v5071, 0.0
      %vm5200 = vcmp.ge.f32.partialorder %v5072, 0.0
      %vm5201 = vcmp.ge.f32.partialorder %v5073, 0.0
      %vm5202 = vcmp.ge.f32.partialorder %v5074, 0.0
      %vm5203 = vcmp.ge.f32.partialorder %v5075, 0.0
      %vm5204 = vcmp.ge.f32.partialorder %v5076, 0.0
      %vm5205 = vcmp.ge.f32.partialorder %v5077, 0.0
      %vm5206 = vcmp.ge.f32.partialorder %v5078, 0.0
      %vm5207 = vcmp.ge.f32.partialorder %v5079, 0.0
      %v5208 = vmul.f32 %v4952, 0.1
      %v5209 = vmul.f32 %v4953, 0.1
      %v5210 = vmul.f32 %v4954, 0.1
      %v5211 = vmul.f32 %v4955, 0.1
      %v5212 = vmul.f32 %v4956, 0.1
      %v5213 = vmul.f32 %v4957, 0.1
      %v5214 = vmul.f32 %v4958, 0.1
      %v5215 = vmul.f32 %v4959, 0.1
      %v5216 = vmul.f32 %v4960, 0.1
      %v5217 = vmul.f32 %v4961, 0.1
      %v5218 = vmul.f32 %v4962, 0.1
      %v5219 = vmul.f32 %v4963, 0.1
      %v5220 = vmul.f32 %v4964, 0.1
      %v5221 = vmul.f32 %v4965, 0.1
      %v5222 = vmul.f32 %v4966, 0.1
      %v5223 = vmul.f32 %v4967, 0.1
      %v5224 = vmul.f32 %v4968, 0.1
      %v5225 = vmul.f32 %v4969, 0.1
      %v5226 = vmul.f32 %v4970, 0.1
      %v5227 = vmul.f32 %v4971, 0.1
      %v5228 = vmul.f32 %v4972, 0.1
      %v5229 = vmul.f32 %v4973, 0.1
      %v5230 = vmul.f32 %v4974, 0.1
      %v5231 = vmul.f32 %v4975, 0.1
      %v5232 = vmul.f32 %v4976, 0.1
      %v5233 = vmul.f32 %v4977, 0.1
      %v5234 = vmul.f32 %v4978, 0.1
      %v5235 = vmul.f32 %v4979, 0.1
      %v5236 = vmul.f32 %v4980, 0.1
      %v5237 = vmul.f32 %v4981, 0.1
      %v5238 = vmul.f32 %v4982, 0.1
      %v5239 = vmul.f32 %v4983, 0.1
      %v5240 = vmul.f32 %v4984, 0.1
      %v5241 = vmul.f32 %v4985, 0.1
      %v5242 = vmul.f32 %v4986, 0.1
      %v5243 = vmul.f32 %v4987, 0.1
      %v5244 = vmul.f32 %v4988, 0.1
      %v5245 = vmul.f32 %v4989, 0.1
      %v5246 = vmul.f32 %v4990, 0.1
      %v5247 = vmul.f32 %v4991, 0.1
      %v5248 = vmul.f32 %v4992, 0.1
      %v5249 = vmul.f32 %v4993, 0.1
      %v5250 = vmul.f32 %v4994, 0.1
      %v5251 = vmul.f32 %v4995, 0.1
      %v5252 = vmul.f32 %v4996, 0.1
      %v5253 = vmul.f32 %v4997, 0.1
      %v5254 = vmul.f32 %v4998, 0.1
      %v5255 = vmul.f32 %v4999, 0.1
      %v5256 = vmul.f32 %v5000, 0.1
      %v5257 = vmul.f32 %v5001, 0.1
      %v5258 = vmul.f32 %v5002, 0.1
      %v5259 = vmul.f32 %v5003, 0.1
      %v5260 = vmul.f32 %v5004, 0.1
      %v5261 = vmul.f32 %v5005, 0.1
      %v5262 = vmul.f32 %v5006, 0.1
      %v5263 = vmul.f32 %v5007, 0.1
      %v5264 = vmul.f32 %v5008, 0.1
      %v5265 = vmul.f32 %v5009, 0.1
      %v5266 = vmul.f32 %v5010, 0.1
      %v5267 = vmul.f32 %v5011, 0.1
      %v5268 = vmul.f32 %v5012, 0.1
      %v5269 = vmul.f32 %v5013, 0.1
      %v5270 = vmul.f32 %v5014, 0.1
      %v5271 = vmul.f32 %v5015, 0.1
      %v5272 = vmul.f32 %v5016, 0.1
      %v5273 = vmul.f32 %v5017, 0.1
      %v5274 = vmul.f32 %v5018, 0.1
      %v5275 = vmul.f32 %v5019, 0.1
      %v5276 = vmul.f32 %v5020, 0.1
      %v5277 = vmul.f32 %v5021, 0.1
      %v5278 = vmul.f32 %v5022, 0.1
      %v5279 = vmul.f32 %v5023, 0.1
      %v5280 = vmul.f32 %v5024, 0.1
      %v5281 = vmul.f32 %v5025, 0.1
      %v5282 = vmul.f32 %v5026, 0.1
      %v5283 = vmul.f32 %v5027, 0.1
      %v5284 = vmul.f32 %v5028, 0.1
      %v5285 = vmul.f32 %v5029, 0.1
      %v5286 = vmul.f32 %v5030, 0.1
      %v5287 = vmul.f32 %v5031, 0.1
      %v5288 = vmul.f32 %v5032, 0.1
      %v5289 = vmul.f32 %v5033, 0.1
      %v5290 = vmul.f32 %v5034, 0.1
      %v5291 = vmul.f32 %v5035, 0.1
      %v5292 = vmul.f32 %v5036, 0.1
      %v5293 = vmul.f32 %v5037, 0.1
      %v5294 = vmul.f32 %v5038, 0.1
      %v5295 = vmul.f32 %v5039, 0.1
      %v5296 = vmul.f32 %v5040, 0.1
      %v5297 = vmul.f32 %v5041, 0.1
      %v5298 = vmul.f32 %v5042, 0.1
      %v5299 = vmul.f32 %v5043, 0.1
      %v5300 = vmul.f32 %v5044, 0.1
      %v5301 = vmul.f32 %v5045, 0.1
      %v5302 = vmul.f32 %v5046, 0.1
      %v5303 = vmul.f32 %v5047, 0.1
      %v5304 = vmul.f32 %v5048, 0.1
      %v5305 = vmul.f32 %v5049, 0.1
      %v5306 = vmul.f32 %v5050, 0.1
      %v5307 = vmul.f32 %v5051, 0.1
      %v5308 = vmul.f32 %v5052, 0.1
      %v5309 = vmul.f32 %v5053, 0.1
      %v5310 = vmul.f32 %v5054, 0.1
      %v5311 = vmul.f32 %v5055, 0.1
      %v5312 = vmul.f32 %v5056, 0.1
      %v5313 = vmul.f32 %v5057, 0.1
      %v5314 = vmul.f32 %v5058, 0.1
      %v5315 = vmul.f32 %v5059, 0.1
      %v5316 = vmul.f32 %v5060, 0.1
      %v5317 = vmul.f32 %v5061, 0.1
      %v5318 = vmul.f32 %v5062, 0.1
      %v5319 = vmul.f32 %v5063, 0.1
      %v5320 = vmul.f32 %v5064, 0.1
      %v5321 = vmul.f32 %v5065, 0.1
      %v5322 = vmul.f32 %v5066, 0.1
      %v5323 = vmul.f32 %v5067, 0.1
      %v5324 = vmul.f32 %v5068, 0.1
      %v5325 = vmul.f32 %v5069, 0.1
      %v5326 = vmul.f32 %v5070, 0.1
      %v5327 = vmul.f32 %v5071, 0.1
      %v5328 = vmul.f32 %v5072, 0.1
      %v5329 = vmul.f32 %v5073, 0.1
      %v5330 = vmul.f32 %v5074, 0.1
      %v5331 = vmul.f32 %v5075, 0.1
      %v5332 = vmul.f32 %v5076, 0.1
      %v5333 = vmul.f32 %v5077, 0.1
      %v5334 = vmul.f32 %v5078, 0.1
      %v5335 = vmul.f32 %v5079, 0.1
      %v5336 = vsel %vm5080, %v4952, %v5208
      %v5337 = vsel %vm5081, %v4953, %v5209
      %v5338 = vsel %vm5082, %v4954, %v5210
      %v5339 = vsel %vm5083, %v4955, %v5211
      %v5340 = vsel %vm5084, %v4956, %v5212
      %v5341 = vsel %vm5085, %v4957, %v5213
      %v5342 = vsel %vm5086, %v4958, %v5214
      %v5343 = vsel %vm5087, %v4959, %v5215
      %v5344 = vsel %vm5088, %v4960, %v5216
      %v5345 = vsel %vm5089, %v4961, %v5217
      %v5346 = vsel %vm5090, %v4962, %v5218
      %v5347 = vsel %vm5091, %v4963, %v5219
      %v5348 = vsel %vm5092, %v4964, %v5220
      %v5349 = vsel %vm5093, %v4965, %v5221
      %v5350 = vsel %vm5094, %v4966, %v5222
      %v5351 = vsel %vm5095, %v4967, %v5223
      %v5352 = vsel %vm5096, %v4968, %v5224
      %v5353 = vsel %vm5097, %v4969, %v5225
      %v5354 = vsel %vm5098, %v4970, %v5226
      %v5355 = vsel %vm5099, %v4971, %v5227
      %v5356 = vsel %vm5100, %v4972, %v5228
      %v5357 = vsel %vm5101, %v4973, %v5229
      %v5358 = vsel %vm5102, %v4974, %v5230
      %v5359 = vsel %vm5103, %v4975, %v5231
      %v5360 = vsel %vm5104, %v4976, %v5232
      %v5361 = vsel %vm5105, %v4977, %v5233
      %v5362 = vsel %vm5106, %v4978, %v5234
      %v5363 = vsel %vm5107, %v4979, %v5235
      %v5364 = vsel %vm5108, %v4980, %v5236
      %v5365 = vsel %vm5109, %v4981, %v5237
      %v5366 = vsel %vm5110, %v4982, %v5238
      %v5367 = vsel %vm5111, %v4983, %v5239
      %v5368 = vsel %vm5112, %v4984, %v5240
      %v5369 = vsel %vm5113, %v4985, %v5241
      %v5370 = vsel %vm5114, %v4986, %v5242
      %v5371 = vsel %vm5115, %v4987, %v5243
      %v5372 = vsel %vm5116, %v4988, %v5244
      %v5373 = vsel %vm5117, %v4989, %v5245
      %v5374 = vsel %vm5118, %v4990, %v5246
      %v5375 = vsel %vm5119, %v4991, %v5247
      %v5376 = vsel %vm5120, %v4992, %v5248
      %v5377 = vsel %vm5121, %v4993, %v5249
      %v5378 = vsel %vm5122, %v4994, %v5250
      %v5379 = vsel %vm5123, %v4995, %v5251
      %v5380 = vsel %vm5124, %v4996, %v5252
      %v5381 = vsel %vm5125, %v4997, %v5253
      %v5382 = vsel %vm5126, %v4998, %v5254
      %v5383 = vsel %vm5127, %v4999, %v5255
      %v5384 = vsel %vm5128, %v5000, %v5256
      %v5385 = vsel %vm5129, %v5001, %v5257
      %v5386 = vsel %vm5130, %v5002, %v5258
      %v5387 = vsel %vm5131, %v5003, %v5259
      %v5388 = vsel %vm5132, %v5004, %v5260
      %v5389 = vsel %vm5133, %v5005, %v5261
      %v5390 = vsel %vm5134, %v5006, %v5262
      %v5391 = vsel %vm5135, %v5007, %v5263
      %v5392 = vsel %vm5136, %v5008, %v5264
      %v5393 = vsel %vm5137, %v5009, %v5265
      %v5394 = vsel %vm5138, %v5010, %v5266
      %v5395 = vsel %vm5139, %v5011, %v5267
      %v5396 = vsel %vm5140, %v5012, %v5268
      %v5397 = vsel %vm5141, %v5013, %v5269
      %v5398 = vsel %vm5142, %v5014, %v5270
      %v5399 = vsel %vm5143, %v5015, %v5271
      %v5400 = vsel %vm5144, %v5016, %v5272
      %v5401 = vsel %vm5145, %v5017, %v5273
      %v5402 = vsel %vm5146, %v5018, %v5274
      %v5403 = vsel %vm5147, %v5019, %v5275
      %v5404 = vsel %vm5148, %v5020, %v5276
      %v5405 = vsel %vm5149, %v5021, %v5277
      %v5406 = vsel %vm5150, %v5022, %v5278
      %v5407 = vsel %vm5151, %v5023, %v5279
      %v5408 = vsel %vm5152, %v5024, %v5280
      %v5409 = vsel %vm5153, %v5025, %v5281
      %v5410 = vsel %vm5154, %v5026, %v5282
      %v5411 = vsel %vm5155, %v5027, %v5283
      %v5412 = vsel %vm5156, %v5028, %v5284
      %v5413 = vsel %vm5157, %v5029, %v5285
      %v5414 = vsel %vm5158, %v5030, %v5286
      %v5415 = vsel %vm5159, %v5031, %v5287
      %v5416 = vsel %vm5160, %v5032, %v5288
      %v5417 = vsel %vm5161, %v5033, %v5289
      %v5418 = vsel %vm5162, %v5034, %v5290
      %v5419 = vsel %vm5163, %v5035, %v5291
      %v5420 = vsel %vm5164, %v5036, %v5292
      %v5421 = vsel %vm5165, %v5037, %v5293
      %v5422 = vsel %vm5166, %v5038, %v5294
      %v5423 = vsel %vm5167, %v5039, %v5295
      %v5424 = vsel %vm5168, %v5040, %v5296
      %v5425 = vsel %vm5169, %v5041, %v5297
      %v5426 = vsel %vm5170, %v5042, %v5298
      %v5427 = vsel %vm5171, %v5043, %v5299
      %v5428 = vsel %vm5172, %v5044, %v5300
      %v5429 = vsel %vm5173, %v5045, %v5301
      %v5430 = vsel %vm5174, %v5046, %v5302
      %v5431 = vsel %vm5175, %v5047, %v5303
      %v5432 = vsel %vm5176, %v5048, %v5304
      %v5433 = vsel %vm5177, %v5049, %v5305
      %v5434 = vsel %vm5178, %v5050, %v5306
      %v5435 = vsel %vm5179, %v5051, %v5307
      %v5436 = vsel %vm5180, %v5052, %v5308
      %v5437 = vsel %vm5181, %v5053, %v5309
      %v5438 = vsel %vm5182, %v5054, %v5310
      %v5439 = vsel %vm5183, %v5055, %v5311
      %v5440 = vsel %vm5184, %v5056, %v5312
      %v5441 = vsel %vm5185, %v5057, %v5313
      %v5442 = vsel %vm5186, %v5058, %v5314
      %v5443 = vsel %vm5187, %v5059, %v5315
      %v5444 = vsel %vm5188, %v5060, %v5316
      %v5445 = vsel %vm5189, %v5061, %v5317
      %v5446 = vsel %vm5190, %v5062, %v5318
      %v5447 = vsel %vm5191, %v5063, %v5319
      %v5448 = vsel %vm5192, %v5064, %v5320
      %v5449 = vsel %vm5193, %v5065, %v5321
      %v5450 = vsel %vm5194, %v5066, %v5322
      %v5451 = vsel %vm5195, %v5067, %v5323
      %v5452 = vsel %vm5196, %v5068, %v5324
      %v5453 = vsel %vm5197, %v5069, %v5325
      %v5454 = vsel %vm5198, %v5070, %v5326
      %v5455 = vsel %vm5199, %v5071, %v5327
      %v5456 = vsel %vm5200, %v5072, %v5328
      %v5457 = vsel %vm5201, %v5073, %v5329
      %v5458 = vsel %vm5202, %v5074, %v5330
      %v5459 = vsel %vm5203, %v5075, %v5331
      %v5460 = vsel %vm5204, %v5076, %v5332
      %v5461 = vsel %vm5205, %v5077, %v5333
      %v5462 = vsel %vm5206, %v5078, %v5334
      %v5463 = vsel %vm5207, %v5079, %v5335
      %v5464 = vpack.c.bf16 %v5337, %v5336
      %v5465 = vpack.c.bf16 %v5339, %v5338
      %v5466 = vpack.c.bf16 %v5341, %v5340
      %v5467 = vpack.c.bf16 %v5343, %v5342
      %v5468 = vpack.c.bf16 %v5345, %v5344
      %v5469 = vpack.c.bf16 %v5347, %v5346
      %v5470 = vpack.c.bf16 %v5349, %v5348
      %v5471 = vpack.c.bf16 %v5351, %v5350
      %v5472 = vpack.c.bf16 %v5353, %v5352
      %v5473 = vpack.c.bf16 %v5355, %v5354
      %v5474 = vpack.c.bf16 %v5357, %v5356
      %v5475 = vpack.c.bf16 %v5359, %v5358
      %v5476 = vpack.c.bf16 %v5361, %v5360
      %v5477 = vpack.c.bf16 %v5363, %v5362
      %v5478 = vpack.c.bf16 %v5365, %v5364
      %v5479 = vpack.c.bf16 %v5367, %v5366
      %v5480 = vpack.c.bf16 %v5369, %v5368
      %v5481 = vpack.c.bf16 %v5371, %v5370
      %v5482 = vpack.c.bf16 %v5373, %v5372
      %v5483 = vpack.c.bf16 %v5375, %v5374
      %v5484 = vpack.c.bf16 %v5377, %v5376
      %v5485 = vpack.c.bf16 %v5379, %v5378
      %v5486 = vpack.c.bf16 %v5381, %v5380
      %v5487 = vpack.c.bf16 %v5383, %v5382
      %v5488 = vpack.c.bf16 %v5385, %v5384
      %v5489 = vpack.c.bf16 %v5387, %v5386
      %v5490 = vpack.c.bf16 %v5389, %v5388
      %v5491 = vpack.c.bf16 %v5391, %v5390
      %v5492 = vpack.c.bf16 %v5393, %v5392
      %v5493 = vpack.c.bf16 %v5395, %v5394
      %v5494 = vpack.c.bf16 %v5397, %v5396
      %v5495 = vpack.c.bf16 %v5399, %v5398
      %v5496 = vpack.c.bf16 %v5401, %v5400
      %v5497 = vpack.c.bf16 %v5403, %v5402
      %v5498 = vpack.c.bf16 %v5405, %v5404
      %v5499 = vpack.c.bf16 %v5407, %v5406
      %v5500 = vpack.c.bf16 %v5409, %v5408
      %v5501 = vpack.c.bf16 %v5411, %v5410
      %v5502 = vpack.c.bf16 %v5413, %v5412
      %v5503 = vpack.c.bf16 %v5415, %v5414
      %v5504 = vpack.c.bf16 %v5417, %v5416
      %v5505 = vpack.c.bf16 %v5419, %v5418
      %v5506 = vpack.c.bf16 %v5421, %v5420
      %v5507 = vpack.c.bf16 %v5423, %v5422
      %v5508 = vpack.c.bf16 %v5425, %v5424
      %v5509 = vpack.c.bf16 %v5427, %v5426
      %v5510 = vpack.c.bf16 %v5429, %v5428
      %v5511 = vpack.c.bf16 %v5431, %v5430
      %v5512 = vpack.c.bf16 %v5433, %v5432
      %v5513 = vpack.c.bf16 %v5435, %v5434
      %v5514 = vpack.c.bf16 %v5437, %v5436
      %v5515 = vpack.c.bf16 %v5439, %v5438
      %v5516 = vpack.c.bf16 %v5441, %v5440
      %v5517 = vpack.c.bf16 %v5443, %v5442
      %v5518 = vpack.c.bf16 %v5445, %v5444
      %v5519 = vpack.c.bf16 %v5447, %v5446
      %v5520 = vpack.c.bf16 %v5449, %v5448
      %v5521 = vpack.c.bf16 %v5451, %v5450
      %v5522 = vpack.c.bf16 %v5453, %v5452
      %v5523 = vpack.c.bf16 %v5455, %v5454
      %v5524 = vpack.c.bf16 %v5457, %v5456
      %v5525 = vpack.c.bf16 %v5459, %v5458
      %v5526 = vpack.c.bf16 %v5461, %v5460
      %v5527 = vpack.c.bf16 %v5463, %v5462
      %v5592 = vunpack.c.l.b16 %v5464
      %v5593 = vunpack.c.h.b16 %v5464
      %v5594 = vunpack.c.l.b16 %v5465
      %v5595 = vunpack.c.h.b16 %v5465
      %v5596 = vunpack.c.l.b16 %v5466
      %v5597 = vunpack.c.h.b16 %v5466
      %v5598 = vunpack.c.l.b16 %v5467
      %v5599 = vunpack.c.h.b16 %v5467
      %v5600 = vunpack.c.l.b16 %v5468
      %v5601 = vunpack.c.h.b16 %v5468
      %v5602 = vunpack.c.l.b16 %v5469
      %v5603 = vunpack.c.h.b16 %v5469
      %v5604 = vunpack.c.l.b16 %v5470
      %v5605 = vunpack.c.h.b16 %v5470
      %v5606 = vunpack.c.l.b16 %v5471
      %v5607 = vunpack.c.h.b16 %v5471
      %v5608 = vunpack.c.l.b16 %v5472
      %v5609 = vunpack.c.h.b16 %v5472
      %v5610 = vunpack.c.l.b16 %v5473
      %v5611 = vunpack.c.h.b16 %v5473
      %v5612 = vunpack.c.l.b16 %v5474
      %v5613 = vunpack.c.h.b16 %v5474
      %v5614 = vunpack.c.l.b16 %v5475
      %v5615 = vunpack.c.h.b16 %v5475
      %v5616 = vunpack.c.l.b16 %v5476
      %v5617 = vunpack.c.h.b16 %v5476
      %v5618 = vunpack.c.l.b16 %v5477
      %v5619 = vunpack.c.h.b16 %v5477
      %v5620 = vunpack.c.l.b16 %v5478
      %v5621 = vunpack.c.h.b16 %v5478
      %v5622 = vunpack.c.l.b16 %v5479
      %v5623 = vunpack.c.h.b16 %v5479
      %v5624 = vunpack.c.l.b16 %v5480
      %v5625 = vunpack.c.h.b16 %v5480
      %v5626 = vunpack.c.l.b16 %v5481
      %v5627 = vunpack.c.h.b16 %v5481
      %v5628 = vunpack.c.l.b16 %v5482
      %v5629 = vunpack.c.h.b16 %v5482
      %v5630 = vunpack.c.l.b16 %v5483
      %v5631 = vunpack.c.h.b16 %v5483
      %v5632 = vunpack.c.l.b16 %v5484
      %v5633 = vunpack.c.h.b16 %v5484
      %v5634 = vunpack.c.l.b16 %v5485
      %v5635 = vunpack.c.h.b16 %v5485
      %v5636 = vunpack.c.l.b16 %v5486
      %v5637 = vunpack.c.h.b16 %v5486
      %v5638 = vunpack.c.l.b16 %v5487
      %v5639 = vunpack.c.h.b16 %v5487
      %v5640 = vunpack.c.l.b16 %v5488
      %v5641 = vunpack.c.h.b16 %v5488
      %v5642 = vunpack.c.l.b16 %v5489
      %v5643 = vunpack.c.h.b16 %v5489
      %v5644 = vunpack.c.l.b16 %v5490
      %v5645 = vunpack.c.h.b16 %v5490
      %v5646 = vunpack.c.l.b16 %v5491
      %v5647 = vunpack.c.h.b16 %v5491
      %v5648 = vunpack.c.l.b16 %v5492
      %v5649 = vunpack.c.h.b16 %v5492
      %v5650 = vunpack.c.l.b16 %v5493
      %v5651 = vunpack.c.h.b16 %v5493
      %v5652 = vunpack.c.l.b16 %v5494
      %v5653 = vunpack.c.h.b16 %v5494
      %v5654 = vunpack.c.l.b16 %v5495
      %v5655 = vunpack.c.h.b16 %v5495
      %v5656 = vunpack.c.l.b16 %v5496
      %v5657 = vunpack.c.h.b16 %v5496
      %v5658 = vunpack.c.l.b16 %v5497
      %v5659 = vunpack.c.h.b16 %v5497
      %v5660 = vunpack.c.l.b16 %v5498
      %v5661 = vunpack.c.h.b16 %v5498
      %v5662 = vunpack.c.l.b16 %v5499
      %v5663 = vunpack.c.h.b16 %v5499
      %v5664 = vunpack.c.l.b16 %v5500
      %v5665 = vunpack.c.h.b16 %v5500
      %v5666 = vunpack.c.l.b16 %v5501
      %v5667 = vunpack.c.h.b16 %v5501
      %v5668 = vunpack.c.l.b16 %v5502
      %v5669 = vunpack.c.h.b16 %v5502
      %v5670 = vunpack.c.l.b16 %v5503
      %v5671 = vunpack.c.h.b16 %v5503
      %v5672 = vunpack.c.l.b16 %v5504
      %v5673 = vunpack.c.h.b16 %v5504
      %v5674 = vunpack.c.l.b16 %v5505
      %v5675 = vunpack.c.h.b16 %v5505
      %v5676 = vunpack.c.l.b16 %v5506
      %v5677 = vunpack.c.h.b16 %v5506
      %v5678 = vunpack.c.l.b16 %v5507
      %v5679 = vunpack.c.h.b16 %v5507
      %v5680 = vunpack.c.l.b16 %v5508
      %v5681 = vunpack.c.h.b16 %v5508
      %v5682 = vunpack.c.l.b16 %v5509
      %v5683 = vunpack.c.h.b16 %v5509
      %v5684 = vunpack.c.l.b16 %v5510
      %v5685 = vunpack.c.h.b16 %v5510
      %v5686 = vunpack.c.l.b16 %v5511
      %v5687 = vunpack.c.h.b16 %v5511
      %v5688 = vunpack.c.l.b16 %v5512
      %v5689 = vunpack.c.h.b16 %v5512
      %v5690 = vunpack.c.l.b16 %v5513
      %v5691 = vunpack.c.h.b16 %v5513
      %v5692 = vunpack.c.l.b16 %v5514
      %v5693 = vunpack.c.h.b16 %v5514
      %v5694 = vunpack.c.l.b16 %v5515
      %v5695 = vunpack.c.h.b16 %v5515
      %v5696 = vunpack.c.l.b16 %v5516
      %v5697 = vunpack.c.h.b16 %v5516
      %v5698 = vunpack.c.l.b16 %v5517
      %v5699 = vunpack.c.h.b16 %v5517
      %v5700 = vunpack.c.l.b16 %v5518
      %v5701 = vunpack.c.h.b16 %v5518
      %v5702 = vunpack.c.l.b16 %v5519
      %v5703 = vunpack.c.h.b16 %v5519
      %v5704 = vunpack.c.l.b16 %v5520
      %v5705 = vunpack.c.h.b16 %v5520
      %v5706 = vunpack.c.l.b16 %v5521
      %v5707 = vunpack.c.h.b16 %v5521
      %v5708 = vunpack.c.l.b16 %v5522
      %v5709 = vunpack.c.h.b16 %v5522
      %v5710 = vunpack.c.l.b16 %v5523
      %v5711 = vunpack.c.h.b16 %v5523
      %v5712 = vunpack.c.l.b16 %v5524
      %v5713 = vunpack.c.h.b16 %v5524
      %v5714 = vunpack.c.l.b16 %v5525
      %v5715 = vunpack.c.h.b16 %v5525
      %v5716 = vunpack.c.l.b16 %v5526
      %v5717 = vunpack.c.h.b16 %v5526
      %v5718 = vunpack.c.l.b16 %v5527
      %v5719 = vunpack.c.h.b16 %v5527
      %v5720 = vpack.c.b16 %v5592, %v5592
      %v5721 = vpack.c.b16 %v5593, %v5593
      %v5722 = vpack.c.b16 %v5594, %v5594
      %v5723 = vpack.c.b16 %v5595, %v5595
      %v5724 = vpack.c.b16 %v5596, %v5596
      %v5725 = vpack.c.b16 %v5597, %v5597
      %v5726 = vpack.c.b16 %v5598, %v5598
      %v5727 = vpack.c.b16 %v5599, %v5599
      %v5728 = vpack.c.b16 %v5600, %v5600
      %v5729 = vpack.c.b16 %v5601, %v5601
      %v5730 = vpack.c.b16 %v5602, %v5602
      %v5731 = vpack.c.b16 %v5603, %v5603
      %v5732 = vpack.c.b16 %v5604, %v5604
      %v5733 = vpack.c.b16 %v5605, %v5605
      %v5734 = vpack.c.b16 %v5606, %v5606
      %v5735 = vpack.c.b16 %v5607, %v5607
      %v5736 = vpack.c.b16 %v5608, %v5608
      %v5737 = vpack.c.b16 %v5609, %v5609
      %v5738 = vpack.c.b16 %v5610, %v5610
      %v5739 = vpack.c.b16 %v5611, %v5611
      %v5740 = vpack.c.b16 %v5612, %v5612
      %v5741 = vpack.c.b16 %v5613, %v5613
      %v5742 = vpack.c.b16 %v5614, %v5614
      %v5743 = vpack.c.b16 %v5615, %v5615
      %v5744 = vpack.c.b16 %v5616, %v5616
      %v5745 = vpack.c.b16 %v5617, %v5617
      %v5746 = vpack.c.b16 %v5618, %v5618
      %v5747 = vpack.c.b16 %v5619, %v5619
      %v5748 = vpack.c.b16 %v5620, %v5620
      %v5749 = vpack.c.b16 %v5621, %v5621
      %v5750 = vpack.c.b16 %v5622, %v5622
      %v5751 = vpack.c.b16 %v5623, %v5623
      %v5752 = vpack.c.b16 %v5624, %v5624
      %v5753 = vpack.c.b16 %v5625, %v5625
      %v5754 = vpack.c.b16 %v5626, %v5626
      %v5755 = vpack.c.b16 %v5627, %v5627
      %v5756 = vpack.c.b16 %v5628, %v5628
      %v5757 = vpack.c.b16 %v5629, %v5629
      %v5758 = vpack.c.b16 %v5630, %v5630
      %v5759 = vpack.c.b16 %v5631, %v5631
      %v5760 = vpack.c.b16 %v5632, %v5632
      %v5761 = vpack.c.b16 %v5633, %v5633
      %v5762 = vpack.c.b16 %v5634, %v5634
      %v5763 = vpack.c.b16 %v5635, %v5635
      %v5764 = vpack.c.b16 %v5636, %v5636
      %v5765 = vpack.c.b16 %v5637, %v5637
      %v5766 = vpack.c.b16 %v5638, %v5638
      %v5767 = vpack.c.b16 %v5639, %v5639
      %v5768 = vpack.c.b16 %v5640, %v5640
      %v5769 = vpack.c.b16 %v5641, %v5641
      %v5770 = vpack.c.b16 %v5642, %v5642
      %v5771 = vpack.c.b16 %v5643, %v5643
      %v5772 = vpack.c.b16 %v5644, %v5644
      %v5773 = vpack.c.b16 %v5645, %v5645
      %v5774 = vpack.c.b16 %v5646, %v5646
      %v5775 = vpack.c.b16 %v5647, %v5647
      %v5776 = vpack.c.b16 %v5648, %v5648
      %v5777 = vpack.c.b16 %v5649, %v5649
      %v5778 = vpack.c.b16 %v5650, %v5650
      %v5779 = vpack.c.b16 %v5651, %v5651
      %v5780 = vpack.c.b16 %v5652, %v5652
      %v5781 = vpack.c.b16 %v5653, %v5653
      %v5782 = vpack.c.b16 %v5654, %v5654
      %v5783 = vpack.c.b16 %v5655, %v5655
      %v5784 = vpack.c.b16 %v5656, %v5656
      %v5785 = vpack.c.b16 %v5657, %v5657
      %v5786 = vpack.c.b16 %v5658, %v5658
      %v5787 = vpack.c.b16 %v5659, %v5659
      %v5788 = vpack.c.b16 %v5660, %v5660
      %v5789 = vpack.c.b16 %v5661, %v5661
      %v5790 = vpack.c.b16 %v5662, %v5662
      %v5791 = vpack.c.b16 %v5663, %v5663
      %v5792 = vpack.c.b16 %v5664, %v5664
      %v5793 = vpack.c.b16 %v5665, %v5665
      %v5794 = vpack.c.b16 %v5666, %v5666
      %v5795 = vpack.c.b16 %v5667, %v5667
      %v5796 = vpack.c.b16 %v5668, %v5668
      %v5797 = vpack.c.b16 %v5669, %v5669
      %v5798 = vpack.c.b16 %v5670, %v5670
      %v5799 = vpack.c.b16 %v5671, %v5671
      %v5800 = vpack.c.b16 %v5672, %v5672
      %v5801 = vpack.c.b16 %v5673, %v5673
      %v5802 = vpack.c.b16 %v5674, %v5674
      %v5803 = vpack.c.b16 %v5675, %v5675
      %v5804 = vpack.c.b16 %v5676, %v5676
      %v5805 = vpack.c.b16 %v5677, %v5677
      %v5806 = vpack.c.b16 %v5678, %v5678
      %v5807 = vpack.c.b16 %v5679, %v5679
      %v5808 = vpack.c.b16 %v5680, %v5680
      %v5809 = vpack.c.b16 %v5681, %v5681
      %v5810 = vpack.c.b16 %v5682, %v5682
      %v5811 = vpack.c.b16 %v5683, %v5683
      %v5812 = vpack.c.b16 %v5684, %v5684
      %v5813 = vpack.c.b16 %v5685, %v5685
      %v5814 = vpack.c.b16 %v5686, %v5686
      %v5815 = vpack.c.b16 %v5687, %v5687
      %v5816 = vpack.c.b16 %v5688, %v5688
      %v5817 = vpack.c.b16 %v5689, %v5689
      %v5818 = vpack.c.b16 %v5690, %v5690
      %v5819 = vpack.c.b16 %v5691, %v5691
      %v5820 = vpack.c.b16 %v5692, %v5692
      %v5821 = vpack.c.b16 %v5693, %v5693
      %v5822 = vpack.c.b16 %v5694, %v5694
      %v5823 = vpack.c.b16 %v5695, %v5695
      %v5824 = vpack.c.b16 %v5696, %v5696
      %v5825 = vpack.c.b16 %v5697, %v5697
      %v5826 = vpack.c.b16 %v5698, %v5698
      %v5827 = vpack.c.b16 %v5699, %v5699
      %v5828 = vpack.c.b16 %v5700, %v5700
      %v5829 = vpack.c.b16 %v5701, %v5701
      %v5830 = vpack.c.b16 %v5702, %v5702
      %v5831 = vpack.c.b16 %v5703, %v5703
      %v5832 = vpack.c.b16 %v5704, %v5704
      %v5833 = vpack.c.b16 %v5705, %v5705
      %v5834 = vpack.c.b16 %v5706, %v5706
      %v5835 = vpack.c.b16 %v5707, %v5707
      %v5836 = vpack.c.b16 %v5708, %v5708
      %v5837 = vpack.c.b16 %v5709, %v5709
      %v5838 = vpack.c.b16 %v5710, %v5710
      %v5839 = vpack.c.b16 %v5711, %v5711
      %v5840 = vpack.c.b16 %v5712, %v5712
      %v5841 = vpack.c.b16 %v5713, %v5713
      %v5842 = vpack.c.b16 %v5714, %v5714
      %v5843 = vpack.c.b16 %v5715, %v5715
      %v5844 = vpack.c.b16 %v5716, %v5716
      %v5845 = vpack.c.b16 %v5717, %v5717
      %v5846 = vpack.c.b16 %v5718, %v5718
      %v5847 = vpack.c.b16 %v5719, %v5719
      %5976 = vst [vmem:[%s272] sm:$0xf] %v5720
      %5977 = vst [vmem:[%s272 + $0x4] sm:$0xf] %v5721
      %5978 = vst [vmem:[%s272 + $0x8] sm:$0xf] %v5722
      %5979 = vst [vmem:[%s272 + $0xc] sm:$0xf] %v5723
      %5980 = vst [vmem:[%s272 + $0x10] sm:$0xf] %v5724
      %5981 = vst [vmem:[%s272 + $0x14] sm:$0xf] %v5725
      %5982 = vst [vmem:[%s272 + $0x18] sm:$0xf] %v5726
      %5983 = vst [vmem:[%s272 + $0x1c] sm:$0xf] %v5727
      %5984 = vst [vmem:[%s272 + $0x20] sm:$0xf] %v5728
      %5985 = vst [vmem:[%s272 + $0x24] sm:$0xf] %v5729
      %5986 = vst [vmem:[%s272 + $0x28] sm:$0xf] %v5730
      %5987 = vst [vmem:[%s272 + $0x2c] sm:$0xf] %v5731
      %5988 = vst [vmem:[%s272 + $0x30] sm:$0xf] %v5732
      %5989 = vst [vmem:[%s272 + $0x34] sm:$0xf] %v5733
      %5990 = vst [vmem:[%s272 + $0x38] sm:$0xf] %v5734
      %5991 = vst [vmem:[%s272 + $0x3c] sm:$0xf] %v5735
      %5992 = vst [vmem:[%s272 + $0x40] sm:$0xf] %v5736
      %5993 = vst [vmem:[%s272 + $0x44] sm:$0xf] %v5737
      %5994 = vst [vmem:[%s272 + $0x48] sm:$0xf] %v5738
      %5995 = vst [vmem:[%s272 + $0x4c] sm:$0xf] %v5739
      %5996 = vst [vmem:[%s272 + $0x50] sm:$0xf] %v5740
      %5997 = vst [vmem:[%s272 + $0x54] sm:$0xf] %v5741
      %5998 = vst [vmem:[%s272 + $0x58] sm:$0xf] %v5742
      %5999 = vst [vmem:[%s272 + $0x5c] sm:$0xf] %v5743
      %6000 = vst [vmem:[%s272 + $0x60] sm:$0xf] %v5744
      %6001 = vst [vmem:[%s272 + $0x64] sm:$0xf] %v5745
      %6002 = vst [vmem:[%s272 + $0x68] sm:$0xf] %v5746
      %6003 = vst [vmem:[%s272 + $0x6c] sm:$0xf] %v5747
      %6004 = vst [vmem:[%s272 + $0x70] sm:$0xf] %v5748
      %6005 = vst [vmem:[%s272 + $0x74] sm:$0xf] %v5749
      %6006 = vst [vmem:[%s272 + $0x78] sm:$0xf] %v5750
      %6007 = vst [vmem:[%s272 + $0x7c] sm:$0xf] %v5751
      %6008 = vst [vmem:[%s272 + $0x80] sm:$0xf] %v5752
      %6009 = vst [vmem:[%s272 + $0x84] sm:$0xf] %v5753
      %6010 = vst [vmem:[%s272 + $0x88] sm:$0xf] %v5754
      %6011 = vst [vmem:[%s272 + $0x8c] sm:$0xf] %v5755
      %6012 = vst [vmem:[%s272 + $0x90] sm:$0xf] %v5756
      %6013 = vst [vmem:[%s272 + $0x94] sm:$0xf] %v5757
      %6014 = vst [vmem:[%s272 + $0x98] sm:$0xf] %v5758
      %6015 = vst [vmem:[%s272 + $0x9c] sm:$0xf] %v5759
      %6016 = vst [vmem:[%s272 + $0xa0] sm:$0xf] %v5760
      %6017 = vst [vmem:[%s272 + $0xa4] sm:$0xf] %v5761
      %6018 = vst [vmem:[%s272 + $0xa8] sm:$0xf] %v5762
      %6019 = vst [vmem:[%s272 + $0xac] sm:$0xf] %v5763
      %6020 = vst [vmem:[%s272 + $0xb0] sm:$0xf] %v5764
      %6021 = vst [vmem:[%s272 + $0xb4] sm:$0xf] %v5765
      %6022 = vst [vmem:[%s272 + $0xb8] sm:$0xf] %v5766
      %6023 = vst [vmem:[%s272 + $0xbc] sm:$0xf] %v5767
      %6024 = vst [vmem:[%s272 + $0xc0] sm:$0xf] %v5768
      %6025 = vst [vmem:[%s272 + $0xc4] sm:$0xf] %v5769
      %6026 = vst [vmem:[%s272 + $0xc8] sm:$0xf] %v5770
      %6027 = vst [vmem:[%s272 + $0xcc] sm:$0xf] %v5771
      %6028 = vst [vmem:[%s272 + $0xd0] sm:$0xf] %v5772
      %6029 = vst [vmem:[%s272 + $0xd4] sm:$0xf] %v5773
      %6030 = vst [vmem:[%s272 + $0xd8] sm:$0xf] %v5774
      %6031 = vst [vmem:[%s272 + $0xdc] sm:$0xf] %v5775
      %6032 = vst [vmem:[%s272 + $0xe0] sm:$0xf] %v5776
      %6033 = vst [vmem:[%s272 + $0xe4] sm:$0xf] %v5777
      %6034 = vst [vmem:[%s272 + $0xe8] sm:$0xf] %v5778
      %6035 = vst [vmem:[%s272 + $0xec] sm:$0xf] %v5779
      %6036 = vst [vmem:[%s272 + $0xf0] sm:$0xf] %v5780
      %6037 = vst [vmem:[%s272 + $0xf4] sm:$0xf] %v5781
      %6038 = vst [vmem:[%s272 + $0xf8] sm:$0xf] %v5782
      %6039 = vst [vmem:[%s272 + $0xfc] sm:$0xf] %v5783
      %6040 = vst [vmem:[%s272 + $0x100] sm:$0xf] %v5784
      %6041 = vst [vmem:[%s272 + $0x104] sm:$0xf] %v5785
      %6042 = vst [vmem:[%s272 + $0x108] sm:$0xf] %v5786
      %6043 = vst [vmem:[%s272 + $0x10c] sm:$0xf] %v5787
      %6044 = vst [vmem:[%s272 + $0x110] sm:$0xf] %v5788
      %6045 = vst [vmem:[%s272 + $0x114] sm:$0xf] %v5789
      %6046 = vst [vmem:[%s272 + $0x118] sm:$0xf] %v5790
      %6047 = vst [vmem:[%s272 + $0x11c] sm:$0xf] %v5791
      %6048 = vst [vmem:[%s272 + $0x120] sm:$0xf] %v5792
      %6049 = vst [vmem:[%s272 + $0x124] sm:$0xf] %v5793
      %6050 = vst [vmem:[%s272 + $0x128] sm:$0xf] %v5794
      %6051 = vst [vmem:[%s272 + $0x12c] sm:$0xf] %v5795
      %6052 = vst [vmem:[%s272 + $0x130] sm:$0xf] %v5796
      %6053 = vst [vmem:[%s272 + $0x134] sm:$0xf] %v5797
      %6054 = vst [vmem:[%s272 + $0x138] sm:$0xf] %v5798
      %6055 = vst [vmem:[%s272 + $0x13c] sm:$0xf] %v5799
      %6056 = vst [vmem:[%s272 + $0x140] sm:$0xf] %v5800
      %6057 = vst [vmem:[%s272 + $0x144] sm:$0xf] %v5801
      %6058 = vst [vmem:[%s272 + $0x148] sm:$0xf] %v5802
      %6059 = vst [vmem:[%s272 + $0x14c] sm:$0xf] %v5803
      %6060 = vst [vmem:[%s272 + $0x150] sm:$0xf] %v5804
      %6061 = vst [vmem:[%s272 + $0x154] sm:$0xf] %v5805
      %6062 = vst [vmem:[%s272 + $0x158] sm:$0xf] %v5806
      %6063 = vst [vmem:[%s272 + $0x15c] sm:$0xf] %v5807
      %6064 = vst [vmem:[%s272 + $0x160] sm:$0xf] %v5808
      %6065 = vst [vmem:[%s272 + $0x164] sm:$0xf] %v5809
      %6066 = vst [vmem:[%s272 + $0x168] sm:$0xf] %v5810
      %6067 = vst [vmem:[%s272 + $0x16c] sm:$0xf] %v5811
      %6068 = vst [vmem:[%s272 + $0x170] sm:$0xf] %v5812
      %6069 = vst [vmem:[%s272 + $0x174] sm:$0xf] %v5813
      %6070 = vst [vmem:[%s272 + $0x178] sm:$0xf] %v5814
      %6071 = vst [vmem:[%s272 + $0x17c] sm:$0xf] %v5815
      %6072 = vst [vmem:[%s272 + $0x180] sm:$0xf] %v5816
      %6073 = vst [vmem:[%s272 + $0x184] sm:$0xf] %v5817
      %6074 = vst [vmem:[%s272 + $0x188] sm:$0xf] %v5818
      %6075 = vst [vmem:[%s272 + $0x18c] sm:$0xf] %v5819
      %6076 = vst [vmem:[%s272 + $0x190] sm:$0xf] %v5820
      %6077 = vst [vmem:[%s272 + $0x194] sm:$0xf] %v5821
      %6078 = vst [vmem:[%s272 + $0x198] sm:$0xf] %v5822
      %6079 = vst [vmem:[%s272 + $0x19c] sm:$0xf] %v5823
      %6080 = vst [vmem:[%s272 + $0x1a0] sm:$0xf] %v5824
      %6081 = vst [vmem:[%s272 + $0x1a4] sm:$0xf] %v5825
      %6082 = vst [vmem:[%s272 + $0x1a8] sm:$0xf] %v5826
      %6083 = vst [vmem:[%s272 + $0x1ac] sm:$0xf] %v5827
      %6084 = vst [vmem:[%s272 + $0x1b0] sm:$0xf] %v5828
      %6085 = vst [vmem:[%s272 + $0x1b4] sm:$0xf] %v5829
      %6086 = vst [vmem:[%s272 + $0x1b8] sm:$0xf] %v5830
      %6087 = vst [vmem:[%s272 + $0x1bc] sm:$0xf] %v5831
      %6088 = vst [vmem:[%s272 + $0x1c0] sm:$0xf] %v5832
      %6089 = vst [vmem:[%s272 + $0x1c4] sm:$0xf] %v5833
      %6090 = vst [vmem:[%s272 + $0x1c8] sm:$0xf] %v5834
      %6091 = vst [vmem:[%s272 + $0x1cc] sm:$0xf] %v5835
      %6092 = vst [vmem:[%s272 + $0x1d0] sm:$0xf] %v5836
      %6093 = vst [vmem:[%s272 + $0x1d4] sm:$0xf] %v5837
      %6094 = vst [vmem:[%s272 + $0x1d8] sm:$0xf] %v5838
      %6095 = vst [vmem:[%s272 + $0x1dc] sm:$0xf] %v5839
      %6096 = vst [vmem:[%s272 + $0x1e0] sm:$0xf] %v5840
      %6097 = vst [vmem:[%s272 + $0x1e4] sm:$0xf] %v5841
      %6098 = vst [vmem:[%s272 + $0x1e8] sm:$0xf] %v5842
      %6099 = vst [vmem:[%s272 + $0x1ec] sm:$0xf] %v5843
      %6100 = vst [vmem:[%s272 + $0x1f0] sm:$0xf] %v5844
      %6101 = vst [vmem:[%s272 + $0x1f4] sm:$0xf] %v5845
      %6102 = vst [vmem:[%s272 + $0x1f8] sm:$0xf] %v5846
      %6103 = vst [vmem:[%s272 + $0x1fc] sm:$0xf] %v5847
      %p6104 = scmp.lt.s32.totalorder %s16, 1
      %s6105 = scalar_select %p6104, %s16, 1
      %s6106 = smul.addr %s6105, 128
      %s6107 = smul.addr %s6106, 4
      %s6108 = scalar_lea.vmem %s5, %s6107
      // Predicated region
      $region41: #{style_block_forward.5} parent=39 // pred_check
        %p6109 = pneg %p159
      $region42: #{style_block_forward.5} parent=39 // pred_check_branch
        %6111 = sbr.rel (%p6109) target = $region44
      $region43: #{style_block_forward.5} parent=39 // pred_region
        _
      $region44: #{style_block_forward.5} parent=39 // pred_fallthru
        _
    $region40: #{style_block_forward.5} parent=5 // pred_fallthru
      _
    %p6112 = scmp.le.s32.totalorder 2, %s11
    // Predicated region
    $region45: #{style_block_forward.5} parent=5 // pred_check
      %p6113 = pneg %p6112
    $region46: #{style_block_forward.5} parent=5 // pred_check_branch
      %6115 = sbr.rel (%p6113) target = $region48
    $region47: #{style_block_forward.5} parent=5 // pred_region
      %s6116 = ssub.s32 %s11, 2
      // Predicated region
      $region49: #{style_block_forward.5} parent=47 // pred_check
        %p6117 = pneg %p165
      $region50: #{style_block_forward.5} parent=47 // pred_check_branch
        %6119 = sbr.rel (%p6117) target = $region52
      $region51: #{style_block_forward.5} parent=47 // pred_region
        %p6120 = scmp.lt.s32.totalorder %s17, 1
        %s6121 = scalar_select %p6120, %s17, 1
        %s6122 = smul.addr %s6121, 128
        %s6123 = smul.addr %s6122, 4
        %s6124 = scalar_lea.vmem %s5, %s6123
      $region52: #{style_block_forward.5} parent=47 // pred_fallthru
        _
    $region48: #{style_block_forward.5} parent=5 // pred_fallthru
      _
  $region6: #{style_block_forward.5} parent=0 // loop_footer
    %s15 = sadd.s32 1, %s11
  $region7: #{style_block_forward.5} parent=0 // loop_footer_branch
    %10 = sbr.rel target = $region3
  $region8: #{style_block_forward.5} parent=0 // loop_exit
    _

</llo_original>
